<compile_context>
chip_gen: v7x
topology: tpu7x:2x2x1
jax: 0.10.0
libtpu: 0.0.40
codegen_flags: <defaults>
</compile_context>

<pallas_src>
import numpy as np

import jax
import jax.numpy as jnp
from jax.experimental import pallas as pl
from jax.experimental.pallas import tpu as pltpu


# ----------------------------------------------------------------------------
# Static module configuration
# ----------------------------------------------------------------------------
N_BATCH = 2
C0, H0, W0 = 4, 16, 16          # branch 0 stream
C1, H1, W1 = 8, 8, 8            # branch 1 stream
HW0 = H0 * W0                   # 256
HW1 = H1 * W1                   # 64


# ----------------------------------------------------------------------------
# In-kernel helpers
# ----------------------------------------------------------------------------
def _conv3x3_same(x, w_ref, b_ref, pad_ref, H, W):
    """3x3 conv, stride 1, pad 1, in (C_in, H*W) layout (spatial on lanes).

    x       : (C_in, H*W) f32 value
    w_ref   : (C_out, 9*C_in) ref; taps ordered (kh, kw) major then ci,
              BN scale already folded in
    b_ref   : (C_out, 1) ref; BN shift (beta)
    pad_ref : (C_in, H*W + 2*W + 2) VMEM scratch used as a flat zero-padded row
    returns : (C_out, H*W) f32 (no activation applied)
    """
    c_in, hw = x.shape
    c_out = w_ref.shape[0]
    assert hw == H * W and (W & (W - 1)) == 0, "W must be a power of two"
    lw = W.bit_length() - 1
    off = W + 1

    # Flat zero-padded copy of x; buffer index (off + p) holds flattened pixel p.
    pad_ref[...] = jnp.zeros_like(pad_ref)
    pad_ref[:, off:off + hw] = x

    # Per-pixel (row, col) for border masking.  W is a power of two so we use
    # shift/and instead of vector integer div/mod.
    pos = jax.lax.broadcasted_iota(jnp.int32, (c_in, hw), 1)
    row = pos >> lw
    col = pos & (W - 1)

    acc = jnp.zeros((c_out, hw), jnp.float32)
    tap = 0
    for dh in (-1, 0, 1):
        for dw in (-1, 0, 1):
            s = dh * W + dw
            # shifted[c, p] == x[c, p + s]; out-of-image positions are masked.
            shifted = pad_ref[:, off + s:off + s + hw]
            valid = ((row + dh >= 0) & (row + dh < H) &
                     (col + dw >= 0) & (col + dw < W))
            patch = jnp.where(valid, shifted, 0.0)
            w_tap = w_ref[:, tap * c_in:(tap + 1) * c_in]        # (C_out, C_in)
            acc = acc + jnp.dot(w_tap, patch,
                                preferred_element_type=jnp.float32)
            tap += 1
    return acc + b_ref[...]          # bias broadcasts along the lane axis


def _hr_module_kernel(x0_ref, x1_ref,
                      b0w1_ref, b0b1_ref, b0w2_ref, b0b2_ref,
                      b1w1_ref, b1b1_ref, b1w2_ref, b1b2_ref,
                      f01w_ref, f01b_ref, f10w_ref, f10b_ref,
                      ut_ref, ds2_ref,
                      o0_ref, o1_ref,
                      pad0_ref, pad1_ref):
    relu = lambda v: jnp.maximum(v, 0.0)

    x0 = x0_ref[0]                                    # (C0, HW0)
    x1 = x1_ref[0]                                    # (C1, HW1)

    # ---- branch 0: BasicBlock on the 16x16 / C=4 stream ---------------------
    h0 = relu(_conv3x3_same(x0, b0w1_ref, b0b1_ref, pad0_ref, H0, W0))
    x0b = relu(_conv3x3_same(h0, b0w2_ref, b0b2_ref, pad0_ref, H0, W0) + x0)

    # ---- branch 1: BasicBlock on the 8x8 / C=8 stream -----------------------
    h1 = relu(_conv3x3_same(x1, b1w1_ref, b1b1_ref, pad1_ref, H1, W1))
    x1b = relu(_conv3x3_same(h1, b1w2_ref, b1b2_ref, pad1_ref, H1, W1) + x1)

    # ---- fuse output 0: relu( x0b + upsample( conv1x1_bn(x1b) ) ) -----------
    z = jnp.dot(f01w_ref[...], x1b,
                preferred_element_type=jnp.float32) + f01b_ref[...]   # (C0, HW1)
    up = jnp.dot(z, ut_ref[...], preferred_element_type=jnp.float32)  # (C0, HW0)
    o0_ref[0] = relu(x0b + up)

    # ---- fuse output 1: relu( conv3x3_s2_bn(x0b) + x1b ) --------------------
    # stride-2 conv == full-res 3x3 conv followed by even-(row,col) selection.
    yf = _conv3x3_same(x0b, f10w_ref, f10b_ref, pad0_ref, H0, W0)     # (C1, HW0)
    yd = jnp.dot(yf, ds2_ref[...], preferred_element_type=jnp.float32)  # (C1, HW1)
    o1_ref[0] = relu(yd + x1b)


# ----------------------------------------------------------------------------
# Pallas wrapper
# ----------------------------------------------------------------------------
def hr_module_forward(x0_nchw, x1_nchw, kp, u_t, d_s2):
    """HighResolutionModule forward. Inputs NCHW; returns [out0, out1] NCHW."""
    n = x0_nchw.shape[0]
    x0 = x0_nchw.reshape(n, C0, HW0).astype(jnp.float32)   # free reshape of NCHW
    x1 = x1_nchw.reshape(n, C1, HW1).astype(jnp.float32)

    weights = (kp["b0_w1"], kp["b0_b1"], kp["b0_w2"], kp["b0_b2"],
               kp["b1_w1"], kp["b1_b1"], kp["b1_w2"], kp["b1_b2"],
               kp["f01_w"], kp["f01_b"], kp["f10_w"], kp["f10_b"],
               u_t, d_s2)
    args = (x0, x1) + weights

    def batch_spec(shape):
        return pl.BlockSpec((1,) + tuple(shape[1:]), lambda b: (b, 0, 0))

    def full_spec(shape):
        return pl.BlockSpec(tuple(shape), lambda b: (0,) * len(shape))

    in_specs = [batch_spec(x0.shape), batch_spec(x1.shape)]
    in_specs += [full_spec(w.shape) for w in weights]
    out_specs = (batch_spec((n, C0, HW0)), batch_spec((n, C1, HW1)))
    out_shape = (jax.ShapeDtypeStruct((n, C0, HW0), jnp.float32),
                 jax.ShapeDtypeStruct((n, C1, HW1), jnp.float32))

    flops = 2 * n * (
        2 * C0 * (9 * C0) * HW0        # branch-0 BasicBlock (two 3x3 convs)
        + 2 * C1 * (9 * C1) * HW1      # branch-1 BasicBlock
        + C0 * C1 * HW1                # fuse 0<-1 : 1x1 conv
        + C0 * HW1 * HW0               # fuse 0<-1 : bilinear upsample matmul
        + C1 * (9 * C0) * HW0          # fuse 1<-0 : 3x3 conv at full res
        + C1 * HW0 * HW1)              # fuse 1<-0 : stride-2 subsample matmul
    bytes_accessed = 4 * (sum(int(np.prod(a.shape)) for a in args)
                          + n * (C0 * HW0 + C1 * HW1))

    out0, out1 = pl.pallas_call(
        _hr_module_kernel,
        grid=(n,),
        in_specs=in_specs,
        out_specs=out_specs,
        out_shape=out_shape,
        scratch_shapes=[
            pltpu.VMEM((C0, HW0 + 2 * W0 + 2), jnp.float32),   # branch-0 pad buf
            pltpu.VMEM((C1, HW1 + 2 * W1 + 2), jnp.float32),   # branch-1 pad buf
        ],
        compiler_params=pltpu.CompilerParams(
            dimension_semantics=("parallel",)),
        cost_estimate=pl.CostEstimate(
            flops=flops, transcendentals=0, bytes_accessed=bytes_accessed),
    )(*args)

    return [out0.reshape(n, C0, H0, W0), out1.reshape(n, C1, H1, W1)]


# ----------------------------------------------------------------------------
# Constant resampling matrices
# ----------------------------------------------------------------------------
def bilinear_matrix(out_size, in_size):
    """1-D interpolation matrix reproducing F.interpolate(bilinear,
    align_corners=False): out = U @ in."""
    scale = in_size / out_size
    src = (np.arange(out_size) + 0.5) * scale - 0.5
    src = np.maximum(src, 0.0)
    i0 = np.minimum(np.floor(src).astype(np.int64), in_size - 1)
    i1 = np.minimum(i0 + 1, in_size - 1)
    w1 = src - i0
    w0 = 1.0 - w1
    u = np.zeros((out_size, in_size), dtype=np.float32)
    np.add.at(u, (np.arange(out_size), i0), w0)
    np.add.at(u, (np.arange(out_size), i1), w1)
    return u


def upsample_matrix_T():
    """(HW1, HW0) matrix: (C, HW1) @ U_T == bilinearly upsampled (C, HW0)."""
    uh = bilinear_matrix(H0, H1)
    uw = bilinear_matrix(W0, W1)
    return jnp.asarray(np.kron(uh, uw).T)        # (64, 256)


def stride2_select_matrix():
    """(HW0, HW1) 0/1 matrix selecting even-(row,col) pixels: a k=3,s=2,p=1 conv
    equals (full-res k=3,s=1,p=1 conv) @ D."""
    d = np.zeros((HW0, HW1), dtype=np.float32)
    for q in range(HW1):
        qh, qw = q // W1, q % W1
        d[(2 * qh) * W0 + (2 * qw), q] = 1.0
    return jnp.asarray(d)


# ----------------------------------------------------------------------------
# Deterministic parameters + BN folding
# ----------------------------------------------------------------------------
def make_bn(key, c):
    k1, k2 = jax.random.split(key)
    gamma = jax.random.uniform(k1, (c,), jnp.float32, 0.5, 1.5)
    beta = jax.random.normal(k2, (c,), jnp.float32) * 0.1
    # eval-mode BatchNorm with running_mean=0, running_var=1
    scale = gamma / jnp.sqrt(1.0 + 1e-5)
    return scale, beta


def make_conv(key, cout, cin, k):
    return jax.random.normal(key, (cout, cin, k, k), jnp.float32) * 0.1   # OIHW


def make_params(key):
    ks = jax.random.split(key, 12)
    p = {}
    p["b0_w1"] = make_conv(ks[0], C0, C0, 3); p["b0_s1"], p["b0_n1"] = make_bn(ks[1], C0)
    p["b0_w2"] = make_conv(ks[2], C0, C0, 3); p["b0_s2"], p["b0_n2"] = make_bn(ks[3], C0)
    p["b1_w1"] = make_conv(ks[4], C1, C1, 3); p["b1_s1"], p["b1_n1"] = make_bn(ks[5], C1)
    p["b1_w2"] = make_conv(ks[6], C1, C1, 3); p["b1_s2"], p["b1_n2"] = make_bn(ks[7], C1)
    p["f01_w"] = make_conv(ks[8], C0, C1, 1); p["f01_s"], p["f01_n"] = make_bn(ks[9], C0)
    p["f10_w"] = make_conv(ks[10], C1, C0, 3); p["f10_s"], p["f10_n"] = make_bn(ks[11], C1)
    return p


def _fold3x3(w4, scale):
    """OIHW (Cout,Cin,3,3) weight + BN scale -> (Cout, 9*Cin), tap-major (kh,kw)
    then ci — matches the in-kernel patch ordering exactly."""
    cout, cin = w4.shape[:2]
    wf = jnp.transpose(w4, (0, 2, 3, 1)).reshape(cout, 9 * cin)
    return wf * scale[:, None]


def fold_params(p):
    return {
        "b0_w1": _fold3x3(p["b0_w1"], p["b0_s1"]), "b0_b1": p["b0_n1"][:, None],
        "b0_w2": _fold3x3(p["b0_w2"], p["b0_s2"]), "b0_b2": p["b0_n2"][:, None],
        "b1_w1": _fold3x3(p["b1_w1"], p["b1_s1"]), "b1_b1": p["b1_n1"][:, None],
        "b1_w2": _fold3x3(p["b1_w2"], p["b1_s2"]), "b1_b2": p["b1_n2"][:, None],
        "f01_w": p["f01_w"][:, :, 0, 0] * p["f01_s"][:, None],
        "f01_b": p["f01_n"][:, None],
        "f10_w": _fold3x3(p["f10_w"], p["f10_s"]), "f10_b": p["f10_n"][:, None],
    }


# ----------------------------------------------------------------------------
# Pure-JAX reference (unfused, unfolded) — mirrors the PyTorch module exactly
# ----------------------------------------------------------------------------
def reference_forward(x0, x1, p, u_t):
    hp = jax.lax.Precision.HIGHEST

    def conv_bn(x, w4, scale, beta, stride=1, pad=1, relu=False):
        y = jax.lax.conv_general_dilated(
            x, w4, (stride, stride), ((pad, pad), (pad, pad)),
            dimension_numbers=("NCHW", "OIHW", "NCHW"), precision=hp)
        y = y * scale[None, :, None, None] + beta[None, :, None, None]
        return jnp.maximum(y, 0.0) if relu else y

    n = x0.shape[0]
    h = conv_bn(x0, p["b0_w1"], p["b0_s1"], p["b0_n1"], relu=True)
    x0b = jnp.maximum(conv_bn(h, p["b0_w2"], p["b0_s2"], p["b0_n2"]) + x0, 0.0)
    h = conv_bn(x1, p["b1_w1"], p["b1_s1"], p["b1_n1"], relu=True)
    x1b = jnp.maximum(conv_bn(h, p["b1_w2"], p["b1_s2"], p["b1_n2"]) + x1, 0.0)

    z = conv_bn(x1b, p["f01_w"], p["f01_s"], p["f01_n"], stride=1, pad=0)
    up = jnp.einsum("ncp,pq->ncq", z.reshape(n, C0, HW1), u_t,
                    precision=hp).reshape(n, C0, H0, W0)
    out0 = jnp.maximum(x0b + up, 0.0)

    y = conv_bn(x0b, p["f10_w"], p["f10_s"], p["f10_n"], stride=2, pad=1)
    out1 = jnp.maximum(y + x1b, 0.0)
    return out0, out1


# ----------------------------------------------------------------------------
if __name__ == "__main__":
    key = jax.random.PRNGKey(0)
    k_in0, k_in1, k_p = jax.random.split(key, 3)

    # Inputs (NCHW, matching the PyTorch module)
    x0 = jax.random.normal(k_in0, (N_BATCH, C0, H0, W0), jnp.float32)
    x1 = jax.random.normal(k_in1, (N_BATCH, C1, H1, W1), jnp.float32)

    params = make_params(k_p)
    kparams = fold_params(params)
    u_t = upsample_matrix_T()            # (64, 256) bilinear, align_corners=False
    d_s2 = stride2_select_matrix()       # (256, 64) stride-2 subsample

    fwd = jax.jit(hr_module_forward)
    out0, out1 = fwd(x0, x1, kparams, u_t, d_s2)
    jax.block_until_ready((out0, out1))

    assert out0.shape == (N_BATCH, C0, H0, W0)
    assert out1.shape == (N_BATCH, C1, H1, W1)

    # Correctness check against a pure-JAX (lax.conv) reference of the module.
    r0, r1 = reference_forward(x0, x1, params, u_t)
    np.testing.assert_allclose(np.asarray(out0), np.asarray(r0), rtol=2e-2, atol=2e-2)
    np.testing.assert_allclose(np.asarray(out1), np.asarray(r1), rtol=2e-2, atol=2e-2)

    print("KERNEL_OK")
</pallas_src>

<mosaic_0001>
module attributes {stable_mosaic.version = 11 : i64} {
  func.func @_hr_module_kernel(%arg0: i32, %arg1: memref<1x4x256xf32, #tpu.memory_space<vmem>>, %arg2: memref<1x8x64xf32, #tpu.memory_space<vmem>>, %arg3: memref<4x36xf32, #tpu.memory_space<vmem>>, %arg4: memref<4x1xf32, #tpu.memory_space<vmem>>, %arg5: memref<4x36xf32, #tpu.memory_space<vmem>>, %arg6: memref<4x1xf32, #tpu.memory_space<vmem>>, %arg7: memref<8x72xf32, #tpu.memory_space<vmem>>, %arg8: memref<8x1xf32, #tpu.memory_space<vmem>>, %arg9: memref<8x72xf32, #tpu.memory_space<vmem>>, %arg10: memref<8x1xf32, #tpu.memory_space<vmem>>, %arg11: memref<4x8xf32, #tpu.memory_space<vmem>>, %arg12: memref<4x1xf32, #tpu.memory_space<vmem>>, %arg13: memref<8x36xf32, #tpu.memory_space<vmem>>, %arg14: memref<8x1xf32, #tpu.memory_space<vmem>>, %arg15: memref<64x256xf32, #tpu.memory_space<vmem>>, %arg16: memref<256x64xf32, #tpu.memory_space<vmem>>, %arg17: memref<1x4x256xf32, #tpu.memory_space<vmem>>, %arg18: memref<1x8x64xf32, #tpu.memory_space<vmem>>, %arg19: memref<4x290xf32, #tpu.memory_space<vmem>>, %arg20: memref<8x82xf32, #tpu.memory_space<vmem>>) attributes {dimension_semantics = [#tpu.dimension_semantics<parallel>], iteration_bounds = array<i64: 2>, scalar_prefetch = 0 : i64, scratch_operands = 2 : i64, tpu.core_type = #tpu.core_type<tc>, window_params = [{transform_indices = @transform_0, window_bounds = array<i64: 1, 4, 256>}, {transform_indices = @transform_1, window_bounds = array<i64: 1, 8, 64>}, {pipeline_mode = #tpu.pipeline_mode<synchronous>, transform_indices = @transform_2, window_bounds = array<i64: 4, 36>}, {pipeline_mode = #tpu.pipeline_mode<synchronous>, transform_indices = @transform_3, window_bounds = array<i64: 4, 1>}, {pipeline_mode = #tpu.pipeline_mode<synchronous>, transform_indices = @transform_4, window_bounds = array<i64: 4, 36>}, {pipeline_mode = #tpu.pipeline_mode<synchronous>, transform_indices = @transform_5, window_bounds = array<i64: 4, 1>}, {pipeline_mode = #tpu.pipeline_mode<synchronous>, transform_indices = @transform_6, window_bounds = array<i64: 8, 72>}, {pipeline_mode = #tpu.pipeline_mode<synchronous>, transform_indices = @transform_7, window_bounds = array<i64: 8, 1>}, {pipeline_mode = #tpu.pipeline_mode<synchronous>, transform_indices = @transform_8, window_bounds = array<i64: 8, 72>}, {pipeline_mode = #tpu.pipeline_mode<synchronous>, transform_indices = @transform_9, window_bounds = array<i64: 8, 1>}, {pipeline_mode = #tpu.pipeline_mode<synchronous>, transform_indices = @transform_10, window_bounds = array<i64: 4, 8>}, {pipeline_mode = #tpu.pipeline_mode<synchronous>, transform_indices = @transform_11, window_bounds = array<i64: 4, 1>}, {pipeline_mode = #tpu.pipeline_mode<synchronous>, transform_indices = @transform_12, window_bounds = array<i64: 8, 36>}, {pipeline_mode = #tpu.pipeline_mode<synchronous>, transform_indices = @transform_13, window_bounds = array<i64: 8, 1>}, {pipeline_mode = #tpu.pipeline_mode<synchronous>, transform_indices = @transform_14, window_bounds = array<i64: 64, 256>}, {pipeline_mode = #tpu.pipeline_mode<synchronous>, transform_indices = @transform_15, window_bounds = array<i64: 256, 64>}, {transform_indices = @transform_16, window_bounds = array<i64: 1, 4, 256>}, {transform_indices = @transform_17, window_bounds = array<i64: 1, 8, 64>}]} {
    %c0 = arith.constant 0 : index
    %c0_0 = arith.constant 0 : index
    %c0_1 = arith.constant 0 : index
    %0 = vector.load %arg1[%c0, %c0_0, %c0_1] : memref<1x4x256xf32, #tpu.memory_space<vmem>>, vector<1x4x256xf32>
    %1 = vector.shape_cast %0 : vector<1x4x256xf32> to vector<4x256xf32>
    %c0_2 = arith.constant 0 : index
    %c0_3 = arith.constant 0 : index
    %c0_4 = arith.constant 0 : index
    %2 = vector.load %arg2[%c0_2, %c0_3, %c0_4] : memref<1x8x64xf32, #tpu.memory_space<vmem>>, vector<1x8x64xf32>
    %3 = vector.shape_cast %2 : vector<1x8x64xf32> to vector<8x64xf32>
    %cst = arith.constant 0.000000e+00 : f32
    %4 = vector.broadcast %cst : f32 to vector<4x290xf32>
    %c0_5 = arith.constant 0 : index
    %c0_6 = arith.constant 0 : index
    %5 = vector.load %arg19[%c0_5, %c0_6] : memref<4x290xf32, #tpu.memory_space<vmem>>, vector<4x290xf32>
    tpu.vector_store %arg19[%c0_5, %c0_6], %4 {strides = array<i32>} : memref<4x290xf32, #tpu.memory_space<vmem>>, vector<4x290xf32>,
    %c0_7 = arith.constant 0 : index
    %c17 = arith.constant 17 : index
    %6 = vector.load %arg19[%c0_7, %c17] : memref<4x290xf32, #tpu.memory_space<vmem>>, vector<4x256xf32>
    tpu.vector_store %arg19[%c0_7, %c17], %1 {strides = array<i32>} : memref<4x290xf32, #tpu.memory_space<vmem>>, vector<4x256xf32>,
    %7 = tpu.iota {dimensions = array<i32: 1>} : vector<4x256xi32>
    %c4_i32 = arith.constant 4 : i32
    %8 = vector.broadcast %c4_i32 : i32 to vector<4x256xi32>
    %9 = arith.shrsi %7, %8 : vector<4x256xi32>
    %c15_i32 = arith.constant 15 : i32
    %10 = vector.broadcast %c15_i32 : i32 to vector<4x256xi32>
    %11 = arith.andi %7, %10 : vector<4x256xi32>
    %cst_8 = arith.constant 0.000000e+00 : f32
    %12 = vector.broadcast %cst_8 : f32 to vector<4x256xf32>
    %c0_9 = arith.constant 0 : index
    %c0_10 = arith.constant 0 : index
    %13 = vector.load %arg19[%c0_9, %c0_10] : memref<4x290xf32, #tpu.memory_space<vmem>>, vector<4x256xf32>
    %c-1_i32 = arith.constant -1 : i32
    %14 = vector.broadcast %c-1_i32 : i32 to vector<4x256xi32>
    %15 = arith.addi %9, %14 : vector<4x256xi32>
    %c0_i32 = arith.constant 0 : i32
    %16 = vector.broadcast %c0_i32 : i32 to vector<4x256xi32>
    %17 = arith.cmpi sge, %15, %16 : vector<4x256xi32>
    %c-1_i32_11 = arith.constant -1 : i32
    %18 = vector.broadcast %c-1_i32_11 : i32 to vector<4x256xi32>
    %19 = arith.addi %9, %18 : vector<4x256xi32>
    %c16_i32 = arith.constant 16 : i32
    %20 = vector.broadcast %c16_i32 : i32 to vector<4x256xi32>
    %21 = arith.cmpi slt, %19, %20 : vector<4x256xi32>
    %22 = arith.andi %17, %21 : vector<4x256xi1>
    %c-1_i32_12 = arith.constant -1 : i32
    %23 = vector.broadcast %c-1_i32_12 : i32 to vector<4x256xi32>
    %24 = arith.addi %11, %23 : vector<4x256xi32>
    %c0_i32_13 = arith.constant 0 : i32
    %25 = vector.broadcast %c0_i32_13 : i32 to vector<4x256xi32>
    %26 = arith.cmpi sge, %24, %25 : vector<4x256xi32>
    %27 = arith.andi %22, %26 : vector<4x256xi1>
    %c-1_i32_14 = arith.constant -1 : i32
    %28 = vector.broadcast %c-1_i32_14 : i32 to vector<4x256xi32>
    %29 = arith.addi %11, %28 : vector<4x256xi32>
    %c16_i32_15 = arith.constant 16 : i32
    %30 = vector.broadcast %c16_i32_15 : i32 to vector<4x256xi32>
    %31 = arith.cmpi slt, %29, %30 : vector<4x256xi32>
    %32 = arith.andi %27, %31 : vector<4x256xi1>
    %cst_16 = arith.constant 0.000000e+00 : f32
    %33 = vector.broadcast %cst_16 : f32 to vector<4x256xf32>
    %34 = arith.select %32, %13, %33 : vector<4x256xi1>, vector<4x256xf32>
    %c0_17 = arith.constant 0 : index
    %c0_18 = arith.constant 0 : index
    %35 = vector.load %arg3[%c0_17, %c0_18] : memref<4x36xf32, #tpu.memory_space<vmem>>, vector<4x4xf32>
    %cst_19 = arith.constant dense<0.000000e+00> : vector<4x256xf32>
    %36 = tpu.matmul %35, %34, %cst_19 {dimension_numbers = #tpu.dot_dimension_numbers<[1], [0], [0], [1], [0, 0, 1, 1], [], []>} : vector<4x4xf32>, vector<4x256xf32>, vector<4x256xf32> -> vector<4x256xf32>
    %37 = arith.addf %12, %36 : vector<4x256xf32>
    %c0_20 = arith.constant 0 : index
    %c1 = arith.constant 1 : index
    %38 = vector.load %arg19[%c0_20, %c1] : memref<4x290xf32, #tpu.memory_space<vmem>>, vector<4x256xf32>
    %c-1_i32_21 = arith.constant -1 : i32
    %39 = vector.broadcast %c-1_i32_21 : i32 to vector<4x256xi32>
    %40 = arith.addi %9, %39 : vector<4x256xi32>
    %c0_i32_22 = arith.constant 0 : i32
    %41 = vector.broadcast %c0_i32_22 : i32 to vector<4x256xi32>
    %42 = arith.cmpi sge, %40, %41 : vector<4x256xi32>
    %c-1_i32_23 = arith.constant -1 : i32
    %43 = vector.broadcast %c-1_i32_23 : i32 to vector<4x256xi32>
    %44 = arith.addi %9, %43 : vector<4x256xi32>
    %c16_i32_24 = arith.constant 16 : i32
    %45 = vector.broadcast %c16_i32_24 : i32 to vector<4x256xi32>
    %46 = arith.cmpi slt, %44, %45 : vector<4x256xi32>
    %47 = arith.andi %42, %46 : vector<4x256xi1>
    %c0_i32_25 = arith.constant 0 : i32
    %48 = vector.broadcast %c0_i32_25 : i32 to vector<4x256xi32>
    %49 = arith.addi %11, %48 : vector<4x256xi32>
    %c0_i32_26 = arith.constant 0 : i32
    %50 = vector.broadcast %c0_i32_26 : i32 to vector<4x256xi32>
    %51 = arith.cmpi sge, %49, %50 : vector<4x256xi32>
    %52 = arith.andi %47, %51 : vector<4x256xi1>
    %c0_i32_27 = arith.constant 0 : i32
    %53 = vector.broadcast %c0_i32_27 : i32 to vector<4x256xi32>
    %54 = arith.addi %11, %53 : vector<4x256xi32>
    %c16_i32_28 = arith.constant 16 : i32
    %55 = vector.broadcast %c16_i32_28 : i32 to vector<4x256xi32>
    %56 = arith.cmpi slt, %54, %55 : vector<4x256xi32>
    %57 = arith.andi %52, %56 : vector<4x256xi1>
    %cst_29 = arith.constant 0.000000e+00 : f32
    %58 = vector.broadcast %cst_29 : f32 to vector<4x256xf32>
    %59 = arith.select %57, %38, %58 : vector<4x256xi1>, vector<4x256xf32>
    %c0_30 = arith.constant 0 : index
    %c4 = arith.constant 4 : index
    %60 = vector.load %arg3[%c0_30, %c4] : memref<4x36xf32, #tpu.memory_space<vmem>>, vector<4x4xf32>
    %cst_31 = arith.constant dense<0.000000e+00> : vector<4x256xf32>
    %61 = tpu.matmul %60, %59, %cst_31 {dimension_numbers = #tpu.dot_dimension_numbers<[1], [0], [0], [1], [0, 0, 1, 1], [], []>} : vector<4x4xf32>, vector<4x256xf32>, vector<4x256xf32> -> vector<4x256xf32>
    %62 = arith.addf %37, %61 : vector<4x256xf32>
    %c0_32 = arith.constant 0 : index
    %c2 = arith.constant 2 : index
    %63 = vector.load %arg19[%c0_32, %c2] : memref<4x290xf32, #tpu.memory_space<vmem>>, vector<4x256xf32>
    %c-1_i32_33 = arith.constant -1 : i32
    %64 = vector.broadcast %c-1_i32_33 : i32 to vector<4x256xi32>
    %65 = arith.addi %9, %64 : vector<4x256xi32>
    %c0_i32_34 = arith.constant 0 : i32
    %66 = vector.broadcast %c0_i32_34 : i32 to vector<4x256xi32>
    %67 = arith.cmpi sge, %65, %66 : vector<4x256xi32>
    %c-1_i32_35 = arith.constant -1 : i32
    %68 = vector.broadcast %c-1_i32_35 : i32 to vector<4x256xi32>
    %69 = arith.addi %9, %68 : vector<4x256xi32>
    %c16_i32_36 = arith.constant 16 : i32
    %70 = vector.broadcast %c16_i32_36 : i32 to vector<4x256xi32>
    %71 = arith.cmpi slt, %69, %70 : vector<4x256xi32>
    %72 = arith.andi %67, %71 : vector<4x256xi1>
    %c1_i32 = arith.constant 1 : i32
    %73 = vector.broadcast %c1_i32 : i32 to vector<4x256xi32>
    %74 = arith.addi %11, %73 : vector<4x256xi32>
    %c0_i32_37 = arith.constant 0 : i32
    %75 = vector.broadcast %c0_i32_37 : i32 to vector<4x256xi32>
    %76 = arith.cmpi sge, %74, %75 : vector<4x256xi32>
    %77 = arith.andi %72, %76 : vector<4x256xi1>
    %c1_i32_38 = arith.constant 1 : i32
    %78 = vector.broadcast %c1_i32_38 : i32 to vector<4x256xi32>
    %79 = arith.addi %11, %78 : vector<4x256xi32>
    %c16_i32_39 = arith.constant 16 : i32
    %80 = vector.broadcast %c16_i32_39 : i32 to vector<4x256xi32>
    %81 = arith.cmpi slt, %79, %80 : vector<4x256xi32>
    %82 = arith.andi %77, %81 : vector<4x256xi1>
    %cst_40 = arith.constant 0.000000e+00 : f32
    %83 = vector.broadcast %cst_40 : f32 to vector<4x256xf32>
    %84 = arith.select %82, %63, %83 : vector<4x256xi1>, vector<4x256xf32>
    %c0_41 = arith.constant 0 : index
    %c8 = arith.constant 8 : index
    %85 = vector.load %arg3[%c0_41, %c8] : memref<4x36xf32, #tpu.memory_space<vmem>>, vector<4x4xf32>
    %cst_42 = arith.constant dense<0.000000e+00> : vector<4x256xf32>
    %86 = tpu.matmul %85, %84, %cst_42 {dimension_numbers = #tpu.dot_dimension_numbers<[1], [0], [0], [1], [0, 0, 1, 1], [], []>} : vector<4x4xf32>, vector<4x256xf32>, vector<4x256xf32> -> vector<4x256xf32>
    %87 = arith.addf %62, %86 : vector<4x256xf32>
    %c0_43 = arith.constant 0 : index
    %c16 = arith.constant 16 : index
    %88 = vector.load %arg19[%c0_43, %c16] : memref<4x290xf32, #tpu.memory_space<vmem>>, vector<4x256xf32>
    %c0_i32_44 = arith.constant 0 : i32
    %89 = vector.broadcast %c0_i32_44 : i32 to vector<4x256xi32>
    %90 = arith.addi %9, %89 : vector<4x256xi32>
    %c0_i32_45 = arith.constant 0 : i32
    %91 = vector.broadcast %c0_i32_45 : i32 to vector<4x256xi32>
    %92 = arith.cmpi sge, %90, %91 : vector<4x256xi32>
    %c0_i32_46 = arith.constant 0 : i32
    %93 = vector.broadcast %c0_i32_46 : i32 to vector<4x256xi32>
    %94 = arith.addi %9, %93 : vector<4x256xi32>
    %c16_i32_47 = arith.constant 16 : i32
    %95 = vector.broadcast %c16_i32_47 : i32 to vector<4x256xi32>
    %96 = arith.cmpi slt, %94, %95 : vector<4x256xi32>
    %97 = arith.andi %92, %96 : vector<4x256xi1>
    %c-1_i32_48 = arith.constant -1 : i32
    %98 = vector.broadcast %c-1_i32_48 : i32 to vector<4x256xi32>
    %99 = arith.addi %11, %98 : vector<4x256xi32>
    %c0_i32_49 = arith.constant 0 : i32
    %100 = vector.broadcast %c0_i32_49 : i32 to vector<4x256xi32>
    %101 = arith.cmpi sge, %99, %100 : vector<4x256xi32>
    %102 = arith.andi %97, %101 : vector<4x256xi1>
    %c-1_i32_50 = arith.constant -1 : i32
    %103 = vector.broadcast %c-1_i32_50 : i32 to vector<4x256xi32>
    %104 = arith.addi %11, %103 : vector<4x256xi32>
    %c16_i32_51 = arith.constant 16 : i32
    %105 = vector.broadcast %c16_i32_51 : i32 to vector<4x256xi32>
    %106 = arith.cmpi slt, %104, %105 : vector<4x256xi32>
    %107 = arith.andi %102, %106 : vector<4x256xi1>
    %cst_52 = arith.constant 0.000000e+00 : f32
    %108 = vector.broadcast %cst_52 : f32 to vector<4x256xf32>
    %109 = arith.select %107, %88, %108 : vector<4x256xi1>, vector<4x256xf32>
    %c0_53 = arith.constant 0 : index
    %c12 = arith.constant 12 : index
    %110 = vector.load %arg3[%c0_53, %c12] : memref<4x36xf32, #tpu.memory_space<vmem>>, vector<4x4xf32>
    %cst_54 = arith.constant dense<0.000000e+00> : vector<4x256xf32>
    %111 = tpu.matmul %110, %109, %cst_54 {dimension_numbers = #tpu.dot_dimension_numbers<[1], [0], [0], [1], [0, 0, 1, 1], [], []>} : vector<4x4xf32>, vector<4x256xf32>, vector<4x256xf32> -> vector<4x256xf32>
    %112 = arith.addf %87, %111 : vector<4x256xf32>
    %c0_55 = arith.constant 0 : index
    %c17_56 = arith.constant 17 : index
    %113 = vector.load %arg19[%c0_55, %c17_56] : memref<4x290xf32, #tpu.memory_space<vmem>>, vector<4x256xf32>
    %c0_i32_57 = arith.constant 0 : i32
    %114 = vector.broadcast %c0_i32_57 : i32 to vector<4x256xi32>
    %115 = arith.addi %9, %114 : vector<4x256xi32>
    %c0_i32_58 = arith.constant 0 : i32
    %116 = vector.broadcast %c0_i32_58 : i32 to vector<4x256xi32>
    %117 = arith.cmpi sge, %115, %116 : vector<4x256xi32>
    %c0_i32_59 = arith.constant 0 : i32
    %118 = vector.broadcast %c0_i32_59 : i32 to vector<4x256xi32>
    %119 = arith.addi %9, %118 : vector<4x256xi32>
    %c16_i32_60 = arith.constant 16 : i32
    %120 = vector.broadcast %c16_i32_60 : i32 to vector<4x256xi32>
    %121 = arith.cmpi slt, %119, %120 : vector<4x256xi32>
    %122 = arith.andi %117, %121 : vector<4x256xi1>
    %c0_i32_61 = arith.constant 0 : i32
    %123 = vector.broadcast %c0_i32_61 : i32 to vector<4x256xi32>
    %124 = arith.addi %11, %123 : vector<4x256xi32>
    %c0_i32_62 = arith.constant 0 : i32
    %125 = vector.broadcast %c0_i32_62 : i32 to vector<4x256xi32>
    %126 = arith.cmpi sge, %124, %125 : vector<4x256xi32>
    %127 = arith.andi %122, %126 : vector<4x256xi1>
    %c0_i32_63 = arith.constant 0 : i32
    %128 = vector.broadcast %c0_i32_63 : i32 to vector<4x256xi32>
    %129 = arith.addi %11, %128 : vector<4x256xi32>
    %c16_i32_64 = arith.constant 16 : i32
    %130 = vector.broadcast %c16_i32_64 : i32 to vector<4x256xi32>
    %131 = arith.cmpi slt, %129, %130 : vector<4x256xi32>
    %132 = arith.andi %127, %131 : vector<4x256xi1>
    %cst_65 = arith.constant 0.000000e+00 : f32
    %133 = vector.broadcast %cst_65 : f32 to vector<4x256xf32>
    %134 = arith.select %132, %113, %133 : vector<4x256xi1>, vector<4x256xf32>
    %c0_66 = arith.constant 0 : index
    %c16_67 = arith.constant 16 : index
    %135 = vector.load %arg3[%c0_66, %c16_67] : memref<4x36xf32, #tpu.memory_space<vmem>>, vector<4x4xf32>
    %cst_68 = arith.constant dense<0.000000e+00> : vector<4x256xf32>
    %136 = tpu.matmul %135, %134, %cst_68 {dimension_numbers = #tpu.dot_dimension_numbers<[1], [0], [0], [1], [0, 0, 1, 1], [], []>} : vector<4x4xf32>, vector<4x256xf32>, vector<4x256xf32> -> vector<4x256xf32>
    %137 = arith.addf %112, %136 : vector<4x256xf32>
    %c0_69 = arith.constant 0 : index
    %c18 = arith.constant 18 : index
    %138 = vector.load %arg19[%c0_69, %c18] : memref<4x290xf32, #tpu.memory_space<vmem>>, vector<4x256xf32>
    %c0_i32_70 = arith.constant 0 : i32
    %139 = vector.broadcast %c0_i32_70 : i32 to vector<4x256xi32>
    %140 = arith.addi %9, %139 : vector<4x256xi32>
    %c0_i32_71 = arith.constant 0 : i32
    %141 = vector.broadcast %c0_i32_71 : i32 to vector<4x256xi32>
    %142 = arith.cmpi sge, %140, %141 : vector<4x256xi32>
    %c0_i32_72 = arith.constant 0 : i32
    %143 = vector.broadcast %c0_i32_72 : i32 to vector<4x256xi32>
    %144 = arith.addi %9, %143 : vector<4x256xi32>
    %c16_i32_73 = arith.constant 16 : i32
    %145 = vector.broadcast %c16_i32_73 : i32 to vector<4x256xi32>
    %146 = arith.cmpi slt, %144, %145 : vector<4x256xi32>
    %147 = arith.andi %142, %146 : vector<4x256xi1>
    %c1_i32_74 = arith.constant 1 : i32
    %148 = vector.broadcast %c1_i32_74 : i32 to vector<4x256xi32>
    %149 = arith.addi %11, %148 : vector<4x256xi32>
    %c0_i32_75 = arith.constant 0 : i32
    %150 = vector.broadcast %c0_i32_75 : i32 to vector<4x256xi32>
    %151 = arith.cmpi sge, %149, %150 : vector<4x256xi32>
    %152 = arith.andi %147, %151 : vector<4x256xi1>
    %c1_i32_76 = arith.constant 1 : i32
    %153 = vector.broadcast %c1_i32_76 : i32 to vector<4x256xi32>
    %154 = arith.addi %11, %153 : vector<4x256xi32>
    %c16_i32_77 = arith.constant 16 : i32
    %155 = vector.broadcast %c16_i32_77 : i32 to vector<4x256xi32>
    %156 = arith.cmpi slt, %154, %155 : vector<4x256xi32>
    %157 = arith.andi %152, %156 : vector<4x256xi1>
    %cst_78 = arith.constant 0.000000e+00 : f32
    %158 = vector.broadcast %cst_78 : f32 to vector<4x256xf32>
    %159 = arith.select %157, %138, %158 : vector<4x256xi1>, vector<4x256xf32>
    %c0_79 = arith.constant 0 : index
    %c20 = arith.constant 20 : index
    %160 = vector.load %arg3[%c0_79, %c20] : memref<4x36xf32, #tpu.memory_space<vmem>>, vector<4x4xf32>
    %cst_80 = arith.constant dense<0.000000e+00> : vector<4x256xf32>
    %161 = tpu.matmul %160, %159, %cst_80 {dimension_numbers = #tpu.dot_dimension_numbers<[1], [0], [0], [1], [0, 0, 1, 1], [], []>} : vector<4x4xf32>, vector<4x256xf32>, vector<4x256xf32> -> vector<4x256xf32>
    %162 = arith.addf %137, %161 : vector<4x256xf32>
    %c0_81 = arith.constant 0 : index
    %c32 = arith.constant 32 : index
    %163 = vector.load %arg19[%c0_81, %c32] : memref<4x290xf32, #tpu.memory_space<vmem>>, vector<4x256xf32>
    %c1_i32_82 = arith.constant 1 : i32
    %164 = vector.broadcast %c1_i32_82 : i32 to vector<4x256xi32>
    %165 = arith.addi %9, %164 : vector<4x256xi32>
    %c0_i32_83 = arith.constant 0 : i32
    %166 = vector.broadcast %c0_i32_83 : i32 to vector<4x256xi32>
    %167 = arith.cmpi sge, %165, %166 : vector<4x256xi32>
    %c1_i32_84 = arith.constant 1 : i32
    %168 = vector.broadcast %c1_i32_84 : i32 to vector<4x256xi32>
    %169 = arith.addi %9, %168 : vector<4x256xi32>
    %c16_i32_85 = arith.constant 16 : i32
    %170 = vector.broadcast %c16_i32_85 : i32 to vector<4x256xi32>
    %171 = arith.cmpi slt, %169, %170 : vector<4x256xi32>
    %172 = arith.andi %167, %171 : vector<4x256xi1>
    %c-1_i32_86 = arith.constant -1 : i32
    %173 = vector.broadcast %c-1_i32_86 : i32 to vector<4x256xi32>
    %174 = arith.addi %11, %173 : vector<4x256xi32>
    %c0_i32_87 = arith.constant 0 : i32
    %175 = vector.broadcast %c0_i32_87 : i32 to vector<4x256xi32>
    %176 = arith.cmpi sge, %174, %175 : vector<4x256xi32>
    %177 = arith.andi %172, %176 : vector<4x256xi1>
    %c-1_i32_88 = arith.constant -1 : i32
    %178 = vector.broadcast %c-1_i32_88 : i32 to vector<4x256xi32>
    %179 = arith.addi %11, %178 : vector<4x256xi32>
    %c16_i32_89 = arith.constant 16 : i32
    %180 = vector.broadcast %c16_i32_89 : i32 to vector<4x256xi32>
    %181 = arith.cmpi slt, %179, %180 : vector<4x256xi32>
    %182 = arith.andi %177, %181 : vector<4x256xi1>
    %cst_90 = arith.constant 0.000000e+00 : f32
    %183 = vector.broadcast %cst_90 : f32 to vector<4x256xf32>
    %184 = arith.select %182, %163, %183 : vector<4x256xi1>, vector<4x256xf32>
    %c0_91 = arith.constant 0 : index
    %c24 = arith.constant 24 : index
    %185 = vector.load %arg3[%c0_91, %c24] : memref<4x36xf32, #tpu.memory_space<vmem>>, vector<4x4xf32>
    %cst_92 = arith.constant dense<0.000000e+00> : vector<4x256xf32>
    %186 = tpu.matmul %185, %184, %cst_92 {dimension_numbers = #tpu.dot_dimension_numbers<[1], [0], [0], [1], [0, 0, 1, 1], [], []>} : vector<4x4xf32>, vector<4x256xf32>, vector<4x256xf32> -> vector<4x256xf32>
    %187 = arith.addf %162, %186 : vector<4x256xf32>
    %c0_93 = arith.constant 0 : index
    %c33 = arith.constant 33 : index
    %188 = vector.load %arg19[%c0_93, %c33] : memref<4x290xf32, #tpu.memory_space<vmem>>, vector<4x256xf32>
    %c1_i32_94 = arith.constant 1 : i32
    %189 = vector.broadcast %c1_i32_94 : i32 to vector<4x256xi32>
    %190 = arith.addi %9, %189 : vector<4x256xi32>
    %c0_i32_95 = arith.constant 0 : i32
    %191 = vector.broadcast %c0_i32_95 : i32 to vector<4x256xi32>
    %192 = arith.cmpi sge, %190, %191 : vector<4x256xi32>
    %c1_i32_96 = arith.constant 1 : i32
    %193 = vector.broadcast %c1_i32_96 : i32 to vector<4x256xi32>
    %194 = arith.addi %9, %193 : vector<4x256xi32>
    %c16_i32_97 = arith.constant 16 : i32
    %195 = vector.broadcast %c16_i32_97 : i32 to vector<4x256xi32>
    %196 = arith.cmpi slt, %194, %195 : vector<4x256xi32>
    %197 = arith.andi %192, %196 : vector<4x256xi1>
    %c0_i32_98 = arith.constant 0 : i32
    %198 = vector.broadcast %c0_i32_98 : i32 to vector<4x256xi32>
    %199 = arith.addi %11, %198 : vector<4x256xi32>
    %c0_i32_99 = arith.constant 0 : i32
    %200 = vector.broadcast %c0_i32_99 : i32 to vector<4x256xi32>
    %201 = arith.cmpi sge, %199, %200 : vector<4x256xi32>
    %202 = arith.andi %197, %201 : vector<4x256xi1>
    %c0_i32_100 = arith.constant 0 : i32
    %203 = vector.broadcast %c0_i32_100 : i32 to vector<4x256xi32>
    %204 = arith.addi %11, %203 : vector<4x256xi32>
    %c16_i32_101 = arith.constant 16 : i32
    %205 = vector.broadcast %c16_i32_101 : i32 to vector<4x256xi32>
    %206 = arith.cmpi slt, %204, %205 : vector<4x256xi32>
    %207 = arith.andi %202, %206 : vector<4x256xi1>
    %cst_102 = arith.constant 0.000000e+00 : f32
    %208 = vector.broadcast %cst_102 : f32 to vector<4x256xf32>
    %209 = arith.select %207, %188, %208 : vector<4x256xi1>, vector<4x256xf32>
    %c0_103 = arith.constant 0 : index
    %c28 = arith.constant 28 : index
    %210 = vector.load %arg3[%c0_103, %c28] : memref<4x36xf32, #tpu.memory_space<vmem>>, vector<4x4xf32>
    %cst_104 = arith.constant dense<0.000000e+00> : vector<4x256xf32>
    %211 = tpu.matmul %210, %209, %cst_104 {dimension_numbers = #tpu.dot_dimension_numbers<[1], [0], [0], [1], [0, 0, 1, 1], [], []>} : vector<4x4xf32>, vector<4x256xf32>, vector<4x256xf32> -> vector<4x256xf32>
    %212 = arith.addf %187, %211 : vector<4x256xf32>
    %c0_105 = arith.constant 0 : index
    %c34 = arith.constant 34 : index
    %213 = vector.load %arg19[%c0_105, %c34] : memref<4x290xf32, #tpu.memory_space<vmem>>, vector<4x256xf32>
    %c1_i32_106 = arith.constant 1 : i32
    %214 = vector.broadcast %c1_i32_106 : i32 to vector<4x256xi32>
    %215 = arith.addi %9, %214 : vector<4x256xi32>
    %c0_i32_107 = arith.constant 0 : i32
    %216 = vector.broadcast %c0_i32_107 : i32 to vector<4x256xi32>
    %217 = arith.cmpi sge, %215, %216 : vector<4x256xi32>
    %c1_i32_108 = arith.constant 1 : i32
    %218 = vector.broadcast %c1_i32_108 : i32 to vector<4x256xi32>
    %219 = arith.addi %9, %218 : vector<4x256xi32>
    %c16_i32_109 = arith.constant 16 : i32
    %220 = vector.broadcast %c16_i32_109 : i32 to vector<4x256xi32>
    %221 = arith.cmpi slt, %219, %220 : vector<4x256xi32>
    %222 = arith.andi %217, %221 : vector<4x256xi1>
    %c1_i32_110 = arith.constant 1 : i32
    %223 = vector.broadcast %c1_i32_110 : i32 to vector<4x256xi32>
    %224 = arith.addi %11, %223 : vector<4x256xi32>
    %c0_i32_111 = arith.constant 0 : i32
    %225 = vector.broadcast %c0_i32_111 : i32 to vector<4x256xi32>
    %226 = arith.cmpi sge, %224, %225 : vector<4x256xi32>
    %227 = arith.andi %222, %226 : vector<4x256xi1>
    %c1_i32_112 = arith.constant 1 : i32
    %228 = vector.broadcast %c1_i32_112 : i32 to vector<4x256xi32>
    %229 = arith.addi %11, %228 : vector<4x256xi32>
    %c16_i32_113 = arith.constant 16 : i32
    %230 = vector.broadcast %c16_i32_113 : i32 to vector<4x256xi32>
    %231 = arith.cmpi slt, %229, %230 : vector<4x256xi32>
    %232 = arith.andi %227, %231 : vector<4x256xi1>
    %cst_114 = arith.constant 0.000000e+00 : f32
    %233 = vector.broadcast %cst_114 : f32 to vector<4x256xf32>
    %234 = arith.select %232, %213, %233 : vector<4x256xi1>, vector<4x256xf32>
    %c0_115 = arith.constant 0 : index
    %c32_116 = arith.constant 32 : index
    %235 = vector.load %arg3[%c0_115, %c32_116] : memref<4x36xf32, #tpu.memory_space<vmem>>, vector<4x4xf32>
    %cst_117 = arith.constant dense<0.000000e+00> : vector<4x256xf32>
    %236 = tpu.matmul %235, %234, %cst_117 {dimension_numbers = #tpu.dot_dimension_numbers<[1], [0], [0], [1], [0, 0, 1, 1], [], []>} : vector<4x4xf32>, vector<4x256xf32>, vector<4x256xf32> -> vector<4x256xf32>
    %237 = arith.addf %212, %236 : vector<4x256xf32>
    %c0_118 = arith.constant 0 : index
    %c0_119 = arith.constant 0 : index
    %238 = vector.load %arg4[%c0_118, %c0_119] : memref<4x1xf32, #tpu.memory_space<vmem>>, vector<4x1xf32>
    %239 = vector.broadcast %238 : vector<4x1xf32> to vector<4x256xf32>
    %240 = arith.addf %237, %239 : vector<4x256xf32>
    %cst_120 = arith.constant 0.000000e+00 : f32
    %241 = vector.broadcast %cst_120 : f32 to vector<4x256xf32>
    %242 = arith.maximumf %240, %241 : vector<4x256xf32>
    %cst_121 = arith.constant 0.000000e+00 : f32
    %243 = vector.broadcast %cst_121 : f32 to vector<4x290xf32>
    %c0_122 = arith.constant 0 : index
    %c0_123 = arith.constant 0 : index
    %244 = vector.load %arg19[%c0_122, %c0_123] : memref<4x290xf32, #tpu.memory_space<vmem>>, vector<4x290xf32>
    tpu.vector_store %arg19[%c0_122, %c0_123], %243 {strides = array<i32>} : memref<4x290xf32, #tpu.memory_space<vmem>>, vector<4x290xf32>,
    %c0_124 = arith.constant 0 : index
    %c17_125 = arith.constant 17 : index
    %245 = vector.load %arg19[%c0_124, %c17_125] : memref<4x290xf32, #tpu.memory_space<vmem>>, vector<4x256xf32>
    tpu.vector_store %arg19[%c0_124, %c17_125], %242 {strides = array<i32>} : memref<4x290xf32, #tpu.memory_space<vmem>>, vector<4x256xf32>,
    %246 = tpu.iota {dimensions = array<i32: 1>} : vector<4x256xi32>
    %c4_i32_126 = arith.constant 4 : i32
    %247 = vector.broadcast %c4_i32_126 : i32 to vector<4x256xi32>
    %248 = arith.shrsi %246, %247 : vector<4x256xi32>
    %c15_i32_127 = arith.constant 15 : i32
    %249 = vector.broadcast %c15_i32_127 : i32 to vector<4x256xi32>
    %250 = arith.andi %246, %249 : vector<4x256xi32>
    %cst_128 = arith.constant 0.000000e+00 : f32
    %251 = vector.broadcast %cst_128 : f32 to vector<4x256xf32>
    %c0_129 = arith.constant 0 : index
    %c0_130 = arith.constant 0 : index
    %252 = vector.load %arg19[%c0_129, %c0_130] : memref<4x290xf32, #tpu.memory_space<vmem>>, vector<4x256xf32>
    %c-1_i32_131 = arith.constant -1 : i32
    %253 = vector.broadcast %c-1_i32_131 : i32 to vector<4x256xi32>
    %254 = arith.addi %248, %253 : vector<4x256xi32>
    %c0_i32_132 = arith.constant 0 : i32
    %255 = vector.broadcast %c0_i32_132 : i32 to vector<4x256xi32>
    %256 = arith.cmpi sge, %254, %255 : vector<4x256xi32>
    %c-1_i32_133 = arith.constant -1 : i32
    %257 = vector.broadcast %c-1_i32_133 : i32 to vector<4x256xi32>
    %258 = arith.addi %248, %257 : vector<4x256xi32>
    %c16_i32_134 = arith.constant 16 : i32
    %259 = vector.broadcast %c16_i32_134 : i32 to vector<4x256xi32>
    %260 = arith.cmpi slt, %258, %259 : vector<4x256xi32>
    %261 = arith.andi %256, %260 : vector<4x256xi1>
    %c-1_i32_135 = arith.constant -1 : i32
    %262 = vector.broadcast %c-1_i32_135 : i32 to vector<4x256xi32>
    %263 = arith.addi %250, %262 : vector<4x256xi32>
    %c0_i32_136 = arith.constant 0 : i32
    %264 = vector.broadcast %c0_i32_136 : i32 to vector<4x256xi32>
    %265 = arith.cmpi sge, %263, %264 : vector<4x256xi32>
    %266 = arith.andi %261, %265 : vector<4x256xi1>
    %c-1_i32_137 = arith.constant -1 : i32
    %267 = vector.broadcast %c-1_i32_137 : i32 to vector<4x256xi32>
    %268 = arith.addi %250, %267 : vector<4x256xi32>
    %c16_i32_138 = arith.constant 16 : i32
    %269 = vector.broadcast %c16_i32_138 : i32 to vector<4x256xi32>
    %270 = arith.cmpi slt, %268, %269 : vector<4x256xi32>
    %271 = arith.andi %266, %270 : vector<4x256xi1>
    %cst_139 = arith.constant 0.000000e+00 : f32
    %272 = vector.broadcast %cst_139 : f32 to vector<4x256xf32>
    %273 = arith.select %271, %252, %272 : vector<4x256xi1>, vector<4x256xf32>
    %c0_140 = arith.constant 0 : index
    %c0_141 = arith.constant 0 : index
    %274 = vector.load %arg5[%c0_140, %c0_141] : memref<4x36xf32, #tpu.memory_space<vmem>>, vector<4x4xf32>
    %cst_142 = arith.constant dense<0.000000e+00> : vector<4x256xf32>
    %275 = tpu.matmul %274, %273, %cst_142 {dimension_numbers = #tpu.dot_dimension_numbers<[1], [0], [0], [1], [0, 0, 1, 1], [], []>} : vector<4x4xf32>, vector<4x256xf32>, vector<4x256xf32> -> vector<4x256xf32>
    %276 = arith.addf %251, %275 : vector<4x256xf32>
    %c0_143 = arith.constant 0 : index
    %c1_144 = arith.constant 1 : index
    %277 = vector.load %arg19[%c0_143, %c1_144] : memref<4x290xf32, #tpu.memory_space<vmem>>, vector<4x256xf32>
    %c-1_i32_145 = arith.constant -1 : i32
    %278 = vector.broadcast %c-1_i32_145 : i32 to vector<4x256xi32>
    %279 = arith.addi %248, %278 : vector<4x256xi32>
    %c0_i32_146 = arith.constant 0 : i32
    %280 = vector.broadcast %c0_i32_146 : i32 to vector<4x256xi32>
    %281 = arith.cmpi sge, %279, %280 : vector<4x256xi32>
    %c-1_i32_147 = arith.constant -1 : i32
    %282 = vector.broadcast %c-1_i32_147 : i32 to vector<4x256xi32>
    %283 = arith.addi %248, %282 : vector<4x256xi32>
    %c16_i32_148 = arith.constant 16 : i32
    %284 = vector.broadcast %c16_i32_148 : i32 to vector<4x256xi32>
    %285 = arith.cmpi slt, %283, %284 : vector<4x256xi32>
    %286 = arith.andi %281, %285 : vector<4x256xi1>
    %c0_i32_149 = arith.constant 0 : i32
    %287 = vector.broadcast %c0_i32_149 : i32 to vector<4x256xi32>
    %288 = arith.addi %250, %287 : vector<4x256xi32>
    %c0_i32_150 = arith.constant 0 : i32
    %289 = vector.broadcast %c0_i32_150 : i32 to vector<4x256xi32>
    %290 = arith.cmpi sge, %288, %289 : vector<4x256xi32>
    %291 = arith.andi %286, %290 : vector<4x256xi1>
    %c0_i32_151 = arith.constant 0 : i32
    %292 = vector.broadcast %c0_i32_151 : i32 to vector<4x256xi32>
    %293 = arith.addi %250, %292 : vector<4x256xi32>
    %c16_i32_152 = arith.constant 16 : i32
    %294 = vector.broadcast %c16_i32_152 : i32 to vector<4x256xi32>
    %295 = arith.cmpi slt, %293, %294 : vector<4x256xi32>
    %296 = arith.andi %291, %295 : vector<4x256xi1>
    %cst_153 = arith.constant 0.000000e+00 : f32
    %297 = vector.broadcast %cst_153 : f32 to vector<4x256xf32>
    %298 = arith.select %296, %277, %297 : vector<4x256xi1>, vector<4x256xf32>
    %c0_154 = arith.constant 0 : index
    %c4_155 = arith.constant 4 : index
    %299 = vector.load %arg5[%c0_154, %c4_155] : memref<4x36xf32, #tpu.memory_space<vmem>>, vector<4x4xf32>
    %cst_156 = arith.constant dense<0.000000e+00> : vector<4x256xf32>
    %300 = tpu.matmul %299, %298, %cst_156 {dimension_numbers = #tpu.dot_dimension_numbers<[1], [0], [0], [1], [0, 0, 1, 1], [], []>} : vector<4x4xf32>, vector<4x256xf32>, vector<4x256xf32> -> vector<4x256xf32>
    %301 = arith.addf %276, %300 : vector<4x256xf32>
    %c0_157 = arith.constant 0 : index
    %c2_158 = arith.constant 2 : index
    %302 = vector.load %arg19[%c0_157, %c2_158] : memref<4x290xf32, #tpu.memory_space<vmem>>, vector<4x256xf32>
    %c-1_i32_159 = arith.constant -1 : i32
    %303 = vector.broadcast %c-1_i32_159 : i32 to vector<4x256xi32>
    %304 = arith.addi %248, %303 : vector<4x256xi32>
    %c0_i32_160 = arith.constant 0 : i32
    %305 = vector.broadcast %c0_i32_160 : i32 to vector<4x256xi32>
    %306 = arith.cmpi sge, %304, %305 : vector<4x256xi32>
    %c-1_i32_161 = arith.constant -1 : i32
    %307 = vector.broadcast %c-1_i32_161 : i32 to vector<4x256xi32>
    %308 = arith.addi %248, %307 : vector<4x256xi32>
    %c16_i32_162 = arith.constant 16 : i32
    %309 = vector.broadcast %c16_i32_162 : i32 to vector<4x256xi32>
    %310 = arith.cmpi slt, %308, %309 : vector<4x256xi32>
    %311 = arith.andi %306, %310 : vector<4x256xi1>
    %c1_i32_163 = arith.constant 1 : i32
    %312 = vector.broadcast %c1_i32_163 : i32 to vector<4x256xi32>
    %313 = arith.addi %250, %312 : vector<4x256xi32>
    %c0_i32_164 = arith.constant 0 : i32
    %314 = vector.broadcast %c0_i32_164 : i32 to vector<4x256xi32>
    %315 = arith.cmpi sge, %313, %314 : vector<4x256xi32>
    %316 = arith.andi %311, %315 : vector<4x256xi1>
    %c1_i32_165 = arith.constant 1 : i32
    %317 = vector.broadcast %c1_i32_165 : i32 to vector<4x256xi32>
    %318 = arith.addi %250, %317 : vector<4x256xi32>
    %c16_i32_166 = arith.constant 16 : i32
    %319 = vector.broadcast %c16_i32_166 : i32 to vector<4x256xi32>
    %320 = arith.cmpi slt, %318, %319 : vector<4x256xi32>
    %321 = arith.andi %316, %320 : vector<4x256xi1>
    %cst_167 = arith.constant 0.000000e+00 : f32
    %322 = vector.broadcast %cst_167 : f32 to vector<4x256xf32>
    %323 = arith.select %321, %302, %322 : vector<4x256xi1>, vector<4x256xf32>
    %c0_168 = arith.constant 0 : index
    %c8_169 = arith.constant 8 : index
    %324 = vector.load %arg5[%c0_168, %c8_169] : memref<4x36xf32, #tpu.memory_space<vmem>>, vector<4x4xf32>
    %cst_170 = arith.constant dense<0.000000e+00> : vector<4x256xf32>
    %325 = tpu.matmul %324, %323, %cst_170 {dimension_numbers = #tpu.dot_dimension_numbers<[1], [0], [0], [1], [0, 0, 1, 1], [], []>} : vector<4x4xf32>, vector<4x256xf32>, vector<4x256xf32> -> vector<4x256xf32>
    %326 = arith.addf %301, %325 : vector<4x256xf32>
    %c0_171 = arith.constant 0 : index
    %c16_172 = arith.constant 16 : index
    %327 = vector.load %arg19[%c0_171, %c16_172] : memref<4x290xf32, #tpu.memory_space<vmem>>, vector<4x256xf32>
    %c0_i32_173 = arith.constant 0 : i32
    %328 = vector.broadcast %c0_i32_173 : i32 to vector<4x256xi32>
    %329 = arith.addi %248, %328 : vector<4x256xi32>
    %c0_i32_174 = arith.constant 0 : i32
    %330 = vector.broadcast %c0_i32_174 : i32 to vector<4x256xi32>
    %331 = arith.cmpi sge, %329, %330 : vector<4x256xi32>
    %c0_i32_175 = arith.constant 0 : i32
    %332 = vector.broadcast %c0_i32_175 : i32 to vector<4x256xi32>
    %333 = arith.addi %248, %332 : vector<4x256xi32>
    %c16_i32_176 = arith.constant 16 : i32
    %334 = vector.broadcast %c16_i32_176 : i32 to vector<4x256xi32>
    %335 = arith.cmpi slt, %333, %334 : vector<4x256xi32>
    %336 = arith.andi %331, %335 : vector<4x256xi1>
    %c-1_i32_177 = arith.constant -1 : i32
    %337 = vector.broadcast %c-1_i32_177 : i32 to vector<4x256xi32>
    %338 = arith.addi %250, %337 : vector<4x256xi32>
    %c0_i32_178 = arith.constant 0 : i32
    %339 = vector.broadcast %c0_i32_178 : i32 to vector<4x256xi32>
    %340 = arith.cmpi sge, %338, %339 : vector<4x256xi32>
    %341 = arith.andi %336, %340 : vector<4x256xi1>
    %c-1_i32_179 = arith.constant -1 : i32
    %342 = vector.broadcast %c-1_i32_179 : i32 to vector<4x256xi32>
    %343 = arith.addi %250, %342 : vector<4x256xi32>
    %c16_i32_180 = arith.constant 16 : i32
    %344 = vector.broadcast %c16_i32_180 : i32 to vector<4x256xi32>
    %345 = arith.cmpi slt, %343, %344 : vector<4x256xi32>
    %346 = arith.andi %341, %345 : vector<4x256xi1>
    %cst_181 = arith.constant 0.000000e+00 : f32
    %347 = vector.broadcast %cst_181 : f32 to vector<4x256xf32>
    %348 = arith.select %346, %327, %347 : vector<4x256xi1>, vector<4x256xf32>
    %c0_182 = arith.constant 0 : index
    %c12_183 = arith.constant 12 : index
    %349 = vector.load %arg5[%c0_182, %c12_183] : memref<4x36xf32, #tpu.memory_space<vmem>>, vector<4x4xf32>
    %cst_184 = arith.constant dense<0.000000e+00> : vector<4x256xf32>
    %350 = tpu.matmul %349, %348, %cst_184 {dimension_numbers = #tpu.dot_dimension_numbers<[1], [0], [0], [1], [0, 0, 1, 1], [], []>} : vector<4x4xf32>, vector<4x256xf32>, vector<4x256xf32> -> vector<4x256xf32>
    %351 = arith.addf %326, %350 : vector<4x256xf32>
    %c0_185 = arith.constant 0 : index
    %c17_186 = arith.constant 17 : index
    %352 = vector.load %arg19[%c0_185, %c17_186] : memref<4x290xf32, #tpu.memory_space<vmem>>, vector<4x256xf32>
    %c0_i32_187 = arith.constant 0 : i32
    %353 = vector.broadcast %c0_i32_187 : i32 to vector<4x256xi32>
    %354 = arith.addi %248, %353 : vector<4x256xi32>
    %c0_i32_188 = arith.constant 0 : i32
    %355 = vector.broadcast %c0_i32_188 : i32 to vector<4x256xi32>
    %356 = arith.cmpi sge, %354, %355 : vector<4x256xi32>
    %c0_i32_189 = arith.constant 0 : i32
    %357 = vector.broadcast %c0_i32_189 : i32 to vector<4x256xi32>
    %358 = arith.addi %248, %357 : vector<4x256xi32>
    %c16_i32_190 = arith.constant 16 : i32
    %359 = vector.broadcast %c16_i32_190 : i32 to vector<4x256xi32>
    %360 = arith.cmpi slt, %358, %359 : vector<4x256xi32>
    %361 = arith.andi %356, %360 : vector<4x256xi1>
    %c0_i32_191 = arith.constant 0 : i32
    %362 = vector.broadcast %c0_i32_191 : i32 to vector<4x256xi32>
    %363 = arith.addi %250, %362 : vector<4x256xi32>
    %c0_i32_192 = arith.constant 0 : i32
    %364 = vector.broadcast %c0_i32_192 : i32 to vector<4x256xi32>
    %365 = arith.cmpi sge, %363, %364 : vector<4x256xi32>
    %366 = arith.andi %361, %365 : vector<4x256xi1>
    %c0_i32_193 = arith.constant 0 : i32
    %367 = vector.broadcast %c0_i32_193 : i32 to vector<4x256xi32>
    %368 = arith.addi %250, %367 : vector<4x256xi32>
    %c16_i32_194 = arith.constant 16 : i32
    %369 = vector.broadcast %c16_i32_194 : i32 to vector<4x256xi32>
    %370 = arith.cmpi slt, %368, %369 : vector<4x256xi32>
    %371 = arith.andi %366, %370 : vector<4x256xi1>
    %cst_195 = arith.constant 0.000000e+00 : f32
    %372 = vector.broadcast %cst_195 : f32 to vector<4x256xf32>
    %373 = arith.select %371, %352, %372 : vector<4x256xi1>, vector<4x256xf32>
    %c0_196 = arith.constant 0 : index
    %c16_197 = arith.constant 16 : index
    %374 = vector.load %arg5[%c0_196, %c16_197] : memref<4x36xf32, #tpu.memory_space<vmem>>, vector<4x4xf32>
    %cst_198 = arith.constant dense<0.000000e+00> : vector<4x256xf32>
    %375 = tpu.matmul %374, %373, %cst_198 {dimension_numbers = #tpu.dot_dimension_numbers<[1], [0], [0], [1], [0, 0, 1, 1], [], []>} : vector<4x4xf32>, vector<4x256xf32>, vector<4x256xf32> -> vector<4x256xf32>
    %376 = arith.addf %351, %375 : vector<4x256xf32>
    %c0_199 = arith.constant 0 : index
    %c18_200 = arith.constant 18 : index
    %377 = vector.load %arg19[%c0_199, %c18_200] : memref<4x290xf32, #tpu.memory_space<vmem>>, vector<4x256xf32>
    %c0_i32_201 = arith.constant 0 : i32
    %378 = vector.broadcast %c0_i32_201 : i32 to vector<4x256xi32>
    %379 = arith.addi %248, %378 : vector<4x256xi32>
    %c0_i32_202 = arith.constant 0 : i32
    %380 = vector.broadcast %c0_i32_202 : i32 to vector<4x256xi32>
    %381 = arith.cmpi sge, %379, %380 : vector<4x256xi32>
    %c0_i32_203 = arith.constant 0 : i32
    %382 = vector.broadcast %c0_i32_203 : i32 to vector<4x256xi32>
    %383 = arith.addi %248, %382 : vector<4x256xi32>
    %c16_i32_204 = arith.constant 16 : i32
    %384 = vector.broadcast %c16_i32_204 : i32 to vector<4x256xi32>
    %385 = arith.cmpi slt, %383, %384 : vector<4x256xi32>
    %386 = arith.andi %381, %385 : vector<4x256xi1>
    %c1_i32_205 = arith.constant 1 : i32
    %387 = vector.broadcast %c1_i32_205 : i32 to vector<4x256xi32>
    %388 = arith.addi %250, %387 : vector<4x256xi32>
    %c0_i32_206 = arith.constant 0 : i32
    %389 = vector.broadcast %c0_i32_206 : i32 to vector<4x256xi32>
    %390 = arith.cmpi sge, %388, %389 : vector<4x256xi32>
    %391 = arith.andi %386, %390 : vector<4x256xi1>
    %c1_i32_207 = arith.constant 1 : i32
    %392 = vector.broadcast %c1_i32_207 : i32 to vector<4x256xi32>
    %393 = arith.addi %250, %392 : vector<4x256xi32>
    %c16_i32_208 = arith.constant 16 : i32
    %394 = vector.broadcast %c16_i32_208 : i32 to vector<4x256xi32>
    %395 = arith.cmpi slt, %393, %394 : vector<4x256xi32>
    %396 = arith.andi %391, %395 : vector<4x256xi1>
    %cst_209 = arith.constant 0.000000e+00 : f32
    %397 = vector.broadcast %cst_209 : f32 to vector<4x256xf32>
    %398 = arith.select %396, %377, %397 : vector<4x256xi1>, vector<4x256xf32>
    %c0_210 = arith.constant 0 : index
    %c20_211 = arith.constant 20 : index
    %399 = vector.load %arg5[%c0_210, %c20_211] : memref<4x36xf32, #tpu.memory_space<vmem>>, vector<4x4xf32>
    %cst_212 = arith.constant dense<0.000000e+00> : vector<4x256xf32>
    %400 = tpu.matmul %399, %398, %cst_212 {dimension_numbers = #tpu.dot_dimension_numbers<[1], [0], [0], [1], [0, 0, 1, 1], [], []>} : vector<4x4xf32>, vector<4x256xf32>, vector<4x256xf32> -> vector<4x256xf32>
    %401 = arith.addf %376, %400 : vector<4x256xf32>
    %c0_213 = arith.constant 0 : index
    %c32_214 = arith.constant 32 : index
    %402 = vector.load %arg19[%c0_213, %c32_214] : memref<4x290xf32, #tpu.memory_space<vmem>>, vector<4x256xf32>
    %c1_i32_215 = arith.constant 1 : i32
    %403 = vector.broadcast %c1_i32_215 : i32 to vector<4x256xi32>
    %404 = arith.addi %248, %403 : vector<4x256xi32>
    %c0_i32_216 = arith.constant 0 : i32
    %405 = vector.broadcast %c0_i32_216 : i32 to vector<4x256xi32>
    %406 = arith.cmpi sge, %404, %405 : vector<4x256xi32>
    %c1_i32_217 = arith.constant 1 : i32
    %407 = vector.broadcast %c1_i32_217 : i32 to vector<4x256xi32>
    %408 = arith.addi %248, %407 : vector<4x256xi32>
    %c16_i32_218 = arith.constant 16 : i32
    %409 = vector.broadcast %c16_i32_218 : i32 to vector<4x256xi32>
    %410 = arith.cmpi slt, %408, %409 : vector<4x256xi32>
    %411 = arith.andi %406, %410 : vector<4x256xi1>
    %c-1_i32_219 = arith.constant -1 : i32
    %412 = vector.broadcast %c-1_i32_219 : i32 to vector<4x256xi32>
    %413 = arith.addi %250, %412 : vector<4x256xi32>
    %c0_i32_220 = arith.constant 0 : i32
    %414 = vector.broadcast %c0_i32_220 : i32 to vector<4x256xi32>
    %415 = arith.cmpi sge, %413, %414 : vector<4x256xi32>
    %416 = arith.andi %411, %415 : vector<4x256xi1>
    %c-1_i32_221 = arith.constant -1 : i32
    %417 = vector.broadcast %c-1_i32_221 : i32 to vector<4x256xi32>
    %418 = arith.addi %250, %417 : vector<4x256xi32>
    %c16_i32_222 = arith.constant 16 : i32
    %419 = vector.broadcast %c16_i32_222 : i32 to vector<4x256xi32>
    %420 = arith.cmpi slt, %418, %419 : vector<4x256xi32>
    %421 = arith.andi %416, %420 : vector<4x256xi1>
    %cst_223 = arith.constant 0.000000e+00 : f32
    %422 = vector.broadcast %cst_223 : f32 to vector<4x256xf32>
    %423 = arith.select %421, %402, %422 : vector<4x256xi1>, vector<4x256xf32>
    %c0_224 = arith.constant 0 : index
    %c24_225 = arith.constant 24 : index
    %424 = vector.load %arg5[%c0_224, %c24_225] : memref<4x36xf32, #tpu.memory_space<vmem>>, vector<4x4xf32>
    %cst_226 = arith.constant dense<0.000000e+00> : vector<4x256xf32>
    %425 = tpu.matmul %424, %423, %cst_226 {dimension_numbers = #tpu.dot_dimension_numbers<[1], [0], [0], [1], [0, 0, 1, 1], [], []>} : vector<4x4xf32>, vector<4x256xf32>, vector<4x256xf32> -> vector<4x256xf32>
    %426 = arith.addf %401, %425 : vector<4x256xf32>
    %c0_227 = arith.constant 0 : index
    %c33_228 = arith.constant 33 : index
    %427 = vector.load %arg19[%c0_227, %c33_228] : memref<4x290xf32, #tpu.memory_space<vmem>>, vector<4x256xf32>
    %c1_i32_229 = arith.constant 1 : i32
    %428 = vector.broadcast %c1_i32_229 : i32 to vector<4x256xi32>
    %429 = arith.addi %248, %428 : vector<4x256xi32>
    %c0_i32_230 = arith.constant 0 : i32
    %430 = vector.broadcast %c0_i32_230 : i32 to vector<4x256xi32>
    %431 = arith.cmpi sge, %429, %430 : vector<4x256xi32>
    %c1_i32_231 = arith.constant 1 : i32
    %432 = vector.broadcast %c1_i32_231 : i32 to vector<4x256xi32>
    %433 = arith.addi %248, %432 : vector<4x256xi32>
    %c16_i32_232 = arith.constant 16 : i32
    %434 = vector.broadcast %c16_i32_232 : i32 to vector<4x256xi32>
    %435 = arith.cmpi slt, %433, %434 : vector<4x256xi32>
    %436 = arith.andi %431, %435 : vector<4x256xi1>
    %c0_i32_233 = arith.constant 0 : i32
    %437 = vector.broadcast %c0_i32_233 : i32 to vector<4x256xi32>
    %438 = arith.addi %250, %437 : vector<4x256xi32>
    %c0_i32_234 = arith.constant 0 : i32
    %439 = vector.broadcast %c0_i32_234 : i32 to vector<4x256xi32>
    %440 = arith.cmpi sge, %438, %439 : vector<4x256xi32>
    %441 = arith.andi %436, %440 : vector<4x256xi1>
    %c0_i32_235 = arith.constant 0 : i32
    %442 = vector.broadcast %c0_i32_235 : i32 to vector<4x256xi32>
    %443 = arith.addi %250, %442 : vector<4x256xi32>
    %c16_i32_236 = arith.constant 16 : i32
    %444 = vector.broadcast %c16_i32_236 : i32 to vector<4x256xi32>
    %445 = arith.cmpi slt, %443, %444 : vector<4x256xi32>
    %446 = arith.andi %441, %445 : vector<4x256xi1>
    %cst_237 = arith.constant 0.000000e+00 : f32
    %447 = vector.broadcast %cst_237 : f32 to vector<4x256xf32>
    %448 = arith.select %446, %427, %447 : vector<4x256xi1>, vector<4x256xf32>
    %c0_238 = arith.constant 0 : index
    %c28_239 = arith.constant 28 : index
    %449 = vector.load %arg5[%c0_238, %c28_239] : memref<4x36xf32, #tpu.memory_space<vmem>>, vector<4x4xf32>
    %cst_240 = arith.constant dense<0.000000e+00> : vector<4x256xf32>
    %450 = tpu.matmul %449, %448, %cst_240 {dimension_numbers = #tpu.dot_dimension_numbers<[1], [0], [0], [1], [0, 0, 1, 1], [], []>} : vector<4x4xf32>, vector<4x256xf32>, vector<4x256xf32> -> vector<4x256xf32>
    %451 = arith.addf %426, %450 : vector<4x256xf32>
    %c0_241 = arith.constant 0 : index
    %c34_242 = arith.constant 34 : index
    %452 = vector.load %arg19[%c0_241, %c34_242] : memref<4x290xf32, #tpu.memory_space<vmem>>, vector<4x256xf32>
    %c1_i32_243 = arith.constant 1 : i32
    %453 = vector.broadcast %c1_i32_243 : i32 to vector<4x256xi32>
    %454 = arith.addi %248, %453 : vector<4x256xi32>
    %c0_i32_244 = arith.constant 0 : i32
    %455 = vector.broadcast %c0_i32_244 : i32 to vector<4x256xi32>
    %456 = arith.cmpi sge, %454, %455 : vector<4x256xi32>
    %c1_i32_245 = arith.constant 1 : i32
    %457 = vector.broadcast %c1_i32_245 : i32 to vector<4x256xi32>
    %458 = arith.addi %248, %457 : vector<4x256xi32>
    %c16_i32_246 = arith.constant 16 : i32
    %459 = vector.broadcast %c16_i32_246 : i32 to vector<4x256xi32>
    %460 = arith.cmpi slt, %458, %459 : vector<4x256xi32>
    %461 = arith.andi %456, %460 : vector<4x256xi1>
    %c1_i32_247 = arith.constant 1 : i32
    %462 = vector.broadcast %c1_i32_247 : i32 to vector<4x256xi32>
    %463 = arith.addi %250, %462 : vector<4x256xi32>
    %c0_i32_248 = arith.constant 0 : i32
    %464 = vector.broadcast %c0_i32_248 : i32 to vector<4x256xi32>
    %465 = arith.cmpi sge, %463, %464 : vector<4x256xi32>
    %466 = arith.andi %461, %465 : vector<4x256xi1>
    %c1_i32_249 = arith.constant 1 : i32
    %467 = vector.broadcast %c1_i32_249 : i32 to vector<4x256xi32>
    %468 = arith.addi %250, %467 : vector<4x256xi32>
    %c16_i32_250 = arith.constant 16 : i32
    %469 = vector.broadcast %c16_i32_250 : i32 to vector<4x256xi32>
    %470 = arith.cmpi slt, %468, %469 : vector<4x256xi32>
    %471 = arith.andi %466, %470 : vector<4x256xi1>
    %cst_251 = arith.constant 0.000000e+00 : f32
    %472 = vector.broadcast %cst_251 : f32 to vector<4x256xf32>
    %473 = arith.select %471, %452, %472 : vector<4x256xi1>, vector<4x256xf32>
    %c0_252 = arith.constant 0 : index
    %c32_253 = arith.constant 32 : index
    %474 = vector.load %arg5[%c0_252, %c32_253] : memref<4x36xf32, #tpu.memory_space<vmem>>, vector<4x4xf32>
    %cst_254 = arith.constant dense<0.000000e+00> : vector<4x256xf32>
    %475 = tpu.matmul %474, %473, %cst_254 {dimension_numbers = #tpu.dot_dimension_numbers<[1], [0], [0], [1], [0, 0, 1, 1], [], []>} : vector<4x4xf32>, vector<4x256xf32>, vector<4x256xf32> -> vector<4x256xf32>
    %476 = arith.addf %451, %475 : vector<4x256xf32>
    %c0_255 = arith.constant 0 : index
    %c0_256 = arith.constant 0 : index
    %477 = vector.load %arg6[%c0_255, %c0_256] : memref<4x1xf32, #tpu.memory_space<vmem>>, vector<4x1xf32>
    %478 = vector.broadcast %477 : vector<4x1xf32> to vector<4x256xf32>
    %479 = arith.addf %476, %478 : vector<4x256xf32>
    %480 = arith.addf %479, %1 : vector<4x256xf32>
    %cst_257 = arith.constant 0.000000e+00 : f32
    %481 = vector.broadcast %cst_257 : f32 to vector<4x256xf32>
    %482 = arith.maximumf %480, %481 : vector<4x256xf32>
    %cst_258 = arith.constant 0.000000e+00 : f32
    %483 = vector.broadcast %cst_258 : f32 to vector<8x82xf32>
    %c0_259 = arith.constant 0 : index
    %c0_260 = arith.constant 0 : index
    %484 = vector.load %arg20[%c0_259, %c0_260] : memref<8x82xf32, #tpu.memory_space<vmem>>, vector<8x82xf32>
    tpu.vector_store %arg20[%c0_259, %c0_260], %483 {strides = array<i32>} : memref<8x82xf32, #tpu.memory_space<vmem>>, vector<8x82xf32>,
    %c0_261 = arith.constant 0 : index
    %c9 = arith.constant 9 : index
    %485 = vector.load %arg20[%c0_261, %c9] : memref<8x82xf32, #tpu.memory_space<vmem>>, vector<8x64xf32>
    tpu.vector_store %arg20[%c0_261, %c9], %3 {strides = array<i32>} : memref<8x82xf32, #tpu.memory_space<vmem>>, vector<8x64xf32>,
    %486 = tpu.iota {dimensions = array<i32: 1>} : vector<8x64xi32>
    %c3_i32 = arith.constant 3 : i32
    %487 = vector.broadcast %c3_i32 : i32 to vector<8x64xi32>
    %488 = arith.shrsi %486, %487 : vector<8x64xi32>
    %c7_i32 = arith.constant 7 : i32
    %489 = vector.broadcast %c7_i32 : i32 to vector<8x64xi32>
    %490 = arith.andi %486, %489 : vector<8x64xi32>
    %cst_262 = arith.constant 0.000000e+00 : f32
    %491 = vector.broadcast %cst_262 : f32 to vector<8x64xf32>
    %c0_263 = arith.constant 0 : index
    %c0_264 = arith.constant 0 : index
    %492 = vector.load %arg20[%c0_263, %c0_264] : memref<8x82xf32, #tpu.memory_space<vmem>>, vector<8x64xf32>
    %c-1_i32_265 = arith.constant -1 : i32
    %493 = vector.broadcast %c-1_i32_265 : i32 to vector<8x64xi32>
    %494 = arith.addi %488, %493 : vector<8x64xi32>
    %c0_i32_266 = arith.constant 0 : i32
    %495 = vector.broadcast %c0_i32_266 : i32 to vector<8x64xi32>
    %496 = arith.cmpi sge, %494, %495 : vector<8x64xi32>
    %c-1_i32_267 = arith.constant -1 : i32
    %497 = vector.broadcast %c-1_i32_267 : i32 to vector<8x64xi32>
    %498 = arith.addi %488, %497 : vector<8x64xi32>
    %c8_i32 = arith.constant 8 : i32
    %499 = vector.broadcast %c8_i32 : i32 to vector<8x64xi32>
    %500 = arith.cmpi slt, %498, %499 : vector<8x64xi32>
    %501 = arith.andi %496, %500 : vector<8x64xi1>
    %c-1_i32_268 = arith.constant -1 : i32
    %502 = vector.broadcast %c-1_i32_268 : i32 to vector<8x64xi32>
    %503 = arith.addi %490, %502 : vector<8x64xi32>
    %c0_i32_269 = arith.constant 0 : i32
    %504 = vector.broadcast %c0_i32_269 : i32 to vector<8x64xi32>
    %505 = arith.cmpi sge, %503, %504 : vector<8x64xi32>
    %506 = arith.andi %501, %505 : vector<8x64xi1>
    %c-1_i32_270 = arith.constant -1 : i32
    %507 = vector.broadcast %c-1_i32_270 : i32 to vector<8x64xi32>
    %508 = arith.addi %490, %507 : vector<8x64xi32>
    %c8_i32_271 = arith.constant 8 : i32
    %509 = vector.broadcast %c8_i32_271 : i32 to vector<8x64xi32>
    %510 = arith.cmpi slt, %508, %509 : vector<8x64xi32>
    %511 = arith.andi %506, %510 : vector<8x64xi1>
    %cst_272 = arith.constant 0.000000e+00 : f32
    %512 = vector.broadcast %cst_272 : f32 to vector<8x64xf32>
    %513 = arith.select %511, %492, %512 : vector<8x64xi1>, vector<8x64xf32>
    %c0_273 = arith.constant 0 : index
    %c0_274 = arith.constant 0 : index
    %514 = vector.load %arg7[%c0_273, %c0_274] : memref<8x72xf32, #tpu.memory_space<vmem>>, vector<8x8xf32>
    %cst_275 = arith.constant dense<0.000000e+00> : vector<8x64xf32>
    %515 = tpu.matmul %514, %513, %cst_275 {dimension_numbers = #tpu.dot_dimension_numbers<[1], [0], [0], [1], [0, 0, 1, 1], [], []>} : vector<8x8xf32>, vector<8x64xf32>, vector<8x64xf32> -> vector<8x64xf32>
    %516 = arith.addf %491, %515 : vector<8x64xf32>
    %c0_276 = arith.constant 0 : index
    %c1_277 = arith.constant 1 : index
    %517 = vector.load %arg20[%c0_276, %c1_277] : memref<8x82xf32, #tpu.memory_space<vmem>>, vector<8x64xf32>
    %c-1_i32_278 = arith.constant -1 : i32
    %518 = vector.broadcast %c-1_i32_278 : i32 to vector<8x64xi32>
    %519 = arith.addi %488, %518 : vector<8x64xi32>
    %c0_i32_279 = arith.constant 0 : i32
    %520 = vector.broadcast %c0_i32_279 : i32 to vector<8x64xi32>
    %521 = arith.cmpi sge, %519, %520 : vector<8x64xi32>
    %c-1_i32_280 = arith.constant -1 : i32
    %522 = vector.broadcast %c-1_i32_280 : i32 to vector<8x64xi32>
    %523 = arith.addi %488, %522 : vector<8x64xi32>
    %c8_i32_281 = arith.constant 8 : i32
    %524 = vector.broadcast %c8_i32_281 : i32 to vector<8x64xi32>
    %525 = arith.cmpi slt, %523, %524 : vector<8x64xi32>
    %526 = arith.andi %521, %525 : vector<8x64xi1>
    %c0_i32_282 = arith.constant 0 : i32
    %527 = vector.broadcast %c0_i32_282 : i32 to vector<8x64xi32>
    %528 = arith.addi %490, %527 : vector<8x64xi32>
    %c0_i32_283 = arith.constant 0 : i32
    %529 = vector.broadcast %c0_i32_283 : i32 to vector<8x64xi32>
    %530 = arith.cmpi sge, %528, %529 : vector<8x64xi32>
    %531 = arith.andi %526, %530 : vector<8x64xi1>
    %c0_i32_284 = arith.constant 0 : i32
    %532 = vector.broadcast %c0_i32_284 : i32 to vector<8x64xi32>
    %533 = arith.addi %490, %532 : vector<8x64xi32>
    %c8_i32_285 = arith.constant 8 : i32
    %534 = vector.broadcast %c8_i32_285 : i32 to vector<8x64xi32>
    %535 = arith.cmpi slt, %533, %534 : vector<8x64xi32>
    %536 = arith.andi %531, %535 : vector<8x64xi1>
    %cst_286 = arith.constant 0.000000e+00 : f32
    %537 = vector.broadcast %cst_286 : f32 to vector<8x64xf32>
    %538 = arith.select %536, %517, %537 : vector<8x64xi1>, vector<8x64xf32>
    %c0_287 = arith.constant 0 : index
    %c8_288 = arith.constant 8 : index
    %539 = vector.load %arg7[%c0_287, %c8_288] : memref<8x72xf32, #tpu.memory_space<vmem>>, vector<8x8xf32>
    %cst_289 = arith.constant dense<0.000000e+00> : vector<8x64xf32>
    %540 = tpu.matmul %539, %538, %cst_289 {dimension_numbers = #tpu.dot_dimension_numbers<[1], [0], [0], [1], [0, 0, 1, 1], [], []>} : vector<8x8xf32>, vector<8x64xf32>, vector<8x64xf32> -> vector<8x64xf32>
    %541 = arith.addf %516, %540 : vector<8x64xf32>
    %c0_290 = arith.constant 0 : index
    %c2_291 = arith.constant 2 : index
    %542 = vector.load %arg20[%c0_290, %c2_291] : memref<8x82xf32, #tpu.memory_space<vmem>>, vector<8x64xf32>
    %c-1_i32_292 = arith.constant -1 : i32
    %543 = vector.broadcast %c-1_i32_292 : i32 to vector<8x64xi32>
    %544 = arith.addi %488, %543 : vector<8x64xi32>
    %c0_i32_293 = arith.constant 0 : i32
    %545 = vector.broadcast %c0_i32_293 : i32 to vector<8x64xi32>
    %546 = arith.cmpi sge, %544, %545 : vector<8x64xi32>
    %c-1_i32_294 = arith.constant -1 : i32
    %547 = vector.broadcast %c-1_i32_294 : i32 to vector<8x64xi32>
    %548 = arith.addi %488, %547 : vector<8x64xi32>
    %c8_i32_295 = arith.constant 8 : i32
    %549 = vector.broadcast %c8_i32_295 : i32 to vector<8x64xi32>
    %550 = arith.cmpi slt, %548, %549 : vector<8x64xi32>
    %551 = arith.andi %546, %550 : vector<8x64xi1>
    %c1_i32_296 = arith.constant 1 : i32
    %552 = vector.broadcast %c1_i32_296 : i32 to vector<8x64xi32>
    %553 = arith.addi %490, %552 : vector<8x64xi32>
    %c0_i32_297 = arith.constant 0 : i32
    %554 = vector.broadcast %c0_i32_297 : i32 to vector<8x64xi32>
    %555 = arith.cmpi sge, %553, %554 : vector<8x64xi32>
    %556 = arith.andi %551, %555 : vector<8x64xi1>
    %c1_i32_298 = arith.constant 1 : i32
    %557 = vector.broadcast %c1_i32_298 : i32 to vector<8x64xi32>
    %558 = arith.addi %490, %557 : vector<8x64xi32>
    %c8_i32_299 = arith.constant 8 : i32
    %559 = vector.broadcast %c8_i32_299 : i32 to vector<8x64xi32>
    %560 = arith.cmpi slt, %558, %559 : vector<8x64xi32>
    %561 = arith.andi %556, %560 : vector<8x64xi1>
    %cst_300 = arith.constant 0.000000e+00 : f32
    %562 = vector.broadcast %cst_300 : f32 to vector<8x64xf32>
    %563 = arith.select %561, %542, %562 : vector<8x64xi1>, vector<8x64xf32>
    %c0_301 = arith.constant 0 : index
    %c16_302 = arith.constant 16 : index
    %564 = vector.load %arg7[%c0_301, %c16_302] : memref<8x72xf32, #tpu.memory_space<vmem>>, vector<8x8xf32>
    %cst_303 = arith.constant dense<0.000000e+00> : vector<8x64xf32>
    %565 = tpu.matmul %564, %563, %cst_303 {dimension_numbers = #tpu.dot_dimension_numbers<[1], [0], [0], [1], [0, 0, 1, 1], [], []>} : vector<8x8xf32>, vector<8x64xf32>, vector<8x64xf32> -> vector<8x64xf32>
    %566 = arith.addf %541, %565 : vector<8x64xf32>
    %c0_304 = arith.constant 0 : index
    %c8_305 = arith.constant 8 : index
    %567 = vector.load %arg20[%c0_304, %c8_305] : memref<8x82xf32, #tpu.memory_space<vmem>>, vector<8x64xf32>
    %c0_i32_306 = arith.constant 0 : i32
    %568 = vector.broadcast %c0_i32_306 : i32 to vector<8x64xi32>
    %569 = arith.addi %488, %568 : vector<8x64xi32>
    %c0_i32_307 = arith.constant 0 : i32
    %570 = vector.broadcast %c0_i32_307 : i32 to vector<8x64xi32>
    %571 = arith.cmpi sge, %569, %570 : vector<8x64xi32>
    %c0_i32_308 = arith.constant 0 : i32
    %572 = vector.broadcast %c0_i32_308 : i32 to vector<8x64xi32>
    %573 = arith.addi %488, %572 : vector<8x64xi32>
    %c8_i32_309 = arith.constant 8 : i32
    %574 = vector.broadcast %c8_i32_309 : i32 to vector<8x64xi32>
    %575 = arith.cmpi slt, %573, %574 : vector<8x64xi32>
    %576 = arith.andi %571, %575 : vector<8x64xi1>
    %c-1_i32_310 = arith.constant -1 : i32
    %577 = vector.broadcast %c-1_i32_310 : i32 to vector<8x64xi32>
    %578 = arith.addi %490, %577 : vector<8x64xi32>
    %c0_i32_311 = arith.constant 0 : i32
    %579 = vector.broadcast %c0_i32_311 : i32 to vector<8x64xi32>
    %580 = arith.cmpi sge, %578, %579 : vector<8x64xi32>
    %581 = arith.andi %576, %580 : vector<8x64xi1>
    %c-1_i32_312 = arith.constant -1 : i32
    %582 = vector.broadcast %c-1_i32_312 : i32 to vector<8x64xi32>
    %583 = arith.addi %490, %582 : vector<8x64xi32>
    %c8_i32_313 = arith.constant 8 : i32
    %584 = vector.broadcast %c8_i32_313 : i32 to vector<8x64xi32>
    %585 = arith.cmpi slt, %583, %584 : vector<8x64xi32>
    %586 = arith.andi %581, %585 : vector<8x64xi1>
    %cst_314 = arith.constant 0.000000e+00 : f32
    %587 = vector.broadcast %cst_314 : f32 to vector<8x64xf32>
    %588 = arith.select %586, %567, %587 : vector<8x64xi1>, vector<8x64xf32>
    %c0_315 = arith.constant 0 : index
    %c24_316 = arith.constant 24 : index
    %589 = vector.load %arg7[%c0_315, %c24_316] : memref<8x72xf32, #tpu.memory_space<vmem>>, vector<8x8xf32>
    %cst_317 = arith.constant dense<0.000000e+00> : vector<8x64xf32>
    %590 = tpu.matmul %589, %588, %cst_317 {dimension_numbers = #tpu.dot_dimension_numbers<[1], [0], [0], [1], [0, 0, 1, 1], [], []>} : vector<8x8xf32>, vector<8x64xf32>, vector<8x64xf32> -> vector<8x64xf32>
    %591 = arith.addf %566, %590 : vector<8x64xf32>
    %c0_318 = arith.constant 0 : index
    %c9_319 = arith.constant 9 : index
    %592 = vector.load %arg20[%c0_318, %c9_319] : memref<8x82xf32, #tpu.memory_space<vmem>>, vector<8x64xf32>
    %c0_i32_320 = arith.constant 0 : i32
    %593 = vector.broadcast %c0_i32_320 : i32 to vector<8x64xi32>
    %594 = arith.addi %488, %593 : vector<8x64xi32>
    %c0_i32_321 = arith.constant 0 : i32
    %595 = vector.broadcast %c0_i32_321 : i32 to vector<8x64xi32>
    %596 = arith.cmpi sge, %594, %595 : vector<8x64xi32>
    %c0_i32_322 = arith.constant 0 : i32
    %597 = vector.broadcast %c0_i32_322 : i32 to vector<8x64xi32>
    %598 = arith.addi %488, %597 : vector<8x64xi32>
    %c8_i32_323 = arith.constant 8 : i32
    %599 = vector.broadcast %c8_i32_323 : i32 to vector<8x64xi32>
    %600 = arith.cmpi slt, %598, %599 : vector<8x64xi32>
    %601 = arith.andi %596, %600 : vector<8x64xi1>
    %c0_i32_324 = arith.constant 0 : i32
    %602 = vector.broadcast %c0_i32_324 : i32 to vector<8x64xi32>
    %603 = arith.addi %490, %602 : vector<8x64xi32>
    %c0_i32_325 = arith.constant 0 : i32
    %604 = vector.broadcast %c0_i32_325 : i32 to vector<8x64xi32>
    %605 = arith.cmpi sge, %603, %604 : vector<8x64xi32>
    %606 = arith.andi %601, %605 : vector<8x64xi1>
    %c0_i32_326 = arith.constant 0 : i32
    %607 = vector.broadcast %c0_i32_326 : i32 to vector<8x64xi32>
    %608 = arith.addi %490, %607 : vector<8x64xi32>
    %c8_i32_327 = arith.constant 8 : i32
    %609 = vector.broadcast %c8_i32_327 : i32 to vector<8x64xi32>
    %610 = arith.cmpi slt, %608, %609 : vector<8x64xi32>
    %611 = arith.andi %606, %610 : vector<8x64xi1>
    %cst_328 = arith.constant 0.000000e+00 : f32
    %612 = vector.broadcast %cst_328 : f32 to vector<8x64xf32>
    %613 = arith.select %611, %592, %612 : vector<8x64xi1>, vector<8x64xf32>
    %c0_329 = arith.constant 0 : index
    %c32_330 = arith.constant 32 : index
    %614 = vector.load %arg7[%c0_329, %c32_330] : memref<8x72xf32, #tpu.memory_space<vmem>>, vector<8x8xf32>
    %cst_331 = arith.constant dense<0.000000e+00> : vector<8x64xf32>
    %615 = tpu.matmul %614, %613, %cst_331 {dimension_numbers = #tpu.dot_dimension_numbers<[1], [0], [0], [1], [0, 0, 1, 1], [], []>} : vector<8x8xf32>, vector<8x64xf32>, vector<8x64xf32> -> vector<8x64xf32>
    %616 = arith.addf %591, %615 : vector<8x64xf32>
    %c0_332 = arith.constant 0 : index
    %c10 = arith.constant 10 : index
    %617 = vector.load %arg20[%c0_332, %c10] : memref<8x82xf32, #tpu.memory_space<vmem>>, vector<8x64xf32>
    %c0_i32_333 = arith.constant 0 : i32
    %618 = vector.broadcast %c0_i32_333 : i32 to vector<8x64xi32>
    %619 = arith.addi %488, %618 : vector<8x64xi32>
    %c0_i32_334 = arith.constant 0 : i32
    %620 = vector.broadcast %c0_i32_334 : i32 to vector<8x64xi32>
    %621 = arith.cmpi sge, %619, %620 : vector<8x64xi32>
    %c0_i32_335 = arith.constant 0 : i32
    %622 = vector.broadcast %c0_i32_335 : i32 to vector<8x64xi32>
    %623 = arith.addi %488, %622 : vector<8x64xi32>
    %c8_i32_336 = arith.constant 8 : i32
    %624 = vector.broadcast %c8_i32_336 : i32 to vector<8x64xi32>
    %625 = arith.cmpi slt, %623, %624 : vector<8x64xi32>
    %626 = arith.andi %621, %625 : vector<8x64xi1>
    %c1_i32_337 = arith.constant 1 : i32
    %627 = vector.broadcast %c1_i32_337 : i32 to vector<8x64xi32>
    %628 = arith.addi %490, %627 : vector<8x64xi32>
    %c0_i32_338 = arith.constant 0 : i32
    %629 = vector.broadcast %c0_i32_338 : i32 to vector<8x64xi32>
    %630 = arith.cmpi sge, %628, %629 : vector<8x64xi32>
    %631 = arith.andi %626, %630 : vector<8x64xi1>
    %c1_i32_339 = arith.constant 1 : i32
    %632 = vector.broadcast %c1_i32_339 : i32 to vector<8x64xi32>
    %633 = arith.addi %490, %632 : vector<8x64xi32>
    %c8_i32_340 = arith.constant 8 : i32
    %634 = vector.broadcast %c8_i32_340 : i32 to vector<8x64xi32>
    %635 = arith.cmpi slt, %633, %634 : vector<8x64xi32>
    %636 = arith.andi %631, %635 : vector<8x64xi1>
    %cst_341 = arith.constant 0.000000e+00 : f32
    %637 = vector.broadcast %cst_341 : f32 to vector<8x64xf32>
    %638 = arith.select %636, %617, %637 : vector<8x64xi1>, vector<8x64xf32>
    %c0_342 = arith.constant 0 : index
    %c40 = arith.constant 40 : index
    %639 = vector.load %arg7[%c0_342, %c40] : memref<8x72xf32, #tpu.memory_space<vmem>>, vector<8x8xf32>
    %cst_343 = arith.constant dense<0.000000e+00> : vector<8x64xf32>
    %640 = tpu.matmul %639, %638, %cst_343 {dimension_numbers = #tpu.dot_dimension_numbers<[1], [0], [0], [1], [0, 0, 1, 1], [], []>} : vector<8x8xf32>, vector<8x64xf32>, vector<8x64xf32> -> vector<8x64xf32>
    %641 = arith.addf %616, %640 : vector<8x64xf32>
    %c0_344 = arith.constant 0 : index
    %c16_345 = arith.constant 16 : index
    %642 = vector.load %arg20[%c0_344, %c16_345] : memref<8x82xf32, #tpu.memory_space<vmem>>, vector<8x64xf32>
    %c1_i32_346 = arith.constant 1 : i32
    %643 = vector.broadcast %c1_i32_346 : i32 to vector<8x64xi32>
    %644 = arith.addi %488, %643 : vector<8x64xi32>
    %c0_i32_347 = arith.constant 0 : i32
    %645 = vector.broadcast %c0_i32_347 : i32 to vector<8x64xi32>
    %646 = arith.cmpi sge, %644, %645 : vector<8x64xi32>
    %c1_i32_348 = arith.constant 1 : i32
    %647 = vector.broadcast %c1_i32_348 : i32 to vector<8x64xi32>
    %648 = arith.addi %488, %647 : vector<8x64xi32>
    %c8_i32_349 = arith.constant 8 : i32
    %649 = vector.broadcast %c8_i32_349 : i32 to vector<8x64xi32>
    %650 = arith.cmpi slt, %648, %649 : vector<8x64xi32>
    %651 = arith.andi %646, %650 : vector<8x64xi1>
    %c-1_i32_350 = arith.constant -1 : i32
    %652 = vector.broadcast %c-1_i32_350 : i32 to vector<8x64xi32>
    %653 = arith.addi %490, %652 : vector<8x64xi32>
    %c0_i32_351 = arith.constant 0 : i32
    %654 = vector.broadcast %c0_i32_351 : i32 to vector<8x64xi32>
    %655 = arith.cmpi sge, %653, %654 : vector<8x64xi32>
    %656 = arith.andi %651, %655 : vector<8x64xi1>
    %c-1_i32_352 = arith.constant -1 : i32
    %657 = vector.broadcast %c-1_i32_352 : i32 to vector<8x64xi32>
    %658 = arith.addi %490, %657 : vector<8x64xi32>
    %c8_i32_353 = arith.constant 8 : i32
    %659 = vector.broadcast %c8_i32_353 : i32 to vector<8x64xi32>
    %660 = arith.cmpi slt, %658, %659 : vector<8x64xi32>
    %661 = arith.andi %656, %660 : vector<8x64xi1>
    %cst_354 = arith.constant 0.000000e+00 : f32
    %662 = vector.broadcast %cst_354 : f32 to vector<8x64xf32>
    %663 = arith.select %661, %642, %662 : vector<8x64xi1>, vector<8x64xf32>
    %c0_355 = arith.constant 0 : index
    %c48 = arith.constant 48 : index
    %664 = vector.load %arg7[%c0_355, %c48] : memref<8x72xf32, #tpu.memory_space<vmem>>, vector<8x8xf32>
    %cst_356 = arith.constant dense<0.000000e+00> : vector<8x64xf32>
    %665 = tpu.matmul %664, %663, %cst_356 {dimension_numbers = #tpu.dot_dimension_numbers<[1], [0], [0], [1], [0, 0, 1, 1], [], []>} : vector<8x8xf32>, vector<8x64xf32>, vector<8x64xf32> -> vector<8x64xf32>
    %666 = arith.addf %641, %665 : vector<8x64xf32>
    %c0_357 = arith.constant 0 : index
    %c17_358 = arith.constant 17 : index
    %667 = vector.load %arg20[%c0_357, %c17_358] : memref<8x82xf32, #tpu.memory_space<vmem>>, vector<8x64xf32>
    %c1_i32_359 = arith.constant 1 : i32
    %668 = vector.broadcast %c1_i32_359 : i32 to vector<8x64xi32>
    %669 = arith.addi %488, %668 : vector<8x64xi32>
    %c0_i32_360 = arith.constant 0 : i32
    %670 = vector.broadcast %c0_i32_360 : i32 to vector<8x64xi32>
    %671 = arith.cmpi sge, %669, %670 : vector<8x64xi32>
    %c1_i32_361 = arith.constant 1 : i32
    %672 = vector.broadcast %c1_i32_361 : i32 to vector<8x64xi32>
    %673 = arith.addi %488, %672 : vector<8x64xi32>
    %c8_i32_362 = arith.constant 8 : i32
    %674 = vector.broadcast %c8_i32_362 : i32 to vector<8x64xi32>
    %675 = arith.cmpi slt, %673, %674 : vector<8x64xi32>
    %676 = arith.andi %671, %675 : vector<8x64xi1>
    %c0_i32_363 = arith.constant 0 : i32
    %677 = vector.broadcast %c0_i32_363 : i32 to vector<8x64xi32>
    %678 = arith.addi %490, %677 : vector<8x64xi32>
    %c0_i32_364 = arith.constant 0 : i32
    %679 = vector.broadcast %c0_i32_364 : i32 to vector<8x64xi32>
    %680 = arith.cmpi sge, %678, %679 : vector<8x64xi32>
    %681 = arith.andi %676, %680 : vector<8x64xi1>
    %c0_i32_365 = arith.constant 0 : i32
    %682 = vector.broadcast %c0_i32_365 : i32 to vector<8x64xi32>
    %683 = arith.addi %490, %682 : vector<8x64xi32>
    %c8_i32_366 = arith.constant 8 : i32
    %684 = vector.broadcast %c8_i32_366 : i32 to vector<8x64xi32>
    %685 = arith.cmpi slt, %683, %684 : vector<8x64xi32>
    %686 = arith.andi %681, %685 : vector<8x64xi1>
    %cst_367 = arith.constant 0.000000e+00 : f32
    %687 = vector.broadcast %cst_367 : f32 to vector<8x64xf32>
    %688 = arith.select %686, %667, %687 : vector<8x64xi1>, vector<8x64xf32>
    %c0_368 = arith.constant 0 : index
    %c56 = arith.constant 56 : index
    %689 = vector.load %arg7[%c0_368, %c56] : memref<8x72xf32, #tpu.memory_space<vmem>>, vector<8x8xf32>
    %cst_369 = arith.constant dense<0.000000e+00> : vector<8x64xf32>
    %690 = tpu.matmul %689, %688, %cst_369 {dimension_numbers = #tpu.dot_dimension_numbers<[1], [0], [0], [1], [0, 0, 1, 1], [], []>} : vector<8x8xf32>, vector<8x64xf32>, vector<8x64xf32> -> vector<8x64xf32>
    %691 = arith.addf %666, %690 : vector<8x64xf32>
    %c0_370 = arith.constant 0 : index
    %c18_371 = arith.constant 18 : index
    %692 = vector.load %arg20[%c0_370, %c18_371] : memref<8x82xf32, #tpu.memory_space<vmem>>, vector<8x64xf32>
    %c1_i32_372 = arith.constant 1 : i32
    %693 = vector.broadcast %c1_i32_372 : i32 to vector<8x64xi32>
    %694 = arith.addi %488, %693 : vector<8x64xi32>
    %c0_i32_373 = arith.constant 0 : i32
    %695 = vector.broadcast %c0_i32_373 : i32 to vector<8x64xi32>
    %696 = arith.cmpi sge, %694, %695 : vector<8x64xi32>
    %c1_i32_374 = arith.constant 1 : i32
    %697 = vector.broadcast %c1_i32_374 : i32 to vector<8x64xi32>
    %698 = arith.addi %488, %697 : vector<8x64xi32>
    %c8_i32_375 = arith.constant 8 : i32
    %699 = vector.broadcast %c8_i32_375 : i32 to vector<8x64xi32>
    %700 = arith.cmpi slt, %698, %699 : vector<8x64xi32>
    %701 = arith.andi %696, %700 : vector<8x64xi1>
    %c1_i32_376 = arith.constant 1 : i32
    %702 = vector.broadcast %c1_i32_376 : i32 to vector<8x64xi32>
    %703 = arith.addi %490, %702 : vector<8x64xi32>
    %c0_i32_377 = arith.constant 0 : i32
    %704 = vector.broadcast %c0_i32_377 : i32 to vector<8x64xi32>
    %705 = arith.cmpi sge, %703, %704 : vector<8x64xi32>
    %706 = arith.andi %701, %705 : vector<8x64xi1>
    %c1_i32_378 = arith.constant 1 : i32
    %707 = vector.broadcast %c1_i32_378 : i32 to vector<8x64xi32>
    %708 = arith.addi %490, %707 : vector<8x64xi32>
    %c8_i32_379 = arith.constant 8 : i32
    %709 = vector.broadcast %c8_i32_379 : i32 to vector<8x64xi32>
    %710 = arith.cmpi slt, %708, %709 : vector<8x64xi32>
    %711 = arith.andi %706, %710 : vector<8x64xi1>
    %cst_380 = arith.constant 0.000000e+00 : f32
    %712 = vector.broadcast %cst_380 : f32 to vector<8x64xf32>
    %713 = arith.select %711, %692, %712 : vector<8x64xi1>, vector<8x64xf32>
    %c0_381 = arith.constant 0 : index
    %c64 = arith.constant 64 : index
    %714 = vector.load %arg7[%c0_381, %c64] : memref<8x72xf32, #tpu.memory_space<vmem>>, vector<8x8xf32>
    %cst_382 = arith.constant dense<0.000000e+00> : vector<8x64xf32>
    %715 = tpu.matmul %714, %713, %cst_382 {dimension_numbers = #tpu.dot_dimension_numbers<[1], [0], [0], [1], [0, 0, 1, 1], [], []>} : vector<8x8xf32>, vector<8x64xf32>, vector<8x64xf32> -> vector<8x64xf32>
    %716 = arith.addf %691, %715 : vector<8x64xf32>
    %c0_383 = arith.constant 0 : index
    %c0_384 = arith.constant 0 : index
    %717 = vector.load %arg8[%c0_383, %c0_384] : memref<8x1xf32, #tpu.memory_space<vmem>>, vector<8x1xf32>
    %718 = vector.broadcast %717 : vector<8x1xf32> to vector<8x64xf32>
    %719 = arith.addf %716, %718 : vector<8x64xf32>
    %cst_385 = arith.constant 0.000000e+00 : f32
    %720 = vector.broadcast %cst_385 : f32 to vector<8x64xf32>
    %721 = arith.maximumf %719, %720 : vector<8x64xf32>
    %cst_386 = arith.constant 0.000000e+00 : f32
    %722 = vector.broadcast %cst_386 : f32 to vector<8x82xf32>
    %c0_387 = arith.constant 0 : index
    %c0_388 = arith.constant 0 : index
    %723 = vector.load %arg20[%c0_387, %c0_388] : memref<8x82xf32, #tpu.memory_space<vmem>>, vector<8x82xf32>
    tpu.vector_store %arg20[%c0_387, %c0_388], %722 {strides = array<i32>} : memref<8x82xf32, #tpu.memory_space<vmem>>, vector<8x82xf32>,
    %c0_389 = arith.constant 0 : index
    %c9_390 = arith.constant 9 : index
    %724 = vector.load %arg20[%c0_389, %c9_390] : memref<8x82xf32, #tpu.memory_space<vmem>>, vector<8x64xf32>
    tpu.vector_store %arg20[%c0_389, %c9_390], %721 {strides = array<i32>} : memref<8x82xf32, #tpu.memory_space<vmem>>, vector<8x64xf32>,
    %725 = tpu.iota {dimensions = array<i32: 1>} : vector<8x64xi32>
    %c3_i32_391 = arith.constant 3 : i32
    %726 = vector.broadcast %c3_i32_391 : i32 to vector<8x64xi32>
    %727 = arith.shrsi %725, %726 : vector<8x64xi32>
    %c7_i32_392 = arith.constant 7 : i32
    %728 = vector.broadcast %c7_i32_392 : i32 to vector<8x64xi32>
    %729 = arith.andi %725, %728 : vector<8x64xi32>
    %cst_393 = arith.constant 0.000000e+00 : f32
    %730 = vector.broadcast %cst_393 : f32 to vector<8x64xf32>
    %c0_394 = arith.constant 0 : index
    %c0_395 = arith.constant 0 : index
    %731 = vector.load %arg20[%c0_394, %c0_395] : memref<8x82xf32, #tpu.memory_space<vmem>>, vector<8x64xf32>
    %c-1_i32_396 = arith.constant -1 : i32
    %732 = vector.broadcast %c-1_i32_396 : i32 to vector<8x64xi32>
    %733 = arith.addi %727, %732 : vector<8x64xi32>
    %c0_i32_397 = arith.constant 0 : i32
    %734 = vector.broadcast %c0_i32_397 : i32 to vector<8x64xi32>
    %735 = arith.cmpi sge, %733, %734 : vector<8x64xi32>
    %c-1_i32_398 = arith.constant -1 : i32
    %736 = vector.broadcast %c-1_i32_398 : i32 to vector<8x64xi32>
    %737 = arith.addi %727, %736 : vector<8x64xi32>
    %c8_i32_399 = arith.constant 8 : i32
    %738 = vector.broadcast %c8_i32_399 : i32 to vector<8x64xi32>
    %739 = arith.cmpi slt, %737, %738 : vector<8x64xi32>
    %740 = arith.andi %735, %739 : vector<8x64xi1>
    %c-1_i32_400 = arith.constant -1 : i32
    %741 = vector.broadcast %c-1_i32_400 : i32 to vector<8x64xi32>
    %742 = arith.addi %729, %741 : vector<8x64xi32>
    %c0_i32_401 = arith.constant 0 : i32
    %743 = vector.broadcast %c0_i32_401 : i32 to vector<8x64xi32>
    %744 = arith.cmpi sge, %742, %743 : vector<8x64xi32>
    %745 = arith.andi %740, %744 : vector<8x64xi1>
    %c-1_i32_402 = arith.constant -1 : i32
    %746 = vector.broadcast %c-1_i32_402 : i32 to vector<8x64xi32>
    %747 = arith.addi %729, %746 : vector<8x64xi32>
    %c8_i32_403 = arith.constant 8 : i32
    %748 = vector.broadcast %c8_i32_403 : i32 to vector<8x64xi32>
    %749 = arith.cmpi slt, %747, %748 : vector<8x64xi32>
    %750 = arith.andi %745, %749 : vector<8x64xi1>
    %cst_404 = arith.constant 0.000000e+00 : f32
    %751 = vector.broadcast %cst_404 : f32 to vector<8x64xf32>
    %752 = arith.select %750, %731, %751 : vector<8x64xi1>, vector<8x64xf32>
    %c0_405 = arith.constant 0 : index
    %c0_406 = arith.constant 0 : index
    %753 = vector.load %arg9[%c0_405, %c0_406] : memref<8x72xf32, #tpu.memory_space<vmem>>, vector<8x8xf32>
    %cst_407 = arith.constant dense<0.000000e+00> : vector<8x64xf32>
    %754 = tpu.matmul %753, %752, %cst_407 {dimension_numbers = #tpu.dot_dimension_numbers<[1], [0], [0], [1], [0, 0, 1, 1], [], []>} : vector<8x8xf32>, vector<8x64xf32>, vector<8x64xf32> -> vector<8x64xf32>
    %755 = arith.addf %730, %754 : vector<8x64xf32>
    %c0_408 = arith.constant 0 : index
    %c1_409 = arith.constant 1 : index
    %756 = vector.load %arg20[%c0_408, %c1_409] : memref<8x82xf32, #tpu.memory_space<vmem>>, vector<8x64xf32>
    %c-1_i32_410 = arith.constant -1 : i32
    %757 = vector.broadcast %c-1_i32_410 : i32 to vector<8x64xi32>
    %758 = arith.addi %727, %757 : vector<8x64xi32>
    %c0_i32_411 = arith.constant 0 : i32
    %759 = vector.broadcast %c0_i32_411 : i32 to vector<8x64xi32>
    %760 = arith.cmpi sge, %758, %759 : vector<8x64xi32>
    %c-1_i32_412 = arith.constant -1 : i32
    %761 = vector.broadcast %c-1_i32_412 : i32 to vector<8x64xi32>
    %762 = arith.addi %727, %761 : vector<8x64xi32>
    %c8_i32_413 = arith.constant 8 : i32
    %763 = vector.broadcast %c8_i32_413 : i32 to vector<8x64xi32>
    %764 = arith.cmpi slt, %762, %763 : vector<8x64xi32>
    %765 = arith.andi %760, %764 : vector<8x64xi1>
    %c0_i32_414 = arith.constant 0 : i32
    %766 = vector.broadcast %c0_i32_414 : i32 to vector<8x64xi32>
    %767 = arith.addi %729, %766 : vector<8x64xi32>
    %c0_i32_415 = arith.constant 0 : i32
    %768 = vector.broadcast %c0_i32_415 : i32 to vector<8x64xi32>
    %769 = arith.cmpi sge, %767, %768 : vector<8x64xi32>
    %770 = arith.andi %765, %769 : vector<8x64xi1>
    %c0_i32_416 = arith.constant 0 : i32
    %771 = vector.broadcast %c0_i32_416 : i32 to vector<8x64xi32>
    %772 = arith.addi %729, %771 : vector<8x64xi32>
    %c8_i32_417 = arith.constant 8 : i32
    %773 = vector.broadcast %c8_i32_417 : i32 to vector<8x64xi32>
    %774 = arith.cmpi slt, %772, %773 : vector<8x64xi32>
    %775 = arith.andi %770, %774 : vector<8x64xi1>
    %cst_418 = arith.constant 0.000000e+00 : f32
    %776 = vector.broadcast %cst_418 : f32 to vector<8x64xf32>
    %777 = arith.select %775, %756, %776 : vector<8x64xi1>, vector<8x64xf32>
    %c0_419 = arith.constant 0 : index
    %c8_420 = arith.constant 8 : index
    %778 = vector.load %arg9[%c0_419, %c8_420] : memref<8x72xf32, #tpu.memory_space<vmem>>, vector<8x8xf32>
    %cst_421 = arith.constant dense<0.000000e+00> : vector<8x64xf32>
    %779 = tpu.matmul %778, %777, %cst_421 {dimension_numbers = #tpu.dot_dimension_numbers<[1], [0], [0], [1], [0, 0, 1, 1], [], []>} : vector<8x8xf32>, vector<8x64xf32>, vector<8x64xf32> -> vector<8x64xf32>
    %780 = arith.addf %755, %779 : vector<8x64xf32>
    %c0_422 = arith.constant 0 : index
    %c2_423 = arith.constant 2 : index
    %781 = vector.load %arg20[%c0_422, %c2_423] : memref<8x82xf32, #tpu.memory_space<vmem>>, vector<8x64xf32>
    %c-1_i32_424 = arith.constant -1 : i32
    %782 = vector.broadcast %c-1_i32_424 : i32 to vector<8x64xi32>
    %783 = arith.addi %727, %782 : vector<8x64xi32>
    %c0_i32_425 = arith.constant 0 : i32
    %784 = vector.broadcast %c0_i32_425 : i32 to vector<8x64xi32>
    %785 = arith.cmpi sge, %783, %784 : vector<8x64xi32>
    %c-1_i32_426 = arith.constant -1 : i32
    %786 = vector.broadcast %c-1_i32_426 : i32 to vector<8x64xi32>
    %787 = arith.addi %727, %786 : vector<8x64xi32>
    %c8_i32_427 = arith.constant 8 : i32
    %788 = vector.broadcast %c8_i32_427 : i32 to vector<8x64xi32>
    %789 = arith.cmpi slt, %787, %788 : vector<8x64xi32>
    %790 = arith.andi %785, %789 : vector<8x64xi1>
    %c1_i32_428 = arith.constant 1 : i32
    %791 = vector.broadcast %c1_i32_428 : i32 to vector<8x64xi32>
    %792 = arith.addi %729, %791 : vector<8x64xi32>
    %c0_i32_429 = arith.constant 0 : i32
    %793 = vector.broadcast %c0_i32_429 : i32 to vector<8x64xi32>
    %794 = arith.cmpi sge, %792, %793 : vector<8x64xi32>
    %795 = arith.andi %790, %794 : vector<8x64xi1>
    %c1_i32_430 = arith.constant 1 : i32
    %796 = vector.broadcast %c1_i32_430 : i32 to vector<8x64xi32>
    %797 = arith.addi %729, %796 : vector<8x64xi32>
    %c8_i32_431 = arith.constant 8 : i32
    %798 = vector.broadcast %c8_i32_431 : i32 to vector<8x64xi32>
    %799 = arith.cmpi slt, %797, %798 : vector<8x64xi32>
    %800 = arith.andi %795, %799 : vector<8x64xi1>
    %cst_432 = arith.constant 0.000000e+00 : f32
    %801 = vector.broadcast %cst_432 : f32 to vector<8x64xf32>
    %802 = arith.select %800, %781, %801 : vector<8x64xi1>, vector<8x64xf32>
    %c0_433 = arith.constant 0 : index
    %c16_434 = arith.constant 16 : index
    %803 = vector.load %arg9[%c0_433, %c16_434] : memref<8x72xf32, #tpu.memory_space<vmem>>, vector<8x8xf32>
    %cst_435 = arith.constant dense<0.000000e+00> : vector<8x64xf32>
    %804 = tpu.matmul %803, %802, %cst_435 {dimension_numbers = #tpu.dot_dimension_numbers<[1], [0], [0], [1], [0, 0, 1, 1], [], []>} : vector<8x8xf32>, vector<8x64xf32>, vector<8x64xf32> -> vector<8x64xf32>
    %805 = arith.addf %780, %804 : vector<8x64xf32>
    %c0_436 = arith.constant 0 : index
    %c8_437 = arith.constant 8 : index
    %806 = vector.load %arg20[%c0_436, %c8_437] : memref<8x82xf32, #tpu.memory_space<vmem>>, vector<8x64xf32>
    %c0_i32_438 = arith.constant 0 : i32
    %807 = vector.broadcast %c0_i32_438 : i32 to vector<8x64xi32>
    %808 = arith.addi %727, %807 : vector<8x64xi32>
    %c0_i32_439 = arith.constant 0 : i32
    %809 = vector.broadcast %c0_i32_439 : i32 to vector<8x64xi32>
    %810 = arith.cmpi sge, %808, %809 : vector<8x64xi32>
    %c0_i32_440 = arith.constant 0 : i32
    %811 = vector.broadcast %c0_i32_440 : i32 to vector<8x64xi32>
    %812 = arith.addi %727, %811 : vector<8x64xi32>
    %c8_i32_441 = arith.constant 8 : i32
    %813 = vector.broadcast %c8_i32_441 : i32 to vector<8x64xi32>
    %814 = arith.cmpi slt, %812, %813 : vector<8x64xi32>
    %815 = arith.andi %810, %814 : vector<8x64xi1>
    %c-1_i32_442 = arith.constant -1 : i32
    %816 = vector.broadcast %c-1_i32_442 : i32 to vector<8x64xi32>
    %817 = arith.addi %729, %816 : vector<8x64xi32>
    %c0_i32_443 = arith.constant 0 : i32
    %818 = vector.broadcast %c0_i32_443 : i32 to vector<8x64xi32>
    %819 = arith.cmpi sge, %817, %818 : vector<8x64xi32>
    %820 = arith.andi %815, %819 : vector<8x64xi1>
    %c-1_i32_444 = arith.constant -1 : i32
    %821 = vector.broadcast %c-1_i32_444 : i32 to vector<8x64xi32>
    %822 = arith.addi %729, %821 : vector<8x64xi32>
    %c8_i32_445 = arith.constant 8 : i32
    %823 = vector.broadcast %c8_i32_445 : i32 to vector<8x64xi32>
    %824 = arith.cmpi slt, %822, %823 : vector<8x64xi32>
    %825 = arith.andi %820, %824 : vector<8x64xi1>
    %cst_446 = arith.constant 0.000000e+00 : f32
    %826 = vector.broadcast %cst_446 : f32 to vector<8x64xf32>
    %827 = arith.select %825, %806, %826 : vector<8x64xi1>, vector<8x64xf32>
    %c0_447 = arith.constant 0 : index
    %c24_448 = arith.constant 24 : index
    %828 = vector.load %arg9[%c0_447, %c24_448] : memref<8x72xf32, #tpu.memory_space<vmem>>, vector<8x8xf32>
    %cst_449 = arith.constant dense<0.000000e+00> : vector<8x64xf32>
    %829 = tpu.matmul %828, %827, %cst_449 {dimension_numbers = #tpu.dot_dimension_numbers<[1], [0], [0], [1], [0, 0, 1, 1], [], []>} : vector<8x8xf32>, vector<8x64xf32>, vector<8x64xf32> -> vector<8x64xf32>
    %830 = arith.addf %805, %829 : vector<8x64xf32>
    %c0_450 = arith.constant 0 : index
    %c9_451 = arith.constant 9 : index
    %831 = vector.load %arg20[%c0_450, %c9_451] : memref<8x82xf32, #tpu.memory_space<vmem>>, vector<8x64xf32>
    %c0_i32_452 = arith.constant 0 : i32
    %832 = vector.broadcast %c0_i32_452 : i32 to vector<8x64xi32>
    %833 = arith.addi %727, %832 : vector<8x64xi32>
    %c0_i32_453 = arith.constant 0 : i32
    %834 = vector.broadcast %c0_i32_453 : i32 to vector<8x64xi32>
    %835 = arith.cmpi sge, %833, %834 : vector<8x64xi32>
    %c0_i32_454 = arith.constant 0 : i32
    %836 = vector.broadcast %c0_i32_454 : i32 to vector<8x64xi32>
    %837 = arith.addi %727, %836 : vector<8x64xi32>
    %c8_i32_455 = arith.constant 8 : i32
    %838 = vector.broadcast %c8_i32_455 : i32 to vector<8x64xi32>
    %839 = arith.cmpi slt, %837, %838 : vector<8x64xi32>
    %840 = arith.andi %835, %839 : vector<8x64xi1>
    %c0_i32_456 = arith.constant 0 : i32
    %841 = vector.broadcast %c0_i32_456 : i32 to vector<8x64xi32>
    %842 = arith.addi %729, %841 : vector<8x64xi32>
    %c0_i32_457 = arith.constant 0 : i32
    %843 = vector.broadcast %c0_i32_457 : i32 to vector<8x64xi32>
    %844 = arith.cmpi sge, %842, %843 : vector<8x64xi32>
    %845 = arith.andi %840, %844 : vector<8x64xi1>
    %c0_i32_458 = arith.constant 0 : i32
    %846 = vector.broadcast %c0_i32_458 : i32 to vector<8x64xi32>
    %847 = arith.addi %729, %846 : vector<8x64xi32>
    %c8_i32_459 = arith.constant 8 : i32
    %848 = vector.broadcast %c8_i32_459 : i32 to vector<8x64xi32>
    %849 = arith.cmpi slt, %847, %848 : vector<8x64xi32>
    %850 = arith.andi %845, %849 : vector<8x64xi1>
    %cst_460 = arith.constant 0.000000e+00 : f32
    %851 = vector.broadcast %cst_460 : f32 to vector<8x64xf32>
    %852 = arith.select %850, %831, %851 : vector<8x64xi1>, vector<8x64xf32>
    %c0_461 = arith.constant 0 : index
    %c32_462 = arith.constant 32 : index
    %853 = vector.load %arg9[%c0_461, %c32_462] : memref<8x72xf32, #tpu.memory_space<vmem>>, vector<8x8xf32>
    %cst_463 = arith.constant dense<0.000000e+00> : vector<8x64xf32>
    %854 = tpu.matmul %853, %852, %cst_463 {dimension_numbers = #tpu.dot_dimension_numbers<[1], [0], [0], [1], [0, 0, 1, 1], [], []>} : vector<8x8xf32>, vector<8x64xf32>, vector<8x64xf32> -> vector<8x64xf32>
    %855 = arith.addf %830, %854 : vector<8x64xf32>
    %c0_464 = arith.constant 0 : index
    %c10_465 = arith.constant 10 : index
    %856 = vector.load %arg20[%c0_464, %c10_465] : memref<8x82xf32, #tpu.memory_space<vmem>>, vector<8x64xf32>
    %c0_i32_466 = arith.constant 0 : i32
    %857 = vector.broadcast %c0_i32_466 : i32 to vector<8x64xi32>
    %858 = arith.addi %727, %857 : vector<8x64xi32>
    %c0_i32_467 = arith.constant 0 : i32
    %859 = vector.broadcast %c0_i32_467 : i32 to vector<8x64xi32>
    %860 = arith.cmpi sge, %858, %859 : vector<8x64xi32>
    %c0_i32_468 = arith.constant 0 : i32
    %861 = vector.broadcast %c0_i32_468 : i32 to vector<8x64xi32>
    %862 = arith.addi %727, %861 : vector<8x64xi32>
    %c8_i32_469 = arith.constant 8 : i32
    %863 = vector.broadcast %c8_i32_469 : i32 to vector<8x64xi32>
    %864 = arith.cmpi slt, %862, %863 : vector<8x64xi32>
    %865 = arith.andi %860, %864 : vector<8x64xi1>
    %c1_i32_470 = arith.constant 1 : i32
    %866 = vector.broadcast %c1_i32_470 : i32 to vector<8x64xi32>
    %867 = arith.addi %729, %866 : vector<8x64xi32>
    %c0_i32_471 = arith.constant 0 : i32
    %868 = vector.broadcast %c0_i32_471 : i32 to vector<8x64xi32>
    %869 = arith.cmpi sge, %867, %868 : vector<8x64xi32>
    %870 = arith.andi %865, %869 : vector<8x64xi1>
    %c1_i32_472 = arith.constant 1 : i32
    %871 = vector.broadcast %c1_i32_472 : i32 to vector<8x64xi32>
    %872 = arith.addi %729, %871 : vector<8x64xi32>
    %c8_i32_473 = arith.constant 8 : i32
    %873 = vector.broadcast %c8_i32_473 : i32 to vector<8x64xi32>
    %874 = arith.cmpi slt, %872, %873 : vector<8x64xi32>
    %875 = arith.andi %870, %874 : vector<8x64xi1>
    %cst_474 = arith.constant 0.000000e+00 : f32
    %876 = vector.broadcast %cst_474 : f32 to vector<8x64xf32>
    %877 = arith.select %875, %856, %876 : vector<8x64xi1>, vector<8x64xf32>
    %c0_475 = arith.constant 0 : index
    %c40_476 = arith.constant 40 : index
    %878 = vector.load %arg9[%c0_475, %c40_476] : memref<8x72xf32, #tpu.memory_space<vmem>>, vector<8x8xf32>
    %cst_477 = arith.constant dense<0.000000e+00> : vector<8x64xf32>
    %879 = tpu.matmul %878, %877, %cst_477 {dimension_numbers = #tpu.dot_dimension_numbers<[1], [0], [0], [1], [0, 0, 1, 1], [], []>} : vector<8x8xf32>, vector<8x64xf32>, vector<8x64xf32> -> vector<8x64xf32>
    %880 = arith.addf %855, %879 : vector<8x64xf32>
    %c0_478 = arith.constant 0 : index
    %c16_479 = arith.constant 16 : index
    %881 = vector.load %arg20[%c0_478, %c16_479] : memref<8x82xf32, #tpu.memory_space<vmem>>, vector<8x64xf32>
    %c1_i32_480 = arith.constant 1 : i32
    %882 = vector.broadcast %c1_i32_480 : i32 to vector<8x64xi32>
    %883 = arith.addi %727, %882 : vector<8x64xi32>
    %c0_i32_481 = arith.constant 0 : i32
    %884 = vector.broadcast %c0_i32_481 : i32 to vector<8x64xi32>
    %885 = arith.cmpi sge, %883, %884 : vector<8x64xi32>
    %c1_i32_482 = arith.constant 1 : i32
    %886 = vector.broadcast %c1_i32_482 : i32 to vector<8x64xi32>
    %887 = arith.addi %727, %886 : vector<8x64xi32>
    %c8_i32_483 = arith.constant 8 : i32
    %888 = vector.broadcast %c8_i32_483 : i32 to vector<8x64xi32>
    %889 = arith.cmpi slt, %887, %888 : vector<8x64xi32>
    %890 = arith.andi %885, %889 : vector<8x64xi1>
    %c-1_i32_484 = arith.constant -1 : i32
    %891 = vector.broadcast %c-1_i32_484 : i32 to vector<8x64xi32>
    %892 = arith.addi %729, %891 : vector<8x64xi32>
    %c0_i32_485 = arith.constant 0 : i32
    %893 = vector.broadcast %c0_i32_485 : i32 to vector<8x64xi32>
    %894 = arith.cmpi sge, %892, %893 : vector<8x64xi32>
    %895 = arith.andi %890, %894 : vector<8x64xi1>
    %c-1_i32_486 = arith.constant -1 : i32
    %896 = vector.broadcast %c-1_i32_486 : i32 to vector<8x64xi32>
    %897 = arith.addi %729, %896 : vector<8x64xi32>
    %c8_i32_487 = arith.constant 8 : i32
    %898 = vector.broadcast %c8_i32_487 : i32 to vector<8x64xi32>
    %899 = arith.cmpi slt, %897, %898 : vector<8x64xi32>
    %900 = arith.andi %895, %899 : vector<8x64xi1>
    %cst_488 = arith.constant 0.000000e+00 : f32
    %901 = vector.broadcast %cst_488 : f32 to vector<8x64xf32>
    %902 = arith.select %900, %881, %901 : vector<8x64xi1>, vector<8x64xf32>
    %c0_489 = arith.constant 0 : index
    %c48_490 = arith.constant 48 : index
    %903 = vector.load %arg9[%c0_489, %c48_490] : memref<8x72xf32, #tpu.memory_space<vmem>>, vector<8x8xf32>
    %cst_491 = arith.constant dense<0.000000e+00> : vector<8x64xf32>
    %904 = tpu.matmul %903, %902, %cst_491 {dimension_numbers = #tpu.dot_dimension_numbers<[1], [0], [0], [1], [0, 0, 1, 1], [], []>} : vector<8x8xf32>, vector<8x64xf32>, vector<8x64xf32> -> vector<8x64xf32>
    %905 = arith.addf %880, %904 : vector<8x64xf32>
    %c0_492 = arith.constant 0 : index
    %c17_493 = arith.constant 17 : index
    %906 = vector.load %arg20[%c0_492, %c17_493] : memref<8x82xf32, #tpu.memory_space<vmem>>, vector<8x64xf32>
    %c1_i32_494 = arith.constant 1 : i32
    %907 = vector.broadcast %c1_i32_494 : i32 to vector<8x64xi32>
    %908 = arith.addi %727, %907 : vector<8x64xi32>
    %c0_i32_495 = arith.constant 0 : i32
    %909 = vector.broadcast %c0_i32_495 : i32 to vector<8x64xi32>
    %910 = arith.cmpi sge, %908, %909 : vector<8x64xi32>
    %c1_i32_496 = arith.constant 1 : i32
    %911 = vector.broadcast %c1_i32_496 : i32 to vector<8x64xi32>
    %912 = arith.addi %727, %911 : vector<8x64xi32>
    %c8_i32_497 = arith.constant 8 : i32
    %913 = vector.broadcast %c8_i32_497 : i32 to vector<8x64xi32>
    %914 = arith.cmpi slt, %912, %913 : vector<8x64xi32>
    %915 = arith.andi %910, %914 : vector<8x64xi1>
    %c0_i32_498 = arith.constant 0 : i32
    %916 = vector.broadcast %c0_i32_498 : i32 to vector<8x64xi32>
    %917 = arith.addi %729, %916 : vector<8x64xi32>
    %c0_i32_499 = arith.constant 0 : i32
    %918 = vector.broadcast %c0_i32_499 : i32 to vector<8x64xi32>
    %919 = arith.cmpi sge, %917, %918 : vector<8x64xi32>
    %920 = arith.andi %915, %919 : vector<8x64xi1>
    %c0_i32_500 = arith.constant 0 : i32
    %921 = vector.broadcast %c0_i32_500 : i32 to vector<8x64xi32>
    %922 = arith.addi %729, %921 : vector<8x64xi32>
    %c8_i32_501 = arith.constant 8 : i32
    %923 = vector.broadcast %c8_i32_501 : i32 to vector<8x64xi32>
    %924 = arith.cmpi slt, %922, %923 : vector<8x64xi32>
    %925 = arith.andi %920, %924 : vector<8x64xi1>
    %cst_502 = arith.constant 0.000000e+00 : f32
    %926 = vector.broadcast %cst_502 : f32 to vector<8x64xf32>
    %927 = arith.select %925, %906, %926 : vector<8x64xi1>, vector<8x64xf32>
    %c0_503 = arith.constant 0 : index
    %c56_504 = arith.constant 56 : index
    %928 = vector.load %arg9[%c0_503, %c56_504] : memref<8x72xf32, #tpu.memory_space<vmem>>, vector<8x8xf32>
    %cst_505 = arith.constant dense<0.000000e+00> : vector<8x64xf32>
    %929 = tpu.matmul %928, %927, %cst_505 {dimension_numbers = #tpu.dot_dimension_numbers<[1], [0], [0], [1], [0, 0, 1, 1], [], []>} : vector<8x8xf32>, vector<8x64xf32>, vector<8x64xf32> -> vector<8x64xf32>
    %930 = arith.addf %905, %929 : vector<8x64xf32>
    %c0_506 = arith.constant 0 : index
    %c18_507 = arith.constant 18 : index
    %931 = vector.load %arg20[%c0_506, %c18_507] : memref<8x82xf32, #tpu.memory_space<vmem>>, vector<8x64xf32>
    %c1_i32_508 = arith.constant 1 : i32
    %932 = vector.broadcast %c1_i32_508 : i32 to vector<8x64xi32>
    %933 = arith.addi %727, %932 : vector<8x64xi32>
    %c0_i32_509 = arith.constant 0 : i32
    %934 = vector.broadcast %c0_i32_509 : i32 to vector<8x64xi32>
    %935 = arith.cmpi sge, %933, %934 : vector<8x64xi32>
    %c1_i32_510 = arith.constant 1 : i32
    %936 = vector.broadcast %c1_i32_510 : i32 to vector<8x64xi32>
    %937 = arith.addi %727, %936 : vector<8x64xi32>
    %c8_i32_511 = arith.constant 8 : i32
    %938 = vector.broadcast %c8_i32_511 : i32 to vector<8x64xi32>
    %939 = arith.cmpi slt, %937, %938 : vector<8x64xi32>
    %940 = arith.andi %935, %939 : vector<8x64xi1>
    %c1_i32_512 = arith.constant 1 : i32
    %941 = vector.broadcast %c1_i32_512 : i32 to vector<8x64xi32>
    %942 = arith.addi %729, %941 : vector<8x64xi32>
    %c0_i32_513 = arith.constant 0 : i32
    %943 = vector.broadcast %c0_i32_513 : i32 to vector<8x64xi32>
    %944 = arith.cmpi sge, %942, %943 : vector<8x64xi32>
    %945 = arith.andi %940, %944 : vector<8x64xi1>
    %c1_i32_514 = arith.constant 1 : i32
    %946 = vector.broadcast %c1_i32_514 : i32 to vector<8x64xi32>
    %947 = arith.addi %729, %946 : vector<8x64xi32>
    %c8_i32_515 = arith.constant 8 : i32
    %948 = vector.broadcast %c8_i32_515 : i32 to vector<8x64xi32>
    %949 = arith.cmpi slt, %947, %948 : vector<8x64xi32>
    %950 = arith.andi %945, %949 : vector<8x64xi1>
    %cst_516 = arith.constant 0.000000e+00 : f32
    %951 = vector.broadcast %cst_516 : f32 to vector<8x64xf32>
    %952 = arith.select %950, %931, %951 : vector<8x64xi1>, vector<8x64xf32>
    %c0_517 = arith.constant 0 : index
    %c64_518 = arith.constant 64 : index
    %953 = vector.load %arg9[%c0_517, %c64_518] : memref<8x72xf32, #tpu.memory_space<vmem>>, vector<8x8xf32>
    %cst_519 = arith.constant dense<0.000000e+00> : vector<8x64xf32>
    %954 = tpu.matmul %953, %952, %cst_519 {dimension_numbers = #tpu.dot_dimension_numbers<[1], [0], [0], [1], [0, 0, 1, 1], [], []>} : vector<8x8xf32>, vector<8x64xf32>, vector<8x64xf32> -> vector<8x64xf32>
    %955 = arith.addf %930, %954 : vector<8x64xf32>
    %c0_520 = arith.constant 0 : index
    %c0_521 = arith.constant 0 : index
    %956 = vector.load %arg10[%c0_520, %c0_521] : memref<8x1xf32, #tpu.memory_space<vmem>>, vector<8x1xf32>
    %957 = vector.broadcast %956 : vector<8x1xf32> to vector<8x64xf32>
    %958 = arith.addf %955, %957 : vector<8x64xf32>
    %959 = arith.addf %958, %3 : vector<8x64xf32>
    %cst_522 = arith.constant 0.000000e+00 : f32
    %960 = vector.broadcast %cst_522 : f32 to vector<8x64xf32>
    %961 = arith.maximumf %959, %960 : vector<8x64xf32>
    %c0_523 = arith.constant 0 : index
    %c0_524 = arith.constant 0 : index
    %962 = vector.load %arg11[%c0_523, %c0_524] : memref<4x8xf32, #tpu.memory_space<vmem>>, vector<4x8xf32>
    %cst_525 = arith.constant dense<0.000000e+00> : vector<4x64xf32>
    %963 = tpu.matmul %962, %961, %cst_525 {dimension_numbers = #tpu.dot_dimension_numbers<[1], [0], [0], [1], [0, 0, 1, 1], [], []>} : vector<4x8xf32>, vector<8x64xf32>, vector<4x64xf32> -> vector<4x64xf32>
    %c0_526 = arith.constant 0 : index
    %c0_527 = arith.constant 0 : index
    %964 = vector.load %arg12[%c0_526, %c0_527] : memref<4x1xf32, #tpu.memory_space<vmem>>, vector<4x1xf32>
    %965 = vector.broadcast %964 : vector<4x1xf32> to vector<4x64xf32>
    %966 = arith.addf %963, %965 : vector<4x64xf32>
    %c0_528 = arith.constant 0 : index
    %c0_529 = arith.constant 0 : index
    %967 = vector.load %arg15[%c0_528, %c0_529] : memref<64x256xf32, #tpu.memory_space<vmem>>, vector<64x256xf32>
    %cst_530 = arith.constant dense<0.000000e+00> : vector<4x256xf32>
    %968 = tpu.matmul %966, %967, %cst_530 {dimension_numbers = #tpu.dot_dimension_numbers<[1], [0], [0], [1], [0, 0, 1, 1], [], []>} : vector<4x64xf32>, vector<64x256xf32>, vector<4x256xf32> -> vector<4x256xf32>
    %969 = arith.addf %482, %968 : vector<4x256xf32>
    %cst_531 = arith.constant 0.000000e+00 : f32
    %970 = vector.broadcast %cst_531 : f32 to vector<4x256xf32>
    %971 = arith.maximumf %969, %970 : vector<4x256xf32>
    %c0_532 = arith.constant 0 : index
    %c0_533 = arith.constant 0 : index
    %c0_534 = arith.constant 0 : index
    %972 = vector.load %arg17[%c0_532, %c0_533, %c0_534] : memref<1x4x256xf32, #tpu.memory_space<vmem>>, vector<1x4x256xf32>
    %973 = vector.shape_cast %972 : vector<1x4x256xf32> to vector<4x256xf32>
    %974 = vector.shape_cast %971 : vector<4x256xf32> to vector<1x4x256xf32>
    tpu.vector_store %arg17[%c0_532, %c0_533, %c0_534], %974 {strides = array<i32>} : memref<1x4x256xf32, #tpu.memory_space<vmem>>, vector<1x4x256xf32>,
    %cst_535 = arith.constant 0.000000e+00 : f32
    %975 = vector.broadcast %cst_535 : f32 to vector<4x290xf32>
    %c0_536 = arith.constant 0 : index
    %c0_537 = arith.constant 0 : index
    %976 = vector.load %arg19[%c0_536, %c0_537] : memref<4x290xf32, #tpu.memory_space<vmem>>, vector<4x290xf32>
    tpu.vector_store %arg19[%c0_536, %c0_537], %975 {strides = array<i32>} : memref<4x290xf32, #tpu.memory_space<vmem>>, vector<4x290xf32>,
    %c0_538 = arith.constant 0 : index
    %c17_539 = arith.constant 17 : index
    %977 = vector.load %arg19[%c0_538, %c17_539] : memref<4x290xf32, #tpu.memory_space<vmem>>, vector<4x256xf32>
    tpu.vector_store %arg19[%c0_538, %c17_539], %482 {strides = array<i32>} : memref<4x290xf32, #tpu.memory_space<vmem>>, vector<4x256xf32>,
    %978 = tpu.iota {dimensions = array<i32: 1>} : vector<4x256xi32>
    %c4_i32_540 = arith.constant 4 : i32
    %979 = vector.broadcast %c4_i32_540 : i32 to vector<4x256xi32>
    %980 = arith.shrsi %978, %979 : vector<4x256xi32>
    %c15_i32_541 = arith.constant 15 : i32
    %981 = vector.broadcast %c15_i32_541 : i32 to vector<4x256xi32>
    %982 = arith.andi %978, %981 : vector<4x256xi32>
    %cst_542 = arith.constant 0.000000e+00 : f32
    %983 = vector.broadcast %cst_542 : f32 to vector<8x256xf32>
    %c0_543 = arith.constant 0 : index
    %c0_544 = arith.constant 0 : index
    %984 = vector.load %arg19[%c0_543, %c0_544] : memref<4x290xf32, #tpu.memory_space<vmem>>, vector<4x256xf32>
    %c-1_i32_545 = arith.constant -1 : i32
    %985 = vector.broadcast %c-1_i32_545 : i32 to vector<4x256xi32>
    %986 = arith.addi %980, %985 : vector<4x256xi32>
    %c0_i32_546 = arith.constant 0 : i32
    %987 = vector.broadcast %c0_i32_546 : i32 to vector<4x256xi32>
    %988 = arith.cmpi sge, %986, %987 : vector<4x256xi32>
    %c-1_i32_547 = arith.constant -1 : i32
    %989 = vector.broadcast %c-1_i32_547 : i32 to vector<4x256xi32>
    %990 = arith.addi %980, %989 : vector<4x256xi32>
    %c16_i32_548 = arith.constant 16 : i32
    %991 = vector.broadcast %c16_i32_548 : i32 to vector<4x256xi32>
    %992 = arith.cmpi slt, %990, %991 : vector<4x256xi32>
    %993 = arith.andi %988, %992 : vector<4x256xi1>
    %c-1_i32_549 = arith.constant -1 : i32
    %994 = vector.broadcast %c-1_i32_549 : i32 to vector<4x256xi32>
    %995 = arith.addi %982, %994 : vector<4x256xi32>
    %c0_i32_550 = arith.constant 0 : i32
    %996 = vector.broadcast %c0_i32_550 : i32 to vector<4x256xi32>
    %997 = arith.cmpi sge, %995, %996 : vector<4x256xi32>
    %998 = arith.andi %993, %997 : vector<4x256xi1>
    %c-1_i32_551 = arith.constant -1 : i32
    %999 = vector.broadcast %c-1_i32_551 : i32 to vector<4x256xi32>
    %1000 = arith.addi %982, %999 : vector<4x256xi32>
    %c16_i32_552 = arith.constant 16 : i32
    %1001 = vector.broadcast %c16_i32_552 : i32 to vector<4x256xi32>
    %1002 = arith.cmpi slt, %1000, %1001 : vector<4x256xi32>
    %1003 = arith.andi %998, %1002 : vector<4x256xi1>
    %cst_553 = arith.constant 0.000000e+00 : f32
    %1004 = vector.broadcast %cst_553 : f32 to vector<4x256xf32>
    %1005 = arith.select %1003, %984, %1004 : vector<4x256xi1>, vector<4x256xf32>
    %c0_554 = arith.constant 0 : index
    %c0_555 = arith.constant 0 : index
    %1006 = vector.load %arg13[%c0_554, %c0_555] : memref<8x36xf32, #tpu.memory_space<vmem>>, vector<8x4xf32>
    %cst_556 = arith.constant dense<0.000000e+00> : vector<8x256xf32>
    %1007 = tpu.matmul %1006, %1005, %cst_556 {dimension_numbers = #tpu.dot_dimension_numbers<[1], [0], [0], [1], [0, 0, 1, 1], [], []>} : vector<8x4xf32>, vector<4x256xf32>, vector<8x256xf32> -> vector<8x256xf32>
    %1008 = arith.addf %983, %1007 : vector<8x256xf32>
    %c0_557 = arith.constant 0 : index
    %c1_558 = arith.constant 1 : index
    %1009 = vector.load %arg19[%c0_557, %c1_558] : memref<4x290xf32, #tpu.memory_space<vmem>>, vector<4x256xf32>
    %c-1_i32_559 = arith.constant -1 : i32
    %1010 = vector.broadcast %c-1_i32_559 : i32 to vector<4x256xi32>
    %1011 = arith.addi %980, %1010 : vector<4x256xi32>
    %c0_i32_560 = arith.constant 0 : i32
    %1012 = vector.broadcast %c0_i32_560 : i32 to vector<4x256xi32>
    %1013 = arith.cmpi sge, %1011, %1012 : vector<4x256xi32>
    %c-1_i32_561 = arith.constant -1 : i32
    %1014 = vector.broadcast %c-1_i32_561 : i32 to vector<4x256xi32>
    %1015 = arith.addi %980, %1014 : vector<4x256xi32>
    %c16_i32_562 = arith.constant 16 : i32
    %1016 = vector.broadcast %c16_i32_562 : i32 to vector<4x256xi32>
    %1017 = arith.cmpi slt, %1015, %1016 : vector<4x256xi32>
    %1018 = arith.andi %1013, %1017 : vector<4x256xi1>
    %c0_i32_563 = arith.constant 0 : i32
    %1019 = vector.broadcast %c0_i32_563 : i32 to vector<4x256xi32>
    %1020 = arith.addi %982, %1019 : vector<4x256xi32>
    %c0_i32_564 = arith.constant 0 : i32
    %1021 = vector.broadcast %c0_i32_564 : i32 to vector<4x256xi32>
    %1022 = arith.cmpi sge, %1020, %1021 : vector<4x256xi32>
    %1023 = arith.andi %1018, %1022 : vector<4x256xi1>
    %c0_i32_565 = arith.constant 0 : i32
    %1024 = vector.broadcast %c0_i32_565 : i32 to vector<4x256xi32>
    %1025 = arith.addi %982, %1024 : vector<4x256xi32>
    %c16_i32_566 = arith.constant 16 : i32
    %1026 = vector.broadcast %c16_i32_566 : i32 to vector<4x256xi32>
    %1027 = arith.cmpi slt, %1025, %1026 : vector<4x256xi32>
    %1028 = arith.andi %1023, %1027 : vector<4x256xi1>
    %cst_567 = arith.constant 0.000000e+00 : f32
    %1029 = vector.broadcast %cst_567 : f32 to vector<4x256xf32>
    %1030 = arith.select %1028, %1009, %1029 : vector<4x256xi1>, vector<4x256xf32>
    %c0_568 = arith.constant 0 : index
    %c4_569 = arith.constant 4 : index
    %1031 = vector.load %arg13[%c0_568, %c4_569] : memref<8x36xf32, #tpu.memory_space<vmem>>, vector<8x4xf32>
    %cst_570 = arith.constant dense<0.000000e+00> : vector<8x256xf32>
    %1032 = tpu.matmul %1031, %1030, %cst_570 {dimension_numbers = #tpu.dot_dimension_numbers<[1], [0], [0], [1], [0, 0, 1, 1], [], []>} : vector<8x4xf32>, vector<4x256xf32>, vector<8x256xf32> -> vector<8x256xf32>
    %1033 = arith.addf %1008, %1032 : vector<8x256xf32>
    %c0_571 = arith.constant 0 : index
    %c2_572 = arith.constant 2 : index
    %1034 = vector.load %arg19[%c0_571, %c2_572] : memref<4x290xf32, #tpu.memory_space<vmem>>, vector<4x256xf32>
    %c-1_i32_573 = arith.constant -1 : i32
    %1035 = vector.broadcast %c-1_i32_573 : i32 to vector<4x256xi32>
    %1036 = arith.addi %980, %1035 : vector<4x256xi32>
    %c0_i32_574 = arith.constant 0 : i32
    %1037 = vector.broadcast %c0_i32_574 : i32 to vector<4x256xi32>
    %1038 = arith.cmpi sge, %1036, %1037 : vector<4x256xi32>
    %c-1_i32_575 = arith.constant -1 : i32
    %1039 = vector.broadcast %c-1_i32_575 : i32 to vector<4x256xi32>
    %1040 = arith.addi %980, %1039 : vector<4x256xi32>
    %c16_i32_576 = arith.constant 16 : i32
    %1041 = vector.broadcast %c16_i32_576 : i32 to vector<4x256xi32>
    %1042 = arith.cmpi slt, %1040, %1041 : vector<4x256xi32>
    %1043 = arith.andi %1038, %1042 : vector<4x256xi1>
    %c1_i32_577 = arith.constant 1 : i32
    %1044 = vector.broadcast %c1_i32_577 : i32 to vector<4x256xi32>
    %1045 = arith.addi %982, %1044 : vector<4x256xi32>
    %c0_i32_578 = arith.constant 0 : i32
    %1046 = vector.broadcast %c0_i32_578 : i32 to vector<4x256xi32>
    %1047 = arith.cmpi sge, %1045, %1046 : vector<4x256xi32>
    %1048 = arith.andi %1043, %1047 : vector<4x256xi1>
    %c1_i32_579 = arith.constant 1 : i32
    %1049 = vector.broadcast %c1_i32_579 : i32 to vector<4x256xi32>
    %1050 = arith.addi %982, %1049 : vector<4x256xi32>
    %c16_i32_580 = arith.constant 16 : i32
    %1051 = vector.broadcast %c16_i32_580 : i32 to vector<4x256xi32>
    %1052 = arith.cmpi slt, %1050, %1051 : vector<4x256xi32>
    %1053 = arith.andi %1048, %1052 : vector<4x256xi1>
    %cst_581 = arith.constant 0.000000e+00 : f32
    %1054 = vector.broadcast %cst_581 : f32 to vector<4x256xf32>
    %1055 = arith.select %1053, %1034, %1054 : vector<4x256xi1>, vector<4x256xf32>
    %c0_582 = arith.constant 0 : index
    %c8_583 = arith.constant 8 : index
    %1056 = vector.load %arg13[%c0_582, %c8_583] : memref<8x36xf32, #tpu.memory_space<vmem>>, vector<8x4xf32>
    %cst_584 = arith.constant dense<0.000000e+00> : vector<8x256xf32>
    %1057 = tpu.matmul %1056, %1055, %cst_584 {dimension_numbers = #tpu.dot_dimension_numbers<[1], [0], [0], [1], [0, 0, 1, 1], [], []>} : vector<8x4xf32>, vector<4x256xf32>, vector<8x256xf32> -> vector<8x256xf32>
    %1058 = arith.addf %1033, %1057 : vector<8x256xf32>
    %c0_585 = arith.constant 0 : index
    %c16_586 = arith.constant 16 : index
    %1059 = vector.load %arg19[%c0_585, %c16_586] : memref<4x290xf32, #tpu.memory_space<vmem>>, vector<4x256xf32>
    %c0_i32_587 = arith.constant 0 : i32
    %1060 = vector.broadcast %c0_i32_587 : i32 to vector<4x256xi32>
    %1061 = arith.addi %980, %1060 : vector<4x256xi32>
    %c0_i32_588 = arith.constant 0 : i32
    %1062 = vector.broadcast %c0_i32_588 : i32 to vector<4x256xi32>
    %1063 = arith.cmpi sge, %1061, %1062 : vector<4x256xi32>
    %c0_i32_589 = arith.constant 0 : i32
    %1064 = vector.broadcast %c0_i32_589 : i32 to vector<4x256xi32>
    %1065 = arith.addi %980, %1064 : vector<4x256xi32>
    %c16_i32_590 = arith.constant 16 : i32
    %1066 = vector.broadcast %c16_i32_590 : i32 to vector<4x256xi32>
    %1067 = arith.cmpi slt, %1065, %1066 : vector<4x256xi32>
    %1068 = arith.andi %1063, %1067 : vector<4x256xi1>
    %c-1_i32_591 = arith.constant -1 : i32
    %1069 = vector.broadcast %c-1_i32_591 : i32 to vector<4x256xi32>
    %1070 = arith.addi %982, %1069 : vector<4x256xi32>
    %c0_i32_592 = arith.constant 0 : i32
    %1071 = vector.broadcast %c0_i32_592 : i32 to vector<4x256xi32>
    %1072 = arith.cmpi sge, %1070, %1071 : vector<4x256xi32>
    %1073 = arith.andi %1068, %1072 : vector<4x256xi1>
    %c-1_i32_593 = arith.constant -1 : i32
    %1074 = vector.broadcast %c-1_i32_593 : i32 to vector<4x256xi32>
    %1075 = arith.addi %982, %1074 : vector<4x256xi32>
    %c16_i32_594 = arith.constant 16 : i32
    %1076 = vector.broadcast %c16_i32_594 : i32 to vector<4x256xi32>
    %1077 = arith.cmpi slt, %1075, %1076 : vector<4x256xi32>
    %1078 = arith.andi %1073, %1077 : vector<4x256xi1>
    %cst_595 = arith.constant 0.000000e+00 : f32
    %1079 = vector.broadcast %cst_595 : f32 to vector<4x256xf32>
    %1080 = arith.select %1078, %1059, %1079 : vector<4x256xi1>, vector<4x256xf32>
    %c0_596 = arith.constant 0 : index
    %c12_597 = arith.constant 12 : index
    %1081 = vector.load %arg13[%c0_596, %c12_597] : memref<8x36xf32, #tpu.memory_space<vmem>>, vector<8x4xf32>
    %cst_598 = arith.constant dense<0.000000e+00> : vector<8x256xf32>
    %1082 = tpu.matmul %1081, %1080, %cst_598 {dimension_numbers = #tpu.dot_dimension_numbers<[1], [0], [0], [1], [0, 0, 1, 1], [], []>} : vector<8x4xf32>, vector<4x256xf32>, vector<8x256xf32> -> vector<8x256xf32>
    %1083 = arith.addf %1058, %1082 : vector<8x256xf32>
    %c0_599 = arith.constant 0 : index
    %c17_600 = arith.constant 17 : index
    %1084 = vector.load %arg19[%c0_599, %c17_600] : memref<4x290xf32, #tpu.memory_space<vmem>>, vector<4x256xf32>
    %c0_i32_601 = arith.constant 0 : i32
    %1085 = vector.broadcast %c0_i32_601 : i32 to vector<4x256xi32>
    %1086 = arith.addi %980, %1085 : vector<4x256xi32>
    %c0_i32_602 = arith.constant 0 : i32
    %1087 = vector.broadcast %c0_i32_602 : i32 to vector<4x256xi32>
    %1088 = arith.cmpi sge, %1086, %1087 : vector<4x256xi32>
    %c0_i32_603 = arith.constant 0 : i32
    %1089 = vector.broadcast %c0_i32_603 : i32 to vector<4x256xi32>
    %1090 = arith.addi %980, %1089 : vector<4x256xi32>
    %c16_i32_604 = arith.constant 16 : i32
    %1091 = vector.broadcast %c16_i32_604 : i32 to vector<4x256xi32>
    %1092 = arith.cmpi slt, %1090, %1091 : vector<4x256xi32>
    %1093 = arith.andi %1088, %1092 : vector<4x256xi1>
    %c0_i32_605 = arith.constant 0 : i32
    %1094 = vector.broadcast %c0_i32_605 : i32 to vector<4x256xi32>
    %1095 = arith.addi %982, %1094 : vector<4x256xi32>
    %c0_i32_606 = arith.constant 0 : i32
    %1096 = vector.broadcast %c0_i32_606 : i32 to vector<4x256xi32>
    %1097 = arith.cmpi sge, %1095, %1096 : vector<4x256xi32>
    %1098 = arith.andi %1093, %1097 : vector<4x256xi1>
    %c0_i32_607 = arith.constant 0 : i32
    %1099 = vector.broadcast %c0_i32_607 : i32 to vector<4x256xi32>
    %1100 = arith.addi %982, %1099 : vector<4x256xi32>
    %c16_i32_608 = arith.constant 16 : i32
    %1101 = vector.broadcast %c16_i32_608 : i32 to vector<4x256xi32>
    %1102 = arith.cmpi slt, %1100, %1101 : vector<4x256xi32>
    %1103 = arith.andi %1098, %1102 : vector<4x256xi1>
    %cst_609 = arith.constant 0.000000e+00 : f32
    %1104 = vector.broadcast %cst_609 : f32 to vector<4x256xf32>
    %1105 = arith.select %1103, %1084, %1104 : vector<4x256xi1>, vector<4x256xf32>
    %c0_610 = arith.constant 0 : index
    %c16_611 = arith.constant 16 : index
    %1106 = vector.load %arg13[%c0_610, %c16_611] : memref<8x36xf32, #tpu.memory_space<vmem>>, vector<8x4xf32>
    %cst_612 = arith.constant dense<0.000000e+00> : vector<8x256xf32>
    %1107 = tpu.matmul %1106, %1105, %cst_612 {dimension_numbers = #tpu.dot_dimension_numbers<[1], [0], [0], [1], [0, 0, 1, 1], [], []>} : vector<8x4xf32>, vector<4x256xf32>, vector<8x256xf32> -> vector<8x256xf32>
    %1108 = arith.addf %1083, %1107 : vector<8x256xf32>
    %c0_613 = arith.constant 0 : index
    %c18_614 = arith.constant 18 : index
    %1109 = vector.load %arg19[%c0_613, %c18_614] : memref<4x290xf32, #tpu.memory_space<vmem>>, vector<4x256xf32>
    %c0_i32_615 = arith.constant 0 : i32
    %1110 = vector.broadcast %c0_i32_615 : i32 to vector<4x256xi32>
    %1111 = arith.addi %980, %1110 : vector<4x256xi32>
    %c0_i32_616 = arith.constant 0 : i32
    %1112 = vector.broadcast %c0_i32_616 : i32 to vector<4x256xi32>
    %1113 = arith.cmpi sge, %1111, %1112 : vector<4x256xi32>
    %c0_i32_617 = arith.constant 0 : i32
    %1114 = vector.broadcast %c0_i32_617 : i32 to vector<4x256xi32>
    %1115 = arith.addi %980, %1114 : vector<4x256xi32>
    %c16_i32_618 = arith.constant 16 : i32
    %1116 = vector.broadcast %c16_i32_618 : i32 to vector<4x256xi32>
    %1117 = arith.cmpi slt, %1115, %1116 : vector<4x256xi32>
    %1118 = arith.andi %1113, %1117 : vector<4x256xi1>
    %c1_i32_619 = arith.constant 1 : i32
    %1119 = vector.broadcast %c1_i32_619 : i32 to vector<4x256xi32>
    %1120 = arith.addi %982, %1119 : vector<4x256xi32>
    %c0_i32_620 = arith.constant 0 : i32
    %1121 = vector.broadcast %c0_i32_620 : i32 to vector<4x256xi32>
    %1122 = arith.cmpi sge, %1120, %1121 : vector<4x256xi32>
    %1123 = arith.andi %1118, %1122 : vector<4x256xi1>
    %c1_i32_621 = arith.constant 1 : i32
    %1124 = vector.broadcast %c1_i32_621 : i32 to vector<4x256xi32>
    %1125 = arith.addi %982, %1124 : vector<4x256xi32>
    %c16_i32_622 = arith.constant 16 : i32
    %1126 = vector.broadcast %c16_i32_622 : i32 to vector<4x256xi32>
    %1127 = arith.cmpi slt, %1125, %1126 : vector<4x256xi32>
    %1128 = arith.andi %1123, %1127 : vector<4x256xi1>
    %cst_623 = arith.constant 0.000000e+00 : f32
    %1129 = vector.broadcast %cst_623 : f32 to vector<4x256xf32>
    %1130 = arith.select %1128, %1109, %1129 : vector<4x256xi1>, vector<4x256xf32>
    %c0_624 = arith.constant 0 : index
    %c20_625 = arith.constant 20 : index
    %1131 = vector.load %arg13[%c0_624, %c20_625] : memref<8x36xf32, #tpu.memory_space<vmem>>, vector<8x4xf32>
    %cst_626 = arith.constant dense<0.000000e+00> : vector<8x256xf32>
    %1132 = tpu.matmul %1131, %1130, %cst_626 {dimension_numbers = #tpu.dot_dimension_numbers<[1], [0], [0], [1], [0, 0, 1, 1], [], []>} : vector<8x4xf32>, vector<4x256xf32>, vector<8x256xf32> -> vector<8x256xf32>
    %1133 = arith.addf %1108, %1132 : vector<8x256xf32>
    %c0_627 = arith.constant 0 : index
    %c32_628 = arith.constant 32 : index
    %1134 = vector.load %arg19[%c0_627, %c32_628] : memref<4x290xf32, #tpu.memory_space<vmem>>, vector<4x256xf32>
    %c1_i32_629 = arith.constant 1 : i32
    %1135 = vector.broadcast %c1_i32_629 : i32 to vector<4x256xi32>
    %1136 = arith.addi %980, %1135 : vector<4x256xi32>
    %c0_i32_630 = arith.constant 0 : i32
    %1137 = vector.broadcast %c0_i32_630 : i32 to vector<4x256xi32>
    %1138 = arith.cmpi sge, %1136, %1137 : vector<4x256xi32>
    %c1_i32_631 = arith.constant 1 : i32
    %1139 = vector.broadcast %c1_i32_631 : i32 to vector<4x256xi32>
    %1140 = arith.addi %980, %1139 : vector<4x256xi32>
    %c16_i32_632 = arith.constant 16 : i32
    %1141 = vector.broadcast %c16_i32_632 : i32 to vector<4x256xi32>
    %1142 = arith.cmpi slt, %1140, %1141 : vector<4x256xi32>
    %1143 = arith.andi %1138, %1142 : vector<4x256xi1>
    %c-1_i32_633 = arith.constant -1 : i32
    %1144 = vector.broadcast %c-1_i32_633 : i32 to vector<4x256xi32>
    %1145 = arith.addi %982, %1144 : vector<4x256xi32>
    %c0_i32_634 = arith.constant 0 : i32
    %1146 = vector.broadcast %c0_i32_634 : i32 to vector<4x256xi32>
    %1147 = arith.cmpi sge, %1145, %1146 : vector<4x256xi32>
    %1148 = arith.andi %1143, %1147 : vector<4x256xi1>
    %c-1_i32_635 = arith.constant -1 : i32
    %1149 = vector.broadcast %c-1_i32_635 : i32 to vector<4x256xi32>
    %1150 = arith.addi %982, %1149 : vector<4x256xi32>
    %c16_i32_636 = arith.constant 16 : i32
    %1151 = vector.broadcast %c16_i32_636 : i32 to vector<4x256xi32>
    %1152 = arith.cmpi slt, %1150, %1151 : vector<4x256xi32>
    %1153 = arith.andi %1148, %1152 : vector<4x256xi1>
    %cst_637 = arith.constant 0.000000e+00 : f32
    %1154 = vector.broadcast %cst_637 : f32 to vector<4x256xf32>
    %1155 = arith.select %1153, %1134, %1154 : vector<4x256xi1>, vector<4x256xf32>
    %c0_638 = arith.constant 0 : index
    %c24_639 = arith.constant 24 : index
    %1156 = vector.load %arg13[%c0_638, %c24_639] : memref<8x36xf32, #tpu.memory_space<vmem>>, vector<8x4xf32>
    %cst_640 = arith.constant dense<0.000000e+00> : vector<8x256xf32>
    %1157 = tpu.matmul %1156, %1155, %cst_640 {dimension_numbers = #tpu.dot_dimension_numbers<[1], [0], [0], [1], [0, 0, 1, 1], [], []>} : vector<8x4xf32>, vector<4x256xf32>, vector<8x256xf32> -> vector<8x256xf32>
    %1158 = arith.addf %1133, %1157 : vector<8x256xf32>
    %c0_641 = arith.constant 0 : index
    %c33_642 = arith.constant 33 : index
    %1159 = vector.load %arg19[%c0_641, %c33_642] : memref<4x290xf32, #tpu.memory_space<vmem>>, vector<4x256xf32>
    %c1_i32_643 = arith.constant 1 : i32
    %1160 = vector.broadcast %c1_i32_643 : i32 to vector<4x256xi32>
    %1161 = arith.addi %980, %1160 : vector<4x256xi32>
    %c0_i32_644 = arith.constant 0 : i32
    %1162 = vector.broadcast %c0_i32_644 : i32 to vector<4x256xi32>
    %1163 = arith.cmpi sge, %1161, %1162 : vector<4x256xi32>
    %c1_i32_645 = arith.constant 1 : i32
    %1164 = vector.broadcast %c1_i32_645 : i32 to vector<4x256xi32>
    %1165 = arith.addi %980, %1164 : vector<4x256xi32>
    %c16_i32_646 = arith.constant 16 : i32
    %1166 = vector.broadcast %c16_i32_646 : i32 to vector<4x256xi32>
    %1167 = arith.cmpi slt, %1165, %1166 : vector<4x256xi32>
    %1168 = arith.andi %1163, %1167 : vector<4x256xi1>
    %c0_i32_647 = arith.constant 0 : i32
    %1169 = vector.broadcast %c0_i32_647 : i32 to vector<4x256xi32>
    %1170 = arith.addi %982, %1169 : vector<4x256xi32>
    %c0_i32_648 = arith.constant 0 : i32
    %1171 = vector.broadcast %c0_i32_648 : i32 to vector<4x256xi32>
    %1172 = arith.cmpi sge, %1170, %1171 : vector<4x256xi32>
    %1173 = arith.andi %1168, %1172 : vector<4x256xi1>
    %c0_i32_649 = arith.constant 0 : i32
    %1174 = vector.broadcast %c0_i32_649 : i32 to vector<4x256xi32>
    %1175 = arith.addi %982, %1174 : vector<4x256xi32>
    %c16_i32_650 = arith.constant 16 : i32
    %1176 = vector.broadcast %c16_i32_650 : i32 to vector<4x256xi32>
    %1177 = arith.cmpi slt, %1175, %1176 : vector<4x256xi32>
    %1178 = arith.andi %1173, %1177 : vector<4x256xi1>
    %cst_651 = arith.constant 0.000000e+00 : f32
    %1179 = vector.broadcast %cst_651 : f32 to vector<4x256xf32>
    %1180 = arith.select %1178, %1159, %1179 : vector<4x256xi1>, vector<4x256xf32>
    %c0_652 = arith.constant 0 : index
    %c28_653 = arith.constant 28 : index
    %1181 = vector.load %arg13[%c0_652, %c28_653] : memref<8x36xf32, #tpu.memory_space<vmem>>, vector<8x4xf32>
    %cst_654 = arith.constant dense<0.000000e+00> : vector<8x256xf32>
    %1182 = tpu.matmul %1181, %1180, %cst_654 {dimension_numbers = #tpu.dot_dimension_numbers<[1], [0], [0], [1], [0, 0, 1, 1], [], []>} : vector<8x4xf32>, vector<4x256xf32>, vector<8x256xf32> -> vector<8x256xf32>
    %1183 = arith.addf %1158, %1182 : vector<8x256xf32>
    %c0_655 = arith.constant 0 : index
    %c34_656 = arith.constant 34 : index
    %1184 = vector.load %arg19[%c0_655, %c34_656] : memref<4x290xf32, #tpu.memory_space<vmem>>, vector<4x256xf32>
    %c1_i32_657 = arith.constant 1 : i32
    %1185 = vector.broadcast %c1_i32_657 : i32 to vector<4x256xi32>
    %1186 = arith.addi %980, %1185 : vector<4x256xi32>
    %c0_i32_658 = arith.constant 0 : i32
    %1187 = vector.broadcast %c0_i32_658 : i32 to vector<4x256xi32>
    %1188 = arith.cmpi sge, %1186, %1187 : vector<4x256xi32>
    %c1_i32_659 = arith.constant 1 : i32
    %1189 = vector.broadcast %c1_i32_659 : i32 to vector<4x256xi32>
    %1190 = arith.addi %980, %1189 : vector<4x256xi32>
    %c16_i32_660 = arith.constant 16 : i32
    %1191 = vector.broadcast %c16_i32_660 : i32 to vector<4x256xi32>
    %1192 = arith.cmpi slt, %1190, %1191 : vector<4x256xi32>
    %1193 = arith.andi %1188, %1192 : vector<4x256xi1>
    %c1_i32_661 = arith.constant 1 : i32
    %1194 = vector.broadcast %c1_i32_661 : i32 to vector<4x256xi32>
    %1195 = arith.addi %982, %1194 : vector<4x256xi32>
    %c0_i32_662 = arith.constant 0 : i32
    %1196 = vector.broadcast %c0_i32_662 : i32 to vector<4x256xi32>
    %1197 = arith.cmpi sge, %1195, %1196 : vector<4x256xi32>
    %1198 = arith.andi %1193, %1197 : vector<4x256xi1>
    %c1_i32_663 = arith.constant 1 : i32
    %1199 = vector.broadcast %c1_i32_663 : i32 to vector<4x256xi32>
    %1200 = arith.addi %982, %1199 : vector<4x256xi32>
    %c16_i32_664 = arith.constant 16 : i32
    %1201 = vector.broadcast %c16_i32_664 : i32 to vector<4x256xi32>
    %1202 = arith.cmpi slt, %1200, %1201 : vector<4x256xi32>
    %1203 = arith.andi %1198, %1202 : vector<4x256xi1>
    %cst_665 = arith.constant 0.000000e+00 : f32
    %1204 = vector.broadcast %cst_665 : f32 to vector<4x256xf32>
    %1205 = arith.select %1203, %1184, %1204 : vector<4x256xi1>, vector<4x256xf32>
    %c0_666 = arith.constant 0 : index
    %c32_667 = arith.constant 32 : index
    %1206 = vector.load %arg13[%c0_666, %c32_667] : memref<8x36xf32, #tpu.memory_space<vmem>>, vector<8x4xf32>
    %cst_668 = arith.constant dense<0.000000e+00> : vector<8x256xf32>
    %1207 = tpu.matmul %1206, %1205, %cst_668 {dimension_numbers = #tpu.dot_dimension_numbers<[1], [0], [0], [1], [0, 0, 1, 1], [], []>} : vector<8x4xf32>, vector<4x256xf32>, vector<8x256xf32> -> vector<8x256xf32>
    %1208 = arith.addf %1183, %1207 : vector<8x256xf32>
    %c0_669 = arith.constant 0 : index
    %c0_670 = arith.constant 0 : index
    %1209 = vector.load %arg14[%c0_669, %c0_670] : memref<8x1xf32, #tpu.memory_space<vmem>>, vector<8x1xf32>
    %1210 = vector.broadcast %1209 : vector<8x1xf32> to vector<8x256xf32>
    %1211 = arith.addf %1208, %1210 : vector<8x256xf32>
    %c0_671 = arith.constant 0 : index
    %c0_672 = arith.constant 0 : index
    %1212 = vector.load %arg16[%c0_671, %c0_672] : memref<256x64xf32, #tpu.memory_space<vmem>>, vector<256x64xf32>
    %cst_673 = arith.constant dense<0.000000e+00> : vector<8x64xf32>
    %1213 = tpu.matmul %1211, %1212, %cst_673 {dimension_numbers = #tpu.dot_dimension_numbers<[1], [0], [0], [1], [0, 0, 1, 1], [], []>} : vector<8x256xf32>, vector<256x64xf32>, vector<8x64xf32> -> vector<8x64xf32>
    %1214 = arith.addf %1213, %961 : vector<8x64xf32>
    %cst_674 = arith.constant 0.000000e+00 : f32
    %1215 = vector.broadcast %cst_674 : f32 to vector<8x64xf32>
    %1216 = arith.maximumf %1214, %1215 : vector<8x64xf32>
    %c0_675 = arith.constant 0 : index
    %c0_676 = arith.constant 0 : index
    %c0_677 = arith.constant 0 : index
    %1217 = vector.load %arg18[%c0_675, %c0_676, %c0_677] : memref<1x8x64xf32, #tpu.memory_space<vmem>>, vector<1x8x64xf32>
    %1218 = vector.shape_cast %1217 : vector<1x8x64xf32> to vector<8x64xf32>
    %1219 = vector.shape_cast %1216 : vector<8x64xf32> to vector<1x8x64xf32>
    tpu.vector_store %arg18[%c0_675, %c0_676, %c0_677], %1219 {strides = array<i32>} : memref<1x8x64xf32, #tpu.memory_space<vmem>>, vector<1x8x64xf32>,
    return
  }
  func.func @transform_0(%arg0: i32) -> (i32, i32, i32) {
    %c0_i32 = arith.constant 0 : i32
    %c0_i32_0 = arith.constant 0 : i32
    %c0_i32_1 = arith.constant 0 : i32
    return %arg0, %c0_i32, %c0_i32_0 : i32, i32, i32
  }
  func.func @transform_1(%arg0: i32) -> (i32, i32, i32) {
    %c0_i32 = arith.constant 0 : i32
    %c0_i32_0 = arith.constant 0 : i32
    %c0_i32_1 = arith.constant 0 : i32
    return %arg0, %c0_i32, %c0_i32_0 : i32, i32, i32
  }
  func.func @transform_2(%arg0: i32) -> (i32, i32) {
    %c0_i32 = arith.constant 0 : i32
    %c0_i32_0 = arith.constant 0 : i32
    %c0_i32_1 = arith.constant 0 : i32
    return %c0_i32, %c0_i32_0 : i32, i32
  }
  func.func @transform_3(%arg0: i32) -> (i32, i32) {
    %c0_i32 = arith.constant 0 : i32
    %c0_i32_0 = arith.constant 0 : i32
    %c0_i32_1 = arith.constant 0 : i32
    return %c0_i32, %c0_i32_0 : i32, i32
  }
  func.func @transform_4(%arg0: i32) -> (i32, i32) {
    %c0_i32 = arith.constant 0 : i32
    %c0_i32_0 = arith.constant 0 : i32
    %c0_i32_1 = arith.constant 0 : i32
    return %c0_i32, %c0_i32_0 : i32, i32
  }
  func.func @transform_5(%arg0: i32) -> (i32, i32) {
    %c0_i32 = arith.constant 0 : i32
    %c0_i32_0 = arith.constant 0 : i32
    %c0_i32_1 = arith.constant 0 : i32
    return %c0_i32, %c0_i32_0 : i32, i32
  }
  func.func @transform_6(%arg0: i32) -> (i32, i32) {
    %c0_i32 = arith.constant 0 : i32
    %c0_i32_0 = arith.constant 0 : i32
    %c0_i32_1 = arith.constant 0 : i32
    return %c0_i32, %c0_i32_0 : i32, i32
  }
  func.func @transform_7(%arg0: i32) -> (i32, i32) {
    %c0_i32 = arith.constant 0 : i32
    %c0_i32_0 = arith.constant 0 : i32
    %c0_i32_1 = arith.constant 0 : i32
    return %c0_i32, %c0_i32_0 : i32, i32
  }
  func.func @transform_8(%arg0: i32) -> (i32, i32) {
    %c0_i32 = arith.constant 0 : i32
    %c0_i32_0 = arith.constant 0 : i32
    %c0_i32_1 = arith.constant 0 : i32
    return %c0_i32, %c0_i32_0 : i32, i32
  }
  func.func @transform_9(%arg0: i32) -> (i32, i32) {
    %c0_i32 = arith.constant 0 : i32
    %c0_i32_0 = arith.constant 0 : i32
    %c0_i32_1 = arith.constant 0 : i32
    return %c0_i32, %c0_i32_0 : i32, i32
  }
  func.func @transform_10(%arg0: i32) -> (i32, i32) {
    %c0_i32 = arith.constant 0 : i32
    %c0_i32_0 = arith.constant 0 : i32
    %c0_i32_1 = arith.constant 0 : i32
    return %c0_i32, %c0_i32_0 : i32, i32
  }
  func.func @transform_11(%arg0: i32) -> (i32, i32) {
    %c0_i32 = arith.constant 0 : i32
    %c0_i32_0 = arith.constant 0 : i32
    %c0_i32_1 = arith.constant 0 : i32
    return %c0_i32, %c0_i32_0 : i32, i32
  }
  func.func @transform_12(%arg0: i32) -> (i32, i32) {
    %c0_i32 = arith.constant 0 : i32
    %c0_i32_0 = arith.constant 0 : i32
    %c0_i32_1 = arith.constant 0 : i32
    return %c0_i32, %c0_i32_0 : i32, i32
  }
  func.func @transform_13(%arg0: i32) -> (i32, i32) {
    %c0_i32 = arith.constant 0 : i32
    %c0_i32_0 = arith.constant 0 : i32
    %c0_i32_1 = arith.constant 0 : i32
    return %c0_i32, %c0_i32_0 : i32, i32
  }
  func.func @transform_14(%arg0: i32) -> (i32, i32) {
    %c0_i32 = arith.constant 0 : i32
    %c0_i32_0 = arith.constant 0 : i32
    %c0_i32_1 = arith.constant 0 : i32
    return %c0_i32, %c0_i32_0 : i32, i32
  }
  func.func @transform_15(%arg0: i32) -> (i32, i32) {
    %c0_i32 = arith.constant 0 : i32
    %c0_i32_0 = arith.constant 0 : i32
    %c0_i32_1 = arith.constant 0 : i32
    return %c0_i32, %c0_i32_0 : i32, i32
  }
  func.func @transform_16(%arg0: i32) -> (i32, i32, i32) {
    %c0_i32 = arith.constant 0 : i32
    %c0_i32_0 = arith.constant 0 : i32
    %c0_i32_1 = arith.constant 0 : i32
    return %arg0, %c0_i32, %c0_i32_0 : i32, i32, i32
  }
  func.func @transform_17(%arg0: i32) -> (i32, i32, i32) {
    %c0_i32 = arith.constant 0 : i32
    %c0_i32_0 = arith.constant 0 : i32
    %c0_i32_1 = arith.constant 0 : i32
    return %arg0, %c0_i32, %c0_i32_0 : i32, i32, i32
  }
}

</mosaic_0001>

<llo_original>
// kernel: hr_module_forward.1
$region0: #{hr_module_forward.1}
  #allocation0 [shape = 'u32[]', space=smem, size = 0x4, offset = 0x4, fixed_abs, tag = 'smem constant byte address 0x4 - core index']
  #allocation1 [shape = 'u32[144,128]{1,0:T(1,128)}', space=vmem, size = 0x12000, scoped, tag = 'internal scratch']
  #allocation2 [shape = 'f32[4,290]{1,0:T(4,128)}', space=vmem, size = 0x1800, scoped, tag = 'scratch operand']
  #allocation3 [shape = 'f32[8,82]{1,0:T(8,128)}', space=vmem, size = 0x1000, scoped, tag = 'scratch operand']
  %s0 = inlined_call_operand.vmem [shape: f32[2,4,256], index: 0, kind: input, shape index: {}]
  %s1 = inlined_call_operand.vmem [shape: f32[2,8,64], index: 1, kind: input, shape index: {}]
  %s2 = inlined_call_operand.vmem [shape: f32[4,36], index: 2, kind: input, shape index: {}]
  %s3 = inlined_call_operand.vmem [shape: f32[4,1], index: 3, kind: input, shape index: {}]
  %s4 = inlined_call_operand.vmem [shape: f32[4,36], index: 4, kind: input, shape index: {}]
  %s5 = inlined_call_operand.vmem [shape: f32[4,1], index: 5, kind: input, shape index: {}]
  %s6 = inlined_call_operand.vmem [shape: f32[8,72], index: 6, kind: input, shape index: {}]
  %s7 = inlined_call_operand.vmem [shape: f32[8,1], index: 7, kind: input, shape index: {}]
  %s8 = inlined_call_operand.vmem [shape: f32[8,72], index: 8, kind: input, shape index: {}]
  %s9 = inlined_call_operand.vmem [shape: f32[8,1], index: 9, kind: input, shape index: {}]
  %s10 = inlined_call_operand.vmem [shape: f32[4,8], index: 10, kind: input, shape index: {}]
  %s11 = inlined_call_operand.vmem [shape: f32[4,1], index: 11, kind: input, shape index: {}]
  %s12 = inlined_call_operand.vmem [shape: f32[8,36], index: 12, kind: input, shape index: {}]
  %s13 = inlined_call_operand.vmem [shape: f32[8,1], index: 13, kind: input, shape index: {}]
  %s14 = inlined_call_operand.vmem [shape: f32[64,256], index: 14, kind: input, shape index: {}]
  %s15 = inlined_call_operand.vmem [shape: f32[256,64], index: 15, kind: input, shape index: {}]
  %s16 = inlined_call_operand.vmem [shape: f32[2,4,256], index: 16, kind: output, shape index: {0}]
  %s17 = inlined_call_operand.vmem [shape: f32[2,8,64], index: 17, kind: output, shape index: {1}]
  %18 = xla_tuple %s16, %s17
  %s19 = sld [smem:[#allocation0]]
  $region105: #{hr_module_forward.1} parent=0
    _
  %s21 = ssub.s32 1, %s19
  %s22 = scalar_select 0, %s21, %s19
  loop: start=0, step=1, limit=4
  $region2: #{hr_module_forward.1} parent=0 // loop_pre_header
    _
  $region3: #{hr_module_forward.1} parent=0 // loop_header
    %s24 = sphi 0, %s28
    %p25 = scmp.ge.s32.totalorder %s24, 4
    %s34 = sphi 0, %s36
    %s37 = sphi 0, %s34
    %s38 = sphi 0, %s37
    %s54 = sphi 0, %s38
    %s60 = sphi 0, %s62
    %s63 = sphi 0, %s60
    %s64 = sphi 0, %s63
    %s80 = sphi 0, %s64
    %s84 = sphi 0, %s84
    %s86 = sphi 0, %s84
    %s87 = sphi 0, %s86
    %s101 = sphi 0, %s87
    %s105 = sphi 0, %s105
    %s107 = sphi 0, %s105
    %s108 = sphi 0, %s107
    %s122 = sphi 0, %s108
    %s126 = sphi 0, %s126
    %s128 = sphi 0, %s126
    %s129 = sphi 0, %s128
    %s143 = sphi 0, %s129
    %s147 = sphi 0, %s147
    %s149 = sphi 0, %s147
    %s150 = sphi 0, %s149
    %s164 = sphi 0, %s150
    %s168 = sphi 0, %s168
    %s170 = sphi 0, %s168
    %s171 = sphi 0, %s170
    %s185 = sphi 0, %s171
    %s189 = sphi 0, %s189
    %s191 = sphi 0, %s189
    %s192 = sphi 0, %s191
    %s206 = sphi 0, %s192
    %s210 = sphi 0, %s210
    %s212 = sphi 0, %s210
    %s213 = sphi 0, %s212
    %s227 = sphi 0, %s213
    %s231 = sphi 0, %s231
    %s233 = sphi 0, %s231
    %s234 = sphi 0, %s233
    %s248 = sphi 0, %s234
    %s252 = sphi 0, %s252
    %s254 = sphi 0, %s252
    %s255 = sphi 0, %s254
    %s269 = sphi 0, %s255
    %s273 = sphi 0, %s273
    %s275 = sphi 0, %s273
    %s276 = sphi 0, %s275
    %s290 = sphi 0, %s276
    %s294 = sphi 0, %s294
    %s296 = sphi 0, %s294
    %s297 = sphi 0, %s296
    %s311 = sphi 0, %s297
    %s315 = sphi 0, %s315
    %s317 = sphi 0, %s315
    %s318 = sphi 0, %s317
    %s332 = sphi 0, %s318
    %s336 = sphi 0, %s336
    %s338 = sphi 0, %s336
    %s339 = sphi 0, %s338
    %s353 = sphi 0, %s339
    %s357 = sphi 0, %s357
    %s359 = sphi 0, %s357
    %s360 = sphi 0, %s359
    %s374 = sphi 0, %s360
    %s380 = sphi 0, %s382
    %s383 = sphi 0, %s380
    %s384 = sphi 0, %s383
    %s400 = sphi 0, %s384
    %s406 = sphi 0, %s408
    %s409 = sphi 0, %s406
    %s410 = sphi 0, %s409
    %s426 = sphi 0, %s410
  $region4: #{hr_module_forward.1} parent=0 // loop_header_branch
    %27 = sbr.rel (%p25) target = $region8
  $region5: #{hr_module_forward.1} parent=0 // loop_body
    %s29 = ssub.s32 %s24, 1
    %s30 = ssub.s32 %s24, 2
    %s31 = sadd.s32 %s24, 1
    %s32 = ssub.s32 %s24, %s31
    %p33 = scmp.eq.s32.totalorder %s32, 0
    %s35 = sadd.s32 %s34, 1
    %s36 = scalar_select %p33, %s34, %s35
    %p39 = pneg %p33
    %p40 = scmp.eq.s32.totalorder %s24, 1
    %p41 = por %p39, %p40
    %p42 = scmp.ne.s32.totalorder %s34, %s37
    %p43 = scmp.eq.s32.totalorder %s24, 0
    %p44 = por %p42, %p43
    %p45 = scmp.ne.s32.totalorder %s34, %s37
    %p46 = scmp.eq.s32.totalorder %s29, 1
    %p47 = por %p45, %p46
    %p48 = scmp.ne.s32.totalorder %s37, %s38
    %p49 = scmp.eq.s32.totalorder %s29, 0
    %p50 = por %p48, %p49
    %p51 = scmp.ne.s32.totalorder %s37, %s38
    %p52 = scmp.eq.s32.totalorder %s30, 1
    %p53 = por %p51, %p52
    %p55 = scmp.ne.s32.totalorder %s38, %s54
    %p56 = scmp.eq.s32.totalorder %s30, 0
    %p57 = por %p55, %p56
    %s58 = ssub.s32 %s24, %s31
    %p59 = scmp.eq.s32.totalorder %s58, 0
    %s61 = sadd.s32 %s60, 1
    %s62 = scalar_select %p59, %s60, %s61
    %p65 = pneg %p59
    %p66 = scmp.eq.s32.totalorder %s24, 1
    %p67 = por %p65, %p66
    %p68 = scmp.ne.s32.totalorder %s60, %s63
    %p69 = scmp.eq.s32.totalorder %s24, 0
    %p70 = por %p68, %p69
    %p71 = scmp.ne.s32.totalorder %s60, %s63
    %p72 = scmp.eq.s32.totalorder %s29, 1
    %p73 = por %p71, %p72
    %p74 = scmp.ne.s32.totalorder %s63, %s64
    %p75 = scmp.eq.s32.totalorder %s29, 0
    %p76 = por %p74, %p75
    %p77 = scmp.ne.s32.totalorder %s63, %s64
    %p78 = scmp.eq.s32.totalorder %s30, 1
    %p79 = por %p77, %p78
    %p81 = scmp.ne.s32.totalorder %s64, %s80
    %p82 = scmp.eq.s32.totalorder %s30, 0
    %p83 = por %p81, %p82
    %s85 = sadd.s32 %s84, 1
    %p88 = scmp.eq.s32.totalorder %s24, 1
    %p89 = scmp.ne.s32.totalorder %s84, %s86
    %p90 = scmp.eq.s32.totalorder %s24, 0
    %p91 = por %p89, %p90
    %p92 = scmp.ne.s32.totalorder %s84, %s86
    %p93 = scmp.eq.s32.totalorder %s29, 1
    %p94 = por %p92, %p93
    %p95 = scmp.ne.s32.totalorder %s86, %s87
    %p96 = scmp.eq.s32.totalorder %s29, 0
    %p97 = por %p95, %p96
    %p98 = scmp.ne.s32.totalorder %s86, %s87
    %p99 = scmp.eq.s32.totalorder %s30, 1
    %p100 = por %p98, %p99
    %p102 = scmp.ne.s32.totalorder %s87, %s101
    %p103 = scmp.eq.s32.totalorder %s30, 0
    %p104 = por %p102, %p103
    %s106 = sadd.s32 %s105, 1
    %p109 = scmp.eq.s32.totalorder %s24, 1
    %p110 = scmp.ne.s32.totalorder %s105, %s107
    %p111 = scmp.eq.s32.totalorder %s24, 0
    %p112 = por %p110, %p111
    %p113 = scmp.ne.s32.totalorder %s105, %s107
    %p114 = scmp.eq.s32.totalorder %s29, 1
    %p115 = por %p113, %p114
    %p116 = scmp.ne.s32.totalorder %s107, %s108
    %p117 = scmp.eq.s32.totalorder %s29, 0
    %p118 = por %p116, %p117
    %p119 = scmp.ne.s32.totalorder %s107, %s108
    %p120 = scmp.eq.s32.totalorder %s30, 1
    %p121 = por %p119, %p120
    %p123 = scmp.ne.s32.totalorder %s108, %s122
    %p124 = scmp.eq.s32.totalorder %s30, 0
    %p125 = por %p123, %p124
    %s127 = sadd.s32 %s126, 1
    %p130 = scmp.eq.s32.totalorder %s24, 1
    %p131 = scmp.ne.s32.totalorder %s126, %s128
    %p132 = scmp.eq.s32.totalorder %s24, 0
    %p133 = por %p131, %p132
    %p134 = scmp.ne.s32.totalorder %s126, %s128
    %p135 = scmp.eq.s32.totalorder %s29, 1
    %p136 = por %p134, %p135
    %p137 = scmp.ne.s32.totalorder %s128, %s129
    %p138 = scmp.eq.s32.totalorder %s29, 0
    %p139 = por %p137, %p138
    %p140 = scmp.ne.s32.totalorder %s128, %s129
    %p141 = scmp.eq.s32.totalorder %s30, 1
    %p142 = por %p140, %p141
    %p144 = scmp.ne.s32.totalorder %s129, %s143
    %p145 = scmp.eq.s32.totalorder %s30, 0
    %p146 = por %p144, %p145
    %s148 = sadd.s32 %s147, 1
    %p151 = scmp.eq.s32.totalorder %s24, 1
    %p152 = scmp.ne.s32.totalorder %s147, %s149
    %p153 = scmp.eq.s32.totalorder %s24, 0
    %p154 = por %p152, %p153
    %p155 = scmp.ne.s32.totalorder %s147, %s149
    %p156 = scmp.eq.s32.totalorder %s29, 1
    %p157 = por %p155, %p156
    %p158 = scmp.ne.s32.totalorder %s149, %s150
    %p159 = scmp.eq.s32.totalorder %s29, 0
    %p160 = por %p158, %p159
    %p161 = scmp.ne.s32.totalorder %s149, %s150
    %p162 = scmp.eq.s32.totalorder %s30, 1
    %p163 = por %p161, %p162
    %p165 = scmp.ne.s32.totalorder %s150, %s164
    %p166 = scmp.eq.s32.totalorder %s30, 0
    %p167 = por %p165, %p166
    %s169 = sadd.s32 %s168, 1
    %p172 = scmp.eq.s32.totalorder %s24, 1
    %p173 = scmp.ne.s32.totalorder %s168, %s170
    %p174 = scmp.eq.s32.totalorder %s24, 0
    %p175 = por %p173, %p174
    %p176 = scmp.ne.s32.totalorder %s168, %s170
    %p177 = scmp.eq.s32.totalorder %s29, 1
    %p178 = por %p176, %p177
    %p179 = scmp.ne.s32.totalorder %s170, %s171
    %p180 = scmp.eq.s32.totalorder %s29, 0
    %p181 = por %p179, %p180
    %p182 = scmp.ne.s32.totalorder %s170, %s171
    %p183 = scmp.eq.s32.totalorder %s30, 1
    %p184 = por %p182, %p183
    %p186 = scmp.ne.s32.totalorder %s171, %s185
    %p187 = scmp.eq.s32.totalorder %s30, 0
    %p188 = por %p186, %p187
    %s190 = sadd.s32 %s189, 1
    %p193 = scmp.eq.s32.totalorder %s24, 1
    %p194 = scmp.ne.s32.totalorder %s189, %s191
    %p195 = scmp.eq.s32.totalorder %s24, 0
    %p196 = por %p194, %p195
    %p197 = scmp.ne.s32.totalorder %s189, %s191
    %p198 = scmp.eq.s32.totalorder %s29, 1
    %p199 = por %p197, %p198
    %p200 = scmp.ne.s32.totalorder %s191, %s192
    %p201 = scmp.eq.s32.totalorder %s29, 0
    %p202 = por %p200, %p201
    %p203 = scmp.ne.s32.totalorder %s191, %s192
    %p204 = scmp.eq.s32.totalorder %s30, 1
    %p205 = por %p203, %p204
    %p207 = scmp.ne.s32.totalorder %s192, %s206
    %p208 = scmp.eq.s32.totalorder %s30, 0
    %p209 = por %p207, %p208
    %s211 = sadd.s32 %s210, 1
    %p214 = scmp.eq.s32.totalorder %s24, 1
    %p215 = scmp.ne.s32.totalorder %s210, %s212
    %p216 = scmp.eq.s32.totalorder %s24, 0
    %p217 = por %p215, %p216
    %p218 = scmp.ne.s32.totalorder %s210, %s212
    %p219 = scmp.eq.s32.totalorder %s29, 1
    %p220 = por %p218, %p219
    %p221 = scmp.ne.s32.totalorder %s212, %s213
    %p222 = scmp.eq.s32.totalorder %s29, 0
    %p223 = por %p221, %p222
    %p224 = scmp.ne.s32.totalorder %s212, %s213
    %p225 = scmp.eq.s32.totalorder %s30, 1
    %p226 = por %p224, %p225
    %p228 = scmp.ne.s32.totalorder %s213, %s227
    %p229 = scmp.eq.s32.totalorder %s30, 0
    %p230 = por %p228, %p229
    %s232 = sadd.s32 %s231, 1
    %p235 = scmp.eq.s32.totalorder %s24, 1
    %p236 = scmp.ne.s32.totalorder %s231, %s233
    %p237 = scmp.eq.s32.totalorder %s24, 0
    %p238 = por %p236, %p237
    %p239 = scmp.ne.s32.totalorder %s231, %s233
    %p240 = scmp.eq.s32.totalorder %s29, 1
    %p241 = por %p239, %p240
    %p242 = scmp.ne.s32.totalorder %s233, %s234
    %p243 = scmp.eq.s32.totalorder %s29, 0
    %p244 = por %p242, %p243
    %p245 = scmp.ne.s32.totalorder %s233, %s234
    %p246 = scmp.eq.s32.totalorder %s30, 1
    %p247 = por %p245, %p246
    %p249 = scmp.ne.s32.totalorder %s234, %s248
    %p250 = scmp.eq.s32.totalorder %s30, 0
    %p251 = por %p249, %p250
    %s253 = sadd.s32 %s252, 1
    %p256 = scmp.eq.s32.totalorder %s24, 1
    %p257 = scmp.ne.s32.totalorder %s252, %s254
    %p258 = scmp.eq.s32.totalorder %s24, 0
    %p259 = por %p257, %p258
    %p260 = scmp.ne.s32.totalorder %s252, %s254
    %p261 = scmp.eq.s32.totalorder %s29, 1
    %p262 = por %p260, %p261
    %p263 = scmp.ne.s32.totalorder %s254, %s255
    %p264 = scmp.eq.s32.totalorder %s29, 0
    %p265 = por %p263, %p264
    %p266 = scmp.ne.s32.totalorder %s254, %s255
    %p267 = scmp.eq.s32.totalorder %s30, 1
    %p268 = por %p266, %p267
    %p270 = scmp.ne.s32.totalorder %s255, %s269
    %p271 = scmp.eq.s32.totalorder %s30, 0
    %p272 = por %p270, %p271
    %s274 = sadd.s32 %s273, 1
    %p277 = scmp.eq.s32.totalorder %s24, 1
    %p278 = scmp.ne.s32.totalorder %s273, %s275
    %p279 = scmp.eq.s32.totalorder %s24, 0
    %p280 = por %p278, %p279
    %p281 = scmp.ne.s32.totalorder %s273, %s275
    %p282 = scmp.eq.s32.totalorder %s29, 1
    %p283 = por %p281, %p282
    %p284 = scmp.ne.s32.totalorder %s275, %s276
    %p285 = scmp.eq.s32.totalorder %s29, 0
    %p286 = por %p284, %p285
    %p287 = scmp.ne.s32.totalorder %s275, %s276
    %p288 = scmp.eq.s32.totalorder %s30, 1
    %p289 = por %p287, %p288
    %p291 = scmp.ne.s32.totalorder %s276, %s290
    %p292 = scmp.eq.s32.totalorder %s30, 0
    %p293 = por %p291, %p292
    %s295 = sadd.s32 %s294, 1
    %p298 = scmp.eq.s32.totalorder %s24, 1
    %p299 = scmp.ne.s32.totalorder %s294, %s296
    %p300 = scmp.eq.s32.totalorder %s24, 0
    %p301 = por %p299, %p300
    %p302 = scmp.ne.s32.totalorder %s294, %s296
    %p303 = scmp.eq.s32.totalorder %s29, 1
    %p304 = por %p302, %p303
    %p305 = scmp.ne.s32.totalorder %s296, %s297
    %p306 = scmp.eq.s32.totalorder %s29, 0
    %p307 = por %p305, %p306
    %p308 = scmp.ne.s32.totalorder %s296, %s297
    %p309 = scmp.eq.s32.totalorder %s30, 1
    %p310 = por %p308, %p309
    %p312 = scmp.ne.s32.totalorder %s297, %s311
    %p313 = scmp.eq.s32.totalorder %s30, 0
    %p314 = por %p312, %p313
    %s316 = sadd.s32 %s315, 1
    %p319 = scmp.eq.s32.totalorder %s24, 1
    %p320 = scmp.ne.s32.totalorder %s315, %s317
    %p321 = scmp.eq.s32.totalorder %s24, 0
    %p322 = por %p320, %p321
    %p323 = scmp.ne.s32.totalorder %s315, %s317
    %p324 = scmp.eq.s32.totalorder %s29, 1
    %p325 = por %p323, %p324
    %p326 = scmp.ne.s32.totalorder %s317, %s318
    %p327 = scmp.eq.s32.totalorder %s29, 0
    %p328 = por %p326, %p327
    %p329 = scmp.ne.s32.totalorder %s317, %s318
    %p330 = scmp.eq.s32.totalorder %s30, 1
    %p331 = por %p329, %p330
    %p333 = scmp.ne.s32.totalorder %s318, %s332
    %p334 = scmp.eq.s32.totalorder %s30, 0
    %p335 = por %p333, %p334
    %s337 = sadd.s32 %s336, 1
    %p340 = scmp.eq.s32.totalorder %s24, 1
    %p341 = scmp.ne.s32.totalorder %s336, %s338
    %p342 = scmp.eq.s32.totalorder %s24, 0
    %p343 = por %p341, %p342
    %p344 = scmp.ne.s32.totalorder %s336, %s338
    %p345 = scmp.eq.s32.totalorder %s29, 1
    %p346 = por %p344, %p345
    %p347 = scmp.ne.s32.totalorder %s338, %s339
    %p348 = scmp.eq.s32.totalorder %s29, 0
    %p349 = por %p347, %p348
    %p350 = scmp.ne.s32.totalorder %s338, %s339
    %p351 = scmp.eq.s32.totalorder %s30, 1
    %p352 = por %p350, %p351
    %p354 = scmp.ne.s32.totalorder %s339, %s353
    %p355 = scmp.eq.s32.totalorder %s30, 0
    %p356 = por %p354, %p355
    %s358 = sadd.s32 %s357, 1
    %p361 = scmp.eq.s32.totalorder %s24, 1
    %p362 = scmp.ne.s32.totalorder %s357, %s359
    %p363 = scmp.eq.s32.totalorder %s24, 0
    %p364 = por %p362, %p363
    %p365 = scmp.ne.s32.totalorder %s357, %s359
    %p366 = scmp.eq.s32.totalorder %s29, 1
    %p367 = por %p365, %p366
    %p368 = scmp.ne.s32.totalorder %s359, %s360
    %p369 = scmp.eq.s32.totalorder %s29, 0
    %p370 = por %p368, %p369
    %p371 = scmp.ne.s32.totalorder %s359, %s360
    %p372 = scmp.eq.s32.totalorder %s30, 1
    %p373 = por %p371, %p372
    %p375 = scmp.ne.s32.totalorder %s360, %s374
    %p376 = scmp.eq.s32.totalorder %s30, 0
    %p377 = por %p375, %p376
    %s378 = ssub.s32 %s24, %s31
    %p379 = scmp.eq.s32.totalorder %s378, 0
    %s381 = sadd.s32 %s380, 1
    %s382 = scalar_select %p379, %s380, %s381
    %p385 = pneg %p379
    %p386 = scmp.eq.s32.totalorder %s24, 1
    %p387 = por %p385, %p386
    %p388 = scmp.ne.s32.totalorder %s380, %s383
    %p389 = scmp.eq.s32.totalorder %s24, 0
    %p390 = por %p388, %p389
    %p391 = scmp.ne.s32.totalorder %s380, %s383
    %p392 = scmp.eq.s32.totalorder %s29, 1
    %p393 = por %p391, %p392
    %p394 = scmp.ne.s32.totalorder %s383, %s384
    %p395 = scmp.eq.s32.totalorder %s29, 0
    %p396 = por %p394, %p395
    %p397 = scmp.ne.s32.totalorder %s383, %s384
    %p398 = scmp.eq.s32.totalorder %s30, 1
    %p399 = por %p397, %p398
    %p401 = scmp.ne.s32.totalorder %s384, %s400
    %p402 = scmp.eq.s32.totalorder %s30, 0
    %p403 = por %p401, %p402
    %s404 = ssub.s32 %s24, %s31
    %p405 = scmp.eq.s32.totalorder %s404, 0
    %s407 = sadd.s32 %s406, 1
    %s408 = scalar_select %p405, %s406, %s407
    %p411 = pneg %p405
    %p412 = scmp.eq.s32.totalorder %s24, 1
    %p413 = por %p411, %p412
    %p414 = scmp.ne.s32.totalorder %s406, %s409
    %p415 = scmp.eq.s32.totalorder %s24, 0
    %p416 = por %p414, %p415
    %p417 = scmp.ne.s32.totalorder %s406, %s409
    %p418 = scmp.eq.s32.totalorder %s29, 1
    %p419 = por %p417, %p418
    %p420 = scmp.ne.s32.totalorder %s409, %s410
    %p421 = scmp.eq.s32.totalorder %s29, 0
    %p422 = por %p420, %p421
    %p423 = scmp.ne.s32.totalorder %s409, %s410
    %p424 = scmp.eq.s32.totalorder %s30, 1
    %p425 = por %p423, %p424
    %p427 = scmp.ne.s32.totalorder %s410, %s426
    %p428 = scmp.eq.s32.totalorder %s30, 0
    %p429 = por %p427, %p428
    %p430 = scmp.le.s32.totalorder 1, %s24
    %p431 = scmp.lt.s32.totalorder %s24, 3
    %p432 = pnand %p430, %p431
    %p433 = pneg %p432
    // Predicated region
    $region9: #{hr_module_forward.1} parent=5 // pred_check
      _
    $region10: #{hr_module_forward.1} parent=5 // pred_check_branch
      %435 = sbr.rel (%p432) target = $region12
    $region11: #{hr_module_forward.1} parent=5 // pred_region
      %s436 = ssub.s32 %s24, 1
      // Predicated region
      $region13: #{hr_module_forward.1} parent=11 // pred_check
        %p437 = pneg %p97
      $region14: #{hr_module_forward.1} parent=11 // pred_check_branch
        %439 = sbr.rel (%p437) target = $region16
      $region15: #{hr_module_forward.1} parent=11 // pred_region
        _
      $region16: #{hr_module_forward.1} parent=11 // pred_fallthru
        _
      // Predicated region
      $region17: #{hr_module_forward.1} parent=11 // pred_check
        %p440 = pneg %p118
      $region18: #{hr_module_forward.1} parent=11 // pred_check_branch
        %442 = sbr.rel (%p440) target = $region20
      $region19: #{hr_module_forward.1} parent=11 // pred_region
        _
      $region20: #{hr_module_forward.1} parent=11 // pred_fallthru
        _
      // Predicated region
      $region21: #{hr_module_forward.1} parent=11 // pred_check
        %p443 = pneg %p139
      $region22: #{hr_module_forward.1} parent=11 // pred_check_branch
        %445 = sbr.rel (%p443) target = $region24
      $region23: #{hr_module_forward.1} parent=11 // pred_region
        _
      $region24: #{hr_module_forward.1} parent=11 // pred_fallthru
        _
      // Predicated region
      $region25: #{hr_module_forward.1} parent=11 // pred_check
        %p446 = pneg %p160
      $region26: #{hr_module_forward.1} parent=11 // pred_check_branch
        %448 = sbr.rel (%p446) target = $region28
      $region27: #{hr_module_forward.1} parent=11 // pred_region
        _
      $region28: #{hr_module_forward.1} parent=11 // pred_fallthru
        _
      // Predicated region
      $region29: #{hr_module_forward.1} parent=11 // pred_check
        %p449 = pneg %p181
      $region30: #{hr_module_forward.1} parent=11 // pred_check_branch
        %451 = sbr.rel (%p449) target = $region32
      $region31: #{hr_module_forward.1} parent=11 // pred_region
        _
      $region32: #{hr_module_forward.1} parent=11 // pred_fallthru
        _
      // Predicated region
      $region33: #{hr_module_forward.1} parent=11 // pred_check
        %p452 = pneg %p202
      $region34: #{hr_module_forward.1} parent=11 // pred_check_branch
        %454 = sbr.rel (%p452) target = $region36
      $region35: #{hr_module_forward.1} parent=11 // pred_region
        _
      $region36: #{hr_module_forward.1} parent=11 // pred_fallthru
        _
      // Predicated region
      $region37: #{hr_module_forward.1} parent=11 // pred_check
        %p455 = pneg %p223
      $region38: #{hr_module_forward.1} parent=11 // pred_check_branch
        %457 = sbr.rel (%p455) target = $region40
      $region39: #{hr_module_forward.1} parent=11 // pred_region
        _
      $region40: #{hr_module_forward.1} parent=11 // pred_fallthru
        _
      // Predicated region
      $region41: #{hr_module_forward.1} parent=11 // pred_check
        %p458 = pneg %p244
      $region42: #{hr_module_forward.1} parent=11 // pred_check_branch
        %460 = sbr.rel (%p458) target = $region44
      $region43: #{hr_module_forward.1} parent=11 // pred_region
        _
      $region44: #{hr_module_forward.1} parent=11 // pred_fallthru
        _
      // Predicated region
      $region45: #{hr_module_forward.1} parent=11 // pred_check
        %p461 = pneg %p265
      $region46: #{hr_module_forward.1} parent=11 // pred_check_branch
        %463 = sbr.rel (%p461) target = $region48
      $region47: #{hr_module_forward.1} parent=11 // pred_region
        _
      $region48: #{hr_module_forward.1} parent=11 // pred_fallthru
        _
      // Predicated region
      $region49: #{hr_module_forward.1} parent=11 // pred_check
        %p464 = pneg %p286
      $region50: #{hr_module_forward.1} parent=11 // pred_check_branch
        %466 = sbr.rel (%p464) target = $region52
      $region51: #{hr_module_forward.1} parent=11 // pred_region
        _
      $region52: #{hr_module_forward.1} parent=11 // pred_fallthru
        _
      // Predicated region
      $region53: #{hr_module_forward.1} parent=11 // pred_check
        %p467 = pneg %p307
      $region54: #{hr_module_forward.1} parent=11 // pred_check_branch
        %469 = sbr.rel (%p467) target = $region56
      $region55: #{hr_module_forward.1} parent=11 // pred_region
        _
      $region56: #{hr_module_forward.1} parent=11 // pred_fallthru
        _
      // Predicated region
      $region57: #{hr_module_forward.1} parent=11 // pred_check
        %p470 = pneg %p328
      $region58: #{hr_module_forward.1} parent=11 // pred_check_branch
        %472 = sbr.rel (%p470) target = $region60
      $region59: #{hr_module_forward.1} parent=11 // pred_region
        _
      $region60: #{hr_module_forward.1} parent=11 // pred_fallthru
        _
      // Predicated region
      $region61: #{hr_module_forward.1} parent=11 // pred_check
        %p473 = pneg %p349
      $region62: #{hr_module_forward.1} parent=11 // pred_check_branch
        %475 = sbr.rel (%p473) target = $region64
      $region63: #{hr_module_forward.1} parent=11 // pred_region
        _
      $region64: #{hr_module_forward.1} parent=11 // pred_fallthru
        _
      // Predicated region
      $region65: #{hr_module_forward.1} parent=11 // pred_check
        %p476 = pneg %p370
      $region66: #{hr_module_forward.1} parent=11 // pred_check_branch
        %478 = sbr.rel (%p476) target = $region68
      $region67: #{hr_module_forward.1} parent=11 // pred_region
        _
      $region68: #{hr_module_forward.1} parent=11 // pred_fallthru
        _
    $region12: #{hr_module_forward.1} parent=5 // pred_fallthru
      _
    %p479 = scmp.lt.s32.totalorder %s24, 2
    // Predicated region
    $region69: #{hr_module_forward.1} parent=5 // pred_check
      %p480 = pneg %p479
    $region70: #{hr_module_forward.1} parent=5 // pred_check_branch
      %482 = sbr.rel (%p480) target = $region72
    $region71: #{hr_module_forward.1} parent=5 // pred_region
      // Predicated region
      $region73: #{hr_module_forward.1} parent=71 // pred_check
        %p483 = pneg %p44
      $region74: #{hr_module_forward.1} parent=71 // pred_check_branch
        %485 = sbr.rel (%p483) target = $region76
      $region75: #{hr_module_forward.1} parent=71 // pred_region
        %p486 = scmp.lt.s32.totalorder %s24, 1
        %s487 = scalar_select %p486, %s24, 1
        %s488 = smul.addr %s487, 2
        %s489 = smul.addr %s488, 4
        %s490 = scalar_lea.vmem %s0, %s489
      $region76: #{hr_module_forward.1} parent=71 // pred_fallthru
        _
      // Predicated region
      $region77: #{hr_module_forward.1} parent=71 // pred_check
        %p491 = pneg %p70
      $region78: #{hr_module_forward.1} parent=71 // pred_check_branch
        %493 = sbr.rel (%p491) target = $region80
      $region79: #{hr_module_forward.1} parent=71 // pred_region
        %p494 = scmp.lt.s32.totalorder %s24, 1
        %s495 = scalar_select %p494, %s24, 1
        %s496 = smul.addr %s495, 8
        %s497 = scalar_lea.vmem %s1, %s496
      $region80: #{hr_module_forward.1} parent=71 // pred_fallthru
        _
    $region72: #{hr_module_forward.1} parent=5 // pred_fallthru
      _
    %p498 = scmp.le.s32.totalorder 1, %s24
    %p499 = scmp.lt.s32.totalorder %s24, 3
    %p500 = pnand %p498, %p499
    %p501 = pneg %p500
    // Predicated region
    $region81: #{hr_module_forward.1} parent=5 // pred_check
      _
    $region82: #{hr_module_forward.1} parent=5 // pred_check_branch
      %503 = sbr.rel (%p500) target = $region84
    $region83: #{hr_module_forward.1} parent=5 // pred_region
      %s504 = ssub.s32 %s24, 1
      %p505 = scmp.lt.s32.totalorder %s29, 1
      %s506 = scalar_select %p505, %s29, 1
      %s507 = smul.addr %s506, 2
      %s508 = smul.addr %s507, 4
      %s509 = scalar_lea.vmem %s0, %s508
      %p510 = pneg %p50
      %p511 = pneg %p47
      %p512 = scmp.lt.s32.totalorder %s29, 1
      %s513 = scalar_select %p512, %s29, 1
      %s514 = smul.addr %s513, 8
      %s515 = scalar_lea.vmem %s1, %s514
      %p516 = pneg %p76
      %p517 = pneg %p73
      %p518 = pneg %p97
      %p519 = pneg %p94
      %p520 = pneg %p118
      %p521 = pneg %p115
      %p522 = pneg %p139
      %p523 = pneg %p136
      %p524 = pneg %p160
      %p525 = pneg %p157
      %p526 = pneg %p181
      %p527 = pneg %p178
      %p528 = pneg %p202
      %p529 = pneg %p199
      %p530 = pneg %p223
      %p531 = pneg %p220
      %p532 = pneg %p244
      %p533 = pneg %p241
      %p534 = pneg %p265
      %p535 = pneg %p262
      %p536 = pneg %p286
      %p537 = pneg %p283
      %p538 = pneg %p307
      %p539 = pneg %p304
      %p540 = pneg %p328
      %p541 = pneg %p325
      %p542 = pneg %p349
      %p543 = pneg %p346
      %p544 = pneg %p370
      %p545 = pneg %p367
      %p546 = pneg %p396
      %p547 = pneg %p393
      %p548 = scmp.lt.s32.totalorder %s29, 1
      %s549 = scalar_select %p548, %s29, 1
      %s550 = smul.addr %s549, 2
      %s551 = smul.addr %s550, 4
      %s552 = scalar_lea.vmem %s16, %s551
      %p553 = pneg %p422
      %p554 = pneg %p419
      %p555 = scmp.lt.s32.totalorder %s29, 1
      %s556 = scalar_select %p555, %s29, 1
      %s557 = smul.addr %s556, 8
      %s558 = scalar_lea.vmem %s17, %s557
      %p559 = scmp.lt.s32.totalorder %s29, 1
      %s560 = scalar_select %p559, %s29, 1
      %s561 = smul.addr %s560, 2
      %s562 = smul.addr %s561, 4
      %s563 = scalar_lea.vmem %s0, %s562
      %p564 = scmp.lt.s32.totalorder %s29, 1
      %s565 = scalar_select %p564, %s29, 1
      %s566 = smul.addr %s565, 8
      %s567 = scalar_lea.vmem %s1, %s566
      %p568 = scmp.lt.s32.totalorder %s29, 1
      %s569 = scalar_select %p568, %s29, 1
      %s570 = smul.addr %s569, 2
      %s571 = smul.addr %s570, 4
      %s572 = scalar_lea.vmem %s16, %s571
      %p573 = scmp.lt.s32.totalorder %s29, 1
      %s574 = scalar_select %p573, %s29, 1
      %s575 = smul.addr %s574, 8
      %s576 = scalar_lea.vmem %s17, %s575
      %v577 = vld [vmem:[%s563] sm:$0xff]
      %v578 = vld [vmem:[%s567] sm:$0xff]
      %579 = vst [vmem:[#allocation2] sm:$0xff] 0.0
      %vm580 = vcmask 273408
      %581 = vst.msk [vmem:[#allocation2 + $0x8] sm:$0xf] %vm580, 0.0
      %583 = vrot.lane.b32.xlu0 %v577, 17
      %v584 = vpop.permute.xlu0 %583
      %v585 = vrot.slane %v584, 4
      %vm586 = vcmask 138240
      %v587 = vsel %vm586, %v585, %v584
      %vm590 = vcmask 1043592
      %vm591 = vcmask 1047556
      %vm592 = vmor %vm591, %vm590
      %593 = vst.msk [vmem:[#allocation2] sm:$0xff] %vm592, %v587
      %vm594 = vcmask 134144
      %595 = vst.msk [vmem:[#allocation2 + $0x8] sm:$0xf] %vm594, %v585
      %v596 = vlaneseq
      %v597 = vand.u32 %v596, 127
      %v598 = vadd.s32 %v597, 128
      %v599 = vshra.s32 %v597, 4
      %v600 = vshra.s32 %v598, 4
      %v601 = vand.u32 %v597, 15
      %v602 = vand.u32 %v598, 15
      %v603 = vld [vmem:[#allocation2] sm:$0xff]
      %v604 = vadd.s32 %v599, 4294967295
      %v605 = vadd.s32 %v600, 4294967295
      %vm606 = vcmp.ge.s32.totalorder %v604, 0
      %vm607 = vcmp.ge.s32.totalorder %v605, 0
      %vm608 = vcmp.lt.s32.totalorder %v604, 16
      %vm609 = vcmp.lt.s32.totalorder %v605, 16
      %vm610 = vmand %vm606, %vm608
      %vm611 = vmand %vm607, %vm609
      %v612 = vadd.s32 %v601, 4294967295
      %v613 = vadd.s32 %v602, 4294967295
      %vm614 = vcmp.ge.s32.totalorder %v612, 0
      %vm615 = vcmp.ge.s32.totalorder %v613, 0
      %vm616 = vmand %vm610, %vm614
      %vm617 = vmand %vm611, %vm615
      %vm618 = vcmp.lt.s32.totalorder %v612, 16
      %vm619 = vcmp.lt.s32.totalorder %v613, 16
      %vm620 = vmand %vm616, %vm618
      %vm621 = vmand %vm617, %vm619
      %v623 = vcombine.high %v603, %v603
      %v625 = vsel %vm620, %v603, 0.0
      %v626 = vsel %vm621, %v623, 0.0
      %v627 = vld [vmem:[%s2] sm:$0xf]
      %v628 = vld [vmem:[#allocation2 + $0x8] sm:$0xf]
      %vm629 = vcmp.ge.s32.totalorder %v601, 0
      %vm630 = vcmp.ge.s32.totalorder %v602, 0
      %vm631 = vmand %vm610, %vm629
      %vm632 = vmand %vm611, %vm630
      %vm633 = vcmp.lt.s32.totalorder %v601, 16
      %vm634 = vcmp.lt.s32.totalorder %v602, 16
      %vm635 = vmand %vm631, %vm633
      %vm636 = vmand %vm632, %vm634
      %638 = vrot.lane.b32.xlu0 %v603, 127
      %v639 = vpop.permute.xlu0 %638
      %640 = vrot.lane.b32.xlu0 %v623, 127
      %v641 = vpop.permute.xlu0 %640
      %642 = vrot.lane.b32.xlu0 %v628, 127
      %v643 = vpop.permute.xlu0 %642
      %vm644 = vcmask 1039360
      %v645 = vsel %vm644, %v639, %v641
      %v646 = vsel %vm644, %v641, %v643
      %v649 = vsel %vm635, %v645, 0.0
      %v650 = vsel %vm636, %v646, 0.0
      %652 = vrot.lane.b32.xlu0 %v627, 124
      %v653 = vpop.permute.xlu0 %652
      %vm654 = vcmask 31744
      %v655 = vsel %vm654, %v653, 0
      %vm657 = vcmask 1043456
      %v659 = vsel %vm657, %v649, 0
      %v662 = vsel %vm657, %v650, 0
      %664 = vmatprep.subr.mxu0 %v662
      %665 = vmatpush1.msra.mxu0 %v659
      %666 = vmatprep.subr.mxu0 0.0
      %667 = vmatpush1.msra.mxu0 0.0
      %668 = vmatprep.subr.mxu0 0.0
      %669 = vmatpush1.msra.mxu0 0.0
      %670 = vmatprep.subr.mxu0 0.0
      %671 = vmatpush1.msra.mxu0 0.0
      %672 = vmatprep.subr.mxu0 0.0
      %673 = vmatpush1.msra.mxu0 0.0
      %674 = vmatprep.subr.mxu0 0.0
      %675 = vmatpush1.msra.mxu0 0.0
      %676 = vmatprep.subr.mxu0 0.0
      %677 = vmatpush1.msra.mxu0 0.0
      %678 = vmatprep.subr.mxu0 0.0
      %679 = vmatpush1.msra.mxu0 0.0
      %680 = vmatprep.subr.mxu0 0.0
      %681 = vmatpush1.msra.mxu0 0.0
      %682 = vmatprep.subr.mxu0 0.0
      %683 = vmatpush1.msra.mxu0 0.0
      %684 = vmatprep.subr.mxu0 0.0
      %685 = vmatpush1.msra.mxu0 0.0
      %686 = vmatprep.subr.mxu0 0.0
      %687 = vmatpush1.msra.mxu0 0.0
      %688 = vmatprep.subr.mxu0 0.0
      %689 = vmatpush1.msra.mxu0 0.0
      %690 = vmatprep.subr.mxu0 0.0
      %691 = vmatpush1.msra.mxu0 0.0
      %692 = vmatprep.subr.mxu0 0.0
      %693 = vmatpush1.msra.mxu0 0.0
      %694 = vmatprep.subr.mxu0 0.0
      %695 = vmatpush1.msra.mxu0 0.0
      %696 = vmatprep.subr.mxu0 0.0
      %697 = vmatpush1.msra.mxu0 0.0
      %698 = vmatprep.subr.mxu0 0.0
      %699 = vmatpush1.msra.mxu0 0.0
      %700 = vmatprep.subr.mxu0 0.0
      %701 = vmatpush1.msra.mxu0 0.0
      %702 = vmatprep.subr.mxu0 0.0
      %703 = vmatpush1.msra.mxu0 0.0
      %704 = vmatprep.subr.mxu0 0.0
      %705 = vmatpush1.msra.mxu0 0.0
      %706 = vmatprep.subr.mxu0 0.0
      %707 = vmatpush1.msra.mxu0 0.0
      %708 = vmatprep.subr.mxu0 0.0
      %709 = vmatpush1.msra.mxu0 0.0
      %710 = vmatprep.subr.mxu0 0.0
      %711 = vmatpush1.msra.mxu0 0.0
      %712 = vmatprep.subr.mxu0 0.0
      %713 = vmatpush1.msra.mxu0 0.0
      %714 = vmatprep.subr.mxu0 0.0
      %715 = vmatpush1.msra.mxu0 0.0
      %716 = vmatprep.subr.mxu0 0.0
      %717 = vmatpush1.msra.mxu0 0.0
      %718 = vmatprep.subr.mxu0 0.0
      %719 = vmatpush1.msra.mxu0 0.0
      %720 = vmatprep.subr.mxu0 0.0
      %721 = vmatpush1.msra.mxu0 0.0
      %722 = vmatprep.subr.mxu0 0.0
      %723 = vmatpush1.msra.mxu0 0.0
      %724 = vmatprep.subr.mxu0 0.0
      %725 = vmatpush1.msra.mxu0 0.0
      %726 = vmatprep.subr.mxu0 0.0
      %727 = vmatpush1.msra.mxu0 0.0
      %728 = vmatprep.mubr.f32.mxu0 0.0
      %729 = vmatmul.mubr.f32.gmra.mrb[0].mxu0 %v655
      %v730 = vpop.f32.mrb[0].mxu0
      %v731 = vadd.f32 0.0, %v730
      %v732 = vpop.f32.mrb[0].mxu0
      %v733 = vadd.f32 0.0, %v732
      %734 = vdwg.mxu0
      %v735 = vsel %vm654, %v627, 0
      %v738 = vsel %vm657, %v625, 0
      %v741 = vsel %vm657, %v626, 0
      %743 = vmatprep.subr.mxu0 %v741
      %744 = vmatpush1.msra.mxu0 %v738
      %745 = vmatprep.subr.mxu0 0.0
      %746 = vmatpush1.msra.mxu0 0.0
      %747 = vmatprep.subr.mxu0 0.0
      %748 = vmatpush1.msra.mxu0 0.0
      %749 = vmatprep.subr.mxu0 0.0
      %750 = vmatpush1.msra.mxu0 0.0
      %751 = vmatprep.subr.mxu0 0.0
      %752 = vmatpush1.msra.mxu0 0.0
      %753 = vmatprep.subr.mxu0 0.0
      %754 = vmatpush1.msra.mxu0 0.0
      %755 = vmatprep.subr.mxu0 0.0
      %756 = vmatpush1.msra.mxu0 0.0
      %757 = vmatprep.subr.mxu0 0.0
      %758 = vmatpush1.msra.mxu0 0.0
      %759 = vmatprep.subr.mxu0 0.0
      %760 = vmatpush1.msra.mxu0 0.0
      %761 = vmatprep.subr.mxu0 0.0
      %762 = vmatpush1.msra.mxu0 0.0
      %763 = vmatprep.subr.mxu0 0.0
      %764 = vmatpush1.msra.mxu0 0.0
      %765 = vmatprep.subr.mxu0 0.0
      %766 = vmatpush1.msra.mxu0 0.0
      %767 = vmatprep.subr.mxu0 0.0
      %768 = vmatpush1.msra.mxu0 0.0
      %769 = vmatprep.subr.mxu0 0.0
      %770 = vmatpush1.msra.mxu0 0.0
      %771 = vmatprep.subr.mxu0 0.0
      %772 = vmatpush1.msra.mxu0 0.0
      %773 = vmatprep.subr.mxu0 0.0
      %774 = vmatpush1.msra.mxu0 0.0
      %775 = vmatprep.subr.mxu0 0.0
      %776 = vmatpush1.msra.mxu0 0.0
      %777 = vmatprep.subr.mxu0 0.0
      %778 = vmatpush1.msra.mxu0 0.0
      %779 = vmatprep.subr.mxu0 0.0
      %780 = vmatpush1.msra.mxu0 0.0
      %781 = vmatprep.subr.mxu0 0.0
      %782 = vmatpush1.msra.mxu0 0.0
      %783 = vmatprep.subr.mxu0 0.0
      %784 = vmatpush1.msra.mxu0 0.0
      %785 = vmatprep.subr.mxu0 0.0
      %786 = vmatpush1.msra.mxu0 0.0
      %787 = vmatprep.subr.mxu0 0.0
      %788 = vmatpush1.msra.mxu0 0.0
      %789 = vmatprep.subr.mxu0 0.0
      %790 = vmatpush1.msra.mxu0 0.0
      %791 = vmatprep.subr.mxu0 0.0
      %792 = vmatpush1.msra.mxu0 0.0
      %793 = vmatprep.subr.mxu0 0.0
      %794 = vmatpush1.msra.mxu0 0.0
      %795 = vmatprep.subr.mxu0 0.0
      %796 = vmatpush1.msra.mxu0 0.0
      %797 = vmatprep.subr.mxu0 0.0
      %798 = vmatpush1.msra.mxu0 0.0
      %799 = vmatprep.subr.mxu0 0.0
      %800 = vmatpush1.msra.mxu0 0.0
      %801 = vmatprep.subr.mxu0 0.0
      %802 = vmatpush1.msra.mxu0 0.0
      %803 = vmatprep.subr.mxu0 0.0
      %804 = vmatpush1.msra.mxu0 0.0
      %805 = vmatprep.subr.mxu0 0.0
      %806 = vmatpush1.msra.mxu0 0.0
      %807 = vmatprep.mubr.f32.mxu0 0.0
      %808 = vmatmul.mubr.f32.gmra.mrb[0].mxu0 %v735
      %v809 = vpop.f32.mrb[0].mxu0
      %v810 = vadd.f32 %v731, %v809
      %v811 = vpop.f32.mrb[0].mxu0
      %v812 = vadd.f32 %v733, %v811
      %813 = vdwg.mxu0
      %v814 = vld [vmem:[#allocation2] sm:$0xff]
      %v815 = vld [vmem:[#allocation2 + $0x8] sm:$0xf]
      %v816 = vadd.s32 %v601, 1
      %v817 = vadd.s32 %v602, 1
      %vm818 = vcmp.ge.s32.totalorder %v816, 0
      %vm819 = vcmp.ge.s32.totalorder %v817, 0
      %vm820 = vmand %vm610, %vm818
      %vm821 = vmand %vm611, %vm819
      %vm822 = vcmp.lt.s32.totalorder %v816, 16
      %vm823 = vcmp.lt.s32.totalorder %v817, 16
      %vm824 = vmand %vm820, %vm822
      %vm825 = vmand %vm821, %vm823
      %v828 = vcombine.high %v814, %v814
      %829 = vrot.lane.b32.xlu0 %v814, 126
      %v830 = vpop.permute.xlu0 %829
      %831 = vrot.lane.b32.xlu0 %v828, 126
      %v832 = vpop.permute.xlu0 %831
      %833 = vrot.lane.b32.xlu0 %v815, 126
      %v834 = vpop.permute.xlu0 %833
      %vm835 = vcmask 1031168
      %v836 = vsel %vm835, %v830, %v832
      %v837 = vsel %vm835, %v832, %v834
      %v840 = vsel %vm824, %v836, 0.0
      %v841 = vsel %vm825, %v837, 0.0
      %v842 = vld [vmem:[%s2] sm:$0xf]
      %844 = vrot.lane.b32.xlu0 %v842, 120
      %v845 = vpop.permute.xlu0 %844
      %v846 = vsel %vm654, %v845, 0
      %v849 = vsel %vm657, %v840, 0
      %v852 = vsel %vm657, %v841, 0
      %854 = vmatprep.subr.mxu0 %v852
      %855 = vmatpush1.msra.mxu0 %v849
      %856 = vmatprep.subr.mxu0 0.0
      %857 = vmatpush1.msra.mxu0 0.0
      %858 = vmatprep.subr.mxu0 0.0
      %859 = vmatpush1.msra.mxu0 0.0
      %860 = vmatprep.subr.mxu0 0.0
      %861 = vmatpush1.msra.mxu0 0.0
      %862 = vmatprep.subr.mxu0 0.0
      %863 = vmatpush1.msra.mxu0 0.0
      %864 = vmatprep.subr.mxu0 0.0
      %865 = vmatpush1.msra.mxu0 0.0
      %866 = vmatprep.subr.mxu0 0.0
      %867 = vmatpush1.msra.mxu0 0.0
      %868 = vmatprep.subr.mxu0 0.0
      %869 = vmatpush1.msra.mxu0 0.0
      %870 = vmatprep.subr.mxu0 0.0
      %871 = vmatpush1.msra.mxu0 0.0
      %872 = vmatprep.subr.mxu0 0.0
      %873 = vmatpush1.msra.mxu0 0.0
      %874 = vmatprep.subr.mxu0 0.0
      %875 = vmatpush1.msra.mxu0 0.0
      %876 = vmatprep.subr.mxu0 0.0
      %877 = vmatpush1.msra.mxu0 0.0
      %878 = vmatprep.subr.mxu0 0.0
      %879 = vmatpush1.msra.mxu0 0.0
      %880 = vmatprep.subr.mxu0 0.0
      %881 = vmatpush1.msra.mxu0 0.0
      %882 = vmatprep.subr.mxu0 0.0
      %883 = vmatpush1.msra.mxu0 0.0
      %884 = vmatprep.subr.mxu0 0.0
      %885 = vmatpush1.msra.mxu0 0.0
      %886 = vmatprep.subr.mxu0 0.0
      %887 = vmatpush1.msra.mxu0 0.0
      %888 = vmatprep.subr.mxu0 0.0
      %889 = vmatpush1.msra.mxu0 0.0
      %890 = vmatprep.subr.mxu0 0.0
      %891 = vmatpush1.msra.mxu0 0.0
      %892 = vmatprep.subr.mxu0 0.0
      %893 = vmatpush1.msra.mxu0 0.0
      %894 = vmatprep.subr.mxu0 0.0
      %895 = vmatpush1.msra.mxu0 0.0
      %896 = vmatprep.subr.mxu0 0.0
      %897 = vmatpush1.msra.mxu0 0.0
      %898 = vmatprep.subr.mxu0 0.0
      %899 = vmatpush1.msra.mxu0 0.0
      %900 = vmatprep.subr.mxu0 0.0
      %901 = vmatpush1.msra.mxu0 0.0
      %902 = vmatprep.subr.mxu0 0.0
      %903 = vmatpush1.msra.mxu0 0.0
      %904 = vmatprep.subr.mxu0 0.0
      %905 = vmatpush1.msra.mxu0 0.0
      %906 = vmatprep.subr.mxu0 0.0
      %907 = vmatpush1.msra.mxu0 0.0
      %908 = vmatprep.subr.mxu0 0.0
      %909 = vmatpush1.msra.mxu0 0.0
      %910 = vmatprep.subr.mxu0 0.0
      %911 = vmatpush1.msra.mxu0 0.0
      %912 = vmatprep.subr.mxu0 0.0
      %913 = vmatpush1.msra.mxu0 0.0
      %914 = vmatprep.subr.mxu0 0.0
      %915 = vmatpush1.msra.mxu0 0.0
      %916 = vmatprep.subr.mxu0 0.0
      %917 = vmatpush1.msra.mxu0 0.0
      %918 = vmatprep.mubr.f32.mxu0 0.0
      %919 = vmatmul.mubr.f32.gmra.mrb[0].mxu0 %v846
      %v920 = vpop.f32.mrb[0].mxu0
      %v921 = vadd.f32 0.0, %v920
      %v922 = vpop.f32.mrb[0].mxu0
      %v923 = vadd.f32 0.0, %v922
      %924 = vdwg.mxu0
      %v925 = vadd.f32 %v810, %v921
      %v926 = vadd.f32 %v812, %v923
      %v927 = vld [vmem:[#allocation2] sm:$0xff]
      %v928 = vld [vmem:[#allocation2 + $0x8] sm:$0xf]
      %vm929 = vcmp.ge.s32.totalorder %v599, 0
      %vm930 = vcmp.ge.s32.totalorder %v600, 0
      %vm931 = vcmp.lt.s32.totalorder %v599, 16
      %vm932 = vcmp.lt.s32.totalorder %v600, 16
      %vm933 = vmand %vm929, %vm931
      %vm934 = vmand %vm930, %vm932
      %vm935 = vmand %vm933, %vm614
      %vm936 = vmand %vm934, %vm615
      %vm937 = vmand %vm935, %vm618
      %vm938 = vmand %vm936, %vm619
      %v941 = vcombine.high %v927, %v927
      %942 = vrot.lane.b32.xlu0 %v927, 112
      %v943 = vpop.permute.xlu0 %942
      %944 = vrot.lane.b32.xlu0 %v941, 112
      %v945 = vpop.permute.xlu0 %944
      %946 = vrot.lane.b32.xlu0 %v928, 112
      %v947 = vpop.permute.xlu0 %946
      %vm948 = vcmask 916480
      %v949 = vsel %vm948, %v943, %v945
      %v950 = vsel %vm948, %v945, %v947
      %v953 = vsel %vm937, %v949, 0.0
      %v954 = vsel %vm938, %v950, 0.0
      %v955 = vld [vmem:[%s2] sm:$0xf]
      %957 = vrot.lane.b32.xlu0 %v955, 116
      %v958 = vpop.permute.xlu0 %957
      %v959 = vsel %vm654, %v958, 0
      %v962 = vsel %vm657, %v953, 0
      %v965 = vsel %vm657, %v954, 0
      %967 = vmatprep.subr.mxu0 %v965
      %968 = vmatpush1.msra.mxu0 %v962
      %969 = vmatprep.subr.mxu0 0.0
      %970 = vmatpush1.msra.mxu0 0.0
      %971 = vmatprep.subr.mxu0 0.0
      %972 = vmatpush1.msra.mxu0 0.0
      %973 = vmatprep.subr.mxu0 0.0
      %974 = vmatpush1.msra.mxu0 0.0
      %975 = vmatprep.subr.mxu0 0.0
      %976 = vmatpush1.msra.mxu0 0.0
      %977 = vmatprep.subr.mxu0 0.0
      %978 = vmatpush1.msra.mxu0 0.0
      %979 = vmatprep.subr.mxu0 0.0
      %980 = vmatpush1.msra.mxu0 0.0
      %981 = vmatprep.subr.mxu0 0.0
      %982 = vmatpush1.msra.mxu0 0.0
      %983 = vmatprep.subr.mxu0 0.0
      %984 = vmatpush1.msra.mxu0 0.0
      %985 = vmatprep.subr.mxu0 0.0
      %986 = vmatpush1.msra.mxu0 0.0
      %987 = vmatprep.subr.mxu0 0.0
      %988 = vmatpush1.msra.mxu0 0.0
      %989 = vmatprep.subr.mxu0 0.0
      %990 = vmatpush1.msra.mxu0 0.0
      %991 = vmatprep.subr.mxu0 0.0
      %992 = vmatpush1.msra.mxu0 0.0
      %993 = vmatprep.subr.mxu0 0.0
      %994 = vmatpush1.msra.mxu0 0.0
      %995 = vmatprep.subr.mxu0 0.0
      %996 = vmatpush1.msra.mxu0 0.0
      %997 = vmatprep.subr.mxu0 0.0
      %998 = vmatpush1.msra.mxu0 0.0
      %999 = vmatprep.subr.mxu0 0.0
      %1000 = vmatpush1.msra.mxu0 0.0
      %1001 = vmatprep.subr.mxu0 0.0
      %1002 = vmatpush1.msra.mxu0 0.0
      %1003 = vmatprep.subr.mxu0 0.0
      %1004 = vmatpush1.msra.mxu0 0.0
      %1005 = vmatprep.subr.mxu0 0.0
      %1006 = vmatpush1.msra.mxu0 0.0
      %1007 = vmatprep.subr.mxu0 0.0
      %1008 = vmatpush1.msra.mxu0 0.0
      %1009 = vmatprep.subr.mxu0 0.0
      %1010 = vmatpush1.msra.mxu0 0.0
      %1011 = vmatprep.subr.mxu0 0.0
      %1012 = vmatpush1.msra.mxu0 0.0
      %1013 = vmatprep.subr.mxu0 0.0
      %1014 = vmatpush1.msra.mxu0 0.0
      %1015 = vmatprep.subr.mxu0 0.0
      %1016 = vmatpush1.msra.mxu0 0.0
      %1017 = vmatprep.subr.mxu0 0.0
      %1018 = vmatpush1.msra.mxu0 0.0
      %1019 = vmatprep.subr.mxu0 0.0
      %1020 = vmatpush1.msra.mxu0 0.0
      %1021 = vmatprep.subr.mxu0 0.0
      %1022 = vmatpush1.msra.mxu0 0.0
      %1023 = vmatprep.subr.mxu0 0.0
      %1024 = vmatpush1.msra.mxu0 0.0
      %1025 = vmatprep.subr.mxu0 0.0
      %1026 = vmatpush1.msra.mxu0 0.0
      %1027 = vmatprep.subr.mxu0 0.0
      %1028 = vmatpush1.msra.mxu0 0.0
      %1029 = vmatprep.subr.mxu0 0.0
      %1030 = vmatpush1.msra.mxu0 0.0
      %1031 = vmatprep.mubr.f32.mxu0 0.0
      %1032 = vmatmul.mubr.f32.gmra.mrb[0].mxu0 %v959
      %v1033 = vpop.f32.mrb[0].mxu0
      %v1034 = vadd.f32 0.0, %v1033
      %v1035 = vpop.f32.mrb[0].mxu0
      %v1036 = vadd.f32 0.0, %v1035
      %1037 = vdwg.mxu0
      %v1038 = vadd.f32 %v925, %v1034
      %v1039 = vadd.f32 %v926, %v1036
      %v1040 = vld [vmem:[#allocation2] sm:$0xff]
      %v1041 = vld [vmem:[#allocation2 + $0x8] sm:$0xf]
      %vm1042 = vmand %vm933, %vm629
      %vm1043 = vmand %vm934, %vm630
      %vm1044 = vmand %vm1042, %vm633
      %vm1045 = vmand %vm1043, %vm634
      %v1048 = vcombine.high %v1040, %v1040
      %1049 = vrot.lane.b32.xlu0 %v1040, 111
      %v1050 = vpop.permute.xlu0 %1049
      %1051 = vrot.lane.b32.xlu0 %v1048, 111
      %v1052 = vpop.permute.xlu0 %1051
      %1053 = vrot.lane.b32.xlu0 %v1041, 111
      %v1054 = vpop.permute.xlu0 %1053
      %vm1055 = vcmask 908288
      %v1056 = vsel %vm1055, %v1050, %v1052
      %v1057 = vsel %vm1055, %v1052, %v1054
      %v1060 = vsel %vm1044, %v1056, 0.0
      %v1061 = vsel %vm1045, %v1057, 0.0
      %v1062 = vld [vmem:[%s2] sm:$0xf]
      %1064 = vrot.lane.b32.xlu0 %v1062, 112
      %v1065 = vpop.permute.xlu0 %1064
      %v1066 = vsel %vm654, %v1065, 0
      %v1069 = vsel %vm657, %v1060, 0
      %v1072 = vsel %vm657, %v1061, 0
      %1074 = vmatprep.subr.mxu0 %v1072
      %1075 = vmatpush1.msra.mxu0 %v1069
      %1076 = vmatprep.subr.mxu0 0.0
      %1077 = vmatpush1.msra.mxu0 0.0
      %1078 = vmatprep.subr.mxu0 0.0
      %1079 = vmatpush1.msra.mxu0 0.0
      %1080 = vmatprep.subr.mxu0 0.0
      %1081 = vmatpush1.msra.mxu0 0.0
      %1082 = vmatprep.subr.mxu0 0.0
      %1083 = vmatpush1.msra.mxu0 0.0
      %1084 = vmatprep.subr.mxu0 0.0
      %1085 = vmatpush1.msra.mxu0 0.0
      %1086 = vmatprep.subr.mxu0 0.0
      %1087 = vmatpush1.msra.mxu0 0.0
      %1088 = vmatprep.subr.mxu0 0.0
      %1089 = vmatpush1.msra.mxu0 0.0
      %1090 = vmatprep.subr.mxu0 0.0
      %1091 = vmatpush1.msra.mxu0 0.0
      %1092 = vmatprep.subr.mxu0 0.0
      %1093 = vmatpush1.msra.mxu0 0.0
      %1094 = vmatprep.subr.mxu0 0.0
      %1095 = vmatpush1.msra.mxu0 0.0
      %1096 = vmatprep.subr.mxu0 0.0
      %1097 = vmatpush1.msra.mxu0 0.0
      %1098 = vmatprep.subr.mxu0 0.0
      %1099 = vmatpush1.msra.mxu0 0.0
      %1100 = vmatprep.subr.mxu0 0.0
      %1101 = vmatpush1.msra.mxu0 0.0
      %1102 = vmatprep.subr.mxu0 0.0
      %1103 = vmatpush1.msra.mxu0 0.0
      %1104 = vmatprep.subr.mxu0 0.0
      %1105 = vmatpush1.msra.mxu0 0.0
      %1106 = vmatprep.subr.mxu0 0.0
      %1107 = vmatpush1.msra.mxu0 0.0
      %1108 = vmatprep.subr.mxu0 0.0
      %1109 = vmatpush1.msra.mxu0 0.0
      %1110 = vmatprep.subr.mxu0 0.0
      %1111 = vmatpush1.msra.mxu0 0.0
      %1112 = vmatprep.subr.mxu0 0.0
      %1113 = vmatpush1.msra.mxu0 0.0
      %1114 = vmatprep.subr.mxu0 0.0
      %1115 = vmatpush1.msra.mxu0 0.0
      %1116 = vmatprep.subr.mxu0 0.0
      %1117 = vmatpush1.msra.mxu0 0.0
      %1118 = vmatprep.subr.mxu0 0.0
      %1119 = vmatpush1.msra.mxu0 0.0
      %1120 = vmatprep.subr.mxu0 0.0
      %1121 = vmatpush1.msra.mxu0 0.0
      %1122 = vmatprep.subr.mxu0 0.0
      %1123 = vmatpush1.msra.mxu0 0.0
      %1124 = vmatprep.subr.mxu0 0.0
      %1125 = vmatpush1.msra.mxu0 0.0
      %1126 = vmatprep.subr.mxu0 0.0
      %1127 = vmatpush1.msra.mxu0 0.0
      %1128 = vmatprep.subr.mxu0 0.0
      %1129 = vmatpush1.msra.mxu0 0.0
      %1130 = vmatprep.subr.mxu0 0.0
      %1131 = vmatpush1.msra.mxu0 0.0
      %1132 = vmatprep.subr.mxu0 0.0
      %1133 = vmatpush1.msra.mxu0 0.0
      %1134 = vmatprep.subr.mxu0 0.0
      %1135 = vmatpush1.msra.mxu0 0.0
      %1136 = vmatprep.subr.mxu0 0.0
      %1137 = vmatpush1.msra.mxu0 0.0
      %1138 = vmatprep.mubr.f32.mxu0 0.0
      %1139 = vmatmul.mubr.f32.gmra.mrb[0].mxu0 %v1066
      %v1140 = vpop.f32.mrb[0].mxu0
      %v1141 = vadd.f32 0.0, %v1140
      %v1142 = vpop.f32.mrb[0].mxu0
      %v1143 = vadd.f32 0.0, %v1142
      %1144 = vdwg.mxu0
      %v1145 = vadd.f32 %v1038, %v1141
      %v1146 = vadd.f32 %v1039, %v1143
      %v1147 = vld [vmem:[#allocation2] sm:$0xff]
      %v1148 = vld [vmem:[#allocation2 + $0x8] sm:$0xf]
      %vm1149 = vmand %vm933, %vm818
      %vm1150 = vmand %vm934, %vm819
      %vm1151 = vmand %vm1149, %vm822
      %vm1152 = vmand %vm1150, %vm823
      %v1155 = vcombine.high %v1147, %v1147
      %1156 = vrot.lane.b32.xlu0 %v1147, 110
      %v1157 = vpop.permute.xlu0 %1156
      %1158 = vrot.lane.b32.xlu0 %v1155, 110
      %v1159 = vpop.permute.xlu0 %1158
      %1160 = vrot.lane.b32.xlu0 %v1148, 110
      %v1161 = vpop.permute.xlu0 %1160
      %vm1162 = vcmask 900096
      %v1163 = vsel %vm1162, %v1157, %v1159
      %v1164 = vsel %vm1162, %v1159, %v1161
      %v1167 = vsel %vm1151, %v1163, 0.0
      %v1168 = vsel %vm1152, %v1164, 0.0
      %v1169 = vld [vmem:[%s2] sm:$0xf]
      %1171 = vrot.lane.b32.xlu0 %v1169, 108
      %v1172 = vpop.permute.xlu0 %1171
      %v1173 = vsel %vm654, %v1172, 0
      %v1176 = vsel %vm657, %v1167, 0
      %v1179 = vsel %vm657, %v1168, 0
      %1181 = vmatprep.subr.mxu0 %v1179
      %1182 = vmatpush1.msra.mxu0 %v1176
      %1183 = vmatprep.subr.mxu0 0.0
      %1184 = vmatpush1.msra.mxu0 0.0
      %1185 = vmatprep.subr.mxu0 0.0
      %1186 = vmatpush1.msra.mxu0 0.0
      %1187 = vmatprep.subr.mxu0 0.0
      %1188 = vmatpush1.msra.mxu0 0.0
      %1189 = vmatprep.subr.mxu0 0.0
      %1190 = vmatpush1.msra.mxu0 0.0
      %1191 = vmatprep.subr.mxu0 0.0
      %1192 = vmatpush1.msra.mxu0 0.0
      %1193 = vmatprep.subr.mxu0 0.0
      %1194 = vmatpush1.msra.mxu0 0.0
      %1195 = vmatprep.subr.mxu0 0.0
      %1196 = vmatpush1.msra.mxu0 0.0
      %1197 = vmatprep.subr.mxu0 0.0
      %1198 = vmatpush1.msra.mxu0 0.0
      %1199 = vmatprep.subr.mxu0 0.0
      %1200 = vmatpush1.msra.mxu0 0.0
      %1201 = vmatprep.subr.mxu0 0.0
      %1202 = vmatpush1.msra.mxu0 0.0
      %1203 = vmatprep.subr.mxu0 0.0
      %1204 = vmatpush1.msra.mxu0 0.0
      %1205 = vmatprep.subr.mxu0 0.0
      %1206 = vmatpush1.msra.mxu0 0.0
      %1207 = vmatprep.subr.mxu0 0.0
      %1208 = vmatpush1.msra.mxu0 0.0
      %1209 = vmatprep.subr.mxu0 0.0
      %1210 = vmatpush1.msra.mxu0 0.0
      %1211 = vmatprep.subr.mxu0 0.0
      %1212 = vmatpush1.msra.mxu0 0.0
      %1213 = vmatprep.subr.mxu0 0.0
      %1214 = vmatpush1.msra.mxu0 0.0
      %1215 = vmatprep.subr.mxu0 0.0
      %1216 = vmatpush1.msra.mxu0 0.0
      %1217 = vmatprep.subr.mxu0 0.0
      %1218 = vmatpush1.msra.mxu0 0.0
      %1219 = vmatprep.subr.mxu0 0.0
      %1220 = vmatpush1.msra.mxu0 0.0
      %1221 = vmatprep.subr.mxu0 0.0
      %1222 = vmatpush1.msra.mxu0 0.0
      %1223 = vmatprep.subr.mxu0 0.0
      %1224 = vmatpush1.msra.mxu0 0.0
      %1225 = vmatprep.subr.mxu0 0.0
      %1226 = vmatpush1.msra.mxu0 0.0
      %1227 = vmatprep.subr.mxu0 0.0
      %1228 = vmatpush1.msra.mxu0 0.0
      %1229 = vmatprep.subr.mxu0 0.0
      %1230 = vmatpush1.msra.mxu0 0.0
      %1231 = vmatprep.subr.mxu0 0.0
      %1232 = vmatpush1.msra.mxu0 0.0
      %1233 = vmatprep.subr.mxu0 0.0
      %1234 = vmatpush1.msra.mxu0 0.0
      %1235 = vmatprep.subr.mxu0 0.0
      %1236 = vmatpush1.msra.mxu0 0.0
      %1237 = vmatprep.subr.mxu0 0.0
      %1238 = vmatpush1.msra.mxu0 0.0
      %1239 = vmatprep.subr.mxu0 0.0
      %1240 = vmatpush1.msra.mxu0 0.0
      %1241 = vmatprep.subr.mxu0 0.0
      %1242 = vmatpush1.msra.mxu0 0.0
      %1243 = vmatprep.subr.mxu0 0.0
      %1244 = vmatpush1.msra.mxu0 0.0
      %1245 = vmatprep.mubr.f32.mxu0 0.0
      %1246 = vmatmul.mubr.f32.gmra.mrb[0].mxu0 %v1173
      %v1247 = vpop.f32.mrb[0].mxu0
      %v1248 = vadd.f32 0.0, %v1247
      %v1249 = vpop.f32.mrb[0].mxu0
      %v1250 = vadd.f32 0.0, %v1249
      %1251 = vdwg.mxu0
      %v1252 = vadd.f32 %v1145, %v1248
      %v1253 = vadd.f32 %v1146, %v1250
      %v1254 = vld [vmem:[#allocation2] sm:$0xff]
      %v1255 = vld [vmem:[#allocation2 + $0x8] sm:$0xf]
      %v1256 = vadd.s32 %v599, 1
      %v1257 = vadd.s32 %v600, 1
      %vm1258 = vcmp.ge.s32.totalorder %v1256, 0
      %vm1259 = vcmp.ge.s32.totalorder %v1257, 0
      %vm1260 = vcmp.lt.s32.totalorder %v1256, 16
      %vm1261 = vcmp.lt.s32.totalorder %v1257, 16
      %vm1262 = vmand %vm1258, %vm1260
      %vm1263 = vmand %vm1259, %vm1261
      %vm1264 = vmand %vm1262, %vm614
      %vm1265 = vmand %vm1263, %vm615
      %vm1266 = vmand %vm1264, %vm618
      %vm1267 = vmand %vm1265, %vm619
      %v1270 = vcombine.high %v1254, %v1254
      %1271 = vrot.lane.b32.xlu0 %v1254, 96
      %v1272 = vpop.permute.xlu0 %1271
      %1273 = vrot.lane.b32.xlu0 %v1270, 96
      %v1274 = vpop.permute.xlu0 %1273
      %1275 = vrot.lane.b32.xlu0 %v1255, 96
      %v1276 = vpop.permute.xlu0 %1275
      %vm1277 = vcmask 785408
      %v1278 = vsel %vm1277, %v1272, %v1274
      %v1279 = vsel %vm1277, %v1274, %v1276
      %v1282 = vsel %vm1266, %v1278, 0.0
      %v1283 = vsel %vm1267, %v1279, 0.0
      %v1284 = vld [vmem:[%s2] sm:$0xf]
      %1286 = vrot.lane.b32.xlu0 %v1284, 104
      %v1287 = vpop.permute.xlu0 %1286
      %v1288 = vsel %vm654, %v1287, 0
      %v1291 = vsel %vm657, %v1282, 0
      %v1294 = vsel %vm657, %v1283, 0
      %1296 = vmatprep.subr.mxu0 %v1294
      %1297 = vmatpush1.msra.mxu0 %v1291
      %1298 = vmatprep.subr.mxu0 0.0
      %1299 = vmatpush1.msra.mxu0 0.0
      %1300 = vmatprep.subr.mxu0 0.0
      %1301 = vmatpush1.msra.mxu0 0.0
      %1302 = vmatprep.subr.mxu0 0.0
      %1303 = vmatpush1.msra.mxu0 0.0
      %1304 = vmatprep.subr.mxu0 0.0
      %1305 = vmatpush1.msra.mxu0 0.0
      %1306 = vmatprep.subr.mxu0 0.0
      %1307 = vmatpush1.msra.mxu0 0.0
      %1308 = vmatprep.subr.mxu0 0.0
      %1309 = vmatpush1.msra.mxu0 0.0
      %1310 = vmatprep.subr.mxu0 0.0
      %1311 = vmatpush1.msra.mxu0 0.0
      %1312 = vmatprep.subr.mxu0 0.0
      %1313 = vmatpush1.msra.mxu0 0.0
      %1314 = vmatprep.subr.mxu0 0.0
      %1315 = vmatpush1.msra.mxu0 0.0
      %1316 = vmatprep.subr.mxu0 0.0
      %1317 = vmatpush1.msra.mxu0 0.0
      %1318 = vmatprep.subr.mxu0 0.0
      %1319 = vmatpush1.msra.mxu0 0.0
      %1320 = vmatprep.subr.mxu0 0.0
      %1321 = vmatpush1.msra.mxu0 0.0
      %1322 = vmatprep.subr.mxu0 0.0
      %1323 = vmatpush1.msra.mxu0 0.0
      %1324 = vmatprep.subr.mxu0 0.0
      %1325 = vmatpush1.msra.mxu0 0.0
      %1326 = vmatprep.subr.mxu0 0.0
      %1327 = vmatpush1.msra.mxu0 0.0
      %1328 = vmatprep.subr.mxu0 0.0
      %1329 = vmatpush1.msra.mxu0 0.0
      %1330 = vmatprep.subr.mxu0 0.0
      %1331 = vmatpush1.msra.mxu0 0.0
      %1332 = vmatprep.subr.mxu0 0.0
      %1333 = vmatpush1.msra.mxu0 0.0
      %1334 = vmatprep.subr.mxu0 0.0
      %1335 = vmatpush1.msra.mxu0 0.0
      %1336 = vmatprep.subr.mxu0 0.0
      %1337 = vmatpush1.msra.mxu0 0.0
      %1338 = vmatprep.subr.mxu0 0.0
      %1339 = vmatpush1.msra.mxu0 0.0
      %1340 = vmatprep.subr.mxu0 0.0
      %1341 = vmatpush1.msra.mxu0 0.0
      %1342 = vmatprep.subr.mxu0 0.0
      %1343 = vmatpush1.msra.mxu0 0.0
      %1344 = vmatprep.subr.mxu0 0.0
      %1345 = vmatpush1.msra.mxu0 0.0
      %1346 = vmatprep.subr.mxu0 0.0
      %1347 = vmatpush1.msra.mxu0 0.0
      %1348 = vmatprep.subr.mxu0 0.0
      %1349 = vmatpush1.msra.mxu0 0.0
      %1350 = vmatprep.subr.mxu0 0.0
      %1351 = vmatpush1.msra.mxu0 0.0
      %1352 = vmatprep.subr.mxu0 0.0
      %1353 = vmatpush1.msra.mxu0 0.0
      %1354 = vmatprep.subr.mxu0 0.0
      %1355 = vmatpush1.msra.mxu0 0.0
      %1356 = vmatprep.subr.mxu0 0.0
      %1357 = vmatpush1.msra.mxu0 0.0
      %1358 = vmatprep.subr.mxu0 0.0
      %1359 = vmatpush1.msra.mxu0 0.0
      %1360 = vmatprep.mubr.f32.mxu0 0.0
      %1361 = vmatmul.mubr.f32.gmra.mrb[0].mxu0 %v1288
      %v1362 = vpop.f32.mrb[0].mxu0
      %v1363 = vadd.f32 0.0, %v1362
      %v1364 = vpop.f32.mrb[0].mxu0
      %v1365 = vadd.f32 0.0, %v1364
      %1366 = vdwg.mxu0
      %v1367 = vadd.f32 %v1252, %v1363
      %v1368 = vadd.f32 %v1253, %v1365
      %v1369 = vld [vmem:[#allocation2] sm:$0xff]
      %v1370 = vld [vmem:[#allocation2 + $0x8] sm:$0xf]
      %vm1371 = vmand %vm1262, %vm629
      %vm1372 = vmand %vm1263, %vm630
      %vm1373 = vmand %vm1371, %vm633
      %vm1374 = vmand %vm1372, %vm634
      %v1377 = vcombine.high %v1369, %v1369
      %1378 = vrot.lane.b32.xlu0 %v1369, 95
      %v1379 = vpop.permute.xlu0 %1378
      %1380 = vrot.lane.b32.xlu0 %v1377, 95
      %v1381 = vpop.permute.xlu0 %1380
      %1382 = vrot.lane.b32.xlu0 %v1370, 95
      %v1383 = vpop.permute.xlu0 %1382
      %vm1384 = vcmask 777216
      %v1385 = vsel %vm1384, %v1379, %v1381
      %v1386 = vsel %vm1384, %v1381, %v1383
      %v1389 = vsel %vm1373, %v1385, 0.0
      %v1390 = vsel %vm1374, %v1386, 0.0
      %v1391 = vld [vmem:[%s2] sm:$0xf]
      %1393 = vrot.lane.b32.xlu0 %v1391, 100
      %v1394 = vpop.permute.xlu0 %1393
      %v1395 = vsel %vm654, %v1394, 0
      %v1398 = vsel %vm657, %v1389, 0
      %v1401 = vsel %vm657, %v1390, 0
      %1403 = vmatprep.subr.mxu0 %v1401
      %1404 = vmatpush1.msra.mxu0 %v1398
      %1405 = vmatprep.subr.mxu0 0.0
      %1406 = vmatpush1.msra.mxu0 0.0
      %1407 = vmatprep.subr.mxu0 0.0
      %1408 = vmatpush1.msra.mxu0 0.0
      %1409 = vmatprep.subr.mxu0 0.0
      %1410 = vmatpush1.msra.mxu0 0.0
      %1411 = vmatprep.subr.mxu0 0.0
      %1412 = vmatpush1.msra.mxu0 0.0
      %1413 = vmatprep.subr.mxu0 0.0
      %1414 = vmatpush1.msra.mxu0 0.0
      %1415 = vmatprep.subr.mxu0 0.0
      %1416 = vmatpush1.msra.mxu0 0.0
      %1417 = vmatprep.subr.mxu0 0.0
      %1418 = vmatpush1.msra.mxu0 0.0
      %1419 = vmatprep.subr.mxu0 0.0
      %1420 = vmatpush1.msra.mxu0 0.0
      %1421 = vmatprep.subr.mxu0 0.0
      %1422 = vmatpush1.msra.mxu0 0.0
      %1423 = vmatprep.subr.mxu0 0.0
      %1424 = vmatpush1.msra.mxu0 0.0
      %1425 = vmatprep.subr.mxu0 0.0
      %1426 = vmatpush1.msra.mxu0 0.0
      %1427 = vmatprep.subr.mxu0 0.0
      %1428 = vmatpush1.msra.mxu0 0.0
      %1429 = vmatprep.subr.mxu0 0.0
      %1430 = vmatpush1.msra.mxu0 0.0
      %1431 = vmatprep.subr.mxu0 0.0
      %1432 = vmatpush1.msra.mxu0 0.0
      %1433 = vmatprep.subr.mxu0 0.0
      %1434 = vmatpush1.msra.mxu0 0.0
      %1435 = vmatprep.subr.mxu0 0.0
      %1436 = vmatpush1.msra.mxu0 0.0
      %1437 = vmatprep.subr.mxu0 0.0
      %1438 = vmatpush1.msra.mxu0 0.0
      %1439 = vmatprep.subr.mxu0 0.0
      %1440 = vmatpush1.msra.mxu0 0.0
      %1441 = vmatprep.subr.mxu0 0.0
      %1442 = vmatpush1.msra.mxu0 0.0
      %1443 = vmatprep.subr.mxu0 0.0
      %1444 = vmatpush1.msra.mxu0 0.0
      %1445 = vmatprep.subr.mxu0 0.0
      %1446 = vmatpush1.msra.mxu0 0.0
      %1447 = vmatprep.subr.mxu0 0.0
      %1448 = vmatpush1.msra.mxu0 0.0
      %1449 = vmatprep.subr.mxu0 0.0
      %1450 = vmatpush1.msra.mxu0 0.0
      %1451 = vmatprep.subr.mxu0 0.0
      %1452 = vmatpush1.msra.mxu0 0.0
      %1453 = vmatprep.subr.mxu0 0.0
      %1454 = vmatpush1.msra.mxu0 0.0
      %1455 = vmatprep.subr.mxu0 0.0
      %1456 = vmatpush1.msra.mxu0 0.0
      %1457 = vmatprep.subr.mxu0 0.0
      %1458 = vmatpush1.msra.mxu0 0.0
      %1459 = vmatprep.subr.mxu0 0.0
      %1460 = vmatpush1.msra.mxu0 0.0
      %1461 = vmatprep.subr.mxu0 0.0
      %1462 = vmatpush1.msra.mxu0 0.0
      %1463 = vmatprep.subr.mxu0 0.0
      %1464 = vmatpush1.msra.mxu0 0.0
      %1465 = vmatprep.subr.mxu0 0.0
      %1466 = vmatpush1.msra.mxu0 0.0
      %1467 = vmatprep.mubr.f32.mxu0 0.0
      %1468 = vmatmul.mubr.f32.gmra.mrb[0].mxu0 %v1395
      %v1469 = vpop.f32.mrb[0].mxu0
      %v1470 = vadd.f32 0.0, %v1469
      %v1471 = vpop.f32.mrb[0].mxu0
      %v1472 = vadd.f32 0.0, %v1471
      %1473 = vdwg.mxu0
      %v1474 = vadd.f32 %v1367, %v1470
      %v1475 = vadd.f32 %v1368, %v1472
      %v1476 = vld [vmem:[#allocation2] sm:$0xff]
      %v1477 = vld [vmem:[#allocation2 + $0x8] sm:$0xf]
      %vm1478 = vmand %vm1262, %vm818
      %vm1479 = vmand %vm1263, %vm819
      %vm1480 = vmand %vm1478, %vm822
      %vm1481 = vmand %vm1479, %vm823
      %v1484 = vcombine.high %v1476, %v1476
      %1485 = vrot.lane.b32.xlu0 %v1476, 94
      %v1486 = vpop.permute.xlu0 %1485
      %1487 = vrot.lane.b32.xlu0 %v1484, 94
      %v1488 = vpop.permute.xlu0 %1487
      %1489 = vrot.lane.b32.xlu0 %v1477, 94
      %v1490 = vpop.permute.xlu0 %1489
      %vm1491 = vcmask 769024
      %v1492 = vsel %vm1491, %v1486, %v1488
      %v1493 = vsel %vm1491, %v1488, %v1490
      %v1496 = vsel %vm1480, %v1492, 0.0
      %v1497 = vsel %vm1481, %v1493, 0.0
      %v1498 = vld [vmem:[%s2] sm:$0xf]
      %1500 = vrot.lane.b32.xlu0 %v1498, 96
      %v1501 = vpop.permute.xlu0 %1500
      %v1502 = vsel %vm654, %v1501, 0
      %v1505 = vsel %vm657, %v1496, 0
      %v1508 = vsel %vm657, %v1497, 0
      %1510 = vmatprep.subr.mxu0 %v1508
      %1511 = vmatpush1.msra.mxu0 %v1505
      %1512 = vmatprep.subr.mxu0 0.0
      %1513 = vmatpush1.msra.mxu0 0.0
      %1514 = vmatprep.subr.mxu0 0.0
      %1515 = vmatpush1.msra.mxu0 0.0
      %1516 = vmatprep.subr.mxu0 0.0
      %1517 = vmatpush1.msra.mxu0 0.0
      %1518 = vmatprep.subr.mxu0 0.0
      %1519 = vmatpush1.msra.mxu0 0.0
      %1520 = vmatprep.subr.mxu0 0.0
      %1521 = vmatpush1.msra.mxu0 0.0
      %1522 = vmatprep.subr.mxu0 0.0
      %1523 = vmatpush1.msra.mxu0 0.0
      %1524 = vmatprep.subr.mxu0 0.0
      %1525 = vmatpush1.msra.mxu0 0.0
      %1526 = vmatprep.subr.mxu0 0.0
      %1527 = vmatpush1.msra.mxu0 0.0
      %1528 = vmatprep.subr.mxu0 0.0
      %1529 = vmatpush1.msra.mxu0 0.0
      %1530 = vmatprep.subr.mxu0 0.0
      %1531 = vmatpush1.msra.mxu0 0.0
      %1532 = vmatprep.subr.mxu0 0.0
      %1533 = vmatpush1.msra.mxu0 0.0
      %1534 = vmatprep.subr.mxu0 0.0
      %1535 = vmatpush1.msra.mxu0 0.0
      %1536 = vmatprep.subr.mxu0 0.0
      %1537 = vmatpush1.msra.mxu0 0.0
      %1538 = vmatprep.subr.mxu0 0.0
      %1539 = vmatpush1.msra.mxu0 0.0
      %1540 = vmatprep.subr.mxu0 0.0
      %1541 = vmatpush1.msra.mxu0 0.0
      %1542 = vmatprep.subr.mxu0 0.0
      %1543 = vmatpush1.msra.mxu0 0.0
      %1544 = vmatprep.subr.mxu0 0.0
      %1545 = vmatpush1.msra.mxu0 0.0
      %1546 = vmatprep.subr.mxu0 0.0
      %1547 = vmatpush1.msra.mxu0 0.0
      %1548 = vmatprep.subr.mxu0 0.0
      %1549 = vmatpush1.msra.mxu0 0.0
      %1550 = vmatprep.subr.mxu0 0.0
      %1551 = vmatpush1.msra.mxu0 0.0
      %1552 = vmatprep.subr.mxu0 0.0
      %1553 = vmatpush1.msra.mxu0 0.0
      %1554 = vmatprep.subr.mxu0 0.0
      %1555 = vmatpush1.msra.mxu0 0.0
      %1556 = vmatprep.subr.mxu0 0.0
      %1557 = vmatpush1.msra.mxu0 0.0
      %1558 = vmatprep.subr.mxu0 0.0
      %1559 = vmatpush1.msra.mxu0 0.0
      %1560 = vmatprep.subr.mxu0 0.0
      %1561 = vmatpush1.msra.mxu0 0.0
      %1562 = vmatprep.subr.mxu0 0.0
      %1563 = vmatpush1.msra.mxu0 0.0
      %1564 = vmatprep.subr.mxu0 0.0
      %1565 = vmatpush1.msra.mxu0 0.0
      %1566 = vmatprep.subr.mxu0 0.0
      %1567 = vmatpush1.msra.mxu0 0.0
      %1568 = vmatprep.subr.mxu0 0.0
      %1569 = vmatpush1.msra.mxu0 0.0
      %1570 = vmatprep.subr.mxu0 0.0
      %1571 = vmatpush1.msra.mxu0 0.0
      %1572 = vmatprep.subr.mxu0 0.0
      %1573 = vmatpush1.msra.mxu0 0.0
      %1574 = vmatprep.mubr.f32.mxu0 0.0
      %1575 = vmatmul.mubr.f32.gmra.mrb[0].mxu0 %v1502
      %v1576 = vpop.f32.mrb[0].mxu0
      %v1577 = vadd.f32 0.0, %v1576
      %v1578 = vpop.f32.mrb[0].mxu0
      %v1579 = vadd.f32 0.0, %v1578
      %1580 = vdwg.mxu0
      %v1581 = vadd.f32 %v1474, %v1577
      %v1582 = vadd.f32 %v1475, %v1579
      %v1583 = vld [vmem:[%s3] sm:$0xf]
      %1585 = vset.pattern.permute.xlu0 0
      %1586 = vperm.xlu0 %1585, %v1583
      %v1587 = vpop.permute.xlu0 %1586
      %v1589 = vadd.f32 %v1581, %v1587
      %v1590 = vadd.f32 %v1582, %v1587
      %v1591 = vmax.f32 %v1589, 0.0
      %v1592 = vmax.f32 %v1590, 0.0
      %1593 = vst [vmem:[#allocation2] sm:$0xff] 0.0
      %1594 = vst.msk [vmem:[#allocation2 + $0x8] sm:$0xf] %vm580, 0.0
      %v1597 = vcombine.low %v1591, %v1592
      %1598 = vrot.lane.b32.xlu0 %v1597, 17
      %v1599 = vpop.permute.xlu0 %1598
      %v1600 = vrot.slane %v1599, 4
      %v1601 = vsel %vm586, %v1600, %v1599
      %1604 = vst.msk [vmem:[#allocation2] sm:$0xff] %vm592, %v1601
      %1605 = vst.msk [vmem:[#allocation2 + $0x8] sm:$0xf] %vm594, %v1600
      %v1606 = vld [vmem:[#allocation2] sm:$0xff]
      %v1608 = vcombine.high %v1606, %v1606
      %v1610 = vsel %vm620, %v1606, 0.0
      %v1611 = vsel %vm621, %v1608, 0.0
      %v1612 = vld [vmem:[%s4] sm:$0xf]
      %v1613 = vld [vmem:[#allocation2 + $0x8] sm:$0xf]
      %1615 = vrot.lane.b32.xlu0 %v1606, 127
      %v1616 = vpop.permute.xlu0 %1615
      %1617 = vrot.lane.b32.xlu0 %v1608, 127
      %v1618 = vpop.permute.xlu0 %1617
      %1619 = vrot.lane.b32.xlu0 %v1613, 127
      %v1620 = vpop.permute.xlu0 %1619
      %v1621 = vsel %vm644, %v1616, %v1618
      %v1622 = vsel %vm644, %v1618, %v1620
      %v1625 = vsel %vm635, %v1621, 0.0
      %v1626 = vsel %vm636, %v1622, 0.0
      %1628 = vrot.lane.b32.xlu0 %v1612, 124
      %v1629 = vpop.permute.xlu0 %1628
      %v1630 = vsel %vm654, %v1629, 0
      %v1633 = vsel %vm657, %v1625, 0
      %v1636 = vsel %vm657, %v1626, 0
      %1638 = vmatprep.subr.mxu0 %v1636
      %1639 = vmatpush1.msra.mxu0 %v1633
      %1640 = vmatprep.subr.mxu0 0.0
      %1641 = vmatpush1.msra.mxu0 0.0
      %1642 = vmatprep.subr.mxu0 0.0
      %1643 = vmatpush1.msra.mxu0 0.0
      %1644 = vmatprep.subr.mxu0 0.0
      %1645 = vmatpush1.msra.mxu0 0.0
      %1646 = vmatprep.subr.mxu0 0.0
      %1647 = vmatpush1.msra.mxu0 0.0
      %1648 = vmatprep.subr.mxu0 0.0
      %1649 = vmatpush1.msra.mxu0 0.0
      %1650 = vmatprep.subr.mxu0 0.0
      %1651 = vmatpush1.msra.mxu0 0.0
      %1652 = vmatprep.subr.mxu0 0.0
      %1653 = vmatpush1.msra.mxu0 0.0
      %1654 = vmatprep.subr.mxu0 0.0
      %1655 = vmatpush1.msra.mxu0 0.0
      %1656 = vmatprep.subr.mxu0 0.0
      %1657 = vmatpush1.msra.mxu0 0.0
      %1658 = vmatprep.subr.mxu0 0.0
      %1659 = vmatpush1.msra.mxu0 0.0
      %1660 = vmatprep.subr.mxu0 0.0
      %1661 = vmatpush1.msra.mxu0 0.0
      %1662 = vmatprep.subr.mxu0 0.0
      %1663 = vmatpush1.msra.mxu0 0.0
      %1664 = vmatprep.subr.mxu0 0.0
      %1665 = vmatpush1.msra.mxu0 0.0
      %1666 = vmatprep.subr.mxu0 0.0
      %1667 = vmatpush1.msra.mxu0 0.0
      %1668 = vmatprep.subr.mxu0 0.0
      %1669 = vmatpush1.msra.mxu0 0.0
      %1670 = vmatprep.subr.mxu0 0.0
      %1671 = vmatpush1.msra.mxu0 0.0
      %1672 = vmatprep.subr.mxu0 0.0
      %1673 = vmatpush1.msra.mxu0 0.0
      %1674 = vmatprep.subr.mxu0 0.0
      %1675 = vmatpush1.msra.mxu0 0.0
      %1676 = vmatprep.subr.mxu0 0.0
      %1677 = vmatpush1.msra.mxu0 0.0
      %1678 = vmatprep.subr.mxu0 0.0
      %1679 = vmatpush1.msra.mxu0 0.0
      %1680 = vmatprep.subr.mxu0 0.0
      %1681 = vmatpush1.msra.mxu0 0.0
      %1682 = vmatprep.subr.mxu0 0.0
      %1683 = vmatpush1.msra.mxu0 0.0
      %1684 = vmatprep.subr.mxu0 0.0
      %1685 = vmatpush1.msra.mxu0 0.0
      %1686 = vmatprep.subr.mxu0 0.0
      %1687 = vmatpush1.msra.mxu0 0.0
      %1688 = vmatprep.subr.mxu0 0.0
      %1689 = vmatpush1.msra.mxu0 0.0
      %1690 = vmatprep.subr.mxu0 0.0
      %1691 = vmatpush1.msra.mxu0 0.0
      %1692 = vmatprep.subr.mxu0 0.0
      %1693 = vmatpush1.msra.mxu0 0.0
      %1694 = vmatprep.subr.mxu0 0.0
      %1695 = vmatpush1.msra.mxu0 0.0
      %1696 = vmatprep.subr.mxu0 0.0
      %1697 = vmatpush1.msra.mxu0 0.0
      %1698 = vmatprep.subr.mxu0 0.0
      %1699 = vmatpush1.msra.mxu0 0.0
      %1700 = vmatprep.subr.mxu0 0.0
      %1701 = vmatpush1.msra.mxu0 0.0
      %1702 = vmatprep.mubr.f32.mxu0 0.0
      %1703 = vmatmul.mubr.f32.gmra.mrb[0].mxu0 %v1630
      %v1704 = vpop.f32.mrb[0].mxu0
      %v1705 = vadd.f32 0.0, %v1704
      %v1706 = vpop.f32.mrb[0].mxu0
      %v1707 = vadd.f32 0.0, %v1706
      %1708 = vdwg.mxu0
      %v1709 = vsel %vm654, %v1612, 0
      %v1712 = vsel %vm657, %v1610, 0
      %v1715 = vsel %vm657, %v1611, 0
      %1717 = vmatprep.subr.mxu0 %v1715
      %1718 = vmatpush1.msra.mxu0 %v1712
      %1719 = vmatprep.subr.mxu0 0.0
      %1720 = vmatpush1.msra.mxu0 0.0
      %1721 = vmatprep.subr.mxu0 0.0
      %1722 = vmatpush1.msra.mxu0 0.0
      %1723 = vmatprep.subr.mxu0 0.0
      %1724 = vmatpush1.msra.mxu0 0.0
      %1725 = vmatprep.subr.mxu0 0.0
      %1726 = vmatpush1.msra.mxu0 0.0
      %1727 = vmatprep.subr.mxu0 0.0
      %1728 = vmatpush1.msra.mxu0 0.0
      %1729 = vmatprep.subr.mxu0 0.0
      %1730 = vmatpush1.msra.mxu0 0.0
      %1731 = vmatprep.subr.mxu0 0.0
      %1732 = vmatpush1.msra.mxu0 0.0
      %1733 = vmatprep.subr.mxu0 0.0
      %1734 = vmatpush1.msra.mxu0 0.0
      %1735 = vmatprep.subr.mxu0 0.0
      %1736 = vmatpush1.msra.mxu0 0.0
      %1737 = vmatprep.subr.mxu0 0.0
      %1738 = vmatpush1.msra.mxu0 0.0
      %1739 = vmatprep.subr.mxu0 0.0
      %1740 = vmatpush1.msra.mxu0 0.0
      %1741 = vmatprep.subr.mxu0 0.0
      %1742 = vmatpush1.msra.mxu0 0.0
      %1743 = vmatprep.subr.mxu0 0.0
      %1744 = vmatpush1.msra.mxu0 0.0
      %1745 = vmatprep.subr.mxu0 0.0
      %1746 = vmatpush1.msra.mxu0 0.0
      %1747 = vmatprep.subr.mxu0 0.0
      %1748 = vmatpush1.msra.mxu0 0.0
      %1749 = vmatprep.subr.mxu0 0.0
      %1750 = vmatpush1.msra.mxu0 0.0
      %1751 = vmatprep.subr.mxu0 0.0
      %1752 = vmatpush1.msra.mxu0 0.0
      %1753 = vmatprep.subr.mxu0 0.0
      %1754 = vmatpush1.msra.mxu0 0.0
      %1755 = vmatprep.subr.mxu0 0.0
      %1756 = vmatpush1.msra.mxu0 0.0
      %1757 = vmatprep.subr.mxu0 0.0
      %1758 = vmatpush1.msra.mxu0 0.0
      %1759 = vmatprep.subr.mxu0 0.0
      %1760 = vmatpush1.msra.mxu0 0.0
      %1761 = vmatprep.subr.mxu0 0.0
      %1762 = vmatpush1.msra.mxu0 0.0
      %1763 = vmatprep.subr.mxu0 0.0
      %1764 = vmatpush1.msra.mxu0 0.0
      %1765 = vmatprep.subr.mxu0 0.0
      %1766 = vmatpush1.msra.mxu0 0.0
      %1767 = vmatprep.subr.mxu0 0.0
      %1768 = vmatpush1.msra.mxu0 0.0
      %1769 = vmatprep.subr.mxu0 0.0
      %1770 = vmatpush1.msra.mxu0 0.0
      %1771 = vmatprep.subr.mxu0 0.0
      %1772 = vmatpush1.msra.mxu0 0.0
      %1773 = vmatprep.subr.mxu0 0.0
      %1774 = vmatpush1.msra.mxu0 0.0
      %1775 = vmatprep.subr.mxu0 0.0
      %1776 = vmatpush1.msra.mxu0 0.0
      %1777 = vmatprep.subr.mxu0 0.0
      %1778 = vmatpush1.msra.mxu0 0.0
      %1779 = vmatprep.subr.mxu0 0.0
      %1780 = vmatpush1.msra.mxu0 0.0
      %1781 = vmatprep.mubr.f32.mxu0 0.0
      %1782 = vmatmul.mubr.f32.gmra.mrb[0].mxu0 %v1709
      %v1783 = vpop.f32.mrb[0].mxu0
      %v1784 = vadd.f32 %v1705, %v1783
      %v1785 = vpop.f32.mrb[0].mxu0
      %v1786 = vadd.f32 %v1707, %v1785
      %1787 = vdwg.mxu0
      %v1788 = vld [vmem:[#allocation2] sm:$0xff]
      %v1789 = vld [vmem:[#allocation2 + $0x8] sm:$0xf]
      %v1792 = vcombine.high %v1788, %v1788
      %1793 = vrot.lane.b32.xlu0 %v1788, 126
      %v1794 = vpop.permute.xlu0 %1793
      %1795 = vrot.lane.b32.xlu0 %v1792, 126
      %v1796 = vpop.permute.xlu0 %1795
      %1797 = vrot.lane.b32.xlu0 %v1789, 126
      %v1798 = vpop.permute.xlu0 %1797
      %v1799 = vsel %vm835, %v1794, %v1796
      %v1800 = vsel %vm835, %v1796, %v1798
      %v1803 = vsel %vm824, %v1799, 0.0
      %v1804 = vsel %vm825, %v1800, 0.0
      %v1805 = vld [vmem:[%s4] sm:$0xf]
      %1807 = vrot.lane.b32.xlu0 %v1805, 120
      %v1808 = vpop.permute.xlu0 %1807
      %v1809 = vsel %vm654, %v1808, 0
      %v1812 = vsel %vm657, %v1803, 0
      %v1815 = vsel %vm657, %v1804, 0
      %1817 = vmatprep.subr.mxu0 %v1815
      %1818 = vmatpush1.msra.mxu0 %v1812
      %1819 = vmatprep.subr.mxu0 0.0
      %1820 = vmatpush1.msra.mxu0 0.0
      %1821 = vmatprep.subr.mxu0 0.0
      %1822 = vmatpush1.msra.mxu0 0.0
      %1823 = vmatprep.subr.mxu0 0.0
      %1824 = vmatpush1.msra.mxu0 0.0
      %1825 = vmatprep.subr.mxu0 0.0
      %1826 = vmatpush1.msra.mxu0 0.0
      %1827 = vmatprep.subr.mxu0 0.0
      %1828 = vmatpush1.msra.mxu0 0.0
      %1829 = vmatprep.subr.mxu0 0.0
      %1830 = vmatpush1.msra.mxu0 0.0
      %1831 = vmatprep.subr.mxu0 0.0
      %1832 = vmatpush1.msra.mxu0 0.0
      %1833 = vmatprep.subr.mxu0 0.0
      %1834 = vmatpush1.msra.mxu0 0.0
      %1835 = vmatprep.subr.mxu0 0.0
      %1836 = vmatpush1.msra.mxu0 0.0
      %1837 = vmatprep.subr.mxu0 0.0
      %1838 = vmatpush1.msra.mxu0 0.0
      %1839 = vmatprep.subr.mxu0 0.0
      %1840 = vmatpush1.msra.mxu0 0.0
      %1841 = vmatprep.subr.mxu0 0.0
      %1842 = vmatpush1.msra.mxu0 0.0
      %1843 = vmatprep.subr.mxu0 0.0
      %1844 = vmatpush1.msra.mxu0 0.0
      %1845 = vmatprep.subr.mxu0 0.0
      %1846 = vmatpush1.msra.mxu0 0.0
      %1847 = vmatprep.subr.mxu0 0.0
      %1848 = vmatpush1.msra.mxu0 0.0
      %1849 = vmatprep.subr.mxu0 0.0
      %1850 = vmatpush1.msra.mxu0 0.0
      %1851 = vmatprep.subr.mxu0 0.0
      %1852 = vmatpush1.msra.mxu0 0.0
      %1853 = vmatprep.subr.mxu0 0.0
      %1854 = vmatpush1.msra.mxu0 0.0
      %1855 = vmatprep.subr.mxu0 0.0
      %1856 = vmatpush1.msra.mxu0 0.0
      %1857 = vmatprep.subr.mxu0 0.0
      %1858 = vmatpush1.msra.mxu0 0.0
      %1859 = vmatprep.subr.mxu0 0.0
      %1860 = vmatpush1.msra.mxu0 0.0
      %1861 = vmatprep.subr.mxu0 0.0
      %1862 = vmatpush1.msra.mxu0 0.0
      %1863 = vmatprep.subr.mxu0 0.0
      %1864 = vmatpush1.msra.mxu0 0.0
      %1865 = vmatprep.subr.mxu0 0.0
      %1866 = vmatpush1.msra.mxu0 0.0
      %1867 = vmatprep.subr.mxu0 0.0
      %1868 = vmatpush1.msra.mxu0 0.0
      %1869 = vmatprep.subr.mxu0 0.0
      %1870 = vmatpush1.msra.mxu0 0.0
      %1871 = vmatprep.subr.mxu0 0.0
      %1872 = vmatpush1.msra.mxu0 0.0
      %1873 = vmatprep.subr.mxu0 0.0
      %1874 = vmatpush1.msra.mxu0 0.0
      %1875 = vmatprep.subr.mxu0 0.0
      %1876 = vmatpush1.msra.mxu0 0.0
      %1877 = vmatprep.subr.mxu0 0.0
      %1878 = vmatpush1.msra.mxu0 0.0
      %1879 = vmatprep.subr.mxu0 0.0
      %1880 = vmatpush1.msra.mxu0 0.0
      %1881 = vmatprep.mubr.f32.mxu0 0.0
      %1882 = vmatmul.mubr.f32.gmra.mrb[0].mxu0 %v1809
      %v1883 = vpop.f32.mrb[0].mxu0
      %v1884 = vadd.f32 0.0, %v1883
      %v1885 = vpop.f32.mrb[0].mxu0
      %v1886 = vadd.f32 0.0, %v1885
      %1887 = vdwg.mxu0
      %v1888 = vadd.f32 %v1784, %v1884
      %v1889 = vadd.f32 %v1786, %v1886
      %v1890 = vld [vmem:[#allocation2] sm:$0xff]
      %v1891 = vld [vmem:[#allocation2 + $0x8] sm:$0xf]
      %v1894 = vcombine.high %v1890, %v1890
      %1895 = vrot.lane.b32.xlu0 %v1890, 112
      %v1896 = vpop.permute.xlu0 %1895
      %1897 = vrot.lane.b32.xlu0 %v1894, 112
      %v1898 = vpop.permute.xlu0 %1897
      %1899 = vrot.lane.b32.xlu0 %v1891, 112
      %v1900 = vpop.permute.xlu0 %1899
      %v1901 = vsel %vm948, %v1896, %v1898
      %v1902 = vsel %vm948, %v1898, %v1900
      %v1905 = vsel %vm937, %v1901, 0.0
      %v1906 = vsel %vm938, %v1902, 0.0
      %v1907 = vld [vmem:[%s4] sm:$0xf]
      %1909 = vrot.lane.b32.xlu0 %v1907, 116
      %v1910 = vpop.permute.xlu0 %1909
      %v1911 = vsel %vm654, %v1910, 0
      %v1914 = vsel %vm657, %v1905, 0
      %v1917 = vsel %vm657, %v1906, 0
      %1919 = vmatprep.subr.mxu0 %v1917
      %1920 = vmatpush1.msra.mxu0 %v1914
      %1921 = vmatprep.subr.mxu0 0.0
      %1922 = vmatpush1.msra.mxu0 0.0
      %1923 = vmatprep.subr.mxu0 0.0
      %1924 = vmatpush1.msra.mxu0 0.0
      %1925 = vmatprep.subr.mxu0 0.0
      %1926 = vmatpush1.msra.mxu0 0.0
      %1927 = vmatprep.subr.mxu0 0.0
      %1928 = vmatpush1.msra.mxu0 0.0
      %1929 = vmatprep.subr.mxu0 0.0
      %1930 = vmatpush1.msra.mxu0 0.0
      %1931 = vmatprep.subr.mxu0 0.0
      %1932 = vmatpush1.msra.mxu0 0.0
      %1933 = vmatprep.subr.mxu0 0.0
      %1934 = vmatpush1.msra.mxu0 0.0
      %1935 = vmatprep.subr.mxu0 0.0
      %1936 = vmatpush1.msra.mxu0 0.0
      %1937 = vmatprep.subr.mxu0 0.0
      %1938 = vmatpush1.msra.mxu0 0.0
      %1939 = vmatprep.subr.mxu0 0.0
      %1940 = vmatpush1.msra.mxu0 0.0
      %1941 = vmatprep.subr.mxu0 0.0
      %1942 = vmatpush1.msra.mxu0 0.0
      %1943 = vmatprep.subr.mxu0 0.0
      %1944 = vmatpush1.msra.mxu0 0.0
      %1945 = vmatprep.subr.mxu0 0.0
      %1946 = vmatpush1.msra.mxu0 0.0
      %1947 = vmatprep.subr.mxu0 0.0
      %1948 = vmatpush1.msra.mxu0 0.0
      %1949 = vmatprep.subr.mxu0 0.0
      %1950 = vmatpush1.msra.mxu0 0.0
      %1951 = vmatprep.subr.mxu0 0.0
      %1952 = vmatpush1.msra.mxu0 0.0
      %1953 = vmatprep.subr.mxu0 0.0
      %1954 = vmatpush1.msra.mxu0 0.0
      %1955 = vmatprep.subr.mxu0 0.0
      %1956 = vmatpush1.msra.mxu0 0.0
      %1957 = vmatprep.subr.mxu0 0.0
      %1958 = vmatpush1.msra.mxu0 0.0
      %1959 = vmatprep.subr.mxu0 0.0
      %1960 = vmatpush1.msra.mxu0 0.0
      %1961 = vmatprep.subr.mxu0 0.0
      %1962 = vmatpush1.msra.mxu0 0.0
      %1963 = vmatprep.subr.mxu0 0.0
      %1964 = vmatpush1.msra.mxu0 0.0
      %1965 = vmatprep.subr.mxu0 0.0
      %1966 = vmatpush1.msra.mxu0 0.0
      %1967 = vmatprep.subr.mxu0 0.0
      %1968 = vmatpush1.msra.mxu0 0.0
      %1969 = vmatprep.subr.mxu0 0.0
      %1970 = vmatpush1.msra.mxu0 0.0
      %1971 = vmatprep.subr.mxu0 0.0
      %1972 = vmatpush1.msra.mxu0 0.0
      %1973 = vmatprep.subr.mxu0 0.0
      %1974 = vmatpush1.msra.mxu0 0.0
      %1975 = vmatprep.subr.mxu0 0.0
      %1976 = vmatpush1.msra.mxu0 0.0
      %1977 = vmatprep.subr.mxu0 0.0
      %1978 = vmatpush1.msra.mxu0 0.0
      %1979 = vmatprep.subr.mxu0 0.0
      %1980 = vmatpush1.msra.mxu0 0.0
      %1981 = vmatprep.subr.mxu0 0.0
      %1982 = vmatpush1.msra.mxu0 0.0
      %1983 = vmatprep.mubr.f32.mxu0 0.0
      %1984 = vmatmul.mubr.f32.gmra.mrb[0].mxu0 %v1911
      %v1985 = vpop.f32.mrb[0].mxu0
      %v1986 = vadd.f32 0.0, %v1985
      %v1987 = vpop.f32.mrb[0].mxu0
      %v1988 = vadd.f32 0.0, %v1987
      %1989 = vdwg.mxu0
      %v1990 = vadd.f32 %v1888, %v1986
      %v1991 = vadd.f32 %v1889, %v1988
      %v1992 = vld [vmem:[#allocation2] sm:$0xff]
      %v1993 = vld [vmem:[#allocation2 + $0x8] sm:$0xf]
      %v1996 = vcombine.high %v1992, %v1992
      %1997 = vrot.lane.b32.xlu0 %v1992, 111
      %v1998 = vpop.permute.xlu0 %1997
      %1999 = vrot.lane.b32.xlu0 %v1996, 111
      %v2000 = vpop.permute.xlu0 %1999
      %2001 = vrot.lane.b32.xlu0 %v1993, 111
      %v2002 = vpop.permute.xlu0 %2001
      %v2003 = vsel %vm1055, %v1998, %v2000
      %v2004 = vsel %vm1055, %v2000, %v2002
      %v2007 = vsel %vm1044, %v2003, 0.0
      %v2008 = vsel %vm1045, %v2004, 0.0
      %v2009 = vld [vmem:[%s4] sm:$0xf]
      %2011 = vrot.lane.b32.xlu0 %v2009, 112
      %v2012 = vpop.permute.xlu0 %2011
      %v2013 = vsel %vm654, %v2012, 0
      %v2016 = vsel %vm657, %v2007, 0
      %v2019 = vsel %vm657, %v2008, 0
      %2021 = vmatprep.subr.mxu0 %v2019
      %2022 = vmatpush1.msra.mxu0 %v2016
      %2023 = vmatprep.subr.mxu0 0.0
      %2024 = vmatpush1.msra.mxu0 0.0
      %2025 = vmatprep.subr.mxu0 0.0
      %2026 = vmatpush1.msra.mxu0 0.0
      %2027 = vmatprep.subr.mxu0 0.0
      %2028 = vmatpush1.msra.mxu0 0.0
      %2029 = vmatprep.subr.mxu0 0.0
      %2030 = vmatpush1.msra.mxu0 0.0
      %2031 = vmatprep.subr.mxu0 0.0
      %2032 = vmatpush1.msra.mxu0 0.0
      %2033 = vmatprep.subr.mxu0 0.0
      %2034 = vmatpush1.msra.mxu0 0.0
      %2035 = vmatprep.subr.mxu0 0.0
      %2036 = vmatpush1.msra.mxu0 0.0
      %2037 = vmatprep.subr.mxu0 0.0
      %2038 = vmatpush1.msra.mxu0 0.0
      %2039 = vmatprep.subr.mxu0 0.0
      %2040 = vmatpush1.msra.mxu0 0.0
      %2041 = vmatprep.subr.mxu0 0.0
      %2042 = vmatpush1.msra.mxu0 0.0
      %2043 = vmatprep.subr.mxu0 0.0
      %2044 = vmatpush1.msra.mxu0 0.0
      %2045 = vmatprep.subr.mxu0 0.0
      %2046 = vmatpush1.msra.mxu0 0.0
      %2047 = vmatprep.subr.mxu0 0.0
      %2048 = vmatpush1.msra.mxu0 0.0
      %2049 = vmatprep.subr.mxu0 0.0
      %2050 = vmatpush1.msra.mxu0 0.0
      %2051 = vmatprep.subr.mxu0 0.0
      %2052 = vmatpush1.msra.mxu0 0.0
      %2053 = vmatprep.subr.mxu0 0.0
      %2054 = vmatpush1.msra.mxu0 0.0
      %2055 = vmatprep.subr.mxu0 0.0
      %2056 = vmatpush1.msra.mxu0 0.0
      %2057 = vmatprep.subr.mxu0 0.0
      %2058 = vmatpush1.msra.mxu0 0.0
      %2059 = vmatprep.subr.mxu0 0.0
      %2060 = vmatpush1.msra.mxu0 0.0
      %2061 = vmatprep.subr.mxu0 0.0
      %2062 = vmatpush1.msra.mxu0 0.0
      %2063 = vmatprep.subr.mxu0 0.0
      %2064 = vmatpush1.msra.mxu0 0.0
      %2065 = vmatprep.subr.mxu0 0.0
      %2066 = vmatpush1.msra.mxu0 0.0
      %2067 = vmatprep.subr.mxu0 0.0
      %2068 = vmatpush1.msra.mxu0 0.0
      %2069 = vmatprep.subr.mxu0 0.0
      %2070 = vmatpush1.msra.mxu0 0.0
      %2071 = vmatprep.subr.mxu0 0.0
      %2072 = vmatpush1.msra.mxu0 0.0
      %2073 = vmatprep.subr.mxu0 0.0
      %2074 = vmatpush1.msra.mxu0 0.0
      %2075 = vmatprep.subr.mxu0 0.0
      %2076 = vmatpush1.msra.mxu0 0.0
      %2077 = vmatprep.subr.mxu0 0.0
      %2078 = vmatpush1.msra.mxu0 0.0
      %2079 = vmatprep.subr.mxu0 0.0
      %2080 = vmatpush1.msra.mxu0 0.0
      %2081 = vmatprep.subr.mxu0 0.0
      %2082 = vmatpush1.msra.mxu0 0.0
      %2083 = vmatprep.subr.mxu0 0.0
      %2084 = vmatpush1.msra.mxu0 0.0
      %2085 = vmatprep.mubr.f32.mxu0 0.0
      %2086 = vmatmul.mubr.f32.gmra.mrb[0].mxu0 %v2013
      %v2087 = vpop.f32.mrb[0].mxu0
      %v2088 = vadd.f32 0.0, %v2087
      %v2089 = vpop.f32.mrb[0].mxu0
      %v2090 = vadd.f32 0.0, %v2089
      %2091 = vdwg.mxu0
      %v2092 = vadd.f32 %v1990, %v2088
      %v2093 = vadd.f32 %v1991, %v2090
      %v2094 = vld [vmem:[#allocation2] sm:$0xff]
      %v2095 = vld [vmem:[#allocation2 + $0x8] sm:$0xf]
      %v2098 = vcombine.high %v2094, %v2094
      %2099 = vrot.lane.b32.xlu0 %v2094, 110
      %v2100 = vpop.permute.xlu0 %2099
      %2101 = vrot.lane.b32.xlu0 %v2098, 110
      %v2102 = vpop.permute.xlu0 %2101
      %2103 = vrot.lane.b32.xlu0 %v2095, 110
      %v2104 = vpop.permute.xlu0 %2103
      %v2105 = vsel %vm1162, %v2100, %v2102
      %v2106 = vsel %vm1162, %v2102, %v2104
      %v2109 = vsel %vm1151, %v2105, 0.0
      %v2110 = vsel %vm1152, %v2106, 0.0
      %v2111 = vld [vmem:[%s4] sm:$0xf]
      %2113 = vrot.lane.b32.xlu0 %v2111, 108
      %v2114 = vpop.permute.xlu0 %2113
      %v2115 = vsel %vm654, %v2114, 0
      %v2118 = vsel %vm657, %v2109, 0
      %v2121 = vsel %vm657, %v2110, 0
      %2123 = vmatprep.subr.mxu0 %v2121
      %2124 = vmatpush1.msra.mxu0 %v2118
      %2125 = vmatprep.subr.mxu0 0.0
      %2126 = vmatpush1.msra.mxu0 0.0
      %2127 = vmatprep.subr.mxu0 0.0
      %2128 = vmatpush1.msra.mxu0 0.0
      %2129 = vmatprep.subr.mxu0 0.0
      %2130 = vmatpush1.msra.mxu0 0.0
      %2131 = vmatprep.subr.mxu0 0.0
      %2132 = vmatpush1.msra.mxu0 0.0
      %2133 = vmatprep.subr.mxu0 0.0
      %2134 = vmatpush1.msra.mxu0 0.0
      %2135 = vmatprep.subr.mxu0 0.0
      %2136 = vmatpush1.msra.mxu0 0.0
      %2137 = vmatprep.subr.mxu0 0.0
      %2138 = vmatpush1.msra.mxu0 0.0
      %2139 = vmatprep.subr.mxu0 0.0
      %2140 = vmatpush1.msra.mxu0 0.0
      %2141 = vmatprep.subr.mxu0 0.0
      %2142 = vmatpush1.msra.mxu0 0.0
      %2143 = vmatprep.subr.mxu0 0.0
      %2144 = vmatpush1.msra.mxu0 0.0
      %2145 = vmatprep.subr.mxu0 0.0
      %2146 = vmatpush1.msra.mxu0 0.0
      %2147 = vmatprep.subr.mxu0 0.0
      %2148 = vmatpush1.msra.mxu0 0.0
      %2149 = vmatprep.subr.mxu0 0.0
      %2150 = vmatpush1.msra.mxu0 0.0
      %2151 = vmatprep.subr.mxu0 0.0
      %2152 = vmatpush1.msra.mxu0 0.0
      %2153 = vmatprep.subr.mxu0 0.0
      %2154 = vmatpush1.msra.mxu0 0.0
      %2155 = vmatprep.subr.mxu0 0.0
      %2156 = vmatpush1.msra.mxu0 0.0
      %2157 = vmatprep.subr.mxu0 0.0
      %2158 = vmatpush1.msra.mxu0 0.0
      %2159 = vmatprep.subr.mxu0 0.0
      %2160 = vmatpush1.msra.mxu0 0.0
      %2161 = vmatprep.subr.mxu0 0.0
      %2162 = vmatpush1.msra.mxu0 0.0
      %2163 = vmatprep.subr.mxu0 0.0
      %2164 = vmatpush1.msra.mxu0 0.0
      %2165 = vmatprep.subr.mxu0 0.0
      %2166 = vmatpush1.msra.mxu0 0.0
      %2167 = vmatprep.subr.mxu0 0.0
      %2168 = vmatpush1.msra.mxu0 0.0
      %2169 = vmatprep.subr.mxu0 0.0
      %2170 = vmatpush1.msra.mxu0 0.0
      %2171 = vmatprep.subr.mxu0 0.0
      %2172 = vmatpush1.msra.mxu0 0.0
      %2173 = vmatprep.subr.mxu0 0.0
      %2174 = vmatpush1.msra.mxu0 0.0
      %2175 = vmatprep.subr.mxu0 0.0
      %2176 = vmatpush1.msra.mxu0 0.0
      %2177 = vmatprep.subr.mxu0 0.0
      %2178 = vmatpush1.msra.mxu0 0.0
      %2179 = vmatprep.subr.mxu0 0.0
      %2180 = vmatpush1.msra.mxu0 0.0
      %2181 = vmatprep.subr.mxu0 0.0
      %2182 = vmatpush1.msra.mxu0 0.0
      %2183 = vmatprep.subr.mxu0 0.0
      %2184 = vmatpush1.msra.mxu0 0.0
      %2185 = vmatprep.subr.mxu0 0.0
      %2186 = vmatpush1.msra.mxu0 0.0
      %2187 = vmatprep.mubr.f32.mxu0 0.0
      %2188 = vmatmul.mubr.f32.gmra.mrb[0].mxu0 %v2115
      %v2189 = vpop.f32.mrb[0].mxu0
      %v2190 = vadd.f32 0.0, %v2189
      %v2191 = vpop.f32.mrb[0].mxu0
      %v2192 = vadd.f32 0.0, %v2191
      %2193 = vdwg.mxu0
      %v2194 = vadd.f32 %v2092, %v2190
      %v2195 = vadd.f32 %v2093, %v2192
      %v2196 = vld [vmem:[#allocation2] sm:$0xff]
      %v2197 = vld [vmem:[#allocation2 + $0x8] sm:$0xf]
      %v2200 = vcombine.high %v2196, %v2196
      %2201 = vrot.lane.b32.xlu0 %v2196, 96
      %v2202 = vpop.permute.xlu0 %2201
      %2203 = vrot.lane.b32.xlu0 %v2200, 96
      %v2204 = vpop.permute.xlu0 %2203
      %2205 = vrot.lane.b32.xlu0 %v2197, 96
      %v2206 = vpop.permute.xlu0 %2205
      %v2207 = vsel %vm1277, %v2202, %v2204
      %v2208 = vsel %vm1277, %v2204, %v2206
      %v2211 = vsel %vm1266, %v2207, 0.0
      %v2212 = vsel %vm1267, %v2208, 0.0
      %v2213 = vld [vmem:[%s4] sm:$0xf]
      %2215 = vrot.lane.b32.xlu0 %v2213, 104
      %v2216 = vpop.permute.xlu0 %2215
      %v2217 = vsel %vm654, %v2216, 0
      %v2220 = vsel %vm657, %v2211, 0
      %v2223 = vsel %vm657, %v2212, 0
      %2225 = vmatprep.subr.mxu0 %v2223
      %2226 = vmatpush1.msra.mxu0 %v2220
      %2227 = vmatprep.subr.mxu0 0.0
      %2228 = vmatpush1.msra.mxu0 0.0
      %2229 = vmatprep.subr.mxu0 0.0
      %2230 = vmatpush1.msra.mxu0 0.0
      %2231 = vmatprep.subr.mxu0 0.0
      %2232 = vmatpush1.msra.mxu0 0.0
      %2233 = vmatprep.subr.mxu0 0.0
      %2234 = vmatpush1.msra.mxu0 0.0
      %2235 = vmatprep.subr.mxu0 0.0
      %2236 = vmatpush1.msra.mxu0 0.0
      %2237 = vmatprep.subr.mxu0 0.0
      %2238 = vmatpush1.msra.mxu0 0.0
      %2239 = vmatprep.subr.mxu0 0.0
      %2240 = vmatpush1.msra.mxu0 0.0
      %2241 = vmatprep.subr.mxu0 0.0
      %2242 = vmatpush1.msra.mxu0 0.0
      %2243 = vmatprep.subr.mxu0 0.0
      %2244 = vmatpush1.msra.mxu0 0.0
      %2245 = vmatprep.subr.mxu0 0.0
      %2246 = vmatpush1.msra.mxu0 0.0
      %2247 = vmatprep.subr.mxu0 0.0
      %2248 = vmatpush1.msra.mxu0 0.0
      %2249 = vmatprep.subr.mxu0 0.0
      %2250 = vmatpush1.msra.mxu0 0.0
      %2251 = vmatprep.subr.mxu0 0.0
      %2252 = vmatpush1.msra.mxu0 0.0
      %2253 = vmatprep.subr.mxu0 0.0
      %2254 = vmatpush1.msra.mxu0 0.0
      %2255 = vmatprep.subr.mxu0 0.0
      %2256 = vmatpush1.msra.mxu0 0.0
      %2257 = vmatprep.subr.mxu0 0.0
      %2258 = vmatpush1.msra.mxu0 0.0
      %2259 = vmatprep.subr.mxu0 0.0
      %2260 = vmatpush1.msra.mxu0 0.0
      %2261 = vmatprep.subr.mxu0 0.0
      %2262 = vmatpush1.msra.mxu0 0.0
      %2263 = vmatprep.subr.mxu0 0.0
      %2264 = vmatpush1.msra.mxu0 0.0
      %2265 = vmatprep.subr.mxu0 0.0
      %2266 = vmatpush1.msra.mxu0 0.0
      %2267 = vmatprep.subr.mxu0 0.0
      %2268 = vmatpush1.msra.mxu0 0.0
      %2269 = vmatprep.subr.mxu0 0.0
      %2270 = vmatpush1.msra.mxu0 0.0
      %2271 = vmatprep.subr.mxu0 0.0
      %2272 = vmatpush1.msra.mxu0 0.0
      %2273 = vmatprep.subr.mxu0 0.0
      %2274 = vmatpush1.msra.mxu0 0.0
      %2275 = vmatprep.subr.mxu0 0.0
      %2276 = vmatpush1.msra.mxu0 0.0
      %2277 = vmatprep.subr.mxu0 0.0
      %2278 = vmatpush1.msra.mxu0 0.0
      %2279 = vmatprep.subr.mxu0 0.0
      %2280 = vmatpush1.msra.mxu0 0.0
      %2281 = vmatprep.subr.mxu0 0.0
      %2282 = vmatpush1.msra.mxu0 0.0
      %2283 = vmatprep.subr.mxu0 0.0
      %2284 = vmatpush1.msra.mxu0 0.0
      %2285 = vmatprep.subr.mxu0 0.0
      %2286 = vmatpush1.msra.mxu0 0.0
      %2287 = vmatprep.subr.mxu0 0.0
      %2288 = vmatpush1.msra.mxu0 0.0
      %2289 = vmatprep.mubr.f32.mxu0 0.0
      %2290 = vmatmul.mubr.f32.gmra.mrb[0].mxu0 %v2217
      %v2291 = vpop.f32.mrb[0].mxu0
      %v2292 = vadd.f32 0.0, %v2291
      %v2293 = vpop.f32.mrb[0].mxu0
      %v2294 = vadd.f32 0.0, %v2293
      %2295 = vdwg.mxu0
      %v2296 = vadd.f32 %v2194, %v2292
      %v2297 = vadd.f32 %v2195, %v2294
      %v2298 = vld [vmem:[#allocation2] sm:$0xff]
      %v2299 = vld [vmem:[#allocation2 + $0x8] sm:$0xf]
      %v2302 = vcombine.high %v2298, %v2298
      %2303 = vrot.lane.b32.xlu0 %v2298, 95
      %v2304 = vpop.permute.xlu0 %2303
      %2305 = vrot.lane.b32.xlu0 %v2302, 95
      %v2306 = vpop.permute.xlu0 %2305
      %2307 = vrot.lane.b32.xlu0 %v2299, 95
      %v2308 = vpop.permute.xlu0 %2307
      %v2309 = vsel %vm1384, %v2304, %v2306
      %v2310 = vsel %vm1384, %v2306, %v2308
      %v2313 = vsel %vm1373, %v2309, 0.0
      %v2314 = vsel %vm1374, %v2310, 0.0
      %v2315 = vld [vmem:[%s4] sm:$0xf]
      %2317 = vrot.lane.b32.xlu0 %v2315, 100
      %v2318 = vpop.permute.xlu0 %2317
      %v2319 = vsel %vm654, %v2318, 0
      %v2322 = vsel %vm657, %v2313, 0
      %v2325 = vsel %vm657, %v2314, 0
      %2327 = vmatprep.subr.mxu0 %v2325
      %2328 = vmatpush1.msra.mxu0 %v2322
      %2329 = vmatprep.subr.mxu0 0.0
      %2330 = vmatpush1.msra.mxu0 0.0
      %2331 = vmatprep.subr.mxu0 0.0
      %2332 = vmatpush1.msra.mxu0 0.0
      %2333 = vmatprep.subr.mxu0 0.0
      %2334 = vmatpush1.msra.mxu0 0.0
      %2335 = vmatprep.subr.mxu0 0.0
      %2336 = vmatpush1.msra.mxu0 0.0
      %2337 = vmatprep.subr.mxu0 0.0
      %2338 = vmatpush1.msra.mxu0 0.0
      %2339 = vmatprep.subr.mxu0 0.0
      %2340 = vmatpush1.msra.mxu0 0.0
      %2341 = vmatprep.subr.mxu0 0.0
      %2342 = vmatpush1.msra.mxu0 0.0
      %2343 = vmatprep.subr.mxu0 0.0
      %2344 = vmatpush1.msra.mxu0 0.0
      %2345 = vmatprep.subr.mxu0 0.0
      %2346 = vmatpush1.msra.mxu0 0.0
      %2347 = vmatprep.subr.mxu0 0.0
      %2348 = vmatpush1.msra.mxu0 0.0
      %2349 = vmatprep.subr.mxu0 0.0
      %2350 = vmatpush1.msra.mxu0 0.0
      %2351 = vmatprep.subr.mxu0 0.0
      %2352 = vmatpush1.msra.mxu0 0.0
      %2353 = vmatprep.subr.mxu0 0.0
      %2354 = vmatpush1.msra.mxu0 0.0
      %2355 = vmatprep.subr.mxu0 0.0
      %2356 = vmatpush1.msra.mxu0 0.0
      %2357 = vmatprep.subr.mxu0 0.0
      %2358 = vmatpush1.msra.mxu0 0.0
      %2359 = vmatprep.subr.mxu0 0.0
      %2360 = vmatpush1.msra.mxu0 0.0
      %2361 = vmatprep.subr.mxu0 0.0
      %2362 = vmatpush1.msra.mxu0 0.0
      %2363 = vmatprep.subr.mxu0 0.0
      %2364 = vmatpush1.msra.mxu0 0.0
      %2365 = vmatprep.subr.mxu0 0.0
      %2366 = vmatpush1.msra.mxu0 0.0
      %2367 = vmatprep.subr.mxu0 0.0
      %2368 = vmatpush1.msra.mxu0 0.0
      %2369 = vmatprep.subr.mxu0 0.0
      %2370 = vmatpush1.msra.mxu0 0.0
      %2371 = vmatprep.subr.mxu0 0.0
      %2372 = vmatpush1.msra.mxu0 0.0
      %2373 = vmatprep.subr.mxu0 0.0
      %2374 = vmatpush1.msra.mxu0 0.0
      %2375 = vmatprep.subr.mxu0 0.0
      %2376 = vmatpush1.msra.mxu0 0.0
      %2377 = vmatprep.subr.mxu0 0.0
      %2378 = vmatpush1.msra.mxu0 0.0
      %2379 = vmatprep.subr.mxu0 0.0
      %2380 = vmatpush1.msra.mxu0 0.0
      %2381 = vmatprep.subr.mxu0 0.0
      %2382 = vmatpush1.msra.mxu0 0.0
      %2383 = vmatprep.subr.mxu0 0.0
      %2384 = vmatpush1.msra.mxu0 0.0
      %2385 = vmatprep.subr.mxu0 0.0
      %2386 = vmatpush1.msra.mxu0 0.0
      %2387 = vmatprep.subr.mxu0 0.0
      %2388 = vmatpush1.msra.mxu0 0.0
      %2389 = vmatprep.subr.mxu0 0.0
      %2390 = vmatpush1.msra.mxu0 0.0
      %2391 = vmatprep.mubr.f32.mxu0 0.0
      %2392 = vmatmul.mubr.f32.gmra.mrb[0].mxu0 %v2319
      %v2393 = vpop.f32.mrb[0].mxu0
      %v2394 = vadd.f32 0.0, %v2393
      %v2395 = vpop.f32.mrb[0].mxu0
      %v2396 = vadd.f32 0.0, %v2395
      %2397 = vdwg.mxu0
      %v2398 = vadd.f32 %v2296, %v2394
      %v2399 = vadd.f32 %v2297, %v2396
      %v2400 = vld [vmem:[#allocation2] sm:$0xff]
      %v2401 = vld [vmem:[#allocation2 + $0x8] sm:$0xf]
      %v2404 = vcombine.high %v2400, %v2400
      %2405 = vrot.lane.b32.xlu0 %v2400, 94
      %v2406 = vpop.permute.xlu0 %2405
      %2407 = vrot.lane.b32.xlu0 %v2404, 94
      %v2408 = vpop.permute.xlu0 %2407
      %2409 = vrot.lane.b32.xlu0 %v2401, 94
      %v2410 = vpop.permute.xlu0 %2409
      %v2411 = vsel %vm1491, %v2406, %v2408
      %v2412 = vsel %vm1491, %v2408, %v2410
      %v2415 = vsel %vm1480, %v2411, 0.0
      %v2416 = vsel %vm1481, %v2412, 0.0
      %v2417 = vld [vmem:[%s4] sm:$0xf]
      %2419 = vrot.lane.b32.xlu0 %v2417, 96
      %v2420 = vpop.permute.xlu0 %2419
      %v2421 = vsel %vm654, %v2420, 0
      %v2424 = vsel %vm657, %v2415, 0
      %v2427 = vsel %vm657, %v2416, 0
      %2429 = vmatprep.subr.mxu0 %v2427
      %2430 = vmatpush1.msra.mxu0 %v2424
      %2431 = vmatprep.subr.mxu0 0.0
      %2432 = vmatpush1.msra.mxu0 0.0
      %2433 = vmatprep.subr.mxu0 0.0
      %2434 = vmatpush1.msra.mxu0 0.0
      %2435 = vmatprep.subr.mxu0 0.0
      %2436 = vmatpush1.msra.mxu0 0.0
      %2437 = vmatprep.subr.mxu0 0.0
      %2438 = vmatpush1.msra.mxu0 0.0
      %2439 = vmatprep.subr.mxu0 0.0
      %2440 = vmatpush1.msra.mxu0 0.0
      %2441 = vmatprep.subr.mxu0 0.0
      %2442 = vmatpush1.msra.mxu0 0.0
      %2443 = vmatprep.subr.mxu0 0.0
      %2444 = vmatpush1.msra.mxu0 0.0
      %2445 = vmatprep.subr.mxu0 0.0
      %2446 = vmatpush1.msra.mxu0 0.0
      %2447 = vmatprep.subr.mxu0 0.0
      %2448 = vmatpush1.msra.mxu0 0.0
      %2449 = vmatprep.subr.mxu0 0.0
      %2450 = vmatpush1.msra.mxu0 0.0
      %2451 = vmatprep.subr.mxu0 0.0
      %2452 = vmatpush1.msra.mxu0 0.0
      %2453 = vmatprep.subr.mxu0 0.0
      %2454 = vmatpush1.msra.mxu0 0.0
      %2455 = vmatprep.subr.mxu0 0.0
      %2456 = vmatpush1.msra.mxu0 0.0
      %2457 = vmatprep.subr.mxu0 0.0
      %2458 = vmatpush1.msra.mxu0 0.0
      %2459 = vmatprep.subr.mxu0 0.0
      %2460 = vmatpush1.msra.mxu0 0.0
      %2461 = vmatprep.subr.mxu0 0.0
      %2462 = vmatpush1.msra.mxu0 0.0
      %2463 = vmatprep.subr.mxu0 0.0
      %2464 = vmatpush1.msra.mxu0 0.0
      %2465 = vmatprep.subr.mxu0 0.0
      %2466 = vmatpush1.msra.mxu0 0.0
      %2467 = vmatprep.subr.mxu0 0.0
      %2468 = vmatpush1.msra.mxu0 0.0
      %2469 = vmatprep.subr.mxu0 0.0
      %2470 = vmatpush1.msra.mxu0 0.0
      %2471 = vmatprep.subr.mxu0 0.0
      %2472 = vmatpush1.msra.mxu0 0.0
      %2473 = vmatprep.subr.mxu0 0.0
      %2474 = vmatpush1.msra.mxu0 0.0
      %2475 = vmatprep.subr.mxu0 0.0
      %2476 = vmatpush1.msra.mxu0 0.0
      %2477 = vmatprep.subr.mxu0 0.0
      %2478 = vmatpush1.msra.mxu0 0.0
      %2479 = vmatprep.subr.mxu0 0.0
      %2480 = vmatpush1.msra.mxu0 0.0
      %2481 = vmatprep.subr.mxu0 0.0
      %2482 = vmatpush1.msra.mxu0 0.0
      %2483 = vmatprep.subr.mxu0 0.0
      %2484 = vmatpush1.msra.mxu0 0.0
      %2485 = vmatprep.subr.mxu0 0.0
      %2486 = vmatpush1.msra.mxu0 0.0
      %2487 = vmatprep.subr.mxu0 0.0
      %2488 = vmatpush1.msra.mxu0 0.0
      %2489 = vmatprep.subr.mxu0 0.0
      %2490 = vmatpush1.msra.mxu0 0.0
      %2491 = vmatprep.subr.mxu0 0.0
      %2492 = vmatpush1.msra.mxu0 0.0
      %2493 = vmatprep.mubr.f32.mxu0 0.0
      %2494 = vmatmul.mubr.f32.gmra.mrb[0].mxu0 %v2421
      %v2495 = vpop.f32.mrb[0].mxu0
      %v2496 = vadd.f32 0.0, %v2495
      %v2497 = vpop.f32.mrb[0].mxu0
      %v2498 = vadd.f32 0.0, %v2497
      %2499 = vdwg.mxu0
      %v2500 = vadd.f32 %v2398, %v2496
      %v2501 = vadd.f32 %v2399, %v2498
      %v2502 = vld [vmem:[%s5] sm:$0xf]
      %2504 = vset.pattern.permute.xlu0 0
      %2505 = vperm.xlu0 %2504, %v2502
      %v2506 = vpop.permute.xlu0 %2505
      %v2508 = vadd.f32 %v2500, %v2506
      %v2509 = vadd.f32 %v2501, %v2506
      %v2510 = vcombine.high %v577, %v577
      %v2512 = vadd.f32 %v2508, %v577
      %v2513 = vadd.f32 %v2509, %v2510
      %v2514 = vmax.f32 %v2512, 0.0
      %v2515 = vmax.f32 %v2513, 0.0
      %vm2516 = vcmask 670720
      %2517 = vst.msk [vmem:[#allocation3] sm:$0xff] %vm2516, 0.0
      %2519 = vrot.lane.b32.xlu0 %v578, 9
      %v2520 = vpop.permute.xlu0 %2519
      %vm2522 = vcmask 597064
      %2523 = vst.msk [vmem:[#allocation3] sm:$0xff] %vm2522, %v2520
      %v2524 = vshra.s32 %v597, 3
      %v2525 = vand.u32 %v597, 7
      %v2526 = vld [vmem:[#allocation3] sm:$0xff]
      %v2527 = vadd.s32 %v2524, 4294967295
      %vm2528 = vcmp.ge.s32.totalorder %v2527, 0
      %vm2529 = vcmp.lt.s32.totalorder %v2527, 8
      %vm2530 = vmand %vm2528, %vm2529
      %v2531 = vadd.s32 %v2525, 4294967295
      %vm2532 = vcmp.ge.s32.totalorder %v2531, 0
      %vm2533 = vmand %vm2530, %vm2532
      %vm2534 = vcmp.lt.s32.totalorder %v2531, 8
      %vm2535 = vmand %vm2533, %vm2534
      %v2536 = vsel %vm2535, %v2526, 0.0
      %v2537 = vld [vmem:[%s6] sm:$0xff]
      %vm2538 = vcmp.ge.s32.totalorder %v2525, 0
      %vm2539 = vmand %vm2530, %vm2538
      %vm2540 = vcmp.lt.s32.totalorder %v2525, 8
      %vm2541 = vmand %vm2539, %vm2540
      %2543 = vrot.lane.b32.xlu0 %v2526, 127
      %v2544 = vpop.permute.xlu0 %2543
      %v2546 = vsel %vm2541, %v2544, 0.0
      %2548 = vrot.lane.b32.xlu0 %v2537, 120
      %v2549 = vpop.permute.xlu0 %2548
      %vm2550 = vcmask 64512
      %v2551 = vsel %vm2550, %v2549, 0
      %2553 = vmatprep.subr.mxu0 0.0
      %2554 = vmatpush1.msra.mxu0 %v2546
      %2555 = vmatprep.subr.mxu0 0.0
      %2556 = vmatpush1.msra.mxu0 0.0
      %2557 = vmatprep.subr.mxu0 0.0
      %2558 = vmatpush1.msra.mxu0 0.0
      %2559 = vmatprep.subr.mxu0 0.0
      %2560 = vmatpush1.msra.mxu0 0.0
      %2561 = vmatprep.subr.mxu0 0.0
      %2562 = vmatpush1.msra.mxu0 0.0
      %2563 = vmatprep.subr.mxu0 0.0
      %2564 = vmatpush1.msra.mxu0 0.0
      %2565 = vmatprep.subr.mxu0 0.0
      %2566 = vmatpush1.msra.mxu0 0.0
      %2567 = vmatprep.subr.mxu0 0.0
      %2568 = vmatpush1.msra.mxu0 0.0
      %2569 = vmatprep.subr.mxu0 0.0
      %2570 = vmatpush1.msra.mxu0 0.0
      %2571 = vmatprep.subr.mxu0 0.0
      %2572 = vmatpush1.msra.mxu0 0.0
      %2573 = vmatprep.subr.mxu0 0.0
      %2574 = vmatpush1.msra.mxu0 0.0
      %2575 = vmatprep.subr.mxu0 0.0
      %2576 = vmatpush1.msra.mxu0 0.0
      %2577 = vmatprep.subr.mxu0 0.0
      %2578 = vmatpush1.msra.mxu0 0.0
      %2579 = vmatprep.subr.mxu0 0.0
      %2580 = vmatpush1.msra.mxu0 0.0
      %2581 = vmatprep.subr.mxu0 0.0
      %2582 = vmatpush1.msra.mxu0 0.0
      %2583 = vmatprep.subr.mxu0 0.0
      %2584 = vmatpush1.msra.mxu0 0.0
      %2585 = vmatprep.subr.mxu0 0.0
      %2586 = vmatpush1.msra.mxu0 0.0
      %2587 = vmatprep.subr.mxu0 0.0
      %2588 = vmatpush1.msra.mxu0 0.0
      %2589 = vmatprep.subr.mxu0 0.0
      %2590 = vmatpush1.msra.mxu0 0.0
      %2591 = vmatprep.subr.mxu0 0.0
      %2592 = vmatpush1.msra.mxu0 0.0
      %2593 = vmatprep.subr.mxu0 0.0
      %2594 = vmatpush1.msra.mxu0 0.0
      %2595 = vmatprep.subr.mxu0 0.0
      %2596 = vmatpush1.msra.mxu0 0.0
      %2597 = vmatprep.subr.mxu0 0.0
      %2598 = vmatpush1.msra.mxu0 0.0
      %2599 = vmatprep.subr.mxu0 0.0
      %2600 = vmatpush1.msra.mxu0 0.0
      %2601 = vmatprep.subr.mxu0 0.0
      %2602 = vmatpush1.msra.mxu0 0.0
      %2603 = vmatprep.subr.mxu0 0.0
      %2604 = vmatpush1.msra.mxu0 0.0
      %2605 = vmatprep.subr.mxu0 0.0
      %2606 = vmatpush1.msra.mxu0 0.0
      %2607 = vmatprep.subr.mxu0 0.0
      %2608 = vmatpush1.msra.mxu0 0.0
      %2609 = vmatprep.subr.mxu0 0.0
      %2610 = vmatpush1.msra.mxu0 0.0
      %2611 = vmatprep.subr.mxu0 0.0
      %2612 = vmatpush1.msra.mxu0 0.0
      %2613 = vmatprep.subr.mxu0 0.0
      %2614 = vmatpush1.msra.mxu0 0.0
      %2615 = vmatprep.subr.mxu0 0.0
      %2616 = vmatpush1.msra.mxu0 0.0
      %2617 = vmatprep.mubr.f32.mxu0 0.0
      %2618 = vmatmul.mubr.f32.gmra.mrb[0].mxu0 %v2551
      %v2619 = vpop.f32.mrb[0].mxu0
      %v2620 = vadd.f32 0.0, %v2619
      %v2621 = vpop.f32.mrb[0].mxu0
      %2622 = vdwg.mxu0
      %v2623 = vsel %vm2550, %v2537, 0
      %2625 = vmatprep.subr.mxu0 0.0
      %2626 = vmatpush1.msra.mxu0 %v2536
      %2627 = vmatprep.subr.mxu0 0.0
      %2628 = vmatpush1.msra.mxu0 0.0
      %2629 = vmatprep.subr.mxu0 0.0
      %2630 = vmatpush1.msra.mxu0 0.0
      %2631 = vmatprep.subr.mxu0 0.0
      %2632 = vmatpush1.msra.mxu0 0.0
      %2633 = vmatprep.subr.mxu0 0.0
      %2634 = vmatpush1.msra.mxu0 0.0
      %2635 = vmatprep.subr.mxu0 0.0
      %2636 = vmatpush1.msra.mxu0 0.0
      %2637 = vmatprep.subr.mxu0 0.0
      %2638 = vmatpush1.msra.mxu0 0.0
      %2639 = vmatprep.subr.mxu0 0.0
      %2640 = vmatpush1.msra.mxu0 0.0
      %2641 = vmatprep.subr.mxu0 0.0
      %2642 = vmatpush1.msra.mxu0 0.0
      %2643 = vmatprep.subr.mxu0 0.0
      %2644 = vmatpush1.msra.mxu0 0.0
      %2645 = vmatprep.subr.mxu0 0.0
      %2646 = vmatpush1.msra.mxu0 0.0
      %2647 = vmatprep.subr.mxu0 0.0
      %2648 = vmatpush1.msra.mxu0 0.0
      %2649 = vmatprep.subr.mxu0 0.0
      %2650 = vmatpush1.msra.mxu0 0.0
      %2651 = vmatprep.subr.mxu0 0.0
      %2652 = vmatpush1.msra.mxu0 0.0
      %2653 = vmatprep.subr.mxu0 0.0
      %2654 = vmatpush1.msra.mxu0 0.0
      %2655 = vmatprep.subr.mxu0 0.0
      %2656 = vmatpush1.msra.mxu0 0.0
      %2657 = vmatprep.subr.mxu0 0.0
      %2658 = vmatpush1.msra.mxu0 0.0
      %2659 = vmatprep.subr.mxu0 0.0
      %2660 = vmatpush1.msra.mxu0 0.0
      %2661 = vmatprep.subr.mxu0 0.0
      %2662 = vmatpush1.msra.mxu0 0.0
      %2663 = vmatprep.subr.mxu0 0.0
      %2664 = vmatpush1.msra.mxu0 0.0
      %2665 = vmatprep.subr.mxu0 0.0
      %2666 = vmatpush1.msra.mxu0 0.0
      %2667 = vmatprep.subr.mxu0 0.0
      %2668 = vmatpush1.msra.mxu0 0.0
      %2669 = vmatprep.subr.mxu0 0.0
      %2670 = vmatpush1.msra.mxu0 0.0
      %2671 = vmatprep.subr.mxu0 0.0
      %2672 = vmatpush1.msra.mxu0 0.0
      %2673 = vmatprep.subr.mxu0 0.0
      %2674 = vmatpush1.msra.mxu0 0.0
      %2675 = vmatprep.subr.mxu0 0.0
      %2676 = vmatpush1.msra.mxu0 0.0
      %2677 = vmatprep.subr.mxu0 0.0
      %2678 = vmatpush1.msra.mxu0 0.0
      %2679 = vmatprep.subr.mxu0 0.0
      %2680 = vmatpush1.msra.mxu0 0.0
      %2681 = vmatprep.subr.mxu0 0.0
      %2682 = vmatpush1.msra.mxu0 0.0
      %2683 = vmatprep.subr.mxu0 0.0
      %2684 = vmatpush1.msra.mxu0 0.0
      %2685 = vmatprep.subr.mxu0 0.0
      %2686 = vmatpush1.msra.mxu0 0.0
      %2687 = vmatprep.subr.mxu0 0.0
      %2688 = vmatpush1.msra.mxu0 0.0
      %2689 = vmatprep.mubr.f32.mxu0 0.0
      %2690 = vmatmul.mubr.f32.gmra.mrb[0].mxu0 %v2623
      %v2691 = vpop.f32.mrb[0].mxu0
      %v2692 = vadd.f32 %v2620, %v2691
      %v2693 = vpop.f32.mrb[0].mxu0
      %2694 = vdwg.mxu0
      %v2695 = vadd.s32 %v2525, 1
      %vm2696 = vcmp.ge.s32.totalorder %v2695, 0
      %vm2697 = vmand %vm2530, %vm2696
      %vm2698 = vcmp.lt.s32.totalorder %v2695, 8
      %vm2699 = vmand %vm2697, %vm2698
      %2700 = vrot.lane.b32.xlu0 %v2526, 126
      %v2701 = vpop.permute.xlu0 %2700
      %v2703 = vsel %vm2699, %v2701, 0.0
      %2704 = vrot.lane.b32.xlu0 %v2537, 112
      %v2705 = vpop.permute.xlu0 %2704
      %v2706 = vsel %vm2550, %v2705, 0
      %2708 = vmatprep.subr.mxu0 0.0
      %2709 = vmatpush1.msra.mxu0 %v2703
      %2710 = vmatprep.subr.mxu0 0.0
      %2711 = vmatpush1.msra.mxu0 0.0
      %2712 = vmatprep.subr.mxu0 0.0
      %2713 = vmatpush1.msra.mxu0 0.0
      %2714 = vmatprep.subr.mxu0 0.0
      %2715 = vmatpush1.msra.mxu0 0.0
      %2716 = vmatprep.subr.mxu0 0.0
      %2717 = vmatpush1.msra.mxu0 0.0
      %2718 = vmatprep.subr.mxu0 0.0
      %2719 = vmatpush1.msra.mxu0 0.0
      %2720 = vmatprep.subr.mxu0 0.0
      %2721 = vmatpush1.msra.mxu0 0.0
      %2722 = vmatprep.subr.mxu0 0.0
      %2723 = vmatpush1.msra.mxu0 0.0
      %2724 = vmatprep.subr.mxu0 0.0
      %2725 = vmatpush1.msra.mxu0 0.0
      %2726 = vmatprep.subr.mxu0 0.0
      %2727 = vmatpush1.msra.mxu0 0.0
      %2728 = vmatprep.subr.mxu0 0.0
      %2729 = vmatpush1.msra.mxu0 0.0
      %2730 = vmatprep.subr.mxu0 0.0
      %2731 = vmatpush1.msra.mxu0 0.0
      %2732 = vmatprep.subr.mxu0 0.0
      %2733 = vmatpush1.msra.mxu0 0.0
      %2734 = vmatprep.subr.mxu0 0.0
      %2735 = vmatpush1.msra.mxu0 0.0
      %2736 = vmatprep.subr.mxu0 0.0
      %2737 = vmatpush1.msra.mxu0 0.0
      %2738 = vmatprep.subr.mxu0 0.0
      %2739 = vmatpush1.msra.mxu0 0.0
      %2740 = vmatprep.subr.mxu0 0.0
      %2741 = vmatpush1.msra.mxu0 0.0
      %2742 = vmatprep.subr.mxu0 0.0
      %2743 = vmatpush1.msra.mxu0 0.0
      %2744 = vmatprep.subr.mxu0 0.0
      %2745 = vmatpush1.msra.mxu0 0.0
      %2746 = vmatprep.subr.mxu0 0.0
      %2747 = vmatpush1.msra.mxu0 0.0
      %2748 = vmatprep.subr.mxu0 0.0
      %2749 = vmatpush1.msra.mxu0 0.0
      %2750 = vmatprep.subr.mxu0 0.0
      %2751 = vmatpush1.msra.mxu0 0.0
      %2752 = vmatprep.subr.mxu0 0.0
      %2753 = vmatpush1.msra.mxu0 0.0
      %2754 = vmatprep.subr.mxu0 0.0
      %2755 = vmatpush1.msra.mxu0 0.0
      %2756 = vmatprep.subr.mxu0 0.0
      %2757 = vmatpush1.msra.mxu0 0.0
      %2758 = vmatprep.subr.mxu0 0.0
      %2759 = vmatpush1.msra.mxu0 0.0
      %2760 = vmatprep.subr.mxu0 0.0
      %2761 = vmatpush1.msra.mxu0 0.0
      %2762 = vmatprep.subr.mxu0 0.0
      %2763 = vmatpush1.msra.mxu0 0.0
      %2764 = vmatprep.subr.mxu0 0.0
      %2765 = vmatpush1.msra.mxu0 0.0
      %2766 = vmatprep.subr.mxu0 0.0
      %2767 = vmatpush1.msra.mxu0 0.0
      %2768 = vmatprep.subr.mxu0 0.0
      %2769 = vmatpush1.msra.mxu0 0.0
      %2770 = vmatprep.subr.mxu0 0.0
      %2771 = vmatpush1.msra.mxu0 0.0
      %2772 = vmatprep.mubr.f32.mxu0 0.0
      %2773 = vmatmul.mubr.f32.gmra.mrb[0].mxu0 %v2706
      %v2774 = vpop.f32.mrb[0].mxu0
      %v2775 = vadd.f32 0.0, %v2774
      %v2776 = vpop.f32.mrb[0].mxu0
      %2777 = vdwg.mxu0
      %v2778 = vadd.f32 %v2692, %v2775
      %vm2779 = vcmp.ge.s32.totalorder %v2524, 0
      %vm2780 = vcmp.lt.s32.totalorder %v2524, 8
      %vm2781 = vmand %vm2779, %vm2780
      %vm2782 = vmand %vm2781, %vm2532
      %vm2783 = vmand %vm2782, %vm2534
      %2784 = vrot.lane.b32.xlu0 %v2526, 120
      %v2785 = vpop.permute.xlu0 %2784
      %v2787 = vsel %vm2783, %v2785, 0.0
      %2788 = vrot.lane.b32.xlu0 %v2537, 104
      %v2789 = vpop.permute.xlu0 %2788
      %v2790 = vsel %vm2550, %v2789, 0
      %2792 = vmatprep.subr.mxu0 0.0
      %2793 = vmatpush1.msra.mxu0 %v2787
      %2794 = vmatprep.subr.mxu0 0.0
      %2795 = vmatpush1.msra.mxu0 0.0
      %2796 = vmatprep.subr.mxu0 0.0
      %2797 = vmatpush1.msra.mxu0 0.0
      %2798 = vmatprep.subr.mxu0 0.0
      %2799 = vmatpush1.msra.mxu0 0.0
      %2800 = vmatprep.subr.mxu0 0.0
      %2801 = vmatpush1.msra.mxu0 0.0
      %2802 = vmatprep.subr.mxu0 0.0
      %2803 = vmatpush1.msra.mxu0 0.0
      %2804 = vmatprep.subr.mxu0 0.0
      %2805 = vmatpush1.msra.mxu0 0.0
      %2806 = vmatprep.subr.mxu0 0.0
      %2807 = vmatpush1.msra.mxu0 0.0
      %2808 = vmatprep.subr.mxu0 0.0
      %2809 = vmatpush1.msra.mxu0 0.0
      %2810 = vmatprep.subr.mxu0 0.0
      %2811 = vmatpush1.msra.mxu0 0.0
      %2812 = vmatprep.subr.mxu0 0.0
      %2813 = vmatpush1.msra.mxu0 0.0
      %2814 = vmatprep.subr.mxu0 0.0
      %2815 = vmatpush1.msra.mxu0 0.0
      %2816 = vmatprep.subr.mxu0 0.0
      %2817 = vmatpush1.msra.mxu0 0.0
      %2818 = vmatprep.subr.mxu0 0.0
      %2819 = vmatpush1.msra.mxu0 0.0
      %2820 = vmatprep.subr.mxu0 0.0
      %2821 = vmatpush1.msra.mxu0 0.0
      %2822 = vmatprep.subr.mxu0 0.0
      %2823 = vmatpush1.msra.mxu0 0.0
      %2824 = vmatprep.subr.mxu0 0.0
      %2825 = vmatpush1.msra.mxu0 0.0
      %2826 = vmatprep.subr.mxu0 0.0
      %2827 = vmatpush1.msra.mxu0 0.0
      %2828 = vmatprep.subr.mxu0 0.0
      %2829 = vmatpush1.msra.mxu0 0.0
      %2830 = vmatprep.subr.mxu0 0.0
      %2831 = vmatpush1.msra.mxu0 0.0
      %2832 = vmatprep.subr.mxu0 0.0
      %2833 = vmatpush1.msra.mxu0 0.0
      %2834 = vmatprep.subr.mxu0 0.0
      %2835 = vmatpush1.msra.mxu0 0.0
      %2836 = vmatprep.subr.mxu0 0.0
      %2837 = vmatpush1.msra.mxu0 0.0
      %2838 = vmatprep.subr.mxu0 0.0
      %2839 = vmatpush1.msra.mxu0 0.0
      %2840 = vmatprep.subr.mxu0 0.0
      %2841 = vmatpush1.msra.mxu0 0.0
      %2842 = vmatprep.subr.mxu0 0.0
      %2843 = vmatpush1.msra.mxu0 0.0
      %2844 = vmatprep.subr.mxu0 0.0
      %2845 = vmatpush1.msra.mxu0 0.0
      %2846 = vmatprep.subr.mxu0 0.0
      %2847 = vmatpush1.msra.mxu0 0.0
      %2848 = vmatprep.subr.mxu0 0.0
      %2849 = vmatpush1.msra.mxu0 0.0
      %2850 = vmatprep.subr.mxu0 0.0
      %2851 = vmatpush1.msra.mxu0 0.0
      %2852 = vmatprep.subr.mxu0 0.0
      %2853 = vmatpush1.msra.mxu0 0.0
      %2854 = vmatprep.subr.mxu0 0.0
      %2855 = vmatpush1.msra.mxu0 0.0
      %2856 = vmatprep.mubr.f32.mxu0 0.0
      %2857 = vmatmul.mubr.f32.gmra.mrb[0].mxu0 %v2790
      %v2858 = vpop.f32.mrb[0].mxu0
      %v2859 = vadd.f32 0.0, %v2858
      %v2860 = vpop.f32.mrb[0].mxu0
      %2861 = vdwg.mxu0
      %v2862 = vadd.f32 %v2778, %v2859
      %vm2863 = vmand %vm2781, %vm2538
      %vm2864 = vmand %vm2863, %vm2540
      %2865 = vrot.lane.b32.xlu0 %v2526, 119
      %v2866 = vpop.permute.xlu0 %2865
      %v2868 = vsel %vm2864, %v2866, 0.0
      %2869 = vrot.lane.b32.xlu0 %v2537, 96
      %v2870 = vpop.permute.xlu0 %2869
      %v2871 = vsel %vm2550, %v2870, 0
      %2873 = vmatprep.subr.mxu0 0.0
      %2874 = vmatpush1.msra.mxu0 %v2868
      %2875 = vmatprep.subr.mxu0 0.0
      %2876 = vmatpush1.msra.mxu0 0.0
      %2877 = vmatprep.subr.mxu0 0.0
      %2878 = vmatpush1.msra.mxu0 0.0
      %2879 = vmatprep.subr.mxu0 0.0
      %2880 = vmatpush1.msra.mxu0 0.0
      %2881 = vmatprep.subr.mxu0 0.0
      %2882 = vmatpush1.msra.mxu0 0.0
      %2883 = vmatprep.subr.mxu0 0.0
      %2884 = vmatpush1.msra.mxu0 0.0
      %2885 = vmatprep.subr.mxu0 0.0
      %2886 = vmatpush1.msra.mxu0 0.0
      %2887 = vmatprep.subr.mxu0 0.0
      %2888 = vmatpush1.msra.mxu0 0.0
      %2889 = vmatprep.subr.mxu0 0.0
      %2890 = vmatpush1.msra.mxu0 0.0
      %2891 = vmatprep.subr.mxu0 0.0
      %2892 = vmatpush1.msra.mxu0 0.0
      %2893 = vmatprep.subr.mxu0 0.0
      %2894 = vmatpush1.msra.mxu0 0.0
      %2895 = vmatprep.subr.mxu0 0.0
      %2896 = vmatpush1.msra.mxu0 0.0
      %2897 = vmatprep.subr.mxu0 0.0
      %2898 = vmatpush1.msra.mxu0 0.0
      %2899 = vmatprep.subr.mxu0 0.0
      %2900 = vmatpush1.msra.mxu0 0.0
      %2901 = vmatprep.subr.mxu0 0.0
      %2902 = vmatpush1.msra.mxu0 0.0
      %2903 = vmatprep.subr.mxu0 0.0
      %2904 = vmatpush1.msra.mxu0 0.0
      %2905 = vmatprep.subr.mxu0 0.0
      %2906 = vmatpush1.msra.mxu0 0.0
      %2907 = vmatprep.subr.mxu0 0.0
      %2908 = vmatpush1.msra.mxu0 0.0
      %2909 = vmatprep.subr.mxu0 0.0
      %2910 = vmatpush1.msra.mxu0 0.0
      %2911 = vmatprep.subr.mxu0 0.0
      %2912 = vmatpush1.msra.mxu0 0.0
      %2913 = vmatprep.subr.mxu0 0.0
      %2914 = vmatpush1.msra.mxu0 0.0
      %2915 = vmatprep.subr.mxu0 0.0
      %2916 = vmatpush1.msra.mxu0 0.0
      %2917 = vmatprep.subr.mxu0 0.0
      %2918 = vmatpush1.msra.mxu0 0.0
      %2919 = vmatprep.subr.mxu0 0.0
      %2920 = vmatpush1.msra.mxu0 0.0
      %2921 = vmatprep.subr.mxu0 0.0
      %2922 = vmatpush1.msra.mxu0 0.0
      %2923 = vmatprep.subr.mxu0 0.0
      %2924 = vmatpush1.msra.mxu0 0.0
      %2925 = vmatprep.subr.mxu0 0.0
      %2926 = vmatpush1.msra.mxu0 0.0
      %2927 = vmatprep.subr.mxu0 0.0
      %2928 = vmatpush1.msra.mxu0 0.0
      %2929 = vmatprep.subr.mxu0 0.0
      %2930 = vmatpush1.msra.mxu0 0.0
      %2931 = vmatprep.subr.mxu0 0.0
      %2932 = vmatpush1.msra.mxu0 0.0
      %2933 = vmatprep.subr.mxu0 0.0
      %2934 = vmatpush1.msra.mxu0 0.0
      %2935 = vmatprep.subr.mxu0 0.0
      %2936 = vmatpush1.msra.mxu0 0.0
      %2937 = vmatprep.mubr.f32.mxu0 0.0
      %2938 = vmatmul.mubr.f32.gmra.mrb[0].mxu0 %v2871
      %v2939 = vpop.f32.mrb[0].mxu0
      %v2940 = vadd.f32 0.0, %v2939
      %v2941 = vpop.f32.mrb[0].mxu0
      %2942 = vdwg.mxu0
      %v2943 = vadd.f32 %v2862, %v2940
      %vm2944 = vmand %vm2781, %vm2696
      %vm2945 = vmand %vm2944, %vm2698
      %2946 = vrot.lane.b32.xlu0 %v2526, 118
      %v2947 = vpop.permute.xlu0 %2946
      %v2949 = vsel %vm2945, %v2947, 0.0
      %2950 = vrot.lane.b32.xlu0 %v2537, 88
      %v2951 = vpop.permute.xlu0 %2950
      %v2952 = vsel %vm2550, %v2951, 0
      %2954 = vmatprep.subr.mxu0 0.0
      %2955 = vmatpush1.msra.mxu0 %v2949
      %2956 = vmatprep.subr.mxu0 0.0
      %2957 = vmatpush1.msra.mxu0 0.0
      %2958 = vmatprep.subr.mxu0 0.0
      %2959 = vmatpush1.msra.mxu0 0.0
      %2960 = vmatprep.subr.mxu0 0.0
      %2961 = vmatpush1.msra.mxu0 0.0
      %2962 = vmatprep.subr.mxu0 0.0
      %2963 = vmatpush1.msra.mxu0 0.0
      %2964 = vmatprep.subr.mxu0 0.0
      %2965 = vmatpush1.msra.mxu0 0.0
      %2966 = vmatprep.subr.mxu0 0.0
      %2967 = vmatpush1.msra.mxu0 0.0
      %2968 = vmatprep.subr.mxu0 0.0
      %2969 = vmatpush1.msra.mxu0 0.0
      %2970 = vmatprep.subr.mxu0 0.0
      %2971 = vmatpush1.msra.mxu0 0.0
      %2972 = vmatprep.subr.mxu0 0.0
      %2973 = vmatpush1.msra.mxu0 0.0
      %2974 = vmatprep.subr.mxu0 0.0
      %2975 = vmatpush1.msra.mxu0 0.0
      %2976 = vmatprep.subr.mxu0 0.0
      %2977 = vmatpush1.msra.mxu0 0.0
      %2978 = vmatprep.subr.mxu0 0.0
      %2979 = vmatpush1.msra.mxu0 0.0
      %2980 = vmatprep.subr.mxu0 0.0
      %2981 = vmatpush1.msra.mxu0 0.0
      %2982 = vmatprep.subr.mxu0 0.0
      %2983 = vmatpush1.msra.mxu0 0.0
      %2984 = vmatprep.subr.mxu0 0.0
      %2985 = vmatpush1.msra.mxu0 0.0
      %2986 = vmatprep.subr.mxu0 0.0
      %2987 = vmatpush1.msra.mxu0 0.0
      %2988 = vmatprep.subr.mxu0 0.0
      %2989 = vmatpush1.msra.mxu0 0.0
      %2990 = vmatprep.subr.mxu0 0.0
      %2991 = vmatpush1.msra.mxu0 0.0
      %2992 = vmatprep.subr.mxu0 0.0
      %2993 = vmatpush1.msra.mxu0 0.0
      %2994 = vmatprep.subr.mxu0 0.0
      %2995 = vmatpush1.msra.mxu0 0.0
      %2996 = vmatprep.subr.mxu0 0.0
      %2997 = vmatpush1.msra.mxu0 0.0
      %2998 = vmatprep.subr.mxu0 0.0
      %2999 = vmatpush1.msra.mxu0 0.0
      %3000 = vmatprep.subr.mxu0 0.0
      %3001 = vmatpush1.msra.mxu0 0.0
      %3002 = vmatprep.subr.mxu0 0.0
      %3003 = vmatpush1.msra.mxu0 0.0
      %3004 = vmatprep.subr.mxu0 0.0
      %3005 = vmatpush1.msra.mxu0 0.0
      %3006 = vmatprep.subr.mxu0 0.0
      %3007 = vmatpush1.msra.mxu0 0.0
      %3008 = vmatprep.subr.mxu0 0.0
      %3009 = vmatpush1.msra.mxu0 0.0
      %3010 = vmatprep.subr.mxu0 0.0
      %3011 = vmatpush1.msra.mxu0 0.0
      %3012 = vmatprep.subr.mxu0 0.0
      %3013 = vmatpush1.msra.mxu0 0.0
      %3014 = vmatprep.subr.mxu0 0.0
      %3015 = vmatpush1.msra.mxu0 0.0
      %3016 = vmatprep.subr.mxu0 0.0
      %3017 = vmatpush1.msra.mxu0 0.0
      %3018 = vmatprep.mubr.f32.mxu0 0.0
      %3019 = vmatmul.mubr.f32.gmra.mrb[0].mxu0 %v2952
      %v3020 = vpop.f32.mrb[0].mxu0
      %v3021 = vadd.f32 0.0, %v3020
      %v3022 = vpop.f32.mrb[0].mxu0
      %3023 = vdwg.mxu0
      %v3024 = vadd.f32 %v2943, %v3021
      %v3025 = vadd.s32 %v2524, 1
      %vm3026 = vcmp.ge.s32.totalorder %v3025, 0
      %vm3027 = vcmp.lt.s32.totalorder %v3025, 8
      %vm3028 = vmand %vm3026, %vm3027
      %vm3029 = vmand %vm3028, %vm2532
      %vm3030 = vmand %vm3029, %vm2534
      %3031 = vrot.lane.b32.xlu0 %v2526, 112
      %v3032 = vpop.permute.xlu0 %3031
      %v3034 = vsel %vm3030, %v3032, 0.0
      %3035 = vrot.lane.b32.xlu0 %v2537, 80
      %v3036 = vpop.permute.xlu0 %3035
      %v3037 = vsel %vm2550, %v3036, 0
      %3039 = vmatprep.subr.mxu0 0.0
      %3040 = vmatpush1.msra.mxu0 %v3034
      %3041 = vmatprep.subr.mxu0 0.0
      %3042 = vmatpush1.msra.mxu0 0.0
      %3043 = vmatprep.subr.mxu0 0.0
      %3044 = vmatpush1.msra.mxu0 0.0
      %3045 = vmatprep.subr.mxu0 0.0
      %3046 = vmatpush1.msra.mxu0 0.0
      %3047 = vmatprep.subr.mxu0 0.0
      %3048 = vmatpush1.msra.mxu0 0.0
      %3049 = vmatprep.subr.mxu0 0.0
      %3050 = vmatpush1.msra.mxu0 0.0
      %3051 = vmatprep.subr.mxu0 0.0
      %3052 = vmatpush1.msra.mxu0 0.0
      %3053 = vmatprep.subr.mxu0 0.0
      %3054 = vmatpush1.msra.mxu0 0.0
      %3055 = vmatprep.subr.mxu0 0.0
      %3056 = vmatpush1.msra.mxu0 0.0
      %3057 = vmatprep.subr.mxu0 0.0
      %3058 = vmatpush1.msra.mxu0 0.0
      %3059 = vmatprep.subr.mxu0 0.0
      %3060 = vmatpush1.msra.mxu0 0.0
      %3061 = vmatprep.subr.mxu0 0.0
      %3062 = vmatpush1.msra.mxu0 0.0
      %3063 = vmatprep.subr.mxu0 0.0
      %3064 = vmatpush1.msra.mxu0 0.0
      %3065 = vmatprep.subr.mxu0 0.0
      %3066 = vmatpush1.msra.mxu0 0.0
      %3067 = vmatprep.subr.mxu0 0.0
      %3068 = vmatpush1.msra.mxu0 0.0
      %3069 = vmatprep.subr.mxu0 0.0
      %3070 = vmatpush1.msra.mxu0 0.0
      %3071 = vmatprep.subr.mxu0 0.0
      %3072 = vmatpush1.msra.mxu0 0.0
      %3073 = vmatprep.subr.mxu0 0.0
      %3074 = vmatpush1.msra.mxu0 0.0
      %3075 = vmatprep.subr.mxu0 0.0
      %3076 = vmatpush1.msra.mxu0 0.0
      %3077 = vmatprep.subr.mxu0 0.0
      %3078 = vmatpush1.msra.mxu0 0.0
      %3079 = vmatprep.subr.mxu0 0.0
      %3080 = vmatpush1.msra.mxu0 0.0
      %3081 = vmatprep.subr.mxu0 0.0
      %3082 = vmatpush1.msra.mxu0 0.0
      %3083 = vmatprep.subr.mxu0 0.0
      %3084 = vmatpush1.msra.mxu0 0.0
      %3085 = vmatprep.subr.mxu0 0.0
      %3086 = vmatpush1.msra.mxu0 0.0
      %3087 = vmatprep.subr.mxu0 0.0
      %3088 = vmatpush1.msra.mxu0 0.0
      %3089 = vmatprep.subr.mxu0 0.0
      %3090 = vmatpush1.msra.mxu0 0.0
      %3091 = vmatprep.subr.mxu0 0.0
      %3092 = vmatpush1.msra.mxu0 0.0
      %3093 = vmatprep.subr.mxu0 0.0
      %3094 = vmatpush1.msra.mxu0 0.0
      %3095 = vmatprep.subr.mxu0 0.0
      %3096 = vmatpush1.msra.mxu0 0.0
      %3097 = vmatprep.subr.mxu0 0.0
      %3098 = vmatpush1.msra.mxu0 0.0
      %3099 = vmatprep.subr.mxu0 0.0
      %3100 = vmatpush1.msra.mxu0 0.0
      %3101 = vmatprep.subr.mxu0 0.0
      %3102 = vmatpush1.msra.mxu0 0.0
      %3103 = vmatprep.mubr.f32.mxu0 0.0
      %3104 = vmatmul.mubr.f32.gmra.mrb[0].mxu0 %v3037
      %v3105 = vpop.f32.mrb[0].mxu0
      %v3106 = vadd.f32 0.0, %v3105
      %v3107 = vpop.f32.mrb[0].mxu0
      %3108 = vdwg.mxu0
      %v3109 = vadd.f32 %v3024, %v3106
      %vm3110 = vmand %vm3028, %vm2538
      %vm3111 = vmand %vm3110, %vm2540
      %3112 = vrot.lane.b32.xlu0 %v2526, 111
      %v3113 = vpop.permute.xlu0 %3112
      %v3115 = vsel %vm3111, %v3113, 0.0
      %3116 = vrot.lane.b32.xlu0 %v2537, 72
      %v3117 = vpop.permute.xlu0 %3116
      %v3118 = vsel %vm2550, %v3117, 0
      %3120 = vmatprep.subr.mxu0 0.0
      %3121 = vmatpush1.msra.mxu0 %v3115
      %3122 = vmatprep.subr.mxu0 0.0
      %3123 = vmatpush1.msra.mxu0 0.0
      %3124 = vmatprep.subr.mxu0 0.0
      %3125 = vmatpush1.msra.mxu0 0.0
      %3126 = vmatprep.subr.mxu0 0.0
      %3127 = vmatpush1.msra.mxu0 0.0
      %3128 = vmatprep.subr.mxu0 0.0
      %3129 = vmatpush1.msra.mxu0 0.0
      %3130 = vmatprep.subr.mxu0 0.0
      %3131 = vmatpush1.msra.mxu0 0.0
      %3132 = vmatprep.subr.mxu0 0.0
      %3133 = vmatpush1.msra.mxu0 0.0
      %3134 = vmatprep.subr.mxu0 0.0
      %3135 = vmatpush1.msra.mxu0 0.0
      %3136 = vmatprep.subr.mxu0 0.0
      %3137 = vmatpush1.msra.mxu0 0.0
      %3138 = vmatprep.subr.mxu0 0.0
      %3139 = vmatpush1.msra.mxu0 0.0
      %3140 = vmatprep.subr.mxu0 0.0
      %3141 = vmatpush1.msra.mxu0 0.0
      %3142 = vmatprep.subr.mxu0 0.0
      %3143 = vmatpush1.msra.mxu0 0.0
      %3144 = vmatprep.subr.mxu0 0.0
      %3145 = vmatpush1.msra.mxu0 0.0
      %3146 = vmatprep.subr.mxu0 0.0
      %3147 = vmatpush1.msra.mxu0 0.0
      %3148 = vmatprep.subr.mxu0 0.0
      %3149 = vmatpush1.msra.mxu0 0.0
      %3150 = vmatprep.subr.mxu0 0.0
      %3151 = vmatpush1.msra.mxu0 0.0
      %3152 = vmatprep.subr.mxu0 0.0
      %3153 = vmatpush1.msra.mxu0 0.0
      %3154 = vmatprep.subr.mxu0 0.0
      %3155 = vmatpush1.msra.mxu0 0.0
      %3156 = vmatprep.subr.mxu0 0.0
      %3157 = vmatpush1.msra.mxu0 0.0
      %3158 = vmatprep.subr.mxu0 0.0
      %3159 = vmatpush1.msra.mxu0 0.0
      %3160 = vmatprep.subr.mxu0 0.0
      %3161 = vmatpush1.msra.mxu0 0.0
      %3162 = vmatprep.subr.mxu0 0.0
      %3163 = vmatpush1.msra.mxu0 0.0
      %3164 = vmatprep.subr.mxu0 0.0
      %3165 = vmatpush1.msra.mxu0 0.0
      %3166 = vmatprep.subr.mxu0 0.0
      %3167 = vmatpush1.msra.mxu0 0.0
      %3168 = vmatprep.subr.mxu0 0.0
      %3169 = vmatpush1.msra.mxu0 0.0
      %3170 = vmatprep.subr.mxu0 0.0
      %3171 = vmatpush1.msra.mxu0 0.0
      %3172 = vmatprep.subr.mxu0 0.0
      %3173 = vmatpush1.msra.mxu0 0.0
      %3174 = vmatprep.subr.mxu0 0.0
      %3175 = vmatpush1.msra.mxu0 0.0
      %3176 = vmatprep.subr.mxu0 0.0
      %3177 = vmatpush1.msra.mxu0 0.0
      %3178 = vmatprep.subr.mxu0 0.0
      %3179 = vmatpush1.msra.mxu0 0.0
      %3180 = vmatprep.subr.mxu0 0.0
      %3181 = vmatpush1.msra.mxu0 0.0
      %3182 = vmatprep.subr.mxu0 0.0
      %3183 = vmatpush1.msra.mxu0 0.0
      %3184 = vmatprep.mubr.f32.mxu0 0.0
      %3185 = vmatmul.mubr.f32.gmra.mrb[0].mxu0 %v3118
      %v3186 = vpop.f32.mrb[0].mxu0
      %v3187 = vadd.f32 0.0, %v3186
      %v3188 = vpop.f32.mrb[0].mxu0
      %3189 = vdwg.mxu0
      %v3190 = vadd.f32 %v3109, %v3187
      %vm3191 = vmand %vm3028, %vm2696
      %vm3192 = vmand %vm3191, %vm2698
      %3193 = vrot.lane.b32.xlu0 %v2526, 110
      %v3194 = vpop.permute.xlu0 %3193
      %v3196 = vsel %vm3192, %v3194, 0.0
      %3197 = vrot.lane.b32.xlu0 %v2537, 64
      %v3198 = vpop.permute.xlu0 %3197
      %v3199 = vsel %vm2550, %v3198, 0
      %3201 = vmatprep.subr.mxu0 0.0
      %3202 = vmatpush1.msra.mxu0 %v3196
      %3203 = vmatprep.subr.mxu0 0.0
      %3204 = vmatpush1.msra.mxu0 0.0
      %3205 = vmatprep.subr.mxu0 0.0
      %3206 = vmatpush1.msra.mxu0 0.0
      %3207 = vmatprep.subr.mxu0 0.0
      %3208 = vmatpush1.msra.mxu0 0.0
      %3209 = vmatprep.subr.mxu0 0.0
      %3210 = vmatpush1.msra.mxu0 0.0
      %3211 = vmatprep.subr.mxu0 0.0
      %3212 = vmatpush1.msra.mxu0 0.0
      %3213 = vmatprep.subr.mxu0 0.0
      %3214 = vmatpush1.msra.mxu0 0.0
      %3215 = vmatprep.subr.mxu0 0.0
      %3216 = vmatpush1.msra.mxu0 0.0
      %3217 = vmatprep.subr.mxu0 0.0
      %3218 = vmatpush1.msra.mxu0 0.0
      %3219 = vmatprep.subr.mxu0 0.0
      %3220 = vmatpush1.msra.mxu0 0.0
      %3221 = vmatprep.subr.mxu0 0.0
      %3222 = vmatpush1.msra.mxu0 0.0
      %3223 = vmatprep.subr.mxu0 0.0
      %3224 = vmatpush1.msra.mxu0 0.0
      %3225 = vmatprep.subr.mxu0 0.0
      %3226 = vmatpush1.msra.mxu0 0.0
      %3227 = vmatprep.subr.mxu0 0.0
      %3228 = vmatpush1.msra.mxu0 0.0
      %3229 = vmatprep.subr.mxu0 0.0
      %3230 = vmatpush1.msra.mxu0 0.0
      %3231 = vmatprep.subr.mxu0 0.0
      %3232 = vmatpush1.msra.mxu0 0.0
      %3233 = vmatprep.subr.mxu0 0.0
      %3234 = vmatpush1.msra.mxu0 0.0
      %3235 = vmatprep.subr.mxu0 0.0
      %3236 = vmatpush1.msra.mxu0 0.0
      %3237 = vmatprep.subr.mxu0 0.0
      %3238 = vmatpush1.msra.mxu0 0.0
      %3239 = vmatprep.subr.mxu0 0.0
      %3240 = vmatpush1.msra.mxu0 0.0
      %3241 = vmatprep.subr.mxu0 0.0
      %3242 = vmatpush1.msra.mxu0 0.0
      %3243 = vmatprep.subr.mxu0 0.0
      %3244 = vmatpush1.msra.mxu0 0.0
      %3245 = vmatprep.subr.mxu0 0.0
      %3246 = vmatpush1.msra.mxu0 0.0
      %3247 = vmatprep.subr.mxu0 0.0
      %3248 = vmatpush1.msra.mxu0 0.0
      %3249 = vmatprep.subr.mxu0 0.0
      %3250 = vmatpush1.msra.mxu0 0.0
      %3251 = vmatprep.subr.mxu0 0.0
      %3252 = vmatpush1.msra.mxu0 0.0
      %3253 = vmatprep.subr.mxu0 0.0
      %3254 = vmatpush1.msra.mxu0 0.0
      %3255 = vmatprep.subr.mxu0 0.0
      %3256 = vmatpush1.msra.mxu0 0.0
      %3257 = vmatprep.subr.mxu0 0.0
      %3258 = vmatpush1.msra.mxu0 0.0
      %3259 = vmatprep.subr.mxu0 0.0
      %3260 = vmatpush1.msra.mxu0 0.0
      %3261 = vmatprep.subr.mxu0 0.0
      %3262 = vmatpush1.msra.mxu0 0.0
      %3263 = vmatprep.subr.mxu0 0.0
      %3264 = vmatpush1.msra.mxu0 0.0
      %3265 = vmatprep.mubr.f32.mxu0 0.0
      %3266 = vmatmul.mubr.f32.gmra.mrb[0].mxu0 %v3199
      %v3267 = vpop.f32.mrb[0].mxu0
      %v3268 = vadd.f32 0.0, %v3267
      %v3269 = vpop.f32.mrb[0].mxu0
      %3270 = vdwg.mxu0
      %v3271 = vadd.f32 %v3190, %v3268
      %v3272 = vld [vmem:[%s7] sm:$0xff]
      %3274 = vset.pattern.permute.xlu0 0
      %3275 = vperm.xlu0 %3274, %v3272
      %v3276 = vpop.permute.xlu0 %3275
      %v3278 = vadd.f32 %v3271, %v3276
      %v3279 = vmax.f32 %v3278, 0.0
      %3280 = vst.msk [vmem:[#allocation3] sm:$0xff] %vm2516, 0.0
      %3282 = vrot.lane.b32.xlu0 %v3279, 9
      %v3283 = vpop.permute.xlu0 %3282
      %3285 = vst.msk [vmem:[#allocation3] sm:$0xff] %vm2522, %v3283
      %v3286 = vld [vmem:[#allocation3] sm:$0xff]
      %v3287 = vsel %vm2535, %v3286, 0.0
      %v3288 = vld [vmem:[%s8] sm:$0xff]
      %3290 = vrot.lane.b32.xlu0 %v3286, 127
      %v3291 = vpop.permute.xlu0 %3290
      %v3293 = vsel %vm2541, %v3291, 0.0
      %3295 = vrot.lane.b32.xlu0 %v3288, 120
      %v3296 = vpop.permute.xlu0 %3295
      %v3297 = vsel %vm2550, %v3296, 0
      %3299 = vmatprep.subr.mxu0 0.0
      %3300 = vmatpush1.msra.mxu0 %v3293
      %3301 = vmatprep.subr.mxu0 0.0
      %3302 = vmatpush1.msra.mxu0 0.0
      %3303 = vmatprep.subr.mxu0 0.0
      %3304 = vmatpush1.msra.mxu0 0.0
      %3305 = vmatprep.subr.mxu0 0.0
      %3306 = vmatpush1.msra.mxu0 0.0
      %3307 = vmatprep.subr.mxu0 0.0
      %3308 = vmatpush1.msra.mxu0 0.0
      %3309 = vmatprep.subr.mxu0 0.0
      %3310 = vmatpush1.msra.mxu0 0.0
      %3311 = vmatprep.subr.mxu0 0.0
      %3312 = vmatpush1.msra.mxu0 0.0
      %3313 = vmatprep.subr.mxu0 0.0
      %3314 = vmatpush1.msra.mxu0 0.0
      %3315 = vmatprep.subr.mxu0 0.0
      %3316 = vmatpush1.msra.mxu0 0.0
      %3317 = vmatprep.subr.mxu0 0.0
      %3318 = vmatpush1.msra.mxu0 0.0
      %3319 = vmatprep.subr.mxu0 0.0
      %3320 = vmatpush1.msra.mxu0 0.0
      %3321 = vmatprep.subr.mxu0 0.0
      %3322 = vmatpush1.msra.mxu0 0.0
      %3323 = vmatprep.subr.mxu0 0.0
      %3324 = vmatpush1.msra.mxu0 0.0
      %3325 = vmatprep.subr.mxu0 0.0
      %3326 = vmatpush1.msra.mxu0 0.0
      %3327 = vmatprep.subr.mxu0 0.0
      %3328 = vmatpush1.msra.mxu0 0.0
      %3329 = vmatprep.subr.mxu0 0.0
      %3330 = vmatpush1.msra.mxu0 0.0
      %3331 = vmatprep.subr.mxu0 0.0
      %3332 = vmatpush1.msra.mxu0 0.0
      %3333 = vmatprep.subr.mxu0 0.0
      %3334 = vmatpush1.msra.mxu0 0.0
      %3335 = vmatprep.subr.mxu0 0.0
      %3336 = vmatpush1.msra.mxu0 0.0
      %3337 = vmatprep.subr.mxu0 0.0
      %3338 = vmatpush1.msra.mxu0 0.0
      %3339 = vmatprep.subr.mxu0 0.0
      %3340 = vmatpush1.msra.mxu0 0.0
      %3341 = vmatprep.subr.mxu0 0.0
      %3342 = vmatpush1.msra.mxu0 0.0
      %3343 = vmatprep.subr.mxu0 0.0
      %3344 = vmatpush1.msra.mxu0 0.0
      %3345 = vmatprep.subr.mxu0 0.0
      %3346 = vmatpush1.msra.mxu0 0.0
      %3347 = vmatprep.subr.mxu0 0.0
      %3348 = vmatpush1.msra.mxu0 0.0
      %3349 = vmatprep.subr.mxu0 0.0
      %3350 = vmatpush1.msra.mxu0 0.0
      %3351 = vmatprep.subr.mxu0 0.0
      %3352 = vmatpush1.msra.mxu0 0.0
      %3353 = vmatprep.subr.mxu0 0.0
      %3354 = vmatpush1.msra.mxu0 0.0
      %3355 = vmatprep.subr.mxu0 0.0
      %3356 = vmatpush1.msra.mxu0 0.0
      %3357 = vmatprep.subr.mxu0 0.0
      %3358 = vmatpush1.msra.mxu0 0.0
      %3359 = vmatprep.subr.mxu0 0.0
      %3360 = vmatpush1.msra.mxu0 0.0
      %3361 = vmatprep.subr.mxu0 0.0
      %3362 = vmatpush1.msra.mxu0 0.0
      %3363 = vmatprep.mubr.f32.mxu0 0.0
      %3364 = vmatmul.mubr.f32.gmra.mrb[0].mxu0 %v3297
      %v3365 = vpop.f32.mrb[0].mxu0
      %v3366 = vadd.f32 0.0, %v3365
      %v3367 = vpop.f32.mrb[0].mxu0
      %3368 = vdwg.mxu0
      %v3369 = vsel %vm2550, %v3288, 0
      %3371 = vmatprep.subr.mxu0 0.0
      %3372 = vmatpush1.msra.mxu0 %v3287
      %3373 = vmatprep.subr.mxu0 0.0
      %3374 = vmatpush1.msra.mxu0 0.0
      %3375 = vmatprep.subr.mxu0 0.0
      %3376 = vmatpush1.msra.mxu0 0.0
      %3377 = vmatprep.subr.mxu0 0.0
      %3378 = vmatpush1.msra.mxu0 0.0
      %3379 = vmatprep.subr.mxu0 0.0
      %3380 = vmatpush1.msra.mxu0 0.0
      %3381 = vmatprep.subr.mxu0 0.0
      %3382 = vmatpush1.msra.mxu0 0.0
      %3383 = vmatprep.subr.mxu0 0.0
      %3384 = vmatpush1.msra.mxu0 0.0
      %3385 = vmatprep.subr.mxu0 0.0
      %3386 = vmatpush1.msra.mxu0 0.0
      %3387 = vmatprep.subr.mxu0 0.0
      %3388 = vmatpush1.msra.mxu0 0.0
      %3389 = vmatprep.subr.mxu0 0.0
      %3390 = vmatpush1.msra.mxu0 0.0
      %3391 = vmatprep.subr.mxu0 0.0
      %3392 = vmatpush1.msra.mxu0 0.0
      %3393 = vmatprep.subr.mxu0 0.0
      %3394 = vmatpush1.msra.mxu0 0.0
      %3395 = vmatprep.subr.mxu0 0.0
      %3396 = vmatpush1.msra.mxu0 0.0
      %3397 = vmatprep.subr.mxu0 0.0
      %3398 = vmatpush1.msra.mxu0 0.0
      %3399 = vmatprep.subr.mxu0 0.0
      %3400 = vmatpush1.msra.mxu0 0.0
      %3401 = vmatprep.subr.mxu0 0.0
      %3402 = vmatpush1.msra.mxu0 0.0
      %3403 = vmatprep.subr.mxu0 0.0
      %3404 = vmatpush1.msra.mxu0 0.0
      %3405 = vmatprep.subr.mxu0 0.0
      %3406 = vmatpush1.msra.mxu0 0.0
      %3407 = vmatprep.subr.mxu0 0.0
      %3408 = vmatpush1.msra.mxu0 0.0
      %3409 = vmatprep.subr.mxu0 0.0
      %3410 = vmatpush1.msra.mxu0 0.0
      %3411 = vmatprep.subr.mxu0 0.0
      %3412 = vmatpush1.msra.mxu0 0.0
      %3413 = vmatprep.subr.mxu0 0.0
      %3414 = vmatpush1.msra.mxu0 0.0
      %3415 = vmatprep.subr.mxu0 0.0
      %3416 = vmatpush1.msra.mxu0 0.0
      %3417 = vmatprep.subr.mxu0 0.0
      %3418 = vmatpush1.msra.mxu0 0.0
      %3419 = vmatprep.subr.mxu0 0.0
      %3420 = vmatpush1.msra.mxu0 0.0
      %3421 = vmatprep.subr.mxu0 0.0
      %3422 = vmatpush1.msra.mxu0 0.0
      %3423 = vmatprep.subr.mxu0 0.0
      %3424 = vmatpush1.msra.mxu0 0.0
      %3425 = vmatprep.subr.mxu0 0.0
      %3426 = vmatpush1.msra.mxu0 0.0
      %3427 = vmatprep.subr.mxu0 0.0
      %3428 = vmatpush1.msra.mxu0 0.0
      %3429 = vmatprep.subr.mxu0 0.0
      %3430 = vmatpush1.msra.mxu0 0.0
      %3431 = vmatprep.subr.mxu0 0.0
      %3432 = vmatpush1.msra.mxu0 0.0
      %3433 = vmatprep.subr.mxu0 0.0
      %3434 = vmatpush1.msra.mxu0 0.0
      %3435 = vmatprep.mubr.f32.mxu0 0.0
      %3436 = vmatmul.mubr.f32.gmra.mrb[0].mxu0 %v3369
      %v3437 = vpop.f32.mrb[0].mxu0
      %v3438 = vadd.f32 %v3366, %v3437
      %v3439 = vpop.f32.mrb[0].mxu0
      %3440 = vdwg.mxu0
      %3441 = vrot.lane.b32.xlu0 %v3286, 126
      %v3442 = vpop.permute.xlu0 %3441
      %v3444 = vsel %vm2699, %v3442, 0.0
      %3445 = vrot.lane.b32.xlu0 %v3288, 112
      %v3446 = vpop.permute.xlu0 %3445
      %v3447 = vsel %vm2550, %v3446, 0
      %3449 = vmatprep.subr.mxu0 0.0
      %3450 = vmatpush1.msra.mxu0 %v3444
      %3451 = vmatprep.subr.mxu0 0.0
      %3452 = vmatpush1.msra.mxu0 0.0
      %3453 = vmatprep.subr.mxu0 0.0
      %3454 = vmatpush1.msra.mxu0 0.0
      %3455 = vmatprep.subr.mxu0 0.0
      %3456 = vmatpush1.msra.mxu0 0.0
      %3457 = vmatprep.subr.mxu0 0.0
      %3458 = vmatpush1.msra.mxu0 0.0
      %3459 = vmatprep.subr.mxu0 0.0
      %3460 = vmatpush1.msra.mxu0 0.0
      %3461 = vmatprep.subr.mxu0 0.0
      %3462 = vmatpush1.msra.mxu0 0.0
      %3463 = vmatprep.subr.mxu0 0.0
      %3464 = vmatpush1.msra.mxu0 0.0
      %3465 = vmatprep.subr.mxu0 0.0
      %3466 = vmatpush1.msra.mxu0 0.0
      %3467 = vmatprep.subr.mxu0 0.0
      %3468 = vmatpush1.msra.mxu0 0.0
      %3469 = vmatprep.subr.mxu0 0.0
      %3470 = vmatpush1.msra.mxu0 0.0
      %3471 = vmatprep.subr.mxu0 0.0
      %3472 = vmatpush1.msra.mxu0 0.0
      %3473 = vmatprep.subr.mxu0 0.0
      %3474 = vmatpush1.msra.mxu0 0.0
      %3475 = vmatprep.subr.mxu0 0.0
      %3476 = vmatpush1.msra.mxu0 0.0
      %3477 = vmatprep.subr.mxu0 0.0
      %3478 = vmatpush1.msra.mxu0 0.0
      %3479 = vmatprep.subr.mxu0 0.0
      %3480 = vmatpush1.msra.mxu0 0.0
      %3481 = vmatprep.subr.mxu0 0.0
      %3482 = vmatpush1.msra.mxu0 0.0
      %3483 = vmatprep.subr.mxu0 0.0
      %3484 = vmatpush1.msra.mxu0 0.0
      %3485 = vmatprep.subr.mxu0 0.0
      %3486 = vmatpush1.msra.mxu0 0.0
      %3487 = vmatprep.subr.mxu0 0.0
      %3488 = vmatpush1.msra.mxu0 0.0
      %3489 = vmatprep.subr.mxu0 0.0
      %3490 = vmatpush1.msra.mxu0 0.0
      %3491 = vmatprep.subr.mxu0 0.0
      %3492 = vmatpush1.msra.mxu0 0.0
      %3493 = vmatprep.subr.mxu0 0.0
      %3494 = vmatpush1.msra.mxu0 0.0
      %3495 = vmatprep.subr.mxu0 0.0
      %3496 = vmatpush1.msra.mxu0 0.0
      %3497 = vmatprep.subr.mxu0 0.0
      %3498 = vmatpush1.msra.mxu0 0.0
      %3499 = vmatprep.subr.mxu0 0.0
      %3500 = vmatpush1.msra.mxu0 0.0
      %3501 = vmatprep.subr.mxu0 0.0
      %3502 = vmatpush1.msra.mxu0 0.0
      %3503 = vmatprep.subr.mxu0 0.0
      %3504 = vmatpush1.msra.mxu0 0.0
      %3505 = vmatprep.subr.mxu0 0.0
      %3506 = vmatpush1.msra.mxu0 0.0
      %3507 = vmatprep.subr.mxu0 0.0
      %3508 = vmatpush1.msra.mxu0 0.0
      %3509 = vmatprep.subr.mxu0 0.0
      %3510 = vmatpush1.msra.mxu0 0.0
      %3511 = vmatprep.subr.mxu0 0.0
      %3512 = vmatpush1.msra.mxu0 0.0
      %3513 = vmatprep.mubr.f32.mxu0 0.0
      %3514 = vmatmul.mubr.f32.gmra.mrb[0].mxu0 %v3447
      %v3515 = vpop.f32.mrb[0].mxu0
      %v3516 = vadd.f32 0.0, %v3515
      %v3517 = vpop.f32.mrb[0].mxu0
      %3518 = vdwg.mxu0
      %v3519 = vadd.f32 %v3438, %v3516
      %3520 = vrot.lane.b32.xlu0 %v3286, 120
      %v3521 = vpop.permute.xlu0 %3520
      %v3523 = vsel %vm2783, %v3521, 0.0
      %3524 = vrot.lane.b32.xlu0 %v3288, 104
      %v3525 = vpop.permute.xlu0 %3524
      %v3526 = vsel %vm2550, %v3525, 0
      %3528 = vmatprep.subr.mxu0 0.0
      %3529 = vmatpush1.msra.mxu0 %v3523
      %3530 = vmatprep.subr.mxu0 0.0
      %3531 = vmatpush1.msra.mxu0 0.0
      %3532 = vmatprep.subr.mxu0 0.0
      %3533 = vmatpush1.msra.mxu0 0.0
      %3534 = vmatprep.subr.mxu0 0.0
      %3535 = vmatpush1.msra.mxu0 0.0
      %3536 = vmatprep.subr.mxu0 0.0
      %3537 = vmatpush1.msra.mxu0 0.0
      %3538 = vmatprep.subr.mxu0 0.0
      %3539 = vmatpush1.msra.mxu0 0.0
      %3540 = vmatprep.subr.mxu0 0.0
      %3541 = vmatpush1.msra.mxu0 0.0
      %3542 = vmatprep.subr.mxu0 0.0
      %3543 = vmatpush1.msra.mxu0 0.0
      %3544 = vmatprep.subr.mxu0 0.0
      %3545 = vmatpush1.msra.mxu0 0.0
      %3546 = vmatprep.subr.mxu0 0.0
      %3547 = vmatpush1.msra.mxu0 0.0
      %3548 = vmatprep.subr.mxu0 0.0
      %3549 = vmatpush1.msra.mxu0 0.0
      %3550 = vmatprep.subr.mxu0 0.0
      %3551 = vmatpush1.msra.mxu0 0.0
      %3552 = vmatprep.subr.mxu0 0.0
      %3553 = vmatpush1.msra.mxu0 0.0
      %3554 = vmatprep.subr.mxu0 0.0
      %3555 = vmatpush1.msra.mxu0 0.0
      %3556 = vmatprep.subr.mxu0 0.0
      %3557 = vmatpush1.msra.mxu0 0.0
      %3558 = vmatprep.subr.mxu0 0.0
      %3559 = vmatpush1.msra.mxu0 0.0
      %3560 = vmatprep.subr.mxu0 0.0
      %3561 = vmatpush1.msra.mxu0 0.0
      %3562 = vmatprep.subr.mxu0 0.0
      %3563 = vmatpush1.msra.mxu0 0.0
      %3564 = vmatprep.subr.mxu0 0.0
      %3565 = vmatpush1.msra.mxu0 0.0
      %3566 = vmatprep.subr.mxu0 0.0
      %3567 = vmatpush1.msra.mxu0 0.0
      %3568 = vmatprep.subr.mxu0 0.0
      %3569 = vmatpush1.msra.mxu0 0.0
      %3570 = vmatprep.subr.mxu0 0.0
      %3571 = vmatpush1.msra.mxu0 0.0
      %3572 = vmatprep.subr.mxu0 0.0
      %3573 = vmatpush1.msra.mxu0 0.0
      %3574 = vmatprep.subr.mxu0 0.0
      %3575 = vmatpush1.msra.mxu0 0.0
      %3576 = vmatprep.subr.mxu0 0.0
      %3577 = vmatpush1.msra.mxu0 0.0
      %3578 = vmatprep.subr.mxu0 0.0
      %3579 = vmatpush1.msra.mxu0 0.0
      %3580 = vmatprep.subr.mxu0 0.0
      %3581 = vmatpush1.msra.mxu0 0.0
      %3582 = vmatprep.subr.mxu0 0.0
      %3583 = vmatpush1.msra.mxu0 0.0
      %3584 = vmatprep.subr.mxu0 0.0
      %3585 = vmatpush1.msra.mxu0 0.0
      %3586 = vmatprep.subr.mxu0 0.0
      %3587 = vmatpush1.msra.mxu0 0.0
      %3588 = vmatprep.subr.mxu0 0.0
      %3589 = vmatpush1.msra.mxu0 0.0
      %3590 = vmatprep.subr.mxu0 0.0
      %3591 = vmatpush1.msra.mxu0 0.0
      %3592 = vmatprep.mubr.f32.mxu0 0.0
      %3593 = vmatmul.mubr.f32.gmra.mrb[0].mxu0 %v3526
      %v3594 = vpop.f32.mrb[0].mxu0
      %v3595 = vadd.f32 0.0, %v3594
      %v3596 = vpop.f32.mrb[0].mxu0
      %3597 = vdwg.mxu0
      %v3598 = vadd.f32 %v3519, %v3595
      %3599 = vrot.lane.b32.xlu0 %v3286, 119
      %v3600 = vpop.permute.xlu0 %3599
      %v3602 = vsel %vm2864, %v3600, 0.0
      %3603 = vrot.lane.b32.xlu0 %v3288, 96
      %v3604 = vpop.permute.xlu0 %3603
      %v3605 = vsel %vm2550, %v3604, 0
      %3607 = vmatprep.subr.mxu0 0.0
      %3608 = vmatpush1.msra.mxu0 %v3602
      %3609 = vmatprep.subr.mxu0 0.0
      %3610 = vmatpush1.msra.mxu0 0.0
      %3611 = vmatprep.subr.mxu0 0.0
      %3612 = vmatpush1.msra.mxu0 0.0
      %3613 = vmatprep.subr.mxu0 0.0
      %3614 = vmatpush1.msra.mxu0 0.0
      %3615 = vmatprep.subr.mxu0 0.0
      %3616 = vmatpush1.msra.mxu0 0.0
      %3617 = vmatprep.subr.mxu0 0.0
      %3618 = vmatpush1.msra.mxu0 0.0
      %3619 = vmatprep.subr.mxu0 0.0
      %3620 = vmatpush1.msra.mxu0 0.0
      %3621 = vmatprep.subr.mxu0 0.0
      %3622 = vmatpush1.msra.mxu0 0.0
      %3623 = vmatprep.subr.mxu0 0.0
      %3624 = vmatpush1.msra.mxu0 0.0
      %3625 = vmatprep.subr.mxu0 0.0
      %3626 = vmatpush1.msra.mxu0 0.0
      %3627 = vmatprep.subr.mxu0 0.0
      %3628 = vmatpush1.msra.mxu0 0.0
      %3629 = vmatprep.subr.mxu0 0.0
      %3630 = vmatpush1.msra.mxu0 0.0
      %3631 = vmatprep.subr.mxu0 0.0
      %3632 = vmatpush1.msra.mxu0 0.0
      %3633 = vmatprep.subr.mxu0 0.0
      %3634 = vmatpush1.msra.mxu0 0.0
      %3635 = vmatprep.subr.mxu0 0.0
      %3636 = vmatpush1.msra.mxu0 0.0
      %3637 = vmatprep.subr.mxu0 0.0
      %3638 = vmatpush1.msra.mxu0 0.0
      %3639 = vmatprep.subr.mxu0 0.0
      %3640 = vmatpush1.msra.mxu0 0.0
      %3641 = vmatprep.subr.mxu0 0.0
      %3642 = vmatpush1.msra.mxu0 0.0
      %3643 = vmatprep.subr.mxu0 0.0
      %3644 = vmatpush1.msra.mxu0 0.0
      %3645 = vmatprep.subr.mxu0 0.0
      %3646 = vmatpush1.msra.mxu0 0.0
      %3647 = vmatprep.subr.mxu0 0.0
      %3648 = vmatpush1.msra.mxu0 0.0
      %3649 = vmatprep.subr.mxu0 0.0
      %3650 = vmatpush1.msra.mxu0 0.0
      %3651 = vmatprep.subr.mxu0 0.0
      %3652 = vmatpush1.msra.mxu0 0.0
      %3653 = vmatprep.subr.mxu0 0.0
      %3654 = vmatpush1.msra.mxu0 0.0
      %3655 = vmatprep.subr.mxu0 0.0
      %3656 = vmatpush1.msra.mxu0 0.0
      %3657 = vmatprep.subr.mxu0 0.0
      %3658 = vmatpush1.msra.mxu0 0.0
      %3659 = vmatprep.subr.mxu0 0.0
      %3660 = vmatpush1.msra.mxu0 0.0
      %3661 = vmatprep.subr.mxu0 0.0
      %3662 = vmatpush1.msra.mxu0 0.0
      %3663 = vmatprep.subr.mxu0 0.0
      %3664 = vmatpush1.msra.mxu0 0.0
      %3665 = vmatprep.subr.mxu0 0.0
      %3666 = vmatpush1.msra.mxu0 0.0
      %3667 = vmatprep.subr.mxu0 0.0
      %3668 = vmatpush1.msra.mxu0 0.0
      %3669 = vmatprep.subr.mxu0 0.0
      %3670 = vmatpush1.msra.mxu0 0.0
      %3671 = vmatprep.mubr.f32.mxu0 0.0
      %3672 = vmatmul.mubr.f32.gmra.mrb[0].mxu0 %v3605
      %v3673 = vpop.f32.mrb[0].mxu0
      %v3674 = vadd.f32 0.0, %v3673
      %v3675 = vpop.f32.mrb[0].mxu0
      %3676 = vdwg.mxu0
      %v3677 = vadd.f32 %v3598, %v3674
      %3678 = vrot.lane.b32.xlu0 %v3286, 118
      %v3679 = vpop.permute.xlu0 %3678
      %v3681 = vsel %vm2945, %v3679, 0.0
      %3682 = vrot.lane.b32.xlu0 %v3288, 88
      %v3683 = vpop.permute.xlu0 %3682
      %v3684 = vsel %vm2550, %v3683, 0
      %3686 = vmatprep.subr.mxu0 0.0
      %3687 = vmatpush1.msra.mxu0 %v3681
      %3688 = vmatprep.subr.mxu0 0.0
      %3689 = vmatpush1.msra.mxu0 0.0
      %3690 = vmatprep.subr.mxu0 0.0
      %3691 = vmatpush1.msra.mxu0 0.0
      %3692 = vmatprep.subr.mxu0 0.0
      %3693 = vmatpush1.msra.mxu0 0.0
      %3694 = vmatprep.subr.mxu0 0.0
      %3695 = vmatpush1.msra.mxu0 0.0
      %3696 = vmatprep.subr.mxu0 0.0
      %3697 = vmatpush1.msra.mxu0 0.0
      %3698 = vmatprep.subr.mxu0 0.0
      %3699 = vmatpush1.msra.mxu0 0.0
      %3700 = vmatprep.subr.mxu0 0.0
      %3701 = vmatpush1.msra.mxu0 0.0
      %3702 = vmatprep.subr.mxu0 0.0
      %3703 = vmatpush1.msra.mxu0 0.0
      %3704 = vmatprep.subr.mxu0 0.0
      %3705 = vmatpush1.msra.mxu0 0.0
      %3706 = vmatprep.subr.mxu0 0.0
      %3707 = vmatpush1.msra.mxu0 0.0
      %3708 = vmatprep.subr.mxu0 0.0
      %3709 = vmatpush1.msra.mxu0 0.0
      %3710 = vmatprep.subr.mxu0 0.0
      %3711 = vmatpush1.msra.mxu0 0.0
      %3712 = vmatprep.subr.mxu0 0.0
      %3713 = vmatpush1.msra.mxu0 0.0
      %3714 = vmatprep.subr.mxu0 0.0
      %3715 = vmatpush1.msra.mxu0 0.0
      %3716 = vmatprep.subr.mxu0 0.0
      %3717 = vmatpush1.msra.mxu0 0.0
      %3718 = vmatprep.subr.mxu0 0.0
      %3719 = vmatpush1.msra.mxu0 0.0
      %3720 = vmatprep.subr.mxu0 0.0
      %3721 = vmatpush1.msra.mxu0 0.0
      %3722 = vmatprep.subr.mxu0 0.0
      %3723 = vmatpush1.msra.mxu0 0.0
      %3724 = vmatprep.subr.mxu0 0.0
      %3725 = vmatpush1.msra.mxu0 0.0
      %3726 = vmatprep.subr.mxu0 0.0
      %3727 = vmatpush1.msra.mxu0 0.0
      %3728 = vmatprep.subr.mxu0 0.0
      %3729 = vmatpush1.msra.mxu0 0.0
      %3730 = vmatprep.subr.mxu0 0.0
      %3731 = vmatpush1.msra.mxu0 0.0
      %3732 = vmatprep.subr.mxu0 0.0
      %3733 = vmatpush1.msra.mxu0 0.0
      %3734 = vmatprep.subr.mxu0 0.0
      %3735 = vmatpush1.msra.mxu0 0.0
      %3736 = vmatprep.subr.mxu0 0.0
      %3737 = vmatpush1.msra.mxu0 0.0
      %3738 = vmatprep.subr.mxu0 0.0
      %3739 = vmatpush1.msra.mxu0 0.0
      %3740 = vmatprep.subr.mxu0 0.0
      %3741 = vmatpush1.msra.mxu0 0.0
      %3742 = vmatprep.subr.mxu0 0.0
      %3743 = vmatpush1.msra.mxu0 0.0
      %3744 = vmatprep.subr.mxu0 0.0
      %3745 = vmatpush1.msra.mxu0 0.0
      %3746 = vmatprep.subr.mxu0 0.0
      %3747 = vmatpush1.msra.mxu0 0.0
      %3748 = vmatprep.subr.mxu0 0.0
      %3749 = vmatpush1.msra.mxu0 0.0
      %3750 = vmatprep.mubr.f32.mxu0 0.0
      %3751 = vmatmul.mubr.f32.gmra.mrb[0].mxu0 %v3684
      %v3752 = vpop.f32.mrb[0].mxu0
      %v3753 = vadd.f32 0.0, %v3752
      %v3754 = vpop.f32.mrb[0].mxu0
      %3755 = vdwg.mxu0
      %v3756 = vadd.f32 %v3677, %v3753
      %3757 = vrot.lane.b32.xlu0 %v3286, 112
      %v3758 = vpop.permute.xlu0 %3757
      %v3760 = vsel %vm3030, %v3758, 0.0
      %3761 = vrot.lane.b32.xlu0 %v3288, 80
      %v3762 = vpop.permute.xlu0 %3761
      %v3763 = vsel %vm2550, %v3762, 0
      %3765 = vmatprep.subr.mxu0 0.0
      %3766 = vmatpush1.msra.mxu0 %v3760
      %3767 = vmatprep.subr.mxu0 0.0
      %3768 = vmatpush1.msra.mxu0 0.0
      %3769 = vmatprep.subr.mxu0 0.0
      %3770 = vmatpush1.msra.mxu0 0.0
      %3771 = vmatprep.subr.mxu0 0.0
      %3772 = vmatpush1.msra.mxu0 0.0
      %3773 = vmatprep.subr.mxu0 0.0
      %3774 = vmatpush1.msra.mxu0 0.0
      %3775 = vmatprep.subr.mxu0 0.0
      %3776 = vmatpush1.msra.mxu0 0.0
      %3777 = vmatprep.subr.mxu0 0.0
      %3778 = vmatpush1.msra.mxu0 0.0
      %3779 = vmatprep.subr.mxu0 0.0
      %3780 = vmatpush1.msra.mxu0 0.0
      %3781 = vmatprep.subr.mxu0 0.0
      %3782 = vmatpush1.msra.mxu0 0.0
      %3783 = vmatprep.subr.mxu0 0.0
      %3784 = vmatpush1.msra.mxu0 0.0
      %3785 = vmatprep.subr.mxu0 0.0
      %3786 = vmatpush1.msra.mxu0 0.0
      %3787 = vmatprep.subr.mxu0 0.0
      %3788 = vmatpush1.msra.mxu0 0.0
      %3789 = vmatprep.subr.mxu0 0.0
      %3790 = vmatpush1.msra.mxu0 0.0
      %3791 = vmatprep.subr.mxu0 0.0
      %3792 = vmatpush1.msra.mxu0 0.0
      %3793 = vmatprep.subr.mxu0 0.0
      %3794 = vmatpush1.msra.mxu0 0.0
      %3795 = vmatprep.subr.mxu0 0.0
      %3796 = vmatpush1.msra.mxu0 0.0
      %3797 = vmatprep.subr.mxu0 0.0
      %3798 = vmatpush1.msra.mxu0 0.0
      %3799 = vmatprep.subr.mxu0 0.0
      %3800 = vmatpush1.msra.mxu0 0.0
      %3801 = vmatprep.subr.mxu0 0.0
      %3802 = vmatpush1.msra.mxu0 0.0
      %3803 = vmatprep.subr.mxu0 0.0
      %3804 = vmatpush1.msra.mxu0 0.0
      %3805 = vmatprep.subr.mxu0 0.0
      %3806 = vmatpush1.msra.mxu0 0.0
      %3807 = vmatprep.subr.mxu0 0.0
      %3808 = vmatpush1.msra.mxu0 0.0
      %3809 = vmatprep.subr.mxu0 0.0
      %3810 = vmatpush1.msra.mxu0 0.0
      %3811 = vmatprep.subr.mxu0 0.0
      %3812 = vmatpush1.msra.mxu0 0.0
      %3813 = vmatprep.subr.mxu0 0.0
      %3814 = vmatpush1.msra.mxu0 0.0
      %3815 = vmatprep.subr.mxu0 0.0
      %3816 = vmatpush1.msra.mxu0 0.0
      %3817 = vmatprep.subr.mxu0 0.0
      %3818 = vmatpush1.msra.mxu0 0.0
      %3819 = vmatprep.subr.mxu0 0.0
      %3820 = vmatpush1.msra.mxu0 0.0
      %3821 = vmatprep.subr.mxu0 0.0
      %3822 = vmatpush1.msra.mxu0 0.0
      %3823 = vmatprep.subr.mxu0 0.0
      %3824 = vmatpush1.msra.mxu0 0.0
      %3825 = vmatprep.subr.mxu0 0.0
      %3826 = vmatpush1.msra.mxu0 0.0
      %3827 = vmatprep.subr.mxu0 0.0
      %3828 = vmatpush1.msra.mxu0 0.0
      %3829 = vmatprep.mubr.f32.mxu0 0.0
      %3830 = vmatmul.mubr.f32.gmra.mrb[0].mxu0 %v3763
      %v3831 = vpop.f32.mrb[0].mxu0
      %v3832 = vadd.f32 0.0, %v3831
      %v3833 = vpop.f32.mrb[0].mxu0
      %3834 = vdwg.mxu0
      %v3835 = vadd.f32 %v3756, %v3832
      %3836 = vrot.lane.b32.xlu0 %v3286, 111
      %v3837 = vpop.permute.xlu0 %3836
      %v3839 = vsel %vm3111, %v3837, 0.0
      %3840 = vrot.lane.b32.xlu0 %v3288, 72
      %v3841 = vpop.permute.xlu0 %3840
      %v3842 = vsel %vm2550, %v3841, 0
      %3844 = vmatprep.subr.mxu0 0.0
      %3845 = vmatpush1.msra.mxu0 %v3839
      %3846 = vmatprep.subr.mxu0 0.0
      %3847 = vmatpush1.msra.mxu0 0.0
      %3848 = vmatprep.subr.mxu0 0.0
      %3849 = vmatpush1.msra.mxu0 0.0
      %3850 = vmatprep.subr.mxu0 0.0
      %3851 = vmatpush1.msra.mxu0 0.0
      %3852 = vmatprep.subr.mxu0 0.0
      %3853 = vmatpush1.msra.mxu0 0.0
      %3854 = vmatprep.subr.mxu0 0.0
      %3855 = vmatpush1.msra.mxu0 0.0
      %3856 = vmatprep.subr.mxu0 0.0
      %3857 = vmatpush1.msra.mxu0 0.0
      %3858 = vmatprep.subr.mxu0 0.0
      %3859 = vmatpush1.msra.mxu0 0.0
      %3860 = vmatprep.subr.mxu0 0.0
      %3861 = vmatpush1.msra.mxu0 0.0
      %3862 = vmatprep.subr.mxu0 0.0
      %3863 = vmatpush1.msra.mxu0 0.0
      %3864 = vmatprep.subr.mxu0 0.0
      %3865 = vmatpush1.msra.mxu0 0.0
      %3866 = vmatprep.subr.mxu0 0.0
      %3867 = vmatpush1.msra.mxu0 0.0
      %3868 = vmatprep.subr.mxu0 0.0
      %3869 = vmatpush1.msra.mxu0 0.0
      %3870 = vmatprep.subr.mxu0 0.0
      %3871 = vmatpush1.msra.mxu0 0.0
      %3872 = vmatprep.subr.mxu0 0.0
      %3873 = vmatpush1.msra.mxu0 0.0
      %3874 = vmatprep.subr.mxu0 0.0
      %3875 = vmatpush1.msra.mxu0 0.0
      %3876 = vmatprep.subr.mxu0 0.0
      %3877 = vmatpush1.msra.mxu0 0.0
      %3878 = vmatprep.subr.mxu0 0.0
      %3879 = vmatpush1.msra.mxu0 0.0
      %3880 = vmatprep.subr.mxu0 0.0
      %3881 = vmatpush1.msra.mxu0 0.0
      %3882 = vmatprep.subr.mxu0 0.0
      %3883 = vmatpush1.msra.mxu0 0.0
      %3884 = vmatprep.subr.mxu0 0.0
      %3885 = vmatpush1.msra.mxu0 0.0
      %3886 = vmatprep.subr.mxu0 0.0
      %3887 = vmatpush1.msra.mxu0 0.0
      %3888 = vmatprep.subr.mxu0 0.0
      %3889 = vmatpush1.msra.mxu0 0.0
      %3890 = vmatprep.subr.mxu0 0.0
      %3891 = vmatpush1.msra.mxu0 0.0
      %3892 = vmatprep.subr.mxu0 0.0
      %3893 = vmatpush1.msra.mxu0 0.0
      %3894 = vmatprep.subr.mxu0 0.0
      %3895 = vmatpush1.msra.mxu0 0.0
      %3896 = vmatprep.subr.mxu0 0.0
      %3897 = vmatpush1.msra.mxu0 0.0
      %3898 = vmatprep.subr.mxu0 0.0
      %3899 = vmatpush1.msra.mxu0 0.0
      %3900 = vmatprep.subr.mxu0 0.0
      %3901 = vmatpush1.msra.mxu0 0.0
      %3902 = vmatprep.subr.mxu0 0.0
      %3903 = vmatpush1.msra.mxu0 0.0
      %3904 = vmatprep.subr.mxu0 0.0
      %3905 = vmatpush1.msra.mxu0 0.0
      %3906 = vmatprep.subr.mxu0 0.0
      %3907 = vmatpush1.msra.mxu0 0.0
      %3908 = vmatprep.mubr.f32.mxu0 0.0
      %3909 = vmatmul.mubr.f32.gmra.mrb[0].mxu0 %v3842
      %v3910 = vpop.f32.mrb[0].mxu0
      %v3911 = vadd.f32 0.0, %v3910
      %v3912 = vpop.f32.mrb[0].mxu0
      %3913 = vdwg.mxu0
      %v3914 = vadd.f32 %v3835, %v3911
      %3915 = vrot.lane.b32.xlu0 %v3286, 110
      %v3916 = vpop.permute.xlu0 %3915
      %v3918 = vsel %vm3192, %v3916, 0.0
      %3919 = vrot.lane.b32.xlu0 %v3288, 64
      %v3920 = vpop.permute.xlu0 %3919
      %v3921 = vsel %vm2550, %v3920, 0
      %3923 = vmatprep.subr.mxu0 0.0
      %3924 = vmatpush1.msra.mxu0 %v3918
      %3925 = vmatprep.subr.mxu0 0.0
      %3926 = vmatpush1.msra.mxu0 0.0
      %3927 = vmatprep.subr.mxu0 0.0
      %3928 = vmatpush1.msra.mxu0 0.0
      %3929 = vmatprep.subr.mxu0 0.0
      %3930 = vmatpush1.msra.mxu0 0.0
      %3931 = vmatprep.subr.mxu0 0.0
      %3932 = vmatpush1.msra.mxu0 0.0
      %3933 = vmatprep.subr.mxu0 0.0
      %3934 = vmatpush1.msra.mxu0 0.0
      %3935 = vmatprep.subr.mxu0 0.0
      %3936 = vmatpush1.msra.mxu0 0.0
      %3937 = vmatprep.subr.mxu0 0.0
      %3938 = vmatpush1.msra.mxu0 0.0
      %3939 = vmatprep.subr.mxu0 0.0
      %3940 = vmatpush1.msra.mxu0 0.0
      %3941 = vmatprep.subr.mxu0 0.0
      %3942 = vmatpush1.msra.mxu0 0.0
      %3943 = vmatprep.subr.mxu0 0.0
      %3944 = vmatpush1.msra.mxu0 0.0
      %3945 = vmatprep.subr.mxu0 0.0
      %3946 = vmatpush1.msra.mxu0 0.0
      %3947 = vmatprep.subr.mxu0 0.0
      %3948 = vmatpush1.msra.mxu0 0.0
      %3949 = vmatprep.subr.mxu0 0.0
      %3950 = vmatpush1.msra.mxu0 0.0
      %3951 = vmatprep.subr.mxu0 0.0
      %3952 = vmatpush1.msra.mxu0 0.0
      %3953 = vmatprep.subr.mxu0 0.0
      %3954 = vmatpush1.msra.mxu0 0.0
      %3955 = vmatprep.subr.mxu0 0.0
      %3956 = vmatpush1.msra.mxu0 0.0
      %3957 = vmatprep.subr.mxu0 0.0
      %3958 = vmatpush1.msra.mxu0 0.0
      %3959 = vmatprep.subr.mxu0 0.0
      %3960 = vmatpush1.msra.mxu0 0.0
      %3961 = vmatprep.subr.mxu0 0.0
      %3962 = vmatpush1.msra.mxu0 0.0
      %3963 = vmatprep.subr.mxu0 0.0
      %3964 = vmatpush1.msra.mxu0 0.0
      %3965 = vmatprep.subr.mxu0 0.0
      %3966 = vmatpush1.msra.mxu0 0.0
      %3967 = vmatprep.subr.mxu0 0.0
      %3968 = vmatpush1.msra.mxu0 0.0
      %3969 = vmatprep.subr.mxu0 0.0
      %3970 = vmatpush1.msra.mxu0 0.0
      %3971 = vmatprep.subr.mxu0 0.0
      %3972 = vmatpush1.msra.mxu0 0.0
      %3973 = vmatprep.subr.mxu0 0.0
      %3974 = vmatpush1.msra.mxu0 0.0
      %3975 = vmatprep.subr.mxu0 0.0
      %3976 = vmatpush1.msra.mxu0 0.0
      %3977 = vmatprep.subr.mxu0 0.0
      %3978 = vmatpush1.msra.mxu0 0.0
      %3979 = vmatprep.subr.mxu0 0.0
      %3980 = vmatpush1.msra.mxu0 0.0
      %3981 = vmatprep.subr.mxu0 0.0
      %3982 = vmatpush1.msra.mxu0 0.0
      %3983 = vmatprep.subr.mxu0 0.0
      %3984 = vmatpush1.msra.mxu0 0.0
      %3985 = vmatprep.subr.mxu0 0.0
      %3986 = vmatpush1.msra.mxu0 0.0
      %3987 = vmatprep.mubr.f32.mxu0 0.0
      %3988 = vmatmul.mubr.f32.gmra.mrb[0].mxu0 %v3921
      %v3989 = vpop.f32.mrb[0].mxu0
      %v3990 = vadd.f32 0.0, %v3989
      %v3991 = vpop.f32.mrb[0].mxu0
      %3992 = vdwg.mxu0
      %v3993 = vadd.f32 %v3914, %v3990
      %v3994 = vld [vmem:[%s9] sm:$0xff]
      %3996 = vset.pattern.permute.xlu0 0
      %3997 = vperm.xlu0 %3996, %v3994
      %v3998 = vpop.permute.xlu0 %3997
      %v4000 = vadd.f32 %v3993, %v3998
      %v4001 = vadd.f32 %v4000, %v578
      %v4002 = vmax.f32 %v4001, 0.0
      %v4003 = vld [vmem:[%s10] sm:$0xf]
      %v4004 = vld [vmem:[%s11] sm:$0xf]
      %4006 = vset.pattern.permute.xlu0 0
      %4007 = vperm.xlu0 %4006, %v4004
      %v4008 = vpop.permute.xlu0 %4007
      %v4011 = vsel %vm2550, %v4003, 0
      %4013 = vmatprep.subr.mxu0 0.0
      %4014 = vmatpush1.msra.mxu0 %v4002
      %4015 = vmatprep.subr.mxu0 0.0
      %4016 = vmatpush1.msra.mxu0 0.0
      %4017 = vmatprep.subr.mxu0 0.0
      %4018 = vmatpush1.msra.mxu0 0.0
      %4019 = vmatprep.subr.mxu0 0.0
      %4020 = vmatpush1.msra.mxu0 0.0
      %4021 = vmatprep.subr.mxu0 0.0
      %4022 = vmatpush1.msra.mxu0 0.0
      %4023 = vmatprep.subr.mxu0 0.0
      %4024 = vmatpush1.msra.mxu0 0.0
      %4025 = vmatprep.subr.mxu0 0.0
      %4026 = vmatpush1.msra.mxu0 0.0
      %4027 = vmatprep.subr.mxu0 0.0
      %4028 = vmatpush1.msra.mxu0 0.0
      %4029 = vmatprep.subr.mxu0 0.0
      %4030 = vmatpush1.msra.mxu0 0.0
      %4031 = vmatprep.subr.mxu0 0.0
      %4032 = vmatpush1.msra.mxu0 0.0
      %4033 = vmatprep.subr.mxu0 0.0
      %4034 = vmatpush1.msra.mxu0 0.0
      %4035 = vmatprep.subr.mxu0 0.0
      %4036 = vmatpush1.msra.mxu0 0.0
      %4037 = vmatprep.subr.mxu0 0.0
      %4038 = vmatpush1.msra.mxu0 0.0
      %4039 = vmatprep.subr.mxu0 0.0
      %4040 = vmatpush1.msra.mxu0 0.0
      %4041 = vmatprep.subr.mxu0 0.0
      %4042 = vmatpush1.msra.mxu0 0.0
      %4043 = vmatprep.subr.mxu0 0.0
      %4044 = vmatpush1.msra.mxu0 0.0
      %4045 = vmatprep.subr.mxu0 0.0
      %4046 = vmatpush1.msra.mxu0 0.0
      %4047 = vmatprep.subr.mxu0 0.0
      %4048 = vmatpush1.msra.mxu0 0.0
      %4049 = vmatprep.subr.mxu0 0.0
      %4050 = vmatpush1.msra.mxu0 0.0
      %4051 = vmatprep.subr.mxu0 0.0
      %4052 = vmatpush1.msra.mxu0 0.0
      %4053 = vmatprep.subr.mxu0 0.0
      %4054 = vmatpush1.msra.mxu0 0.0
      %4055 = vmatprep.subr.mxu0 0.0
      %4056 = vmatpush1.msra.mxu0 0.0
      %4057 = vmatprep.subr.mxu0 0.0
      %4058 = vmatpush1.msra.mxu0 0.0
      %4059 = vmatprep.subr.mxu0 0.0
      %4060 = vmatpush1.msra.mxu0 0.0
      %4061 = vmatprep.subr.mxu0 0.0
      %4062 = vmatpush1.msra.mxu0 0.0
      %4063 = vmatprep.subr.mxu0 0.0
      %4064 = vmatpush1.msra.mxu0 0.0
      %4065 = vmatprep.subr.mxu0 0.0
      %4066 = vmatpush1.msra.mxu0 0.0
      %4067 = vmatprep.subr.mxu0 0.0
      %4068 = vmatpush1.msra.mxu0 0.0
      %4069 = vmatprep.subr.mxu0 0.0
      %4070 = vmatpush1.msra.mxu0 0.0
      %4071 = vmatprep.subr.mxu0 0.0
      %4072 = vmatpush1.msra.mxu0 0.0
      %4073 = vmatprep.subr.mxu0 0.0
      %4074 = vmatpush1.msra.mxu0 0.0
      %4075 = vmatprep.subr.mxu0 0.0
      %4076 = vmatpush1.msra.mxu0 0.0
      %4077 = vmatprep.mubr.f32.mxu0 0.0
      %4078 = vmatmul.mubr.f32.gmra.mrb[0].mxu0 %v4011
      %v4079 = vpop.f32.mrb[0].mxu0
      %v4080 = vadd.f32 %v4008, %v4079
      %v4081 = vpop.f32.mrb[0].mxu0
      %4082 = vdwg.mxu0
      %v4083 = vld [vmem:[%s14] sm:$0xff]
      %v4084 = vld [vmem:[%s14 + $0x8] sm:$0xff]
      %v4085 = vld [vmem:[%s14 + $0x10] sm:$0xff]
      %v4086 = vld [vmem:[%s14 + $0x18] sm:$0xff]
      %v4087 = vld [vmem:[%s14 + $0x20] sm:$0xff]
      %v4088 = vld [vmem:[%s14 + $0x28] sm:$0xff]
      %v4089 = vld [vmem:[%s14 + $0x30] sm:$0xff]
      %v4090 = vld [vmem:[%s14 + $0x38] sm:$0xff]
      %v4091 = vld [vmem:[%s14 + $0x40] sm:$0xff]
      %v4092 = vld [vmem:[%s14 + $0x48] sm:$0xff]
      %v4093 = vld [vmem:[%s14 + $0x50] sm:$0xff]
      %v4094 = vld [vmem:[%s14 + $0x58] sm:$0xff]
      %v4095 = vld [vmem:[%s14 + $0x60] sm:$0xff]
      %v4096 = vld [vmem:[%s14 + $0x68] sm:$0xff]
      %v4097 = vld [vmem:[%s14 + $0x70] sm:$0xff]
      %v4098 = vld [vmem:[%s14 + $0x78] sm:$0xff]
      %vm4099 = vcmask 523264
      %v4101 = vsel %vm4099, %v4080, 0
      %4103 = vmatprep.subr.mxu0 %v4084
      %4104 = vmatpush1.msra.mxu0 %v4083
      %4105 = vmatprep.subr.mxu0 %v4086
      %4106 = vmatpush1.msra.mxu0 %v4085
      %4107 = vmatprep.subr.mxu0 %v4088
      %4108 = vmatpush1.msra.mxu0 %v4087
      %4109 = vmatprep.subr.mxu0 %v4090
      %4110 = vmatpush1.msra.mxu0 %v4089
      %4111 = vmatprep.subr.mxu0 %v4092
      %4112 = vmatpush1.msra.mxu0 %v4091
      %4113 = vmatprep.subr.mxu0 %v4094
      %4114 = vmatpush1.msra.mxu0 %v4093
      %4115 = vmatprep.subr.mxu0 %v4096
      %4116 = vmatpush1.msra.mxu0 %v4095
      %4117 = vmatprep.subr.mxu0 %v4098
      %4118 = vmatpush1.msra.mxu0 %v4097
      %4119 = vmatprep.subr.mxu0 0.0
      %4120 = vmatpush1.msra.mxu0 0.0
      %4121 = vmatprep.subr.mxu0 0.0
      %4122 = vmatpush1.msra.mxu0 0.0
      %4123 = vmatprep.subr.mxu0 0.0
      %4124 = vmatpush1.msra.mxu0 0.0
      %4125 = vmatprep.subr.mxu0 0.0
      %4126 = vmatpush1.msra.mxu0 0.0
      %4127 = vmatprep.subr.mxu0 0.0
      %4128 = vmatpush1.msra.mxu0 0.0
      %4129 = vmatprep.subr.mxu0 0.0
      %4130 = vmatpush1.msra.mxu0 0.0
      %4131 = vmatprep.subr.mxu0 0.0
      %4132 = vmatpush1.msra.mxu0 0.0
      %4133 = vmatprep.subr.mxu0 0.0
      %4134 = vmatpush1.msra.mxu0 0.0
      %4135 = vmatprep.subr.mxu0 0.0
      %4136 = vmatpush1.msra.mxu0 0.0
      %4137 = vmatprep.subr.mxu0 0.0
      %4138 = vmatpush1.msra.mxu0 0.0
      %4139 = vmatprep.subr.mxu0 0.0
      %4140 = vmatpush1.msra.mxu0 0.0
      %4141 = vmatprep.subr.mxu0 0.0
      %4142 = vmatpush1.msra.mxu0 0.0
      %4143 = vmatprep.subr.mxu0 0.0
      %4144 = vmatpush1.msra.mxu0 0.0
      %4145 = vmatprep.subr.mxu0 0.0
      %4146 = vmatpush1.msra.mxu0 0.0
      %4147 = vmatprep.subr.mxu0 0.0
      %4148 = vmatpush1.msra.mxu0 0.0
      %4149 = vmatprep.subr.mxu0 0.0
      %4150 = vmatpush1.msra.mxu0 0.0
      %4151 = vmatprep.subr.mxu0 0.0
      %4152 = vmatpush1.msra.mxu0 0.0
      %4153 = vmatprep.subr.mxu0 0.0
      %4154 = vmatpush1.msra.mxu0 0.0
      %4155 = vmatprep.subr.mxu0 0.0
      %4156 = vmatpush1.msra.mxu0 0.0
      %4157 = vmatprep.subr.mxu0 0.0
      %4158 = vmatpush1.msra.mxu0 0.0
      %4159 = vmatprep.subr.mxu0 0.0
      %4160 = vmatpush1.msra.mxu0 0.0
      %4161 = vmatprep.subr.mxu0 0.0
      %4162 = vmatpush1.msra.mxu0 0.0
      %4163 = vmatprep.subr.mxu0 0.0
      %4164 = vmatpush1.msra.mxu0 0.0
      %4165 = vmatprep.subr.mxu0 0.0
      %4166 = vmatpush1.msra.mxu0 0.0
      %4167 = vmatprep.mubr.f32.mxu0 0.0
      %4168 = vmatmul.mubr.f32.gmra.mrb[0].mxu0 %v4101
      %v4169 = vpop.f32.mrb[0].mxu0
      %v4170 = vadd.f32 0.0, %v4169
      %v4171 = vpop.f32.mrb[0].mxu0
      %v4172 = vadd.f32 0.0, %v4171
      %4173 = vdwg.mxu0
      %v4174 = vadd.f32 %v2514, %v4170
      %v4175 = vadd.f32 %v2515, %v4172
      %v4176 = vmax.f32 %v4174, 0.0
      %v4177 = vmax.f32 %v4175, 0.0
      %v4180 = vcombine.low %v4176, %v4177
      %4182 = vst [vmem:[%s572] sm:$0xff] %v4180
      %4183 = vst [vmem:[#allocation2] sm:$0xff] 0.0
      %4184 = vst.msk [vmem:[#allocation2 + $0x8] sm:$0xf] %vm580, 0.0
      %v4187 = vcombine.low %v2514, %v2515
      %4188 = vrot.lane.b32.xlu0 %v4187, 17
      %v4189 = vpop.permute.xlu0 %4188
      %v4190 = vrot.slane %v4189, 4
      %v4191 = vsel %vm586, %v4190, %v4189
      %4194 = vst.msk [vmem:[#allocation2] sm:$0xff] %vm592, %v4191
      %4195 = vst.msk [vmem:[#allocation2 + $0x8] sm:$0xf] %vm594, %v4190
      %v4196 = vld [vmem:[#allocation2] sm:$0xff]
      %v4198 = vcombine.high %v4196, %v4196
      %v4200 = vsel %vm620, %v4196, 0.0
      %v4201 = vsel %vm621, %v4198, 0.0
      %v4202 = vld [vmem:[%s12] sm:$0xff]
      %v4203 = vld [vmem:[#allocation2 + $0x8] sm:$0xf]
      %4205 = vrot.lane.b32.xlu0 %v4196, 127
      %v4206 = vpop.permute.xlu0 %4205
      %4207 = vrot.lane.b32.xlu0 %v4198, 127
      %v4208 = vpop.permute.xlu0 %4207
      %4209 = vrot.lane.b32.xlu0 %v4203, 127
      %v4210 = vpop.permute.xlu0 %4209
      %v4211 = vsel %vm644, %v4206, %v4208
      %v4212 = vsel %vm644, %v4208, %v4210
      %v4215 = vsel %vm635, %v4211, 0.0
      %v4216 = vsel %vm636, %v4212, 0.0
      %4218 = vrot.lane.b32.xlu0 %v4202, 124
      %v4219 = vpop.permute.xlu0 %4218
      %v4220 = vsel %vm654, %v4219, 0
      %v4223 = vsel %vm657, %v4215, 0
      %v4226 = vsel %vm657, %v4216, 0
      %4228 = vmatprep.subr.mxu0 %v4226
      %4229 = vmatpush1.msra.mxu0 %v4223
      %4230 = vmatprep.subr.mxu0 0.0
      %4231 = vmatpush1.msra.mxu0 0.0
      %4232 = vmatprep.subr.mxu0 0.0
      %4233 = vmatpush1.msra.mxu0 0.0
      %4234 = vmatprep.subr.mxu0 0.0
      %4235 = vmatpush1.msra.mxu0 0.0
      %4236 = vmatprep.subr.mxu0 0.0
      %4237 = vmatpush1.msra.mxu0 0.0
      %4238 = vmatprep.subr.mxu0 0.0
      %4239 = vmatpush1.msra.mxu0 0.0
      %4240 = vmatprep.subr.mxu0 0.0
      %4241 = vmatpush1.msra.mxu0 0.0
      %4242 = vmatprep.subr.mxu0 0.0
      %4243 = vmatpush1.msra.mxu0 0.0
      %4244 = vmatprep.subr.mxu0 0.0
      %4245 = vmatpush1.msra.mxu0 0.0
      %4246 = vmatprep.subr.mxu0 0.0
      %4247 = vmatpush1.msra.mxu0 0.0
      %4248 = vmatprep.subr.mxu0 0.0
      %4249 = vmatpush1.msra.mxu0 0.0
      %4250 = vmatprep.subr.mxu0 0.0
      %4251 = vmatpush1.msra.mxu0 0.0
      %4252 = vmatprep.subr.mxu0 0.0
      %4253 = vmatpush1.msra.mxu0 0.0
      %4254 = vmatprep.subr.mxu0 0.0
      %4255 = vmatpush1.msra.mxu0 0.0
      %4256 = vmatprep.subr.mxu0 0.0
      %4257 = vmatpush1.msra.mxu0 0.0
      %4258 = vmatprep.subr.mxu0 0.0
      %4259 = vmatpush1.msra.mxu0 0.0
      %4260 = vmatprep.subr.mxu0 0.0
      %4261 = vmatpush1.msra.mxu0 0.0
      %4262 = vmatprep.subr.mxu0 0.0
      %4263 = vmatpush1.msra.mxu0 0.0
      %4264 = vmatprep.subr.mxu0 0.0
      %4265 = vmatpush1.msra.mxu0 0.0
      %4266 = vmatprep.subr.mxu0 0.0
      %4267 = vmatpush1.msra.mxu0 0.0
      %4268 = vmatprep.subr.mxu0 0.0
      %4269 = vmatpush1.msra.mxu0 0.0
      %4270 = vmatprep.subr.mxu0 0.0
      %4271 = vmatpush1.msra.mxu0 0.0
      %4272 = vmatprep.subr.mxu0 0.0
      %4273 = vmatpush1.msra.mxu0 0.0
      %4274 = vmatprep.subr.mxu0 0.0
      %4275 = vmatpush1.msra.mxu0 0.0
      %4276 = vmatprep.subr.mxu0 0.0
      %4277 = vmatpush1.msra.mxu0 0.0
      %4278 = vmatprep.subr.mxu0 0.0
      %4279 = vmatpush1.msra.mxu0 0.0
      %4280 = vmatprep.subr.mxu0 0.0
      %4281 = vmatpush1.msra.mxu0 0.0
      %4282 = vmatprep.subr.mxu0 0.0
      %4283 = vmatpush1.msra.mxu0 0.0
      %4284 = vmatprep.subr.mxu0 0.0
      %4285 = vmatpush1.msra.mxu0 0.0
      %4286 = vmatprep.subr.mxu0 0.0
      %4287 = vmatpush1.msra.mxu0 0.0
      %4288 = vmatprep.subr.mxu0 0.0
      %4289 = vmatpush1.msra.mxu0 0.0
      %4290 = vmatprep.subr.mxu0 0.0
      %4291 = vmatpush1.msra.mxu0 0.0
      %4292 = vmatprep.mubr.f32.mxu0 0.0
      %4293 = vmatmul.mubr.f32.gmra.mrb[0].mxu0 %v4220
      %v4294 = vpop.f32.mrb[0].mxu0
      %v4295 = vadd.f32 0.0, %v4294
      %v4296 = vpop.f32.mrb[0].mxu0
      %v4297 = vadd.f32 0.0, %v4296
      %4298 = vdwg.mxu0
      %v4299 = vsel %vm654, %v4202, 0
      %v4302 = vsel %vm657, %v4200, 0
      %v4305 = vsel %vm657, %v4201, 0
      %4307 = vmatprep.subr.mxu0 %v4305
      %4308 = vmatpush1.msra.mxu0 %v4302
      %4309 = vmatprep.subr.mxu0 0.0
      %4310 = vmatpush1.msra.mxu0 0.0
      %4311 = vmatprep.subr.mxu0 0.0
      %4312 = vmatpush1.msra.mxu0 0.0
      %4313 = vmatprep.subr.mxu0 0.0
      %4314 = vmatpush1.msra.mxu0 0.0
      %4315 = vmatprep.subr.mxu0 0.0
      %4316 = vmatpush1.msra.mxu0 0.0
      %4317 = vmatprep.subr.mxu0 0.0
      %4318 = vmatpush1.msra.mxu0 0.0
      %4319 = vmatprep.subr.mxu0 0.0
      %4320 = vmatpush1.msra.mxu0 0.0
      %4321 = vmatprep.subr.mxu0 0.0
      %4322 = vmatpush1.msra.mxu0 0.0
      %4323 = vmatprep.subr.mxu0 0.0
      %4324 = vmatpush1.msra.mxu0 0.0
      %4325 = vmatprep.subr.mxu0 0.0
      %4326 = vmatpush1.msra.mxu0 0.0
      %4327 = vmatprep.subr.mxu0 0.0
      %4328 = vmatpush1.msra.mxu0 0.0
      %4329 = vmatprep.subr.mxu0 0.0
      %4330 = vmatpush1.msra.mxu0 0.0
      %4331 = vmatprep.subr.mxu0 0.0
      %4332 = vmatpush1.msra.mxu0 0.0
      %4333 = vmatprep.subr.mxu0 0.0
      %4334 = vmatpush1.msra.mxu0 0.0
      %4335 = vmatprep.subr.mxu0 0.0
      %4336 = vmatpush1.msra.mxu0 0.0
      %4337 = vmatprep.subr.mxu0 0.0
      %4338 = vmatpush1.msra.mxu0 0.0
      %4339 = vmatprep.subr.mxu0 0.0
      %4340 = vmatpush1.msra.mxu0 0.0
      %4341 = vmatprep.subr.mxu0 0.0
      %4342 = vmatpush1.msra.mxu0 0.0
      %4343 = vmatprep.subr.mxu0 0.0
      %4344 = vmatpush1.msra.mxu0 0.0
      %4345 = vmatprep.subr.mxu0 0.0
      %4346 = vmatpush1.msra.mxu0 0.0
      %4347 = vmatprep.subr.mxu0 0.0
      %4348 = vmatpush1.msra.mxu0 0.0
      %4349 = vmatprep.subr.mxu0 0.0
      %4350 = vmatpush1.msra.mxu0 0.0
      %4351 = vmatprep.subr.mxu0 0.0
      %4352 = vmatpush1.msra.mxu0 0.0
      %4353 = vmatprep.subr.mxu0 0.0
      %4354 = vmatpush1.msra.mxu0 0.0
      %4355 = vmatprep.subr.mxu0 0.0
      %4356 = vmatpush1.msra.mxu0 0.0
      %4357 = vmatprep.subr.mxu0 0.0
      %4358 = vmatpush1.msra.mxu0 0.0
      %4359 = vmatprep.subr.mxu0 0.0
      %4360 = vmatpush1.msra.mxu0 0.0
      %4361 = vmatprep.subr.mxu0 0.0
      %4362 = vmatpush1.msra.mxu0 0.0
      %4363 = vmatprep.subr.mxu0 0.0
      %4364 = vmatpush1.msra.mxu0 0.0
      %4365 = vmatprep.subr.mxu0 0.0
      %4366 = vmatpush1.msra.mxu0 0.0
      %4367 = vmatprep.subr.mxu0 0.0
      %4368 = vmatpush1.msra.mxu0 0.0
      %4369 = vmatprep.subr.mxu0 0.0
      %4370 = vmatpush1.msra.mxu0 0.0
      %4371 = vmatprep.mubr.f32.mxu0 0.0
      %4372 = vmatmul.mubr.f32.gmra.mrb[0].mxu0 %v4299
      %v4373 = vpop.f32.mrb[0].mxu0
      %v4374 = vadd.f32 %v4295, %v4373
      %v4375 = vpop.f32.mrb[0].mxu0
      %v4376 = vadd.f32 %v4297, %v4375
      %4377 = vdwg.mxu0
      %v4378 = vld [vmem:[#allocation2] sm:$0xff]
      %v4379 = vld [vmem:[#allocation2 + $0x8] sm:$0xf]
      %v4382 = vcombine.high %v4378, %v4378
      %4383 = vrot.lane.b32.xlu0 %v4378, 126
      %v4384 = vpop.permute.xlu0 %4383
      %4385 = vrot.lane.b32.xlu0 %v4382, 126
      %v4386 = vpop.permute.xlu0 %4385
      %4387 = vrot.lane.b32.xlu0 %v4379, 126
      %v4388 = vpop.permute.xlu0 %4387
      %v4389 = vsel %vm835, %v4384, %v4386
      %v4390 = vsel %vm835, %v4386, %v4388
      %v4393 = vsel %vm824, %v4389, 0.0
      %v4394 = vsel %vm825, %v4390, 0.0
      %v4395 = vld [vmem:[%s12] sm:$0xff]
      %4397 = vrot.lane.b32.xlu0 %v4395, 120
      %v4398 = vpop.permute.xlu0 %4397
      %v4399 = vsel %vm654, %v4398, 0
      %v4402 = vsel %vm657, %v4393, 0
      %v4405 = vsel %vm657, %v4394, 0
      %4407 = vmatprep.subr.mxu0 %v4405
      %4408 = vmatpush1.msra.mxu0 %v4402
      %4409 = vmatprep.subr.mxu0 0.0
      %4410 = vmatpush1.msra.mxu0 0.0
      %4411 = vmatprep.subr.mxu0 0.0
      %4412 = vmatpush1.msra.mxu0 0.0
      %4413 = vmatprep.subr.mxu0 0.0
      %4414 = vmatpush1.msra.mxu0 0.0
      %4415 = vmatprep.subr.mxu0 0.0
      %4416 = vmatpush1.msra.mxu0 0.0
      %4417 = vmatprep.subr.mxu0 0.0
      %4418 = vmatpush1.msra.mxu0 0.0
      %4419 = vmatprep.subr.mxu0 0.0
      %4420 = vmatpush1.msra.mxu0 0.0
      %4421 = vmatprep.subr.mxu0 0.0
      %4422 = vmatpush1.msra.mxu0 0.0
      %4423 = vmatprep.subr.mxu0 0.0
      %4424 = vmatpush1.msra.mxu0 0.0
      %4425 = vmatprep.subr.mxu0 0.0
      %4426 = vmatpush1.msra.mxu0 0.0
      %4427 = vmatprep.subr.mxu0 0.0
      %4428 = vmatpush1.msra.mxu0 0.0
      %4429 = vmatprep.subr.mxu0 0.0
      %4430 = vmatpush1.msra.mxu0 0.0
      %4431 = vmatprep.subr.mxu0 0.0
      %4432 = vmatpush1.msra.mxu0 0.0
      %4433 = vmatprep.subr.mxu0 0.0
      %4434 = vmatpush1.msra.mxu0 0.0
      %4435 = vmatprep.subr.mxu0 0.0
      %4436 = vmatpush1.msra.mxu0 0.0
      %4437 = vmatprep.subr.mxu0 0.0
      %4438 = vmatpush1.msra.mxu0 0.0
      %4439 = vmatprep.subr.mxu0 0.0
      %4440 = vmatpush1.msra.mxu0 0.0
      %4441 = vmatprep.subr.mxu0 0.0
      %4442 = vmatpush1.msra.mxu0 0.0
      %4443 = vmatprep.subr.mxu0 0.0
      %4444 = vmatpush1.msra.mxu0 0.0
      %4445 = vmatprep.subr.mxu0 0.0
      %4446 = vmatpush1.msra.mxu0 0.0
      %4447 = vmatprep.subr.mxu0 0.0
      %4448 = vmatpush1.msra.mxu0 0.0
      %4449 = vmatprep.subr.mxu0 0.0
      %4450 = vmatpush1.msra.mxu0 0.0
      %4451 = vmatprep.subr.mxu0 0.0
      %4452 = vmatpush1.msra.mxu0 0.0
      %4453 = vmatprep.subr.mxu0 0.0
      %4454 = vmatpush1.msra.mxu0 0.0
      %4455 = vmatprep.subr.mxu0 0.0
      %4456 = vmatpush1.msra.mxu0 0.0
      %4457 = vmatprep.subr.mxu0 0.0
      %4458 = vmatpush1.msra.mxu0 0.0
      %4459 = vmatprep.subr.mxu0 0.0
      %4460 = vmatpush1.msra.mxu0 0.0
      %4461 = vmatprep.subr.mxu0 0.0
      %4462 = vmatpush1.msra.mxu0 0.0
      %4463 = vmatprep.subr.mxu0 0.0
      %4464 = vmatpush1.msra.mxu0 0.0
      %4465 = vmatprep.subr.mxu0 0.0
      %4466 = vmatpush1.msra.mxu0 0.0
      %4467 = vmatprep.subr.mxu0 0.0
      %4468 = vmatpush1.msra.mxu0 0.0
      %4469 = vmatprep.subr.mxu0 0.0
      %4470 = vmatpush1.msra.mxu0 0.0
      %4471 = vmatprep.mubr.f32.mxu0 0.0
      %4472 = vmatmul.mubr.f32.gmra.mrb[0].mxu0 %v4399
      %v4473 = vpop.f32.mrb[0].mxu0
      %v4474 = vadd.f32 0.0, %v4473
      %v4475 = vpop.f32.mrb[0].mxu0
      %v4476 = vadd.f32 0.0, %v4475
      %4477 = vdwg.mxu0
      %v4478 = vadd.f32 %v4374, %v4474
      %v4479 = vadd.f32 %v4376, %v4476
      %v4480 = vld [vmem:[#allocation2] sm:$0xff]
      %v4481 = vld [vmem:[#allocation2 + $0x8] sm:$0xf]
      %v4484 = vcombine.high %v4480, %v4480
      %4485 = vrot.lane.b32.xlu0 %v4480, 112
      %v4486 = vpop.permute.xlu0 %4485
      %4487 = vrot.lane.b32.xlu0 %v4484, 112
      %v4488 = vpop.permute.xlu0 %4487
      %4489 = vrot.lane.b32.xlu0 %v4481, 112
      %v4490 = vpop.permute.xlu0 %4489
      %v4491 = vsel %vm948, %v4486, %v4488
      %v4492 = vsel %vm948, %v4488, %v4490
      %v4495 = vsel %vm937, %v4491, 0.0
      %v4496 = vsel %vm938, %v4492, 0.0
      %v4497 = vld [vmem:[%s12] sm:$0xff]
      %4499 = vrot.lane.b32.xlu0 %v4497, 116
      %v4500 = vpop.permute.xlu0 %4499
      %v4501 = vsel %vm654, %v4500, 0
      %v4504 = vsel %vm657, %v4495, 0
      %v4507 = vsel %vm657, %v4496, 0
      %4509 = vmatprep.subr.mxu0 %v4507
      %4510 = vmatpush1.msra.mxu0 %v4504
      %4511 = vmatprep.subr.mxu0 0.0
      %4512 = vmatpush1.msra.mxu0 0.0
      %4513 = vmatprep.subr.mxu0 0.0
      %4514 = vmatpush1.msra.mxu0 0.0
      %4515 = vmatprep.subr.mxu0 0.0
      %4516 = vmatpush1.msra.mxu0 0.0
      %4517 = vmatprep.subr.mxu0 0.0
      %4518 = vmatpush1.msra.mxu0 0.0
      %4519 = vmatprep.subr.mxu0 0.0
      %4520 = vmatpush1.msra.mxu0 0.0
      %4521 = vmatprep.subr.mxu0 0.0
      %4522 = vmatpush1.msra.mxu0 0.0
      %4523 = vmatprep.subr.mxu0 0.0
      %4524 = vmatpush1.msra.mxu0 0.0
      %4525 = vmatprep.subr.mxu0 0.0
      %4526 = vmatpush1.msra.mxu0 0.0
      %4527 = vmatprep.subr.mxu0 0.0
      %4528 = vmatpush1.msra.mxu0 0.0
      %4529 = vmatprep.subr.mxu0 0.0
      %4530 = vmatpush1.msra.mxu0 0.0
      %4531 = vmatprep.subr.mxu0 0.0
      %4532 = vmatpush1.msra.mxu0 0.0
      %4533 = vmatprep.subr.mxu0 0.0
      %4534 = vmatpush1.msra.mxu0 0.0
      %4535 = vmatprep.subr.mxu0 0.0
      %4536 = vmatpush1.msra.mxu0 0.0
      %4537 = vmatprep.subr.mxu0 0.0
      %4538 = vmatpush1.msra.mxu0 0.0
      %4539 = vmatprep.subr.mxu0 0.0
      %4540 = vmatpush1.msra.mxu0 0.0
      %4541 = vmatprep.subr.mxu0 0.0
      %4542 = vmatpush1.msra.mxu0 0.0
      %4543 = vmatprep.subr.mxu0 0.0
      %4544 = vmatpush1.msra.mxu0 0.0
      %4545 = vmatprep.subr.mxu0 0.0
      %4546 = vmatpush1.msra.mxu0 0.0
      %4547 = vmatprep.subr.mxu0 0.0
      %4548 = vmatpush1.msra.mxu0 0.0
      %4549 = vmatprep.subr.mxu0 0.0
      %4550 = vmatpush1.msra.mxu0 0.0
      %4551 = vmatprep.subr.mxu0 0.0
      %4552 = vmatpush1.msra.mxu0 0.0
      %4553 = vmatprep.subr.mxu0 0.0
      %4554 = vmatpush1.msra.mxu0 0.0
      %4555 = vmatprep.subr.mxu0 0.0
      %4556 = vmatpush1.msra.mxu0 0.0
      %4557 = vmatprep.subr.mxu0 0.0
      %4558 = vmatpush1.msra.mxu0 0.0
      %4559 = vmatprep.subr.mxu0 0.0
      %4560 = vmatpush1.msra.mxu0 0.0
      %4561 = vmatprep.subr.mxu0 0.0
      %4562 = vmatpush1.msra.mxu0 0.0
      %4563 = vmatprep.subr.mxu0 0.0
      %4564 = vmatpush1.msra.mxu0 0.0
      %4565 = vmatprep.subr.mxu0 0.0
      %4566 = vmatpush1.msra.mxu0 0.0
      %4567 = vmatprep.subr.mxu0 0.0
      %4568 = vmatpush1.msra.mxu0 0.0
      %4569 = vmatprep.subr.mxu0 0.0
      %4570 = vmatpush1.msra.mxu0 0.0
      %4571 = vmatprep.subr.mxu0 0.0
      %4572 = vmatpush1.msra.mxu0 0.0
      %4573 = vmatprep.mubr.f32.mxu0 0.0
      %4574 = vmatmul.mubr.f32.gmra.mrb[0].mxu0 %v4501
      %v4575 = vpop.f32.mrb[0].mxu0
      %v4576 = vadd.f32 0.0, %v4575
      %v4577 = vpop.f32.mrb[0].mxu0
      %v4578 = vadd.f32 0.0, %v4577
      %4579 = vdwg.mxu0
      %v4580 = vadd.f32 %v4478, %v4576
      %v4581 = vadd.f32 %v4479, %v4578
      %v4582 = vld [vmem:[#allocation2] sm:$0xff]
      %v4583 = vld [vmem:[#allocation2 + $0x8] sm:$0xf]
      %v4586 = vcombine.high %v4582, %v4582
      %4587 = vrot.lane.b32.xlu0 %v4582, 111
      %v4588 = vpop.permute.xlu0 %4587
      %4589 = vrot.lane.b32.xlu0 %v4586, 111
      %v4590 = vpop.permute.xlu0 %4589
      %4591 = vrot.lane.b32.xlu0 %v4583, 111
      %v4592 = vpop.permute.xlu0 %4591
      %v4593 = vsel %vm1055, %v4588, %v4590
      %v4594 = vsel %vm1055, %v4590, %v4592
      %v4597 = vsel %vm1044, %v4593, 0.0
      %v4598 = vsel %vm1045, %v4594, 0.0
      %v4599 = vld [vmem:[%s12] sm:$0xff]
      %4601 = vrot.lane.b32.xlu0 %v4599, 112
      %v4602 = vpop.permute.xlu0 %4601
      %v4603 = vsel %vm654, %v4602, 0
      %v4606 = vsel %vm657, %v4597, 0
      %v4609 = vsel %vm657, %v4598, 0
      %4611 = vmatprep.subr.mxu0 %v4609
      %4612 = vmatpush1.msra.mxu0 %v4606
      %4613 = vmatprep.subr.mxu0 0.0
      %4614 = vmatpush1.msra.mxu0 0.0
      %4615 = vmatprep.subr.mxu0 0.0
      %4616 = vmatpush1.msra.mxu0 0.0
      %4617 = vmatprep.subr.mxu0 0.0
      %4618 = vmatpush1.msra.mxu0 0.0
      %4619 = vmatprep.subr.mxu0 0.0
      %4620 = vmatpush1.msra.mxu0 0.0
      %4621 = vmatprep.subr.mxu0 0.0
      %4622 = vmatpush1.msra.mxu0 0.0
      %4623 = vmatprep.subr.mxu0 0.0
      %4624 = vmatpush1.msra.mxu0 0.0
      %4625 = vmatprep.subr.mxu0 0.0
      %4626 = vmatpush1.msra.mxu0 0.0
      %4627 = vmatprep.subr.mxu0 0.0
      %4628 = vmatpush1.msra.mxu0 0.0
      %4629 = vmatprep.subr.mxu0 0.0
      %4630 = vmatpush1.msra.mxu0 0.0
      %4631 = vmatprep.subr.mxu0 0.0
      %4632 = vmatpush1.msra.mxu0 0.0
      %4633 = vmatprep.subr.mxu0 0.0
      %4634 = vmatpush1.msra.mxu0 0.0
      %4635 = vmatprep.subr.mxu0 0.0
      %4636 = vmatpush1.msra.mxu0 0.0
      %4637 = vmatprep.subr.mxu0 0.0
      %4638 = vmatpush1.msra.mxu0 0.0
      %4639 = vmatprep.subr.mxu0 0.0
      %4640 = vmatpush1.msra.mxu0 0.0
      %4641 = vmatprep.subr.mxu0 0.0
      %4642 = vmatpush1.msra.mxu0 0.0
      %4643 = vmatprep.subr.mxu0 0.0
      %4644 = vmatpush1.msra.mxu0 0.0
      %4645 = vmatprep.subr.mxu0 0.0
      %4646 = vmatpush1.msra.mxu0 0.0
      %4647 = vmatprep.subr.mxu0 0.0
      %4648 = vmatpush1.msra.mxu0 0.0
      %4649 = vmatprep.subr.mxu0 0.0
      %4650 = vmatpush1.msra.mxu0 0.0
      %4651 = vmatprep.subr.mxu0 0.0
      %4652 = vmatpush1.msra.mxu0 0.0
      %4653 = vmatprep.subr.mxu0 0.0
      %4654 = vmatpush1.msra.mxu0 0.0
      %4655 = vmatprep.subr.mxu0 0.0
      %4656 = vmatpush1.msra.mxu0 0.0
      %4657 = vmatprep.subr.mxu0 0.0
      %4658 = vmatpush1.msra.mxu0 0.0
      %4659 = vmatprep.subr.mxu0 0.0
      %4660 = vmatpush1.msra.mxu0 0.0
      %4661 = vmatprep.subr.mxu0 0.0
      %4662 = vmatpush1.msra.mxu0 0.0
      %4663 = vmatprep.subr.mxu0 0.0
      %4664 = vmatpush1.msra.mxu0 0.0
      %4665 = vmatprep.subr.mxu0 0.0
      %4666 = vmatpush1.msra.mxu0 0.0
      %4667 = vmatprep.subr.mxu0 0.0
      %4668 = vmatpush1.msra.mxu0 0.0
      %4669 = vmatprep.subr.mxu0 0.0
      %4670 = vmatpush1.msra.mxu0 0.0
      %4671 = vmatprep.subr.mxu0 0.0
      %4672 = vmatpush1.msra.mxu0 0.0
      %4673 = vmatprep.subr.mxu0 0.0
      %4674 = vmatpush1.msra.mxu0 0.0
      %4675 = vmatprep.mubr.f32.mxu0 0.0
      %4676 = vmatmul.mubr.f32.gmra.mrb[0].mxu0 %v4603
      %v4677 = vpop.f32.mrb[0].mxu0
      %v4678 = vadd.f32 0.0, %v4677
      %v4679 = vpop.f32.mrb[0].mxu0
      %v4680 = vadd.f32 0.0, %v4679
      %4681 = vdwg.mxu0
      %v4682 = vadd.f32 %v4580, %v4678
      %v4683 = vadd.f32 %v4581, %v4680
      %v4684 = vld [vmem:[#allocation2] sm:$0xff]
      %v4685 = vld [vmem:[#allocation2 + $0x8] sm:$0xf]
      %v4688 = vcombine.high %v4684, %v4684
      %4689 = vrot.lane.b32.xlu0 %v4684, 110
      %v4690 = vpop.permute.xlu0 %4689
      %4691 = vrot.lane.b32.xlu0 %v4688, 110
      %v4692 = vpop.permute.xlu0 %4691
      %4693 = vrot.lane.b32.xlu0 %v4685, 110
      %v4694 = vpop.permute.xlu0 %4693
      %v4695 = vsel %vm1162, %v4690, %v4692
      %v4696 = vsel %vm1162, %v4692, %v4694
      %v4699 = vsel %vm1151, %v4695, 0.0
      %v4700 = vsel %vm1152, %v4696, 0.0
      %v4701 = vld [vmem:[%s12] sm:$0xff]
      %4703 = vrot.lane.b32.xlu0 %v4701, 108
      %v4704 = vpop.permute.xlu0 %4703
      %v4705 = vsel %vm654, %v4704, 0
      %v4708 = vsel %vm657, %v4699, 0
      %v4711 = vsel %vm657, %v4700, 0
      %4713 = vmatprep.subr.mxu0 %v4711
      %4714 = vmatpush1.msra.mxu0 %v4708
      %4715 = vmatprep.subr.mxu0 0.0
      %4716 = vmatpush1.msra.mxu0 0.0
      %4717 = vmatprep.subr.mxu0 0.0
      %4718 = vmatpush1.msra.mxu0 0.0
      %4719 = vmatprep.subr.mxu0 0.0
      %4720 = vmatpush1.msra.mxu0 0.0
      %4721 = vmatprep.subr.mxu0 0.0
      %4722 = vmatpush1.msra.mxu0 0.0
      %4723 = vmatprep.subr.mxu0 0.0
      %4724 = vmatpush1.msra.mxu0 0.0
      %4725 = vmatprep.subr.mxu0 0.0
      %4726 = vmatpush1.msra.mxu0 0.0
      %4727 = vmatprep.subr.mxu0 0.0
      %4728 = vmatpush1.msra.mxu0 0.0
      %4729 = vmatprep.subr.mxu0 0.0
      %4730 = vmatpush1.msra.mxu0 0.0
      %4731 = vmatprep.subr.mxu0 0.0
      %4732 = vmatpush1.msra.mxu0 0.0
      %4733 = vmatprep.subr.mxu0 0.0
      %4734 = vmatpush1.msra.mxu0 0.0
      %4735 = vmatprep.subr.mxu0 0.0
      %4736 = vmatpush1.msra.mxu0 0.0
      %4737 = vmatprep.subr.mxu0 0.0
      %4738 = vmatpush1.msra.mxu0 0.0
      %4739 = vmatprep.subr.mxu0 0.0
      %4740 = vmatpush1.msra.mxu0 0.0
      %4741 = vmatprep.subr.mxu0 0.0
      %4742 = vmatpush1.msra.mxu0 0.0
      %4743 = vmatprep.subr.mxu0 0.0
      %4744 = vmatpush1.msra.mxu0 0.0
      %4745 = vmatprep.subr.mxu0 0.0
      %4746 = vmatpush1.msra.mxu0 0.0
      %4747 = vmatprep.subr.mxu0 0.0
      %4748 = vmatpush1.msra.mxu0 0.0
      %4749 = vmatprep.subr.mxu0 0.0
      %4750 = vmatpush1.msra.mxu0 0.0
      %4751 = vmatprep.subr.mxu0 0.0
      %4752 = vmatpush1.msra.mxu0 0.0
      %4753 = vmatprep.subr.mxu0 0.0
      %4754 = vmatpush1.msra.mxu0 0.0
      %4755 = vmatprep.subr.mxu0 0.0
      %4756 = vmatpush1.msra.mxu0 0.0
      %4757 = vmatprep.subr.mxu0 0.0
      %4758 = vmatpush1.msra.mxu0 0.0
      %4759 = vmatprep.subr.mxu0 0.0
      %4760 = vmatpush1.msra.mxu0 0.0
      %4761 = vmatprep.subr.mxu0 0.0
      %4762 = vmatpush1.msra.mxu0 0.0
      %4763 = vmatprep.subr.mxu0 0.0
      %4764 = vmatpush1.msra.mxu0 0.0
      %4765 = vmatprep.subr.mxu0 0.0
      %4766 = vmatpush1.msra.mxu0 0.0
      %4767 = vmatprep.subr.mxu0 0.0
      %4768 = vmatpush1.msra.mxu0 0.0
      %4769 = vmatprep.subr.mxu0 0.0
      %4770 = vmatpush1.msra.mxu0 0.0
      %4771 = vmatprep.subr.mxu0 0.0
      %4772 = vmatpush1.msra.mxu0 0.0
      %4773 = vmatprep.subr.mxu0 0.0
      %4774 = vmatpush1.msra.mxu0 0.0
      %4775 = vmatprep.subr.mxu0 0.0
      %4776 = vmatpush1.msra.mxu0 0.0
      %4777 = vmatprep.mubr.f32.mxu0 0.0
      %4778 = vmatmul.mubr.f32.gmra.mrb[0].mxu0 %v4705
      %v4779 = vpop.f32.mrb[0].mxu0
      %v4780 = vadd.f32 0.0, %v4779
      %v4781 = vpop.f32.mrb[0].mxu0
      %v4782 = vadd.f32 0.0, %v4781
      %4783 = vdwg.mxu0
      %v4784 = vadd.f32 %v4682, %v4780
      %v4785 = vadd.f32 %v4683, %v4782
      %v4786 = vld [vmem:[#allocation2] sm:$0xff]
      %v4787 = vld [vmem:[#allocation2 + $0x8] sm:$0xf]
      %v4790 = vcombine.high %v4786, %v4786
      %4791 = vrot.lane.b32.xlu0 %v4786, 96
      %v4792 = vpop.permute.xlu0 %4791
      %4793 = vrot.lane.b32.xlu0 %v4790, 96
      %v4794 = vpop.permute.xlu0 %4793
      %4795 = vrot.lane.b32.xlu0 %v4787, 96
      %v4796 = vpop.permute.xlu0 %4795
      %v4797 = vsel %vm1277, %v4792, %v4794
      %v4798 = vsel %vm1277, %v4794, %v4796
      %v4801 = vsel %vm1266, %v4797, 0.0
      %v4802 = vsel %vm1267, %v4798, 0.0
      %v4803 = vld [vmem:[%s12] sm:$0xff]
      %4805 = vrot.lane.b32.xlu0 %v4803, 104
      %v4806 = vpop.permute.xlu0 %4805
      %v4807 = vsel %vm654, %v4806, 0
      %v4810 = vsel %vm657, %v4801, 0
      %v4813 = vsel %vm657, %v4802, 0
      %4815 = vmatprep.subr.mxu0 %v4813
      %4816 = vmatpush1.msra.mxu0 %v4810
      %4817 = vmatprep.subr.mxu0 0.0
      %4818 = vmatpush1.msra.mxu0 0.0
      %4819 = vmatprep.subr.mxu0 0.0
      %4820 = vmatpush1.msra.mxu0 0.0
      %4821 = vmatprep.subr.mxu0 0.0
      %4822 = vmatpush1.msra.mxu0 0.0
      %4823 = vmatprep.subr.mxu0 0.0
      %4824 = vmatpush1.msra.mxu0 0.0
      %4825 = vmatprep.subr.mxu0 0.0
      %4826 = vmatpush1.msra.mxu0 0.0
      %4827 = vmatprep.subr.mxu0 0.0
      %4828 = vmatpush1.msra.mxu0 0.0
      %4829 = vmatprep.subr.mxu0 0.0
      %4830 = vmatpush1.msra.mxu0 0.0
      %4831 = vmatprep.subr.mxu0 0.0
      %4832 = vmatpush1.msra.mxu0 0.0
      %4833 = vmatprep.subr.mxu0 0.0
      %4834 = vmatpush1.msra.mxu0 0.0
      %4835 = vmatprep.subr.mxu0 0.0
      %4836 = vmatpush1.msra.mxu0 0.0
      %4837 = vmatprep.subr.mxu0 0.0
      %4838 = vmatpush1.msra.mxu0 0.0
      %4839 = vmatprep.subr.mxu0 0.0
      %4840 = vmatpush1.msra.mxu0 0.0
      %4841 = vmatprep.subr.mxu0 0.0
      %4842 = vmatpush1.msra.mxu0 0.0
      %4843 = vmatprep.subr.mxu0 0.0
      %4844 = vmatpush1.msra.mxu0 0.0
      %4845 = vmatprep.subr.mxu0 0.0
      %4846 = vmatpush1.msra.mxu0 0.0
      %4847 = vmatprep.subr.mxu0 0.0
      %4848 = vmatpush1.msra.mxu0 0.0
      %4849 = vmatprep.subr.mxu0 0.0
      %4850 = vmatpush1.msra.mxu0 0.0
      %4851 = vmatprep.subr.mxu0 0.0
      %4852 = vmatpush1.msra.mxu0 0.0
      %4853 = vmatprep.subr.mxu0 0.0
      %4854 = vmatpush1.msra.mxu0 0.0
      %4855 = vmatprep.subr.mxu0 0.0
      %4856 = vmatpush1.msra.mxu0 0.0
      %4857 = vmatprep.subr.mxu0 0.0
      %4858 = vmatpush1.msra.mxu0 0.0
      %4859 = vmatprep.subr.mxu0 0.0
      %4860 = vmatpush1.msra.mxu0 0.0
      %4861 = vmatprep.subr.mxu0 0.0
      %4862 = vmatpush1.msra.mxu0 0.0
      %4863 = vmatprep.subr.mxu0 0.0
      %4864 = vmatpush1.msra.mxu0 0.0
      %4865 = vmatprep.subr.mxu0 0.0
      %4866 = vmatpush1.msra.mxu0 0.0
      %4867 = vmatprep.subr.mxu0 0.0
      %4868 = vmatpush1.msra.mxu0 0.0
      %4869 = vmatprep.subr.mxu0 0.0
      %4870 = vmatpush1.msra.mxu0 0.0
      %4871 = vmatprep.subr.mxu0 0.0
      %4872 = vmatpush1.msra.mxu0 0.0
      %4873 = vmatprep.subr.mxu0 0.0
      %4874 = vmatpush1.msra.mxu0 0.0
      %4875 = vmatprep.subr.mxu0 0.0
      %4876 = vmatpush1.msra.mxu0 0.0
      %4877 = vmatprep.subr.mxu0 0.0
      %4878 = vmatpush1.msra.mxu0 0.0
      %4879 = vmatprep.mubr.f32.mxu0 0.0
      %4880 = vmatmul.mubr.f32.gmra.mrb[0].mxu0 %v4807
      %v4881 = vpop.f32.mrb[0].mxu0
      %v4882 = vadd.f32 0.0, %v4881
      %v4883 = vpop.f32.mrb[0].mxu0
      %v4884 = vadd.f32 0.0, %v4883
      %4885 = vdwg.mxu0
      %v4886 = vadd.f32 %v4784, %v4882
      %v4887 = vadd.f32 %v4785, %v4884
      %v4888 = vld [vmem:[#allocation2] sm:$0xff]
      %v4889 = vld [vmem:[#allocation2 + $0x8] sm:$0xf]
      %v4892 = vcombine.high %v4888, %v4888
      %4893 = vrot.lane.b32.xlu0 %v4888, 95
      %v4894 = vpop.permute.xlu0 %4893
      %4895 = vrot.lane.b32.xlu0 %v4892, 95
      %v4896 = vpop.permute.xlu0 %4895
      %4897 = vrot.lane.b32.xlu0 %v4889, 95
      %v4898 = vpop.permute.xlu0 %4897
      %v4899 = vsel %vm1384, %v4894, %v4896
      %v4900 = vsel %vm1384, %v4896, %v4898
      %v4903 = vsel %vm1373, %v4899, 0.0
      %v4904 = vsel %vm1374, %v4900, 0.0
      %v4905 = vld [vmem:[%s12] sm:$0xff]
      %4907 = vrot.lane.b32.xlu0 %v4905, 100
      %v4908 = vpop.permute.xlu0 %4907
      %v4909 = vsel %vm654, %v4908, 0
      %v4912 = vsel %vm657, %v4903, 0
      %v4915 = vsel %vm657, %v4904, 0
      %4917 = vmatprep.subr.mxu0 %v4915
      %4918 = vmatpush1.msra.mxu0 %v4912
      %4919 = vmatprep.subr.mxu0 0.0
      %4920 = vmatpush1.msra.mxu0 0.0
      %4921 = vmatprep.subr.mxu0 0.0
      %4922 = vmatpush1.msra.mxu0 0.0
      %4923 = vmatprep.subr.mxu0 0.0
      %4924 = vmatpush1.msra.mxu0 0.0
      %4925 = vmatprep.subr.mxu0 0.0
      %4926 = vmatpush1.msra.mxu0 0.0
      %4927 = vmatprep.subr.mxu0 0.0
      %4928 = vmatpush1.msra.mxu0 0.0
      %4929 = vmatprep.subr.mxu0 0.0
      %4930 = vmatpush1.msra.mxu0 0.0
      %4931 = vmatprep.subr.mxu0 0.0
      %4932 = vmatpush1.msra.mxu0 0.0
      %4933 = vmatprep.subr.mxu0 0.0
      %4934 = vmatpush1.msra.mxu0 0.0
      %4935 = vmatprep.subr.mxu0 0.0
      %4936 = vmatpush1.msra.mxu0 0.0
      %4937 = vmatprep.subr.mxu0 0.0
      %4938 = vmatpush1.msra.mxu0 0.0
      %4939 = vmatprep.subr.mxu0 0.0
      %4940 = vmatpush1.msra.mxu0 0.0
      %4941 = vmatprep.subr.mxu0 0.0
      %4942 = vmatpush1.msra.mxu0 0.0
      %4943 = vmatprep.subr.mxu0 0.0
      %4944 = vmatpush1.msra.mxu0 0.0
      %4945 = vmatprep.subr.mxu0 0.0
      %4946 = vmatpush1.msra.mxu0 0.0
      %4947 = vmatprep.subr.mxu0 0.0
      %4948 = vmatpush1.msra.mxu0 0.0
      %4949 = vmatprep.subr.mxu0 0.0
      %4950 = vmatpush1.msra.mxu0 0.0
      %4951 = vmatprep.subr.mxu0 0.0
      %4952 = vmatpush1.msra.mxu0 0.0
      %4953 = vmatprep.subr.mxu0 0.0
      %4954 = vmatpush1.msra.mxu0 0.0
      %4955 = vmatprep.subr.mxu0 0.0
      %4956 = vmatpush1.msra.mxu0 0.0
      %4957 = vmatprep.subr.mxu0 0.0
      %4958 = vmatpush1.msra.mxu0 0.0
      %4959 = vmatprep.subr.mxu0 0.0
      %4960 = vmatpush1.msra.mxu0 0.0
      %4961 = vmatprep.subr.mxu0 0.0
      %4962 = vmatpush1.msra.mxu0 0.0
      %4963 = vmatprep.subr.mxu0 0.0
      %4964 = vmatpush1.msra.mxu0 0.0
      %4965 = vmatprep.subr.mxu0 0.0
      %4966 = vmatpush1.msra.mxu0 0.0
      %4967 = vmatprep.subr.mxu0 0.0
      %4968 = vmatpush1.msra.mxu0 0.0
      %4969 = vmatprep.subr.mxu0 0.0
      %4970 = vmatpush1.msra.mxu0 0.0
      %4971 = vmatprep.subr.mxu0 0.0
      %4972 = vmatpush1.msra.mxu0 0.0
      %4973 = vmatprep.subr.mxu0 0.0
      %4974 = vmatpush1.msra.mxu0 0.0
      %4975 = vmatprep.subr.mxu0 0.0
      %4976 = vmatpush1.msra.mxu0 0.0
      %4977 = vmatprep.subr.mxu0 0.0
      %4978 = vmatpush1.msra.mxu0 0.0
      %4979 = vmatprep.subr.mxu0 0.0
      %4980 = vmatpush1.msra.mxu0 0.0
      %4981 = vmatprep.mubr.f32.mxu0 0.0
      %4982 = vmatmul.mubr.f32.gmra.mrb[0].mxu0 %v4909
      %v4983 = vpop.f32.mrb[0].mxu0
      %v4984 = vadd.f32 0.0, %v4983
      %v4985 = vpop.f32.mrb[0].mxu0
      %v4986 = vadd.f32 0.0, %v4985
      %4987 = vdwg.mxu0
      %v4988 = vadd.f32 %v4886, %v4984
      %v4989 = vadd.f32 %v4887, %v4986
      %v4990 = vld [vmem:[#allocation2] sm:$0xff]
      %v4991 = vld [vmem:[#allocation2 + $0x8] sm:$0xf]
      %v4994 = vcombine.high %v4990, %v4990
      %4995 = vrot.lane.b32.xlu0 %v4990, 94
      %v4996 = vpop.permute.xlu0 %4995
      %4997 = vrot.lane.b32.xlu0 %v4994, 94
      %v4998 = vpop.permute.xlu0 %4997
      %4999 = vrot.lane.b32.xlu0 %v4991, 94
      %v5000 = vpop.permute.xlu0 %4999
      %v5001 = vsel %vm1491, %v4996, %v4998
      %v5002 = vsel %vm1491, %v4998, %v5000
      %v5005 = vsel %vm1480, %v5001, 0.0
      %v5006 = vsel %vm1481, %v5002, 0.0
      %v5007 = vld [vmem:[%s12] sm:$0xff]
      %5009 = vrot.lane.b32.xlu0 %v5007, 96
      %v5010 = vpop.permute.xlu0 %5009
      %v5011 = vsel %vm654, %v5010, 0
      %v5014 = vsel %vm657, %v5005, 0
      %v5017 = vsel %vm657, %v5006, 0
      %5019 = vmatprep.subr.mxu0 %v5017
      %5020 = vmatpush1.msra.mxu0 %v5014
      %5021 = vmatprep.subr.mxu0 0.0
      %5022 = vmatpush1.msra.mxu0 0.0
      %5023 = vmatprep.subr.mxu0 0.0
      %5024 = vmatpush1.msra.mxu0 0.0
      %5025 = vmatprep.subr.mxu0 0.0
      %5026 = vmatpush1.msra.mxu0 0.0
      %5027 = vmatprep.subr.mxu0 0.0
      %5028 = vmatpush1.msra.mxu0 0.0
      %5029 = vmatprep.subr.mxu0 0.0
      %5030 = vmatpush1.msra.mxu0 0.0
      %5031 = vmatprep.subr.mxu0 0.0
      %5032 = vmatpush1.msra.mxu0 0.0
      %5033 = vmatprep.subr.mxu0 0.0
      %5034 = vmatpush1.msra.mxu0 0.0
      %5035 = vmatprep.subr.mxu0 0.0
      %5036 = vmatpush1.msra.mxu0 0.0
      %5037 = vmatprep.subr.mxu0 0.0
      %5038 = vmatpush1.msra.mxu0 0.0
      %5039 = vmatprep.subr.mxu0 0.0
      %5040 = vmatpush1.msra.mxu0 0.0
      %5041 = vmatprep.subr.mxu0 0.0
      %5042 = vmatpush1.msra.mxu0 0.0
      %5043 = vmatprep.subr.mxu0 0.0
      %5044 = vmatpush1.msra.mxu0 0.0
      %5045 = vmatprep.subr.mxu0 0.0
      %5046 = vmatpush1.msra.mxu0 0.0
      %5047 = vmatprep.subr.mxu0 0.0
      %5048 = vmatpush1.msra.mxu0 0.0
      %5049 = vmatprep.subr.mxu0 0.0
      %5050 = vmatpush1.msra.mxu0 0.0
      %5051 = vmatprep.subr.mxu0 0.0
      %5052 = vmatpush1.msra.mxu0 0.0
      %5053 = vmatprep.subr.mxu0 0.0
      %5054 = vmatpush1.msra.mxu0 0.0
      %5055 = vmatprep.subr.mxu0 0.0
      %5056 = vmatpush1.msra.mxu0 0.0
      %5057 = vmatprep.subr.mxu0 0.0
      %5058 = vmatpush1.msra.mxu0 0.0
      %5059 = vmatprep.subr.mxu0 0.0
      %5060 = vmatpush1.msra.mxu0 0.0
      %5061 = vmatprep.subr.mxu0 0.0
      %5062 = vmatpush1.msra.mxu0 0.0
      %5063 = vmatprep.subr.mxu0 0.0
      %5064 = vmatpush1.msra.mxu0 0.0
      %5065 = vmatprep.subr.mxu0 0.0
      %5066 = vmatpush1.msra.mxu0 0.0
      %5067 = vmatprep.subr.mxu0 0.0
      %5068 = vmatpush1.msra.mxu0 0.0
      %5069 = vmatprep.subr.mxu0 0.0
      %5070 = vmatpush1.msra.mxu0 0.0
      %5071 = vmatprep.subr.mxu0 0.0
      %5072 = vmatpush1.msra.mxu0 0.0
      %5073 = vmatprep.subr.mxu0 0.0
      %5074 = vmatpush1.msra.mxu0 0.0
      %5075 = vmatprep.subr.mxu0 0.0
      %5076 = vmatpush1.msra.mxu0 0.0
      %5077 = vmatprep.subr.mxu0 0.0
      %5078 = vmatpush1.msra.mxu0 0.0
      %5079 = vmatprep.subr.mxu0 0.0
      %5080 = vmatpush1.msra.mxu0 0.0
      %5081 = vmatprep.subr.mxu0 0.0
      %5082 = vmatpush1.msra.mxu0 0.0
      %5083 = vmatprep.mubr.f32.mxu0 0.0
      %5084 = vmatmul.mubr.f32.gmra.mrb[0].mxu0 %v5011
      %v5085 = vpop.f32.mrb[0].mxu0
      %v5086 = vadd.f32 0.0, %v5085
      %v5087 = vpop.f32.mrb[0].mxu0
      %v5088 = vadd.f32 0.0, %v5087
      %5089 = vdwg.mxu0
      %v5090 = vadd.f32 %v4988, %v5086
      %v5091 = vadd.f32 %v4989, %v5088
      %v5092 = vld [vmem:[%s13] sm:$0xff]
      %5094 = vset.pattern.permute.xlu0 0
      %5095 = vperm.xlu0 %5094, %v5092
      %v5096 = vpop.permute.xlu0 %5095
      %v5098 = vadd.f32 %v5090, %v5096
      %v5099 = vadd.f32 %v5091, %v5096
      %v5100 = vld [vmem:[%s15] sm:$0xff]
      %v5101 = vld [vmem:[%s15 + $0x8] sm:$0xff]
      %v5102 = vld [vmem:[%s15 + $0x10] sm:$0xff]
      %v5103 = vld [vmem:[%s15 + $0x18] sm:$0xff]
      %v5104 = vld [vmem:[%s15 + $0x20] sm:$0xff]
      %v5105 = vld [vmem:[%s15 + $0x28] sm:$0xff]
      %v5106 = vld [vmem:[%s15 + $0x30] sm:$0xff]
      %v5107 = vld [vmem:[%s15 + $0x38] sm:$0xff]
      %v5108 = vld [vmem:[%s15 + $0x40] sm:$0xff]
      %v5109 = vld [vmem:[%s15 + $0x48] sm:$0xff]
      %v5110 = vld [vmem:[%s15 + $0x50] sm:$0xff]
      %v5111 = vld [vmem:[%s15 + $0x58] sm:$0xff]
      %v5112 = vld [vmem:[%s15 + $0x60] sm:$0xff]
      %v5113 = vld [vmem:[%s15 + $0x68] sm:$0xff]
      %v5114 = vld [vmem:[%s15 + $0x70] sm:$0xff]
      %v5115 = vld [vmem:[%s15 + $0x78] sm:$0xff]
      %v5116 = vld [vmem:[%s15 + $0x80] sm:$0xff]
      %v5117 = vld [vmem:[%s15 + $0x88] sm:$0xff]
      %v5118 = vld [vmem:[%s15 + $0x90] sm:$0xff]
      %v5119 = vld [vmem:[%s15 + $0x98] sm:$0xff]
      %v5120 = vld [vmem:[%s15 + $0xa0] sm:$0xff]
      %v5121 = vld [vmem:[%s15 + $0xa8] sm:$0xff]
      %v5122 = vld [vmem:[%s15 + $0xb0] sm:$0xff]
      %v5123 = vld [vmem:[%s15 + $0xb8] sm:$0xff]
      %v5124 = vld [vmem:[%s15 + $0xc0] sm:$0xff]
      %v5125 = vld [vmem:[%s15 + $0xc8] sm:$0xff]
      %v5126 = vld [vmem:[%s15 + $0xd0] sm:$0xff]
      %v5127 = vld [vmem:[%s15 + $0xd8] sm:$0xff]
      %v5128 = vld [vmem:[%s15 + $0xe0] sm:$0xff]
      %v5129 = vld [vmem:[%s15 + $0xe8] sm:$0xff]
      %v5130 = vld [vmem:[%s15 + $0xf0] sm:$0xff]
      %v5131 = vld [vmem:[%s15 + $0xf8] sm:$0xff]
      %5132 = vmatprep.subr.mxu0 0.0
      %5133 = vmatpush1.msra.mxu0 %v5100
      %5134 = vmatprep.subr.mxu0 0.0
      %5135 = vmatpush1.msra.mxu0 %v5101
      %5136 = vmatprep.subr.mxu0 0.0
      %5137 = vmatpush1.msra.mxu0 %v5102
      %5138 = vmatprep.subr.mxu0 0.0
      %5139 = vmatpush1.msra.mxu0 %v5103
      %5140 = vmatprep.subr.mxu0 0.0
      %5141 = vmatpush1.msra.mxu0 %v5104
      %5142 = vmatprep.subr.mxu0 0.0
      %5143 = vmatpush1.msra.mxu0 %v5105
      %5144 = vmatprep.subr.mxu0 0.0
      %5145 = vmatpush1.msra.mxu0 %v5106
      %5146 = vmatprep.subr.mxu0 0.0
      %5147 = vmatpush1.msra.mxu0 %v5107
      %5148 = vmatprep.subr.mxu0 0.0
      %5149 = vmatpush1.msra.mxu0 %v5108
      %5150 = vmatprep.subr.mxu0 0.0
      %5151 = vmatpush1.msra.mxu0 %v5109
      %5152 = vmatprep.subr.mxu0 0.0
      %5153 = vmatpush1.msra.mxu0 %v5110
      %5154 = vmatprep.subr.mxu0 0.0
      %5155 = vmatpush1.msra.mxu0 %v5111
      %5156 = vmatprep.subr.mxu0 0.0
      %5157 = vmatpush1.msra.mxu0 %v5112
      %5158 = vmatprep.subr.mxu0 0.0
      %5159 = vmatpush1.msra.mxu0 %v5113
      %5160 = vmatprep.subr.mxu0 0.0
      %5161 = vmatpush1.msra.mxu0 %v5114
      %5162 = vmatprep.subr.mxu0 0.0
      %5163 = vmatpush1.msra.mxu0 %v5115
      %5164 = vmatprep.subr.mxu0 0.0
      %5165 = vmatpush1.msra.mxu0 %v5116
      %5166 = vmatprep.subr.mxu0 0.0
      %5167 = vmatpush1.msra.mxu0 %v5117
      %5168 = vmatprep.subr.mxu0 0.0
      %5169 = vmatpush1.msra.mxu0 %v5118
      %5170 = vmatprep.subr.mxu0 0.0
      %5171 = vmatpush1.msra.mxu0 %v5119
      %5172 = vmatprep.subr.mxu0 0.0
      %5173 = vmatpush1.msra.mxu0 %v5120
      %5174 = vmatprep.subr.mxu0 0.0
      %5175 = vmatpush1.msra.mxu0 %v5121
      %5176 = vmatprep.subr.mxu0 0.0
      %5177 = vmatpush1.msra.mxu0 %v5122
      %5178 = vmatprep.subr.mxu0 0.0
      %5179 = vmatpush1.msra.mxu0 %v5123
      %5180 = vmatprep.subr.mxu0 0.0
      %5181 = vmatpush1.msra.mxu0 %v5124
      %5182 = vmatprep.subr.mxu0 0.0
      %5183 = vmatpush1.msra.mxu0 %v5125
      %5184 = vmatprep.subr.mxu0 0.0
      %5185 = vmatpush1.msra.mxu0 %v5126
      %5186 = vmatprep.subr.mxu0 0.0
      %5187 = vmatpush1.msra.mxu0 %v5127
      %5188 = vmatprep.subr.mxu0 0.0
      %5189 = vmatpush1.msra.mxu0 %v5128
      %5190 = vmatprep.subr.mxu0 0.0
      %5191 = vmatpush1.msra.mxu0 %v5129
      %5192 = vmatprep.subr.mxu0 0.0
      %5193 = vmatpush1.msra.mxu0 %v5130
      %5194 = vmatprep.subr.mxu0 0.0
      %5195 = vmatpush1.msra.mxu0 %v5131
      %5196 = vmatprep.mubr.f32.mxu0 %v5099
      %5197 = vmatmul.mubr.f32.gmra.mrb[0].mxu0 %v5098
      %v5198 = vpop.f32.mrb[0].mxu0
      %v5199 = vadd.f32 %v4002, %v5198
      %v5200 = vpop.f32.mrb[0].mxu0
      %5201 = vdwg.mxu0
      %v5202 = vmax.f32 %v5199, 0.0
      %5203 = vst.msk [vmem:[%s576] sm:$0xff] %vm4099, %v5202
      %p5204 = scmp.lt.s32.totalorder %s29, 1
      %s5205 = scalar_select %p5204, %s29, 1
      %s5206 = smul.addr %s5205, 2
      %s5207 = smul.addr %s5206, 4
      %s5208 = scalar_lea.vmem %s16, %s5207
      %p5209 = scmp.lt.s32.totalorder %s29, 1
      %s5210 = scalar_select %p5209, %s29, 1
      %s5211 = smul.addr %s5210, 8
      %s5212 = scalar_lea.vmem %s17, %s5211
      // Predicated region
      $region85: #{hr_module_forward.1} parent=83 // pred_check
        %p5213 = pneg %p393
      $region86: #{hr_module_forward.1} parent=83 // pred_check_branch
        %5215 = sbr.rel (%p5213) target = $region88
      $region87: #{hr_module_forward.1} parent=83 // pred_region
        _
      $region88: #{hr_module_forward.1} parent=83 // pred_fallthru
        _
      // Predicated region
      $region89: #{hr_module_forward.1} parent=83 // pred_check
        %p5216 = pneg %p419
      $region90: #{hr_module_forward.1} parent=83 // pred_check_branch
        %5218 = sbr.rel (%p5216) target = $region92
      $region91: #{hr_module_forward.1} parent=83 // pred_region
        _
      $region92: #{hr_module_forward.1} parent=83 // pred_fallthru
        _
    $region84: #{hr_module_forward.1} parent=5 // pred_fallthru
      _
    %p5219 = scmp.le.s32.totalorder 2, %s24
    // Predicated region
    $region93: #{hr_module_forward.1} parent=5 // pred_check
      %p5220 = pneg %p5219
    $region94: #{hr_module_forward.1} parent=5 // pred_check_branch
      %5222 = sbr.rel (%p5220) target = $region96
    $region95: #{hr_module_forward.1} parent=5 // pred_region
      %s5223 = ssub.s32 %s24, 2
      // Predicated region
      $region97: #{hr_module_forward.1} parent=95 // pred_check
        %p5224 = pneg %p399
      $region98: #{hr_module_forward.1} parent=95 // pred_check_branch
        %5226 = sbr.rel (%p5224) target = $region100
      $region99: #{hr_module_forward.1} parent=95 // pred_region
        %p5227 = scmp.lt.s32.totalorder %s30, 1
        %s5228 = scalar_select %p5227, %s30, 1
        %s5229 = smul.addr %s5228, 2
        %s5230 = smul.addr %s5229, 4
        %s5231 = scalar_lea.vmem %s16, %s5230
      $region100: #{hr_module_forward.1} parent=95 // pred_fallthru
        _
      // Predicated region
      $region101: #{hr_module_forward.1} parent=95 // pred_check
        %p5232 = pneg %p425
      $region102: #{hr_module_forward.1} parent=95 // pred_check_branch
        %5234 = sbr.rel (%p5232) target = $region104
      $region103: #{hr_module_forward.1} parent=95 // pred_region
        %p5235 = scmp.lt.s32.totalorder %s30, 1
        %s5236 = scalar_select %p5235, %s30, 1
        %s5237 = smul.addr %s5236, 8
        %s5238 = scalar_lea.vmem %s17, %s5237
      $region104: #{hr_module_forward.1} parent=95 // pred_fallthru
        _
    $region96: #{hr_module_forward.1} parent=5 // pred_fallthru
      _
  $region6: #{hr_module_forward.1} parent=0 // loop_footer
    %s28 = sadd.s32 1, %s24
  $region7: #{hr_module_forward.1} parent=0 // loop_footer_branch
    %23 = sbr.rel target = $region3
  $region8: #{hr_module_forward.1} parent=0 // loop_exit
    _

</llo_original>
